<compile_context>
chip_gen: v6e
topology: v6e:2x2x1
jax: 0.10.0
libtpu: 0.0.40
codegen_flags: <defaults>
</compile_context>

<pallas_src>
import functools

import jax
import jax.numpy as jnp
from jax.experimental import pallas as pl
from jax.experimental.pallas import tpu as pltpu

LANES = 128
VMEM_LIMIT = 32 * 1024 * 1024


def _sigmoid(x):
    # exp on the EUP; divide via the EUP approx reciprocal (frees the VALU).
    return pl.reciprocal(1.0 + jnp.exp(-x), approx=True)


# ----------------------------------------------------------------------------
# Fused forward kernel (one batch tile of B images per grid step)
# ----------------------------------------------------------------------------
def _fused_forward_kernel(
    p1_ref,        # (4, B*192, 32) bf16  conv1 im2col, pool-phase-major rows
    w1_ref,        # (32, 128)      bf16  conv1 weights (k=(kh,kw) x co)
    b1_ref,        # (1, 128)       f32
    w2_ref,        # (3200, 128)    bf16  conv2 weights ((kh,kw,ci) x co)
    b2_ref,        # (1, 128)       f32
    wf1_ref,       # (4096, 128)    bf16  fc1 (flatten + pool2-x folded in)
    bf1_ref,       # (1, 128)       f32
    wf2_ref,       # (128, 128)     bf16
    bf2_ref,       # (1, 128)       f32
    wf3_ref,       # (128, 128)     bf16
    bf3_ref,       # (1, 128)       f32
    o_ref,         # (B, 128)       f32
    pooled1_ref,   # (B, 12, 16, 128) f32  scratch: pooled conv1 activations
    patches_ref,   # (B*64, 3200)   bf16   scratch: conv2 im2col
    ys_ref,        # (B, 4, 8, 128) f32    scratch: row-pooled conv2 acts
    flat_ref,      # (B, 4096)      bf16   scratch: flattened fc1 input
    *, block_b):
    B = block_b

    # ---- conv1 + sigmoid + 2x2 avg-pool --------------------------------
    # The 4 pool phases (dy,dx) are separate row blocks of the patch matrix,
    # so the average pool is just the mean of 4 full-M matmul outputs.
    pooled = None
    for q in range(4):
        a = jnp.dot(p1_ref[q], w1_ref[...],
                    preferred_element_type=jnp.float32)       # (B*192, 128)
        s = _sigmoid(a + b1_ref[...])
        pooled = s if pooled is None else pooled + s
    pooled = 0.25 * pooled                                     # (B*192, 128)
    # rows are (b, yy, xx) with xx padded 12->16, so this view is tile-aligned.
    pooled1_ref[...] = pooled.reshape(B, 12, 16, LANES)

    # ---- conv2: im2col in VMEM (25 lane-dense copies) + one matmul ------
    for kh in range(5):
        for kw in range(5):
            t = kh * 5 + kw
            tap = pooled1_ref[:, kh:kh + 8, kw:kw + 8, :]      # (B,8,8,128)
            patches_ref[:, t * LANES:(t + 1) * LANES] = (
                tap.reshape(B * 64, LANES).astype(jnp.bfloat16))

    acc2 = jnp.dot(patches_ref[...], w2_ref[...],
                   preferred_element_type=jnp.float32)         # (B*64, 128)
    z2 = _sigmoid(acc2 + b2_ref[...])

    # ---- pool2 over rows (free outer-dim split); pool2 over columns and
    # ---- the NCHW flatten are folded into the fc1 weights ---------------
    z4 = z2.reshape(B, 4, 2, 8, LANES)
    ys_ref[...] = z4[:, :, 0] + z4[:, :, 1]                    # (B,4,8,128)
    for y2p in range(4):
        for x2 in range(8):
            s_idx = y2p * 8 + x2
            flat_ref[:, s_idx * LANES:(s_idx + 1) * LANES] = (
                ys_ref[:, y2p, x2, :].astype(jnp.bfloat16))

    # ---- fc1 -> sigmoid -> fc2 -> sigmoid -> fc3 ------------------------
    h = _sigmoid(jnp.dot(flat_ref[...], wf1_ref[...],
                         preferred_element_type=jnp.float32) + bf1_ref[...])
    h = _sigmoid(jnp.dot(h.astype(jnp.bfloat16), wf2_ref[...],
                         preferred_element_type=jnp.float32) + bf2_ref[...])
    out = jnp.dot(h.astype(jnp.bfloat16), wf3_ref[...],
                  preferred_element_type=jnp.float32) + bf3_ref[...]
    o_ref[...] = out


# ----------------------------------------------------------------------------
# Host-side layout plumbing
# ----------------------------------------------------------------------------
def _conv1_patches(img):
    """img: (N, 28, 28) -> (4, N*192, 32) bf16 conv1 im2col patches.

    Row-block q = (dy,dx) is one phase of the 2x2 avg-pool; within a block
    rows are (b, yy, xx) with xx zero-padded 12->16 (tile alignment, the extra
    rows are never read).  Columns are (kh, kw) zero-padded 25->32.
    """
    n = img.shape[0]
    taps = [img[:, kh:kh + 24, kw:kw + 24]
            for kh in range(5) for kw in range(5)]
    pat = jnp.stack(taps, axis=-1)                             # (N,24,24,25)
    phases = [pat[:, dy::2, dx::2, :] for dy in (0, 1) for dx in (0, 1)]
    pat = jnp.stack(phases, axis=0)                            # (4,N,12,12,25)
    pat = jnp.pad(pat, ((0, 0), (0, 0), (0, 0), (0, 4), (0, 7)))
    return pat.reshape(4, n * 192, 32).astype(jnp.bfloat16)


def _pick_block(n):
    """Largest batch tile in {8,4,2,1} that still gives >=2 grid steps."""
    for b in (8, 4, 2, 1):
        if n % b == 0 and n // b >= 2:
            return b
    return 1


def _fixed_spec(shape):
    """BlockSpec for a grid-invariant operand: constant index, single buffer."""
    ndim = len(shape)
    return pl.BlockSpec(shape, lambda i, _nd=ndim: (0,) * _nd,
                        pipeline_mode=pl.Buffered(1))


# ----------------------------------------------------------------------------
# Parameters
# ----------------------------------------------------------------------------
def init_params(key):
    ks = jax.random.split(key, 10)
    scale = 0.1
    return {
        "conv1_w": scale * jax.random.normal(ks[0], (10, 1, 5, 5), jnp.float32),
        "conv1_b": scale * jax.random.normal(ks[1], (10,), jnp.float32),
        "conv2_w": scale * jax.random.normal(ks[2], (20, 10, 5, 5), jnp.float32),
        "conv2_b": scale * jax.random.normal(ks[3], (20,), jnp.float32),
        "fc1_w": scale * jax.random.normal(ks[4], (120, 320), jnp.float32),
        "fc1_b": scale * jax.random.normal(ks[5], (120,), jnp.float32),
        "fc2_w": scale * jax.random.normal(ks[6], (84, 120), jnp.float32),
        "fc2_b": scale * jax.random.normal(ks[7], (84,), jnp.float32),
        "fc3_w": scale * jax.random.normal(ks[8], (10, 84), jnp.float32),
        "fc3_b": scale * jax.random.normal(ks[9], (10,), jnp.float32),
    }


def prepare_params(p):
    """One-time weight relayout: transpose / zero-pad to MXU-ready, lane-dense
    layouts.  All padded rows are zero so the sigmoid(0)=0.5 garbage produced
    in padded output lanes is annihilated by the next layer's weights."""
    bf16, f32 = jnp.bfloat16, jnp.float32

    def bias(v):
        return jnp.pad(v, (0, LANES - v.shape[0])).reshape(1, LANES).astype(f32)

    # conv1: (co,1,kh,kw) -> rows k = kh*5+kw, cols co; pad to (32,128)
    w1 = jnp.transpose(p["conv1_w"][:, 0], (1, 2, 0)).reshape(25, 10)
    w1 = jnp.pad(w1, ((0, 7), (0, LANES - 10))).astype(bf16)

    # conv2: (co,ci,kh,kw) -> rows (kh*5+kw)*128 + ci, cols co; (3200,128)
    w2 = jnp.transpose(p["conv2_w"], (2, 3, 1, 0))             # (5,5,10,20)
    w2 = jnp.pad(w2, ((0, 0), (0, 0), (0, LANES - 10), (0, LANES - 20)))
    w2 = w2.reshape(25 * LANES, LANES).astype(bf16)

    # fc1: fold in the flatten (feature = c*16 + h*4 + w) and the 0.25 * x-pair
    # average of pool2.  rows = (h*8 + x2)*128 + c with x2 // 2 = w; (4096,128)
    f1 = p["fc1_w"].reshape(120, 20, 4, 4)                     # (f, c, h, w)
    f1 = jnp.transpose(f1, (2, 3, 1, 0))                       # (h, w, c, f)
    f1 = jnp.repeat(f1, 2, axis=1) * 0.25                      # (4, 8, 20, 120)
    f1 = jnp.pad(f1, ((0, 0), (0, 0), (0, LANES - 20), (0, LANES - 120)))
    f1 = f1.reshape(4 * 8 * LANES, LANES).astype(bf16)

    f2 = jnp.pad(p["fc2_w"].T, ((0, LANES - 120), (0, LANES - 84))).astype(bf16)
    f3 = jnp.pad(p["fc3_w"].T, ((0, LANES - 84), (0, LANES - 10))).astype(bf16)

    return {
        "w1": w1, "b1": bias(p["conv1_b"]),
        "w2": w2, "b2": bias(p["conv2_b"]),
        "wf1": f1, "bf1": bias(p["fc1_b"]),
        "wf2": f2, "bf2": bias(p["fc2_b"]),
        "wf3": f3, "bf3": bias(p["fc3_b"]),
    }


# ----------------------------------------------------------------------------
# Forward
# ----------------------------------------------------------------------------
@jax.jit
def jcnn_forward(prep, x):
    # x: (N, 1, 28, 28) NCHW float32 (28x28 so that Flatten -> 320 features)
    n = x.shape[0]
    b = _pick_block(n)
    steps = n // b

    img = x[:, 0].astype(jnp.float32)                          # (N, 28, 28)
    p1 = _conv1_patches(img)                                   # (4, N*192, 32)

    kernel = functools.partial(_fused_forward_kernel, block_b=b)
    out = pl.pallas_call(
        kernel,
        out_shape=jax.ShapeDtypeStruct((steps, b, LANES), jnp.float32),
        grid=(steps,),
        in_specs=[
            pl.BlockSpec((4, b * 192, 32), lambda i: (0, i, 0)),
            _fixed_spec((32, LANES)),
            _fixed_spec((1, LANES)),
            _fixed_spec((25 * LANES, LANES)),
            _fixed_spec((1, LANES)),
            _fixed_spec((4 * 8 * LANES, LANES)),
            _fixed_spec((1, LANES)),
            _fixed_spec((LANES, LANES)),
            _fixed_spec((1, LANES)),
            _fixed_spec((LANES, LANES)),
            _fixed_spec((1, LANES)),
        ],
        out_specs=pl.BlockSpec((None, b, LANES), lambda i: (i, 0, 0)),
        scratch_shapes=[
            pltpu.VMEM((b, 12, 16, LANES), jnp.float32),       # pooled1
            pltpu.VMEM((b * 64, 25 * LANES), jnp.bfloat16),    # conv2 patches
            pltpu.VMEM((b, 4, 8, LANES), jnp.float32),         # row-pooled z2
            pltpu.VMEM((b, 4 * 8 * LANES), jnp.bfloat16),      # fc1 input
        ],
        compiler_params=pltpu.CompilerParams(
            dimension_semantics=("parallel",),
            vmem_limit_bytes=VMEM_LIMIT),
    )(p1, prep["w1"], prep["b1"], prep["w2"], prep["b2"],
      prep["wf1"], prep["bf1"], prep["wf2"], prep["bf2"],
      prep["wf3"], prep["bf3"])

    return out.reshape(n, LANES)[:, :10]


if __name__ == "__main__":
    key = jax.random.PRNGKey(0)
    pkey, xkey = jax.random.split(key)
    params = init_params(pkey)
    prepped = prepare_params(params)     # one-time weight layout prep
    x = jax.random.normal(xkey, (2, 1, 28, 28), jnp.float32)
    out = jax.block_until_ready(jcnn_forward(prepped, x))
    assert out.shape == (2, 10)
    assert bool(jnp.all(jnp.isfinite(out)))
    print("KERNEL_OK")
</pallas_src>

<mosaic_0001>
module attributes {stable_mosaic.version = 11 : i64} {
  func.func @_fused_forward_kernel(%arg0: i32, %arg1: memref<4x192x32xbf16, #tpu.memory_space<vmem>>, %arg2: memref<32x128xbf16, #tpu.memory_space<vmem>>, %arg3: memref<1x128xf32, #tpu.memory_space<vmem>>, %arg4: memref<3200x128xbf16, #tpu.memory_space<vmem>>, %arg5: memref<1x128xf32, #tpu.memory_space<vmem>>, %arg6: memref<4096x128xbf16, #tpu.memory_space<vmem>>, %arg7: memref<1x128xf32, #tpu.memory_space<vmem>>, %arg8: memref<128x128xbf16, #tpu.memory_space<vmem>>, %arg9: memref<1x128xf32, #tpu.memory_space<vmem>>, %arg10: memref<128x128xbf16, #tpu.memory_space<vmem>>, %arg11: memref<1x128xf32, #tpu.memory_space<vmem>>, %arg12: memref<1x1x128xf32, #tpu.memory_space<vmem>>, %arg13: memref<1x12x16x128xf32, #tpu.memory_space<vmem>>, %arg14: memref<64x3200xbf16, #tpu.memory_space<vmem>>, %arg15: memref<1x4x8x128xf32, #tpu.memory_space<vmem>>, %arg16: memref<1x4096xbf16, #tpu.memory_space<vmem>>) attributes {dimension_semantics = [#tpu.dimension_semantics<parallel>], iteration_bounds = array<i64: 2>, scalar_prefetch = 0 : i64, scratch_operands = 4 : i64, tpu.core_type = #tpu.core_type<tc>, window_params = [{transform_indices = @transform_0, window_bounds = array<i64: 4, 192, 32>}, {pipeline_mode = #tpu.pipeline_mode<synchronous>, transform_indices = @transform_1, window_bounds = array<i64: 32, 128>}, {pipeline_mode = #tpu.pipeline_mode<synchronous>, transform_indices = @transform_2, window_bounds = array<i64: 1, 128>}, {pipeline_mode = #tpu.pipeline_mode<synchronous>, transform_indices = @transform_3, window_bounds = array<i64: 3200, 128>}, {pipeline_mode = #tpu.pipeline_mode<synchronous>, transform_indices = @transform_4, window_bounds = array<i64: 1, 128>}, {pipeline_mode = #tpu.pipeline_mode<synchronous>, transform_indices = @transform_5, window_bounds = array<i64: 4096, 128>}, {pipeline_mode = #tpu.pipeline_mode<synchronous>, transform_indices = @transform_6, window_bounds = array<i64: 1, 128>}, {pipeline_mode = #tpu.pipeline_mode<synchronous>, transform_indices = @transform_7, window_bounds = array<i64: 128, 128>}, {pipeline_mode = #tpu.pipeline_mode<synchronous>, transform_indices = @transform_8, window_bounds = array<i64: 1, 128>}, {pipeline_mode = #tpu.pipeline_mode<synchronous>, transform_indices = @transform_9, window_bounds = array<i64: 128, 128>}, {pipeline_mode = #tpu.pipeline_mode<synchronous>, transform_indices = @transform_10, window_bounds = array<i64: 1, 128>}, {transform_indices = @transform_11, window_bounds = array<i64: 1, 1, 128>}]} {
    %c0 = arith.constant 0 : index
    %c0_0 = arith.constant 0 : index
    %c0_1 = arith.constant 0 : index
    %0 = vector.load %arg1[%c0, %c0_0, %c0_1] : memref<4x192x32xbf16, #tpu.memory_space<vmem>>, vector<1x192x32xbf16>
    %1 = vector.shape_cast %0 : vector<1x192x32xbf16> to vector<192x32xbf16>
    %c0_2 = arith.constant 0 : index
    %c0_3 = arith.constant 0 : index
    %2 = vector.load %arg2[%c0_2, %c0_3] : memref<32x128xbf16, #tpu.memory_space<vmem>>, vector<32x128xbf16>
    %cst = arith.constant dense<0.000000e+00> : vector<192x128xf32>
    %3 = tpu.matmul %1, %2, %cst {dimension_numbers = #tpu.dot_dimension_numbers<[1], [0], [0], [1], [0, 0, 1, 1], [], []>} : vector<192x32xbf16>, vector<32x128xbf16>, vector<192x128xf32> -> vector<192x128xf32>
    %c0_4 = arith.constant 0 : index
    %c0_5 = arith.constant 0 : index
    %4 = vector.load %arg3[%c0_4, %c0_5] : memref<1x128xf32, #tpu.memory_space<vmem>>, vector<1x128xf32>
    %5 = vector.broadcast %4 : vector<1x128xf32> to vector<192x128xf32>
    %6 = arith.addf %3, %5 : vector<192x128xf32>
    %cst_6 = arith.constant 0.000000e+00 : f32
    %7 = vector.broadcast %cst_6 : f32 to vector<192x128xf32>
    %8 = arith.subf %7, %6 : vector<192x128xf32>
    %9 = math.exp %8 : vector<192x128xf32>
    %cst_7 = arith.constant 1.000000e+00 : f32
    %10 = vector.broadcast %cst_7 : f32 to vector<192x128xf32>
    %11 = arith.addf %10, %9 : vector<192x128xf32>
    %12 = tpu.reciprocal %11 {approx = true} : vector<192x128xf32> -> vector<192x128xf32>
    %c1 = arith.constant 1 : index
    %c0_8 = arith.constant 0 : index
    %c0_9 = arith.constant 0 : index
    %13 = vector.load %arg1[%c1, %c0_8, %c0_9] : memref<4x192x32xbf16, #tpu.memory_space<vmem>>, vector<1x192x32xbf16>
    %14 = vector.shape_cast %13 : vector<1x192x32xbf16> to vector<192x32xbf16>
    %c0_10 = arith.constant 0 : index
    %c0_11 = arith.constant 0 : index
    %15 = vector.load %arg2[%c0_10, %c0_11] : memref<32x128xbf16, #tpu.memory_space<vmem>>, vector<32x128xbf16>
    %cst_12 = arith.constant dense<0.000000e+00> : vector<192x128xf32>
    %16 = tpu.matmul %14, %15, %cst_12 {dimension_numbers = #tpu.dot_dimension_numbers<[1], [0], [0], [1], [0, 0, 1, 1], [], []>} : vector<192x32xbf16>, vector<32x128xbf16>, vector<192x128xf32> -> vector<192x128xf32>
    %c0_13 = arith.constant 0 : index
    %c0_14 = arith.constant 0 : index
    %17 = vector.load %arg3[%c0_13, %c0_14] : memref<1x128xf32, #tpu.memory_space<vmem>>, vector<1x128xf32>
    %18 = vector.broadcast %17 : vector<1x128xf32> to vector<192x128xf32>
    %19 = arith.addf %16, %18 : vector<192x128xf32>
    %cst_15 = arith.constant 0.000000e+00 : f32
    %20 = vector.broadcast %cst_15 : f32 to vector<192x128xf32>
    %21 = arith.subf %20, %19 : vector<192x128xf32>
    %22 = math.exp %21 : vector<192x128xf32>
    %cst_16 = arith.constant 1.000000e+00 : f32
    %23 = vector.broadcast %cst_16 : f32 to vector<192x128xf32>
    %24 = arith.addf %23, %22 : vector<192x128xf32>
    %25 = tpu.reciprocal %24 {approx = true} : vector<192x128xf32> -> vector<192x128xf32>
    %26 = arith.addf %12, %25 : vector<192x128xf32>
    %c2 = arith.constant 2 : index
    %c0_17 = arith.constant 0 : index
    %c0_18 = arith.constant 0 : index
    %27 = vector.load %arg1[%c2, %c0_17, %c0_18] : memref<4x192x32xbf16, #tpu.memory_space<vmem>>, vector<1x192x32xbf16>
    %28 = vector.shape_cast %27 : vector<1x192x32xbf16> to vector<192x32xbf16>
    %c0_19 = arith.constant 0 : index
    %c0_20 = arith.constant 0 : index
    %29 = vector.load %arg2[%c0_19, %c0_20] : memref<32x128xbf16, #tpu.memory_space<vmem>>, vector<32x128xbf16>
    %cst_21 = arith.constant dense<0.000000e+00> : vector<192x128xf32>
    %30 = tpu.matmul %28, %29, %cst_21 {dimension_numbers = #tpu.dot_dimension_numbers<[1], [0], [0], [1], [0, 0, 1, 1], [], []>} : vector<192x32xbf16>, vector<32x128xbf16>, vector<192x128xf32> -> vector<192x128xf32>
    %c0_22 = arith.constant 0 : index
    %c0_23 = arith.constant 0 : index
    %31 = vector.load %arg3[%c0_22, %c0_23] : memref<1x128xf32, #tpu.memory_space<vmem>>, vector<1x128xf32>
    %32 = vector.broadcast %31 : vector<1x128xf32> to vector<192x128xf32>
    %33 = arith.addf %30, %32 : vector<192x128xf32>
    %cst_24 = arith.constant 0.000000e+00 : f32
    %34 = vector.broadcast %cst_24 : f32 to vector<192x128xf32>
    %35 = arith.subf %34, %33 : vector<192x128xf32>
    %36 = math.exp %35 : vector<192x128xf32>
    %cst_25 = arith.constant 1.000000e+00 : f32
    %37 = vector.broadcast %cst_25 : f32 to vector<192x128xf32>
    %38 = arith.addf %37, %36 : vector<192x128xf32>
    %39 = tpu.reciprocal %38 {approx = true} : vector<192x128xf32> -> vector<192x128xf32>
    %40 = arith.addf %26, %39 : vector<192x128xf32>
    %c3 = arith.constant 3 : index
    %c0_26 = arith.constant 0 : index
    %c0_27 = arith.constant 0 : index
    %41 = vector.load %arg1[%c3, %c0_26, %c0_27] : memref<4x192x32xbf16, #tpu.memory_space<vmem>>, vector<1x192x32xbf16>
    %42 = vector.shape_cast %41 : vector<1x192x32xbf16> to vector<192x32xbf16>
    %c0_28 = arith.constant 0 : index
    %c0_29 = arith.constant 0 : index
    %43 = vector.load %arg2[%c0_28, %c0_29] : memref<32x128xbf16, #tpu.memory_space<vmem>>, vector<32x128xbf16>
    %cst_30 = arith.constant dense<0.000000e+00> : vector<192x128xf32>
    %44 = tpu.matmul %42, %43, %cst_30 {dimension_numbers = #tpu.dot_dimension_numbers<[1], [0], [0], [1], [0, 0, 1, 1], [], []>} : vector<192x32xbf16>, vector<32x128xbf16>, vector<192x128xf32> -> vector<192x128xf32>
    %c0_31 = arith.constant 0 : index
    %c0_32 = arith.constant 0 : index
    %45 = vector.load %arg3[%c0_31, %c0_32] : memref<1x128xf32, #tpu.memory_space<vmem>>, vector<1x128xf32>
    %46 = vector.broadcast %45 : vector<1x128xf32> to vector<192x128xf32>
    %47 = arith.addf %44, %46 : vector<192x128xf32>
    %cst_33 = arith.constant 0.000000e+00 : f32
    %48 = vector.broadcast %cst_33 : f32 to vector<192x128xf32>
    %49 = arith.subf %48, %47 : vector<192x128xf32>
    %50 = math.exp %49 : vector<192x128xf32>
    %cst_34 = arith.constant 1.000000e+00 : f32
    %51 = vector.broadcast %cst_34 : f32 to vector<192x128xf32>
    %52 = arith.addf %51, %50 : vector<192x128xf32>
    %53 = tpu.reciprocal %52 {approx = true} : vector<192x128xf32> -> vector<192x128xf32>
    %54 = arith.addf %40, %53 : vector<192x128xf32>
    %cst_35 = arith.constant 2.500000e-01 : f32
    %55 = vector.broadcast %cst_35 : f32 to vector<192x128xf32>
    %56 = arith.mulf %55, %54 : vector<192x128xf32>
    %57 = vector.shape_cast %56 : vector<192x128xf32> to vector<1x12x16x128xf32>
    %c0_36 = arith.constant 0 : index
    %c0_37 = arith.constant 0 : index
    %c0_38 = arith.constant 0 : index
    %c0_39 = arith.constant 0 : index
    %58 = vector.load %arg13[%c0_36, %c0_37, %c0_38, %c0_39] : memref<1x12x16x128xf32, #tpu.memory_space<vmem>>, vector<1x12x16x128xf32>
    tpu.vector_store %arg13[%c0_36, %c0_37, %c0_38, %c0_39], %57 {strides = array<i32>} : memref<1x12x16x128xf32, #tpu.memory_space<vmem>>, vector<1x12x16x128xf32>,
    %c0_40 = arith.constant 0 : index
    %c0_41 = arith.constant 0 : index
    %c0_42 = arith.constant 0 : index
    %c0_43 = arith.constant 0 : index
    %59 = vector.load %arg13[%c0_40, %c0_41, %c0_42, %c0_43] : memref<1x12x16x128xf32, #tpu.memory_space<vmem>>, vector<1x8x8x128xf32>
    %60 = vector.shape_cast %59 : vector<1x8x8x128xf32> to vector<64x128xf32>
    %61 = arith.truncf %60 : vector<64x128xf32> to vector<64x128xbf16>
    %c0_44 = arith.constant 0 : index
    %c0_45 = arith.constant 0 : index
    %62 = vector.load %arg14[%c0_44, %c0_45] : memref<64x3200xbf16, #tpu.memory_space<vmem>>, vector<64x128xbf16>
    tpu.vector_store %arg14[%c0_44, %c0_45], %61 {strides = array<i32>} : memref<64x3200xbf16, #tpu.memory_space<vmem>>, vector<64x128xbf16>,
    %c0_46 = arith.constant 0 : index
    %c0_47 = arith.constant 0 : index
    %c1_48 = arith.constant 1 : index
    %c0_49 = arith.constant 0 : index
    %63 = vector.load %arg13[%c0_46, %c0_47, %c1_48, %c0_49] : memref<1x12x16x128xf32, #tpu.memory_space<vmem>>, vector<1x8x8x128xf32>
    %64 = vector.shape_cast %63 : vector<1x8x8x128xf32> to vector<64x128xf32>
    %65 = arith.truncf %64 : vector<64x128xf32> to vector<64x128xbf16>
    %c0_50 = arith.constant 0 : index
    %c128 = arith.constant 128 : index
    %66 = vector.load %arg14[%c0_50, %c128] : memref<64x3200xbf16, #tpu.memory_space<vmem>>, vector<64x128xbf16>
    tpu.vector_store %arg14[%c0_50, %c128], %65 {strides = array<i32>} : memref<64x3200xbf16, #tpu.memory_space<vmem>>, vector<64x128xbf16>,
    %c0_51 = arith.constant 0 : index
    %c0_52 = arith.constant 0 : index
    %c2_53 = arith.constant 2 : index
    %c0_54 = arith.constant 0 : index
    %67 = vector.load %arg13[%c0_51, %c0_52, %c2_53, %c0_54] : memref<1x12x16x128xf32, #tpu.memory_space<vmem>>, vector<1x8x8x128xf32>
    %68 = vector.shape_cast %67 : vector<1x8x8x128xf32> to vector<64x128xf32>
    %69 = arith.truncf %68 : vector<64x128xf32> to vector<64x128xbf16>
    %c0_55 = arith.constant 0 : index
    %c256 = arith.constant 256 : index
    %70 = vector.load %arg14[%c0_55, %c256] : memref<64x3200xbf16, #tpu.memory_space<vmem>>, vector<64x128xbf16>
    tpu.vector_store %arg14[%c0_55, %c256], %69 {strides = array<i32>} : memref<64x3200xbf16, #tpu.memory_space<vmem>>, vector<64x128xbf16>,
    %c0_56 = arith.constant 0 : index
    %c0_57 = arith.constant 0 : index
    %c3_58 = arith.constant 3 : index
    %c0_59 = arith.constant 0 : index
    %71 = vector.load %arg13[%c0_56, %c0_57, %c3_58, %c0_59] : memref<1x12x16x128xf32, #tpu.memory_space<vmem>>, vector<1x8x8x128xf32>
    %72 = vector.shape_cast %71 : vector<1x8x8x128xf32> to vector<64x128xf32>
    %73 = arith.truncf %72 : vector<64x128xf32> to vector<64x128xbf16>
    %c0_60 = arith.constant 0 : index
    %c384 = arith.constant 384 : index
    %74 = vector.load %arg14[%c0_60, %c384] : memref<64x3200xbf16, #tpu.memory_space<vmem>>, vector<64x128xbf16>
    tpu.vector_store %arg14[%c0_60, %c384], %73 {strides = array<i32>} : memref<64x3200xbf16, #tpu.memory_space<vmem>>, vector<64x128xbf16>,
    %c0_61 = arith.constant 0 : index
    %c0_62 = arith.constant 0 : index
    %c4 = arith.constant 4 : index
    %c0_63 = arith.constant 0 : index
    %75 = vector.load %arg13[%c0_61, %c0_62, %c4, %c0_63] : memref<1x12x16x128xf32, #tpu.memory_space<vmem>>, vector<1x8x8x128xf32>
    %76 = vector.shape_cast %75 : vector<1x8x8x128xf32> to vector<64x128xf32>
    %77 = arith.truncf %76 : vector<64x128xf32> to vector<64x128xbf16>
    %c0_64 = arith.constant 0 : index
    %c512 = arith.constant 512 : index
    %78 = vector.load %arg14[%c0_64, %c512] : memref<64x3200xbf16, #tpu.memory_space<vmem>>, vector<64x128xbf16>
    tpu.vector_store %arg14[%c0_64, %c512], %77 {strides = array<i32>} : memref<64x3200xbf16, #tpu.memory_space<vmem>>, vector<64x128xbf16>,
    %c0_65 = arith.constant 0 : index
    %c1_66 = arith.constant 1 : index
    %c0_67 = arith.constant 0 : index
    %c0_68 = arith.constant 0 : index
    %79 = vector.load %arg13[%c0_65, %c1_66, %c0_67, %c0_68] : memref<1x12x16x128xf32, #tpu.memory_space<vmem>>, vector<1x8x8x128xf32>
    %80 = vector.shape_cast %79 : vector<1x8x8x128xf32> to vector<64x128xf32>
    %81 = arith.truncf %80 : vector<64x128xf32> to vector<64x128xbf16>
    %c0_69 = arith.constant 0 : index
    %c640 = arith.constant 640 : index
    %82 = vector.load %arg14[%c0_69, %c640] : memref<64x3200xbf16, #tpu.memory_space<vmem>>, vector<64x128xbf16>
    tpu.vector_store %arg14[%c0_69, %c640], %81 {strides = array<i32>} : memref<64x3200xbf16, #tpu.memory_space<vmem>>, vector<64x128xbf16>,
    %c0_70 = arith.constant 0 : index
    %c1_71 = arith.constant 1 : index
    %c1_72 = arith.constant 1 : index
    %c0_73 = arith.constant 0 : index
    %83 = vector.load %arg13[%c0_70, %c1_71, %c1_72, %c0_73] : memref<1x12x16x128xf32, #tpu.memory_space<vmem>>, vector<1x8x8x128xf32>
    %84 = vector.shape_cast %83 : vector<1x8x8x128xf32> to vector<64x128xf32>
    %85 = arith.truncf %84 : vector<64x128xf32> to vector<64x128xbf16>
    %c0_74 = arith.constant 0 : index
    %c768 = arith.constant 768 : index
    %86 = vector.load %arg14[%c0_74, %c768] : memref<64x3200xbf16, #tpu.memory_space<vmem>>, vector<64x128xbf16>
    tpu.vector_store %arg14[%c0_74, %c768], %85 {strides = array<i32>} : memref<64x3200xbf16, #tpu.memory_space<vmem>>, vector<64x128xbf16>,
    %c0_75 = arith.constant 0 : index
    %c1_76 = arith.constant 1 : index
    %c2_77 = arith.constant 2 : index
    %c0_78 = arith.constant 0 : index
    %87 = vector.load %arg13[%c0_75, %c1_76, %c2_77, %c0_78] : memref<1x12x16x128xf32, #tpu.memory_space<vmem>>, vector<1x8x8x128xf32>
    %88 = vector.shape_cast %87 : vector<1x8x8x128xf32> to vector<64x128xf32>
    %89 = arith.truncf %88 : vector<64x128xf32> to vector<64x128xbf16>
    %c0_79 = arith.constant 0 : index
    %c896 = arith.constant 896 : index
    %90 = vector.load %arg14[%c0_79, %c896] : memref<64x3200xbf16, #tpu.memory_space<vmem>>, vector<64x128xbf16>
    tpu.vector_store %arg14[%c0_79, %c896], %89 {strides = array<i32>} : memref<64x3200xbf16, #tpu.memory_space<vmem>>, vector<64x128xbf16>,
    %c0_80 = arith.constant 0 : index
    %c1_81 = arith.constant 1 : index
    %c3_82 = arith.constant 3 : index
    %c0_83 = arith.constant 0 : index
    %91 = vector.load %arg13[%c0_80, %c1_81, %c3_82, %c0_83] : memref<1x12x16x128xf32, #tpu.memory_space<vmem>>, vector<1x8x8x128xf32>
    %92 = vector.shape_cast %91 : vector<1x8x8x128xf32> to vector<64x128xf32>
    %93 = arith.truncf %92 : vector<64x128xf32> to vector<64x128xbf16>
    %c0_84 = arith.constant 0 : index
    %c1024 = arith.constant 1024 : index
    %94 = vector.load %arg14[%c0_84, %c1024] : memref<64x3200xbf16, #tpu.memory_space<vmem>>, vector<64x128xbf16>
    tpu.vector_store %arg14[%c0_84, %c1024], %93 {strides = array<i32>} : memref<64x3200xbf16, #tpu.memory_space<vmem>>, vector<64x128xbf16>,
    %c0_85 = arith.constant 0 : index
    %c1_86 = arith.constant 1 : index
    %c4_87 = arith.constant 4 : index
    %c0_88 = arith.constant 0 : index
    %95 = vector.load %arg13[%c0_85, %c1_86, %c4_87, %c0_88] : memref<1x12x16x128xf32, #tpu.memory_space<vmem>>, vector<1x8x8x128xf32>
    %96 = vector.shape_cast %95 : vector<1x8x8x128xf32> to vector<64x128xf32>
    %97 = arith.truncf %96 : vector<64x128xf32> to vector<64x128xbf16>
    %c0_89 = arith.constant 0 : index
    %c1152 = arith.constant 1152 : index
    %98 = vector.load %arg14[%c0_89, %c1152] : memref<64x3200xbf16, #tpu.memory_space<vmem>>, vector<64x128xbf16>
    tpu.vector_store %arg14[%c0_89, %c1152], %97 {strides = array<i32>} : memref<64x3200xbf16, #tpu.memory_space<vmem>>, vector<64x128xbf16>,
    %c0_90 = arith.constant 0 : index
    %c2_91 = arith.constant 2 : index
    %c0_92 = arith.constant 0 : index
    %c0_93 = arith.constant 0 : index
    %99 = vector.load %arg13[%c0_90, %c2_91, %c0_92, %c0_93] : memref<1x12x16x128xf32, #tpu.memory_space<vmem>>, vector<1x8x8x128xf32>
    %100 = vector.shape_cast %99 : vector<1x8x8x128xf32> to vector<64x128xf32>
    %101 = arith.truncf %100 : vector<64x128xf32> to vector<64x128xbf16>
    %c0_94 = arith.constant 0 : index
    %c1280 = arith.constant 1280 : index
    %102 = vector.load %arg14[%c0_94, %c1280] : memref<64x3200xbf16, #tpu.memory_space<vmem>>, vector<64x128xbf16>
    tpu.vector_store %arg14[%c0_94, %c1280], %101 {strides = array<i32>} : memref<64x3200xbf16, #tpu.memory_space<vmem>>, vector<64x128xbf16>,
    %c0_95 = arith.constant 0 : index
    %c2_96 = arith.constant 2 : index
    %c1_97 = arith.constant 1 : index
    %c0_98 = arith.constant 0 : index
    %103 = vector.load %arg13[%c0_95, %c2_96, %c1_97, %c0_98] : memref<1x12x16x128xf32, #tpu.memory_space<vmem>>, vector<1x8x8x128xf32>
    %104 = vector.shape_cast %103 : vector<1x8x8x128xf32> to vector<64x128xf32>
    %105 = arith.truncf %104 : vector<64x128xf32> to vector<64x128xbf16>
    %c0_99 = arith.constant 0 : index
    %c1408 = arith.constant 1408 : index
    %106 = vector.load %arg14[%c0_99, %c1408] : memref<64x3200xbf16, #tpu.memory_space<vmem>>, vector<64x128xbf16>
    tpu.vector_store %arg14[%c0_99, %c1408], %105 {strides = array<i32>} : memref<64x3200xbf16, #tpu.memory_space<vmem>>, vector<64x128xbf16>,
    %c0_100 = arith.constant 0 : index
    %c2_101 = arith.constant 2 : index
    %c2_102 = arith.constant 2 : index
    %c0_103 = arith.constant 0 : index
    %107 = vector.load %arg13[%c0_100, %c2_101, %c2_102, %c0_103] : memref<1x12x16x128xf32, #tpu.memory_space<vmem>>, vector<1x8x8x128xf32>
    %108 = vector.shape_cast %107 : vector<1x8x8x128xf32> to vector<64x128xf32>
    %109 = arith.truncf %108 : vector<64x128xf32> to vector<64x128xbf16>
    %c0_104 = arith.constant 0 : index
    %c1536 = arith.constant 1536 : index
    %110 = vector.load %arg14[%c0_104, %c1536] : memref<64x3200xbf16, #tpu.memory_space<vmem>>, vector<64x128xbf16>
    tpu.vector_store %arg14[%c0_104, %c1536], %109 {strides = array<i32>} : memref<64x3200xbf16, #tpu.memory_space<vmem>>, vector<64x128xbf16>,
    %c0_105 = arith.constant 0 : index
    %c2_106 = arith.constant 2 : index
    %c3_107 = arith.constant 3 : index
    %c0_108 = arith.constant 0 : index
    %111 = vector.load %arg13[%c0_105, %c2_106, %c3_107, %c0_108] : memref<1x12x16x128xf32, #tpu.memory_space<vmem>>, vector<1x8x8x128xf32>
    %112 = vector.shape_cast %111 : vector<1x8x8x128xf32> to vector<64x128xf32>
    %113 = arith.truncf %112 : vector<64x128xf32> to vector<64x128xbf16>
    %c0_109 = arith.constant 0 : index
    %c1664 = arith.constant 1664 : index
    %114 = vector.load %arg14[%c0_109, %c1664] : memref<64x3200xbf16, #tpu.memory_space<vmem>>, vector<64x128xbf16>
    tpu.vector_store %arg14[%c0_109, %c1664], %113 {strides = array<i32>} : memref<64x3200xbf16, #tpu.memory_space<vmem>>, vector<64x128xbf16>,
    %c0_110 = arith.constant 0 : index
    %c2_111 = arith.constant 2 : index
    %c4_112 = arith.constant 4 : index
    %c0_113 = arith.constant 0 : index
    %115 = vector.load %arg13[%c0_110, %c2_111, %c4_112, %c0_113] : memref<1x12x16x128xf32, #tpu.memory_space<vmem>>, vector<1x8x8x128xf32>
    %116 = vector.shape_cast %115 : vector<1x8x8x128xf32> to vector<64x128xf32>
    %117 = arith.truncf %116 : vector<64x128xf32> to vector<64x128xbf16>
    %c0_114 = arith.constant 0 : index
    %c1792 = arith.constant 1792 : index
    %118 = vector.load %arg14[%c0_114, %c1792] : memref<64x3200xbf16, #tpu.memory_space<vmem>>, vector<64x128xbf16>
    tpu.vector_store %arg14[%c0_114, %c1792], %117 {strides = array<i32>} : memref<64x3200xbf16, #tpu.memory_space<vmem>>, vector<64x128xbf16>,
    %c0_115 = arith.constant 0 : index
    %c3_116 = arith.constant 3 : index
    %c0_117 = arith.constant 0 : index
    %c0_118 = arith.constant 0 : index
    %119 = vector.load %arg13[%c0_115, %c3_116, %c0_117, %c0_118] : memref<1x12x16x128xf32, #tpu.memory_space<vmem>>, vector<1x8x8x128xf32>
    %120 = vector.shape_cast %119 : vector<1x8x8x128xf32> to vector<64x128xf32>
    %121 = arith.truncf %120 : vector<64x128xf32> to vector<64x128xbf16>
    %c0_119 = arith.constant 0 : index
    %c1920 = arith.constant 1920 : index
    %122 = vector.load %arg14[%c0_119, %c1920] : memref<64x3200xbf16, #tpu.memory_space<vmem>>, vector<64x128xbf16>
    tpu.vector_store %arg14[%c0_119, %c1920], %121 {strides = array<i32>} : memref<64x3200xbf16, #tpu.memory_space<vmem>>, vector<64x128xbf16>,
    %c0_120 = arith.constant 0 : index
    %c3_121 = arith.constant 3 : index
    %c1_122 = arith.constant 1 : index
    %c0_123 = arith.constant 0 : index
    %123 = vector.load %arg13[%c0_120, %c3_121, %c1_122, %c0_123] : memref<1x12x16x128xf32, #tpu.memory_space<vmem>>, vector<1x8x8x128xf32>
    %124 = vector.shape_cast %123 : vector<1x8x8x128xf32> to vector<64x128xf32>
    %125 = arith.truncf %124 : vector<64x128xf32> to vector<64x128xbf16>
    %c0_124 = arith.constant 0 : index
    %c2048 = arith.constant 2048 : index
    %126 = vector.load %arg14[%c0_124, %c2048] : memref<64x3200xbf16, #tpu.memory_space<vmem>>, vector<64x128xbf16>
    tpu.vector_store %arg14[%c0_124, %c2048], %125 {strides = array<i32>} : memref<64x3200xbf16, #tpu.memory_space<vmem>>, vector<64x128xbf16>,
    %c0_125 = arith.constant 0 : index
    %c3_126 = arith.constant 3 : index
    %c2_127 = arith.constant 2 : index
    %c0_128 = arith.constant 0 : index
    %127 = vector.load %arg13[%c0_125, %c3_126, %c2_127, %c0_128] : memref<1x12x16x128xf32, #tpu.memory_space<vmem>>, vector<1x8x8x128xf32>
    %128 = vector.shape_cast %127 : vector<1x8x8x128xf32> to vector<64x128xf32>
    %129 = arith.truncf %128 : vector<64x128xf32> to vector<64x128xbf16>
    %c0_129 = arith.constant 0 : index
    %c2176 = arith.constant 2176 : index
    %130 = vector.load %arg14[%c0_129, %c2176] : memref<64x3200xbf16, #tpu.memory_space<vmem>>, vector<64x128xbf16>
    tpu.vector_store %arg14[%c0_129, %c2176], %129 {strides = array<i32>} : memref<64x3200xbf16, #tpu.memory_space<vmem>>, vector<64x128xbf16>,
    %c0_130 = arith.constant 0 : index
    %c3_131 = arith.constant 3 : index
    %c3_132 = arith.constant 3 : index
    %c0_133 = arith.constant 0 : index
    %131 = vector.load %arg13[%c0_130, %c3_131, %c3_132, %c0_133] : memref<1x12x16x128xf32, #tpu.memory_space<vmem>>, vector<1x8x8x128xf32>
    %132 = vector.shape_cast %131 : vector<1x8x8x128xf32> to vector<64x128xf32>
    %133 = arith.truncf %132 : vector<64x128xf32> to vector<64x128xbf16>
    %c0_134 = arith.constant 0 : index
    %c2304 = arith.constant 2304 : index
    %134 = vector.load %arg14[%c0_134, %c2304] : memref<64x3200xbf16, #tpu.memory_space<vmem>>, vector<64x128xbf16>
    tpu.vector_store %arg14[%c0_134, %c2304], %133 {strides = array<i32>} : memref<64x3200xbf16, #tpu.memory_space<vmem>>, vector<64x128xbf16>,
    %c0_135 = arith.constant 0 : index
    %c3_136 = arith.constant 3 : index
    %c4_137 = arith.constant 4 : index
    %c0_138 = arith.constant 0 : index
    %135 = vector.load %arg13[%c0_135, %c3_136, %c4_137, %c0_138] : memref<1x12x16x128xf32, #tpu.memory_space<vmem>>, vector<1x8x8x128xf32>
    %136 = vector.shape_cast %135 : vector<1x8x8x128xf32> to vector<64x128xf32>
    %137 = arith.truncf %136 : vector<64x128xf32> to vector<64x128xbf16>
    %c0_139 = arith.constant 0 : index
    %c2432 = arith.constant 2432 : index
    %138 = vector.load %arg14[%c0_139, %c2432] : memref<64x3200xbf16, #tpu.memory_space<vmem>>, vector<64x128xbf16>
    tpu.vector_store %arg14[%c0_139, %c2432], %137 {strides = array<i32>} : memref<64x3200xbf16, #tpu.memory_space<vmem>>, vector<64x128xbf16>,
    %c0_140 = arith.constant 0 : index
    %c4_141 = arith.constant 4 : index
    %c0_142 = arith.constant 0 : index
    %c0_143 = arith.constant 0 : index
    %139 = vector.load %arg13[%c0_140, %c4_141, %c0_142, %c0_143] : memref<1x12x16x128xf32, #tpu.memory_space<vmem>>, vector<1x8x8x128xf32>
    %140 = vector.shape_cast %139 : vector<1x8x8x128xf32> to vector<64x128xf32>
    %141 = arith.truncf %140 : vector<64x128xf32> to vector<64x128xbf16>
    %c0_144 = arith.constant 0 : index
    %c2560 = arith.constant 2560 : index
    %142 = vector.load %arg14[%c0_144, %c2560] : memref<64x3200xbf16, #tpu.memory_space<vmem>>, vector<64x128xbf16>
    tpu.vector_store %arg14[%c0_144, %c2560], %141 {strides = array<i32>} : memref<64x3200xbf16, #tpu.memory_space<vmem>>, vector<64x128xbf16>,
    %c0_145 = arith.constant 0 : index
    %c4_146 = arith.constant 4 : index
    %c1_147 = arith.constant 1 : index
    %c0_148 = arith.constant 0 : index
    %143 = vector.load %arg13[%c0_145, %c4_146, %c1_147, %c0_148] : memref<1x12x16x128xf32, #tpu.memory_space<vmem>>, vector<1x8x8x128xf32>
    %144 = vector.shape_cast %143 : vector<1x8x8x128xf32> to vector<64x128xf32>
    %145 = arith.truncf %144 : vector<64x128xf32> to vector<64x128xbf16>
    %c0_149 = arith.constant 0 : index
    %c2688 = arith.constant 2688 : index
    %146 = vector.load %arg14[%c0_149, %c2688] : memref<64x3200xbf16, #tpu.memory_space<vmem>>, vector<64x128xbf16>
    tpu.vector_store %arg14[%c0_149, %c2688], %145 {strides = array<i32>} : memref<64x3200xbf16, #tpu.memory_space<vmem>>, vector<64x128xbf16>,
    %c0_150 = arith.constant 0 : index
    %c4_151 = arith.constant 4 : index
    %c2_152 = arith.constant 2 : index
    %c0_153 = arith.constant 0 : index
    %147 = vector.load %arg13[%c0_150, %c4_151, %c2_152, %c0_153] : memref<1x12x16x128xf32, #tpu.memory_space<vmem>>, vector<1x8x8x128xf32>
    %148 = vector.shape_cast %147 : vector<1x8x8x128xf32> to vector<64x128xf32>
    %149 = arith.truncf %148 : vector<64x128xf32> to vector<64x128xbf16>
    %c0_154 = arith.constant 0 : index
    %c2816 = arith.constant 2816 : index
    %150 = vector.load %arg14[%c0_154, %c2816] : memref<64x3200xbf16, #tpu.memory_space<vmem>>, vector<64x128xbf16>
    tpu.vector_store %arg14[%c0_154, %c2816], %149 {strides = array<i32>} : memref<64x3200xbf16, #tpu.memory_space<vmem>>, vector<64x128xbf16>,
    %c0_155 = arith.constant 0 : index
    %c4_156 = arith.constant 4 : index
    %c3_157 = arith.constant 3 : index
    %c0_158 = arith.constant 0 : index
    %151 = vector.load %arg13[%c0_155, %c4_156, %c3_157, %c0_158] : memref<1x12x16x128xf32, #tpu.memory_space<vmem>>, vector<1x8x8x128xf32>
    %152 = vector.shape_cast %151 : vector<1x8x8x128xf32> to vector<64x128xf32>
    %153 = arith.truncf %152 : vector<64x128xf32> to vector<64x128xbf16>
    %c0_159 = arith.constant 0 : index
    %c2944 = arith.constant 2944 : index
    %154 = vector.load %arg14[%c0_159, %c2944] : memref<64x3200xbf16, #tpu.memory_space<vmem>>, vector<64x128xbf16>
    tpu.vector_store %arg14[%c0_159, %c2944], %153 {strides = array<i32>} : memref<64x3200xbf16, #tpu.memory_space<vmem>>, vector<64x128xbf16>,
    %c0_160 = arith.constant 0 : index
    %c4_161 = arith.constant 4 : index
    %c4_162 = arith.constant 4 : index
    %c0_163 = arith.constant 0 : index
    %155 = vector.load %arg13[%c0_160, %c4_161, %c4_162, %c0_163] : memref<1x12x16x128xf32, #tpu.memory_space<vmem>>, vector<1x8x8x128xf32>
    %156 = vector.shape_cast %155 : vector<1x8x8x128xf32> to vector<64x128xf32>
    %157 = arith.truncf %156 : vector<64x128xf32> to vector<64x128xbf16>
    %c0_164 = arith.constant 0 : index
    %c3072 = arith.constant 3072 : index
    %158 = vector.load %arg14[%c0_164, %c3072] : memref<64x3200xbf16, #tpu.memory_space<vmem>>, vector<64x128xbf16>
    tpu.vector_store %arg14[%c0_164, %c3072], %157 {strides = array<i32>} : memref<64x3200xbf16, #tpu.memory_space<vmem>>, vector<64x128xbf16>,
    %c0_165 = arith.constant 0 : index
    %c0_166 = arith.constant 0 : index
    %159 = vector.load %arg14[%c0_165, %c0_166] : memref<64x3200xbf16, #tpu.memory_space<vmem>>, vector<64x3200xbf16>
    %c0_167 = arith.constant 0 : index
    %c0_168 = arith.constant 0 : index
    %160 = vector.load %arg4[%c0_167, %c0_168] : memref<3200x128xbf16, #tpu.memory_space<vmem>>, vector<3200x128xbf16>
    %cst_169 = arith.constant dense<0.000000e+00> : vector<64x128xf32>
    %161 = tpu.matmul %159, %160, %cst_169 {dimension_numbers = #tpu.dot_dimension_numbers<[1], [0], [0], [1], [0, 0, 1, 1], [], []>} : vector<64x3200xbf16>, vector<3200x128xbf16>, vector<64x128xf32> -> vector<64x128xf32>
    %c0_170 = arith.constant 0 : index
    %c0_171 = arith.constant 0 : index
    %162 = vector.load %arg5[%c0_170, %c0_171] : memref<1x128xf32, #tpu.memory_space<vmem>>, vector<1x128xf32>
    %163 = vector.broadcast %162 : vector<1x128xf32> to vector<64x128xf32>
    %164 = arith.addf %161, %163 : vector<64x128xf32>
    %cst_172 = arith.constant 0.000000e+00 : f32
    %165 = vector.broadcast %cst_172 : f32 to vector<64x128xf32>
    %166 = arith.subf %165, %164 : vector<64x128xf32>
    %167 = math.exp %166 : vector<64x128xf32>
    %cst_173 = arith.constant 1.000000e+00 : f32
    %168 = vector.broadcast %cst_173 : f32 to vector<64x128xf32>
    %169 = arith.addf %168, %167 : vector<64x128xf32>
    %170 = tpu.reciprocal %169 {approx = true} : vector<64x128xf32> -> vector<64x128xf32>
    %171 = vector.shape_cast %170 : vector<64x128xf32> to vector<1x4x2x8x128xf32>
    %172 = vector.extract_strided_slice %171 {offsets = [0, 0, 0, 0, 0], sizes = [1, 4, 1, 8, 128], strides = [1, 1, 1, 1, 1]} : vector<1x4x2x8x128xf32> to vector<1x4x1x8x128xf32>
    %173 = vector.shape_cast %172 : vector<1x4x1x8x128xf32> to vector<1x4x8x128xf32>
    %174 = vector.extract_strided_slice %171 {offsets = [0, 0, 1, 0, 0], sizes = [1, 4, 1, 8, 128], strides = [1, 1, 1, 1, 1]} : vector<1x4x2x8x128xf32> to vector<1x4x1x8x128xf32>
    %175 = vector.shape_cast %174 : vector<1x4x1x8x128xf32> to vector<1x4x8x128xf32>
    %176 = arith.addf %173, %175 : vector<1x4x8x128xf32>
    %c0_174 = arith.constant 0 : index
    %c0_175 = arith.constant 0 : index
    %c0_176 = arith.constant 0 : index
    %c0_177 = arith.constant 0 : index
    %177 = vector.load %arg15[%c0_174, %c0_175, %c0_176, %c0_177] : memref<1x4x8x128xf32, #tpu.memory_space<vmem>>, vector<1x4x8x128xf32>
    tpu.vector_store %arg15[%c0_174, %c0_175, %c0_176, %c0_177], %176 {strides = array<i32>} : memref<1x4x8x128xf32, #tpu.memory_space<vmem>>, vector<1x4x8x128xf32>,
    %c0_178 = arith.constant 0 : index
    %c0_179 = arith.constant 0 : index
    %c0_180 = arith.constant 0 : index
    %c0_181 = arith.constant 0 : index
    %178 = vector.load %arg15[%c0_178, %c0_179, %c0_180, %c0_181] : memref<1x4x8x128xf32, #tpu.memory_space<vmem>>, vector<1x1x1x128xf32>
    %179 = vector.shape_cast %178 : vector<1x1x1x128xf32> to vector<1x128xf32>
    %180 = arith.truncf %179 : vector<1x128xf32> to vector<1x128xbf16>
    %c0_182 = arith.constant 0 : index
    %c0_183 = arith.constant 0 : index
    %181 = vector.load %arg16[%c0_182, %c0_183] : memref<1x4096xbf16, #tpu.memory_space<vmem>>, vector<1x128xbf16>
    tpu.vector_store %arg16[%c0_182, %c0_183], %180 {strides = array<i32>} : memref<1x4096xbf16, #tpu.memory_space<vmem>>, vector<1x128xbf16>,
    %c0_184 = arith.constant 0 : index
    %c0_185 = arith.constant 0 : index
    %c1_186 = arith.constant 1 : index
    %c0_187 = arith.constant 0 : index
    %182 = vector.load %arg15[%c0_184, %c0_185, %c1_186, %c0_187] : memref<1x4x8x128xf32, #tpu.memory_space<vmem>>, vector<1x1x1x128xf32>
    %183 = vector.shape_cast %182 : vector<1x1x1x128xf32> to vector<1x128xf32>
    %184 = arith.truncf %183 : vector<1x128xf32> to vector<1x128xbf16>
    %c0_188 = arith.constant 0 : index
    %c128_189 = arith.constant 128 : index
    %185 = vector.load %arg16[%c0_188, %c128_189] : memref<1x4096xbf16, #tpu.memory_space<vmem>>, vector<1x128xbf16>
    tpu.vector_store %arg16[%c0_188, %c128_189], %184 {strides = array<i32>} : memref<1x4096xbf16, #tpu.memory_space<vmem>>, vector<1x128xbf16>,
    %c0_190 = arith.constant 0 : index
    %c0_191 = arith.constant 0 : index
    %c2_192 = arith.constant 2 : index
    %c0_193 = arith.constant 0 : index
    %186 = vector.load %arg15[%c0_190, %c0_191, %c2_192, %c0_193] : memref<1x4x8x128xf32, #tpu.memory_space<vmem>>, vector<1x1x1x128xf32>
    %187 = vector.shape_cast %186 : vector<1x1x1x128xf32> to vector<1x128xf32>
    %188 = arith.truncf %187 : vector<1x128xf32> to vector<1x128xbf16>
    %c0_194 = arith.constant 0 : index
    %c256_195 = arith.constant 256 : index
    %189 = vector.load %arg16[%c0_194, %c256_195] : memref<1x4096xbf16, #tpu.memory_space<vmem>>, vector<1x128xbf16>
    tpu.vector_store %arg16[%c0_194, %c256_195], %188 {strides = array<i32>} : memref<1x4096xbf16, #tpu.memory_space<vmem>>, vector<1x128xbf16>,
    %c0_196 = arith.constant 0 : index
    %c0_197 = arith.constant 0 : index
    %c3_198 = arith.constant 3 : index
    %c0_199 = arith.constant 0 : index
    %190 = vector.load %arg15[%c0_196, %c0_197, %c3_198, %c0_199] : memref<1x4x8x128xf32, #tpu.memory_space<vmem>>, vector<1x1x1x128xf32>
    %191 = vector.shape_cast %190 : vector<1x1x1x128xf32> to vector<1x128xf32>
    %192 = arith.truncf %191 : vector<1x128xf32> to vector<1x128xbf16>
    %c0_200 = arith.constant 0 : index
    %c384_201 = arith.constant 384 : index
    %193 = vector.load %arg16[%c0_200, %c384_201] : memref<1x4096xbf16, #tpu.memory_space<vmem>>, vector<1x128xbf16>
    tpu.vector_store %arg16[%c0_200, %c384_201], %192 {strides = array<i32>} : memref<1x4096xbf16, #tpu.memory_space<vmem>>, vector<1x128xbf16>,
    %c0_202 = arith.constant 0 : index
    %c0_203 = arith.constant 0 : index
    %c4_204 = arith.constant 4 : index
    %c0_205 = arith.constant 0 : index
    %194 = vector.load %arg15[%c0_202, %c0_203, %c4_204, %c0_205] : memref<1x4x8x128xf32, #tpu.memory_space<vmem>>, vector<1x1x1x128xf32>
    %195 = vector.shape_cast %194 : vector<1x1x1x128xf32> to vector<1x128xf32>
    %196 = arith.truncf %195 : vector<1x128xf32> to vector<1x128xbf16>
    %c0_206 = arith.constant 0 : index
    %c512_207 = arith.constant 512 : index
    %197 = vector.load %arg16[%c0_206, %c512_207] : memref<1x4096xbf16, #tpu.memory_space<vmem>>, vector<1x128xbf16>
    tpu.vector_store %arg16[%c0_206, %c512_207], %196 {strides = array<i32>} : memref<1x4096xbf16, #tpu.memory_space<vmem>>, vector<1x128xbf16>,
    %c0_208 = arith.constant 0 : index
    %c0_209 = arith.constant 0 : index
    %c5 = arith.constant 5 : index
    %c0_210 = arith.constant 0 : index
    %198 = vector.load %arg15[%c0_208, %c0_209, %c5, %c0_210] : memref<1x4x8x128xf32, #tpu.memory_space<vmem>>, vector<1x1x1x128xf32>
    %199 = vector.shape_cast %198 : vector<1x1x1x128xf32> to vector<1x128xf32>
    %200 = arith.truncf %199 : vector<1x128xf32> to vector<1x128xbf16>
    %c0_211 = arith.constant 0 : index
    %c640_212 = arith.constant 640 : index
    %201 = vector.load %arg16[%c0_211, %c640_212] : memref<1x4096xbf16, #tpu.memory_space<vmem>>, vector<1x128xbf16>
    tpu.vector_store %arg16[%c0_211, %c640_212], %200 {strides = array<i32>} : memref<1x4096xbf16, #tpu.memory_space<vmem>>, vector<1x128xbf16>,
    %c0_213 = arith.constant 0 : index
    %c0_214 = arith.constant 0 : index
    %c6 = arith.constant 6 : index
    %c0_215 = arith.constant 0 : index
    %202 = vector.load %arg15[%c0_213, %c0_214, %c6, %c0_215] : memref<1x4x8x128xf32, #tpu.memory_space<vmem>>, vector<1x1x1x128xf32>
    %203 = vector.shape_cast %202 : vector<1x1x1x128xf32> to vector<1x128xf32>
    %204 = arith.truncf %203 : vector<1x128xf32> to vector<1x128xbf16>
    %c0_216 = arith.constant 0 : index
    %c768_217 = arith.constant 768 : index
    %205 = vector.load %arg16[%c0_216, %c768_217] : memref<1x4096xbf16, #tpu.memory_space<vmem>>, vector<1x128xbf16>
    tpu.vector_store %arg16[%c0_216, %c768_217], %204 {strides = array<i32>} : memref<1x4096xbf16, #tpu.memory_space<vmem>>, vector<1x128xbf16>,
    %c0_218 = arith.constant 0 : index
    %c0_219 = arith.constant 0 : index
    %c7 = arith.constant 7 : index
    %c0_220 = arith.constant 0 : index
    %206 = vector.load %arg15[%c0_218, %c0_219, %c7, %c0_220] : memref<1x4x8x128xf32, #tpu.memory_space<vmem>>, vector<1x1x1x128xf32>
    %207 = vector.shape_cast %206 : vector<1x1x1x128xf32> to vector<1x128xf32>
    %208 = arith.truncf %207 : vector<1x128xf32> to vector<1x128xbf16>
    %c0_221 = arith.constant 0 : index
    %c896_222 = arith.constant 896 : index
    %209 = vector.load %arg16[%c0_221, %c896_222] : memref<1x4096xbf16, #tpu.memory_space<vmem>>, vector<1x128xbf16>
    tpu.vector_store %arg16[%c0_221, %c896_222], %208 {strides = array<i32>} : memref<1x4096xbf16, #tpu.memory_space<vmem>>, vector<1x128xbf16>,
    %c0_223 = arith.constant 0 : index
    %c1_224 = arith.constant 1 : index
    %c0_225 = arith.constant 0 : index
    %c0_226 = arith.constant 0 : index
    %210 = vector.load %arg15[%c0_223, %c1_224, %c0_225, %c0_226] : memref<1x4x8x128xf32, #tpu.memory_space<vmem>>, vector<1x1x1x128xf32>
    %211 = vector.shape_cast %210 : vector<1x1x1x128xf32> to vector<1x128xf32>
    %212 = arith.truncf %211 : vector<1x128xf32> to vector<1x128xbf16>
    %c0_227 = arith.constant 0 : index
    %c1024_228 = arith.constant 1024 : index
    %213 = vector.load %arg16[%c0_227, %c1024_228] : memref<1x4096xbf16, #tpu.memory_space<vmem>>, vector<1x128xbf16>
    tpu.vector_store %arg16[%c0_227, %c1024_228], %212 {strides = array<i32>} : memref<1x4096xbf16, #tpu.memory_space<vmem>>, vector<1x128xbf16>,
    %c0_229 = arith.constant 0 : index
    %c1_230 = arith.constant 1 : index
    %c1_231 = arith.constant 1 : index
    %c0_232 = arith.constant 0 : index
    %214 = vector.load %arg15[%c0_229, %c1_230, %c1_231, %c0_232] : memref<1x4x8x128xf32, #tpu.memory_space<vmem>>, vector<1x1x1x128xf32>
    %215 = vector.shape_cast %214 : vector<1x1x1x128xf32> to vector<1x128xf32>
    %216 = arith.truncf %215 : vector<1x128xf32> to vector<1x128xbf16>
    %c0_233 = arith.constant 0 : index
    %c1152_234 = arith.constant 1152 : index
    %217 = vector.load %arg16[%c0_233, %c1152_234] : memref<1x4096xbf16, #tpu.memory_space<vmem>>, vector<1x128xbf16>
    tpu.vector_store %arg16[%c0_233, %c1152_234], %216 {strides = array<i32>} : memref<1x4096xbf16, #tpu.memory_space<vmem>>, vector<1x128xbf16>,
    %c0_235 = arith.constant 0 : index
    %c1_236 = arith.constant 1 : index
    %c2_237 = arith.constant 2 : index
    %c0_238 = arith.constant 0 : index
    %218 = vector.load %arg15[%c0_235, %c1_236, %c2_237, %c0_238] : memref<1x4x8x128xf32, #tpu.memory_space<vmem>>, vector<1x1x1x128xf32>
    %219 = vector.shape_cast %218 : vector<1x1x1x128xf32> to vector<1x128xf32>
    %220 = arith.truncf %219 : vector<1x128xf32> to vector<1x128xbf16>
    %c0_239 = arith.constant 0 : index
    %c1280_240 = arith.constant 1280 : index
    %221 = vector.load %arg16[%c0_239, %c1280_240] : memref<1x4096xbf16, #tpu.memory_space<vmem>>, vector<1x128xbf16>
    tpu.vector_store %arg16[%c0_239, %c1280_240], %220 {strides = array<i32>} : memref<1x4096xbf16, #tpu.memory_space<vmem>>, vector<1x128xbf16>,
    %c0_241 = arith.constant 0 : index
    %c1_242 = arith.constant 1 : index
    %c3_243 = arith.constant 3 : index
    %c0_244 = arith.constant 0 : index
    %222 = vector.load %arg15[%c0_241, %c1_242, %c3_243, %c0_244] : memref<1x4x8x128xf32, #tpu.memory_space<vmem>>, vector<1x1x1x128xf32>
    %223 = vector.shape_cast %222 : vector<1x1x1x128xf32> to vector<1x128xf32>
    %224 = arith.truncf %223 : vector<1x128xf32> to vector<1x128xbf16>
    %c0_245 = arith.constant 0 : index
    %c1408_246 = arith.constant 1408 : index
    %225 = vector.load %arg16[%c0_245, %c1408_246] : memref<1x4096xbf16, #tpu.memory_space<vmem>>, vector<1x128xbf16>
    tpu.vector_store %arg16[%c0_245, %c1408_246], %224 {strides = array<i32>} : memref<1x4096xbf16, #tpu.memory_space<vmem>>, vector<1x128xbf16>,
    %c0_247 = arith.constant 0 : index
    %c1_248 = arith.constant 1 : index
    %c4_249 = arith.constant 4 : index
    %c0_250 = arith.constant 0 : index
    %226 = vector.load %arg15[%c0_247, %c1_248, %c4_249, %c0_250] : memref<1x4x8x128xf32, #tpu.memory_space<vmem>>, vector<1x1x1x128xf32>
    %227 = vector.shape_cast %226 : vector<1x1x1x128xf32> to vector<1x128xf32>
    %228 = arith.truncf %227 : vector<1x128xf32> to vector<1x128xbf16>
    %c0_251 = arith.constant 0 : index
    %c1536_252 = arith.constant 1536 : index
    %229 = vector.load %arg16[%c0_251, %c1536_252] : memref<1x4096xbf16, #tpu.memory_space<vmem>>, vector<1x128xbf16>
    tpu.vector_store %arg16[%c0_251, %c1536_252], %228 {strides = array<i32>} : memref<1x4096xbf16, #tpu.memory_space<vmem>>, vector<1x128xbf16>,
    %c0_253 = arith.constant 0 : index
    %c1_254 = arith.constant 1 : index
    %c5_255 = arith.constant 5 : index
    %c0_256 = arith.constant 0 : index
    %230 = vector.load %arg15[%c0_253, %c1_254, %c5_255, %c0_256] : memref<1x4x8x128xf32, #tpu.memory_space<vmem>>, vector<1x1x1x128xf32>
    %231 = vector.shape_cast %230 : vector<1x1x1x128xf32> to vector<1x128xf32>
    %232 = arith.truncf %231 : vector<1x128xf32> to vector<1x128xbf16>
    %c0_257 = arith.constant 0 : index
    %c1664_258 = arith.constant 1664 : index
    %233 = vector.load %arg16[%c0_257, %c1664_258] : memref<1x4096xbf16, #tpu.memory_space<vmem>>, vector<1x128xbf16>
    tpu.vector_store %arg16[%c0_257, %c1664_258], %232 {strides = array<i32>} : memref<1x4096xbf16, #tpu.memory_space<vmem>>, vector<1x128xbf16>,
    %c0_259 = arith.constant 0 : index
    %c1_260 = arith.constant 1 : index
    %c6_261 = arith.constant 6 : index
    %c0_262 = arith.constant 0 : index
    %234 = vector.load %arg15[%c0_259, %c1_260, %c6_261, %c0_262] : memref<1x4x8x128xf32, #tpu.memory_space<vmem>>, vector<1x1x1x128xf32>
    %235 = vector.shape_cast %234 : vector<1x1x1x128xf32> to vector<1x128xf32>
    %236 = arith.truncf %235 : vector<1x128xf32> to vector<1x128xbf16>
    %c0_263 = arith.constant 0 : index
    %c1792_264 = arith.constant 1792 : index
    %237 = vector.load %arg16[%c0_263, %c1792_264] : memref<1x4096xbf16, #tpu.memory_space<vmem>>, vector<1x128xbf16>
    tpu.vector_store %arg16[%c0_263, %c1792_264], %236 {strides = array<i32>} : memref<1x4096xbf16, #tpu.memory_space<vmem>>, vector<1x128xbf16>,
    %c0_265 = arith.constant 0 : index
    %c1_266 = arith.constant 1 : index
    %c7_267 = arith.constant 7 : index
    %c0_268 = arith.constant 0 : index
    %238 = vector.load %arg15[%c0_265, %c1_266, %c7_267, %c0_268] : memref<1x4x8x128xf32, #tpu.memory_space<vmem>>, vector<1x1x1x128xf32>
    %239 = vector.shape_cast %238 : vector<1x1x1x128xf32> to vector<1x128xf32>
    %240 = arith.truncf %239 : vector<1x128xf32> to vector<1x128xbf16>
    %c0_269 = arith.constant 0 : index
    %c1920_270 = arith.constant 1920 : index
    %241 = vector.load %arg16[%c0_269, %c1920_270] : memref<1x4096xbf16, #tpu.memory_space<vmem>>, vector<1x128xbf16>
    tpu.vector_store %arg16[%c0_269, %c1920_270], %240 {strides = array<i32>} : memref<1x4096xbf16, #tpu.memory_space<vmem>>, vector<1x128xbf16>,
    %c0_271 = arith.constant 0 : index
    %c2_272 = arith.constant 2 : index
    %c0_273 = arith.constant 0 : index
    %c0_274 = arith.constant 0 : index
    %242 = vector.load %arg15[%c0_271, %c2_272, %c0_273, %c0_274] : memref<1x4x8x128xf32, #tpu.memory_space<vmem>>, vector<1x1x1x128xf32>
    %243 = vector.shape_cast %242 : vector<1x1x1x128xf32> to vector<1x128xf32>
    %244 = arith.truncf %243 : vector<1x128xf32> to vector<1x128xbf16>
    %c0_275 = arith.constant 0 : index
    %c2048_276 = arith.constant 2048 : index
    %245 = vector.load %arg16[%c0_275, %c2048_276] : memref<1x4096xbf16, #tpu.memory_space<vmem>>, vector<1x128xbf16>
    tpu.vector_store %arg16[%c0_275, %c2048_276], %244 {strides = array<i32>} : memref<1x4096xbf16, #tpu.memory_space<vmem>>, vector<1x128xbf16>,
    %c0_277 = arith.constant 0 : index
    %c2_278 = arith.constant 2 : index
    %c1_279 = arith.constant 1 : index
    %c0_280 = arith.constant 0 : index
    %246 = vector.load %arg15[%c0_277, %c2_278, %c1_279, %c0_280] : memref<1x4x8x128xf32, #tpu.memory_space<vmem>>, vector<1x1x1x128xf32>
    %247 = vector.shape_cast %246 : vector<1x1x1x128xf32> to vector<1x128xf32>
    %248 = arith.truncf %247 : vector<1x128xf32> to vector<1x128xbf16>
    %c0_281 = arith.constant 0 : index
    %c2176_282 = arith.constant 2176 : index
    %249 = vector.load %arg16[%c0_281, %c2176_282] : memref<1x4096xbf16, #tpu.memory_space<vmem>>, vector<1x128xbf16>
    tpu.vector_store %arg16[%c0_281, %c2176_282], %248 {strides = array<i32>} : memref<1x4096xbf16, #tpu.memory_space<vmem>>, vector<1x128xbf16>,
    %c0_283 = arith.constant 0 : index
    %c2_284 = arith.constant 2 : index
    %c2_285 = arith.constant 2 : index
    %c0_286 = arith.constant 0 : index
    %250 = vector.load %arg15[%c0_283, %c2_284, %c2_285, %c0_286] : memref<1x4x8x128xf32, #tpu.memory_space<vmem>>, vector<1x1x1x128xf32>
    %251 = vector.shape_cast %250 : vector<1x1x1x128xf32> to vector<1x128xf32>
    %252 = arith.truncf %251 : vector<1x128xf32> to vector<1x128xbf16>
    %c0_287 = arith.constant 0 : index
    %c2304_288 = arith.constant 2304 : index
    %253 = vector.load %arg16[%c0_287, %c2304_288] : memref<1x4096xbf16, #tpu.memory_space<vmem>>, vector<1x128xbf16>
    tpu.vector_store %arg16[%c0_287, %c2304_288], %252 {strides = array<i32>} : memref<1x4096xbf16, #tpu.memory_space<vmem>>, vector<1x128xbf16>,
    %c0_289 = arith.constant 0 : index
    %c2_290 = arith.constant 2 : index
    %c3_291 = arith.constant 3 : index
    %c0_292 = arith.constant 0 : index
    %254 = vector.load %arg15[%c0_289, %c2_290, %c3_291, %c0_292] : memref<1x4x8x128xf32, #tpu.memory_space<vmem>>, vector<1x1x1x128xf32>
    %255 = vector.shape_cast %254 : vector<1x1x1x128xf32> to vector<1x128xf32>
    %256 = arith.truncf %255 : vector<1x128xf32> to vector<1x128xbf16>
    %c0_293 = arith.constant 0 : index
    %c2432_294 = arith.constant 2432 : index
    %257 = vector.load %arg16[%c0_293, %c2432_294] : memref<1x4096xbf16, #tpu.memory_space<vmem>>, vector<1x128xbf16>
    tpu.vector_store %arg16[%c0_293, %c2432_294], %256 {strides = array<i32>} : memref<1x4096xbf16, #tpu.memory_space<vmem>>, vector<1x128xbf16>,
    %c0_295 = arith.constant 0 : index
    %c2_296 = arith.constant 2 : index
    %c4_297 = arith.constant 4 : index
    %c0_298 = arith.constant 0 : index
    %258 = vector.load %arg15[%c0_295, %c2_296, %c4_297, %c0_298] : memref<1x4x8x128xf32, #tpu.memory_space<vmem>>, vector<1x1x1x128xf32>
    %259 = vector.shape_cast %258 : vector<1x1x1x128xf32> to vector<1x128xf32>
    %260 = arith.truncf %259 : vector<1x128xf32> to vector<1x128xbf16>
    %c0_299 = arith.constant 0 : index
    %c2560_300 = arith.constant 2560 : index
    %261 = vector.load %arg16[%c0_299, %c2560_300] : memref<1x4096xbf16, #tpu.memory_space<vmem>>, vector<1x128xbf16>
    tpu.vector_store %arg16[%c0_299, %c2560_300], %260 {strides = array<i32>} : memref<1x4096xbf16, #tpu.memory_space<vmem>>, vector<1x128xbf16>,
    %c0_301 = arith.constant 0 : index
    %c2_302 = arith.constant 2 : index
    %c5_303 = arith.constant 5 : index
    %c0_304 = arith.constant 0 : index
    %262 = vector.load %arg15[%c0_301, %c2_302, %c5_303, %c0_304] : memref<1x4x8x128xf32, #tpu.memory_space<vmem>>, vector<1x1x1x128xf32>
    %263 = vector.shape_cast %262 : vector<1x1x1x128xf32> to vector<1x128xf32>
    %264 = arith.truncf %263 : vector<1x128xf32> to vector<1x128xbf16>
    %c0_305 = arith.constant 0 : index
    %c2688_306 = arith.constant 2688 : index
    %265 = vector.load %arg16[%c0_305, %c2688_306] : memref<1x4096xbf16, #tpu.memory_space<vmem>>, vector<1x128xbf16>
    tpu.vector_store %arg16[%c0_305, %c2688_306], %264 {strides = array<i32>} : memref<1x4096xbf16, #tpu.memory_space<vmem>>, vector<1x128xbf16>,
    %c0_307 = arith.constant 0 : index
    %c2_308 = arith.constant 2 : index
    %c6_309 = arith.constant 6 : index
    %c0_310 = arith.constant 0 : index
    %266 = vector.load %arg15[%c0_307, %c2_308, %c6_309, %c0_310] : memref<1x4x8x128xf32, #tpu.memory_space<vmem>>, vector<1x1x1x128xf32>
    %267 = vector.shape_cast %266 : vector<1x1x1x128xf32> to vector<1x128xf32>
    %268 = arith.truncf %267 : vector<1x128xf32> to vector<1x128xbf16>
    %c0_311 = arith.constant 0 : index
    %c2816_312 = arith.constant 2816 : index
    %269 = vector.load %arg16[%c0_311, %c2816_312] : memref<1x4096xbf16, #tpu.memory_space<vmem>>, vector<1x128xbf16>
    tpu.vector_store %arg16[%c0_311, %c2816_312], %268 {strides = array<i32>} : memref<1x4096xbf16, #tpu.memory_space<vmem>>, vector<1x128xbf16>,
    %c0_313 = arith.constant 0 : index
    %c2_314 = arith.constant 2 : index
    %c7_315 = arith.constant 7 : index
    %c0_316 = arith.constant 0 : index
    %270 = vector.load %arg15[%c0_313, %c2_314, %c7_315, %c0_316] : memref<1x4x8x128xf32, #tpu.memory_space<vmem>>, vector<1x1x1x128xf32>
    %271 = vector.shape_cast %270 : vector<1x1x1x128xf32> to vector<1x128xf32>
    %272 = arith.truncf %271 : vector<1x128xf32> to vector<1x128xbf16>
    %c0_317 = arith.constant 0 : index
    %c2944_318 = arith.constant 2944 : index
    %273 = vector.load %arg16[%c0_317, %c2944_318] : memref<1x4096xbf16, #tpu.memory_space<vmem>>, vector<1x128xbf16>
    tpu.vector_store %arg16[%c0_317, %c2944_318], %272 {strides = array<i32>} : memref<1x4096xbf16, #tpu.memory_space<vmem>>, vector<1x128xbf16>,
    %c0_319 = arith.constant 0 : index
    %c3_320 = arith.constant 3 : index
    %c0_321 = arith.constant 0 : index
    %c0_322 = arith.constant 0 : index
    %274 = vector.load %arg15[%c0_319, %c3_320, %c0_321, %c0_322] : memref<1x4x8x128xf32, #tpu.memory_space<vmem>>, vector<1x1x1x128xf32>
    %275 = vector.shape_cast %274 : vector<1x1x1x128xf32> to vector<1x128xf32>
    %276 = arith.truncf %275 : vector<1x128xf32> to vector<1x128xbf16>
    %c0_323 = arith.constant 0 : index
    %c3072_324 = arith.constant 3072 : index
    %277 = vector.load %arg16[%c0_323, %c3072_324] : memref<1x4096xbf16, #tpu.memory_space<vmem>>, vector<1x128xbf16>
    tpu.vector_store %arg16[%c0_323, %c3072_324], %276 {strides = array<i32>} : memref<1x4096xbf16, #tpu.memory_space<vmem>>, vector<1x128xbf16>,
    %c0_325 = arith.constant 0 : index
    %c3_326 = arith.constant 3 : index
    %c1_327 = arith.constant 1 : index
    %c0_328 = arith.constant 0 : index
    %278 = vector.load %arg15[%c0_325, %c3_326, %c1_327, %c0_328] : memref<1x4x8x128xf32, #tpu.memory_space<vmem>>, vector<1x1x1x128xf32>
    %279 = vector.shape_cast %278 : vector<1x1x1x128xf32> to vector<1x128xf32>
    %280 = arith.truncf %279 : vector<1x128xf32> to vector<1x128xbf16>
    %c0_329 = arith.constant 0 : index
    %c3200 = arith.constant 3200 : index
    %281 = vector.load %arg16[%c0_329, %c3200] : memref<1x4096xbf16, #tpu.memory_space<vmem>>, vector<1x128xbf16>
    tpu.vector_store %arg16[%c0_329, %c3200], %280 {strides = array<i32>} : memref<1x4096xbf16, #tpu.memory_space<vmem>>, vector<1x128xbf16>,
    %c0_330 = arith.constant 0 : index
    %c3_331 = arith.constant 3 : index
    %c2_332 = arith.constant 2 : index
    %c0_333 = arith.constant 0 : index
    %282 = vector.load %arg15[%c0_330, %c3_331, %c2_332, %c0_333] : memref<1x4x8x128xf32, #tpu.memory_space<vmem>>, vector<1x1x1x128xf32>
    %283 = vector.shape_cast %282 : vector<1x1x1x128xf32> to vector<1x128xf32>
    %284 = arith.truncf %283 : vector<1x128xf32> to vector<1x128xbf16>
    %c0_334 = arith.constant 0 : index
    %c3328 = arith.constant 3328 : index
    %285 = vector.load %arg16[%c0_334, %c3328] : memref<1x4096xbf16, #tpu.memory_space<vmem>>, vector<1x128xbf16>
    tpu.vector_store %arg16[%c0_334, %c3328], %284 {strides = array<i32>} : memref<1x4096xbf16, #tpu.memory_space<vmem>>, vector<1x128xbf16>,
    %c0_335 = arith.constant 0 : index
    %c3_336 = arith.constant 3 : index
    %c3_337 = arith.constant 3 : index
    %c0_338 = arith.constant 0 : index
    %286 = vector.load %arg15[%c0_335, %c3_336, %c3_337, %c0_338] : memref<1x4x8x128xf32, #tpu.memory_space<vmem>>, vector<1x1x1x128xf32>
    %287 = vector.shape_cast %286 : vector<1x1x1x128xf32> to vector<1x128xf32>
    %288 = arith.truncf %287 : vector<1x128xf32> to vector<1x128xbf16>
    %c0_339 = arith.constant 0 : index
    %c3456 = arith.constant 3456 : index
    %289 = vector.load %arg16[%c0_339, %c3456] : memref<1x4096xbf16, #tpu.memory_space<vmem>>, vector<1x128xbf16>
    tpu.vector_store %arg16[%c0_339, %c3456], %288 {strides = array<i32>} : memref<1x4096xbf16, #tpu.memory_space<vmem>>, vector<1x128xbf16>,
    %c0_340 = arith.constant 0 : index
    %c3_341 = arith.constant 3 : index
    %c4_342 = arith.constant 4 : index
    %c0_343 = arith.constant 0 : index
    %290 = vector.load %arg15[%c0_340, %c3_341, %c4_342, %c0_343] : memref<1x4x8x128xf32, #tpu.memory_space<vmem>>, vector<1x1x1x128xf32>
    %291 = vector.shape_cast %290 : vector<1x1x1x128xf32> to vector<1x128xf32>
    %292 = arith.truncf %291 : vector<1x128xf32> to vector<1x128xbf16>
    %c0_344 = arith.constant 0 : index
    %c3584 = arith.constant 3584 : index
    %293 = vector.load %arg16[%c0_344, %c3584] : memref<1x4096xbf16, #tpu.memory_space<vmem>>, vector<1x128xbf16>
    tpu.vector_store %arg16[%c0_344, %c3584], %292 {strides = array<i32>} : memref<1x4096xbf16, #tpu.memory_space<vmem>>, vector<1x128xbf16>,
    %c0_345 = arith.constant 0 : index
    %c3_346 = arith.constant 3 : index
    %c5_347 = arith.constant 5 : index
    %c0_348 = arith.constant 0 : index
    %294 = vector.load %arg15[%c0_345, %c3_346, %c5_347, %c0_348] : memref<1x4x8x128xf32, #tpu.memory_space<vmem>>, vector<1x1x1x128xf32>
    %295 = vector.shape_cast %294 : vector<1x1x1x128xf32> to vector<1x128xf32>
    %296 = arith.truncf %295 : vector<1x128xf32> to vector<1x128xbf16>
    %c0_349 = arith.constant 0 : index
    %c3712 = arith.constant 3712 : index
    %297 = vector.load %arg16[%c0_349, %c3712] : memref<1x4096xbf16, #tpu.memory_space<vmem>>, vector<1x128xbf16>
    tpu.vector_store %arg16[%c0_349, %c3712], %296 {strides = array<i32>} : memref<1x4096xbf16, #tpu.memory_space<vmem>>, vector<1x128xbf16>,
    %c0_350 = arith.constant 0 : index
    %c3_351 = arith.constant 3 : index
    %c6_352 = arith.constant 6 : index
    %c0_353 = arith.constant 0 : index
    %298 = vector.load %arg15[%c0_350, %c3_351, %c6_352, %c0_353] : memref<1x4x8x128xf32, #tpu.memory_space<vmem>>, vector<1x1x1x128xf32>
    %299 = vector.shape_cast %298 : vector<1x1x1x128xf32> to vector<1x128xf32>
    %300 = arith.truncf %299 : vector<1x128xf32> to vector<1x128xbf16>
    %c0_354 = arith.constant 0 : index
    %c3840 = arith.constant 3840 : index
    %301 = vector.load %arg16[%c0_354, %c3840] : memref<1x4096xbf16, #tpu.memory_space<vmem>>, vector<1x128xbf16>
    tpu.vector_store %arg16[%c0_354, %c3840], %300 {strides = array<i32>} : memref<1x4096xbf16, #tpu.memory_space<vmem>>, vector<1x128xbf16>,
    %c0_355 = arith.constant 0 : index
    %c3_356 = arith.constant 3 : index
    %c7_357 = arith.constant 7 : index
    %c0_358 = arith.constant 0 : index
    %302 = vector.load %arg15[%c0_355, %c3_356, %c7_357, %c0_358] : memref<1x4x8x128xf32, #tpu.memory_space<vmem>>, vector<1x1x1x128xf32>
    %303 = vector.shape_cast %302 : vector<1x1x1x128xf32> to vector<1x128xf32>
    %304 = arith.truncf %303 : vector<1x128xf32> to vector<1x128xbf16>
    %c0_359 = arith.constant 0 : index
    %c3968 = arith.constant 3968 : index
    %305 = vector.load %arg16[%c0_359, %c3968] : memref<1x4096xbf16, #tpu.memory_space<vmem>>, vector<1x128xbf16>
    tpu.vector_store %arg16[%c0_359, %c3968], %304 {strides = array<i32>} : memref<1x4096xbf16, #tpu.memory_space<vmem>>, vector<1x128xbf16>,
    %c0_360 = arith.constant 0 : index
    %c0_361 = arith.constant 0 : index
    %306 = vector.load %arg16[%c0_360, %c0_361] : memref<1x4096xbf16, #tpu.memory_space<vmem>>, vector<1x4096xbf16>
    %c0_362 = arith.constant 0 : index
    %c0_363 = arith.constant 0 : index
    %307 = vector.load %arg6[%c0_362, %c0_363] : memref<4096x128xbf16, #tpu.memory_space<vmem>>, vector<4096x128xbf16>
    %cst_364 = arith.constant dense<0.000000e+00> : vector<1x128xf32>
    %308 = tpu.matmul %306, %307, %cst_364 {dimension_numbers = #tpu.dot_dimension_numbers<[1], [0], [0], [1], [0, 0, 1, 1], [], []>} : vector<1x4096xbf16>, vector<4096x128xbf16>, vector<1x128xf32> -> vector<1x128xf32>
    %c0_365 = arith.constant 0 : index
    %c0_366 = arith.constant 0 : index
    %309 = vector.load %arg7[%c0_365, %c0_366] : memref<1x128xf32, #tpu.memory_space<vmem>>, vector<1x128xf32>
    %310 = arith.addf %308, %309 : vector<1x128xf32>
    %cst_367 = arith.constant 0.000000e+00 : f32
    %311 = vector.broadcast %cst_367 : f32 to vector<1x128xf32>
    %312 = arith.subf %311, %310 : vector<1x128xf32>
    %313 = math.exp %312 : vector<1x128xf32>
    %cst_368 = arith.constant 1.000000e+00 : f32
    %314 = vector.broadcast %cst_368 : f32 to vector<1x128xf32>
    %315 = arith.addf %314, %313 : vector<1x128xf32>
    %316 = tpu.reciprocal %315 {approx = true} : vector<1x128xf32> -> vector<1x128xf32>
    %317 = arith.truncf %316 : vector<1x128xf32> to vector<1x128xbf16>
    %c0_369 = arith.constant 0 : index
    %c0_370 = arith.constant 0 : index
    %318 = vector.load %arg8[%c0_369, %c0_370] : memref<128x128xbf16, #tpu.memory_space<vmem>>, vector<128x128xbf16>
    %cst_371 = arith.constant dense<0.000000e+00> : vector<1x128xf32>
    %319 = tpu.matmul %317, %318, %cst_371 {dimension_numbers = #tpu.dot_dimension_numbers<[1], [0], [0], [1], [0, 0, 1, 1], [], []>} : vector<1x128xbf16>, vector<128x128xbf16>, vector<1x128xf32> -> vector<1x128xf32>
    %c0_372 = arith.constant 0 : index
    %c0_373 = arith.constant 0 : index
    %320 = vector.load %arg9[%c0_372, %c0_373] : memref<1x128xf32, #tpu.memory_space<vmem>>, vector<1x128xf32>
    %321 = arith.addf %319, %320 : vector<1x128xf32>
    %cst_374 = arith.constant 0.000000e+00 : f32
    %322 = vector.broadcast %cst_374 : f32 to vector<1x128xf32>
    %323 = arith.subf %322, %321 : vector<1x128xf32>
    %324 = math.exp %323 : vector<1x128xf32>
    %cst_375 = arith.constant 1.000000e+00 : f32
    %325 = vector.broadcast %cst_375 : f32 to vector<1x128xf32>
    %326 = arith.addf %325, %324 : vector<1x128xf32>
    %327 = tpu.reciprocal %326 {approx = true} : vector<1x128xf32> -> vector<1x128xf32>
    %328 = arith.truncf %327 : vector<1x128xf32> to vector<1x128xbf16>
    %c0_376 = arith.constant 0 : index
    %c0_377 = arith.constant 0 : index
    %329 = vector.load %arg10[%c0_376, %c0_377] : memref<128x128xbf16, #tpu.memory_space<vmem>>, vector<128x128xbf16>
    %cst_378 = arith.constant dense<0.000000e+00> : vector<1x128xf32>
    %330 = tpu.matmul %328, %329, %cst_378 {dimension_numbers = #tpu.dot_dimension_numbers<[1], [0], [0], [1], [0, 0, 1, 1], [], []>} : vector<1x128xbf16>, vector<128x128xbf16>, vector<1x128xf32> -> vector<1x128xf32>
    %c0_379 = arith.constant 0 : index
    %c0_380 = arith.constant 0 : index
    %331 = vector.load %arg11[%c0_379, %c0_380] : memref<1x128xf32, #tpu.memory_space<vmem>>, vector<1x128xf32>
    %332 = arith.addf %330, %331 : vector<1x128xf32>
    %c0_381 = arith.constant 0 : index
    %c0_382 = arith.constant 0 : index
    %c0_383 = arith.constant 0 : index
    %333 = vector.load %arg12[%c0_381, %c0_382, %c0_383] : memref<1x1x128xf32, #tpu.memory_space<vmem>>, vector<1x1x128xf32>
    %334 = vector.shape_cast %333 : vector<1x1x128xf32> to vector<1x128xf32>
    %335 = vector.shape_cast %332 : vector<1x128xf32> to vector<1x1x128xf32>
    tpu.vector_store %arg12[%c0_381, %c0_382, %c0_383], %335 {strides = array<i32>} : memref<1x1x128xf32, #tpu.memory_space<vmem>>, vector<1x1x128xf32>,
    return
  }
  func.func @transform_0(%arg0: i32) -> (i32, i32, i32) {
    %c0_i32 = arith.constant 0 : i32
    %c0_i32_0 = arith.constant 0 : i32
    %c0_i32_1 = arith.constant 0 : i32
    return %c0_i32, %arg0, %c0_i32_0 : i32, i32, i32
  }
  func.func @transform_1(%arg0: i32) -> (i32, i32) {
    %c0_i32 = arith.constant 0 : i32
    %c0_i32_0 = arith.constant 0 : i32
    %c0_i32_1 = arith.constant 0 : i32
    return %c0_i32, %c0_i32_0 : i32, i32
  }
  func.func @transform_2(%arg0: i32) -> (i32, i32) {
    %c0_i32 = arith.constant 0 : i32
    %c0_i32_0 = arith.constant 0 : i32
    %c0_i32_1 = arith.constant 0 : i32
    return %c0_i32, %c0_i32_0 : i32, i32
  }
  func.func @transform_3(%arg0: i32) -> (i32, i32) {
    %c0_i32 = arith.constant 0 : i32
    %c0_i32_0 = arith.constant 0 : i32
    %c0_i32_1 = arith.constant 0 : i32
    return %c0_i32, %c0_i32_0 : i32, i32
  }
  func.func @transform_4(%arg0: i32) -> (i32, i32) {
    %c0_i32 = arith.constant 0 : i32
    %c0_i32_0 = arith.constant 0 : i32
    %c0_i32_1 = arith.constant 0 : i32
    return %c0_i32, %c0_i32_0 : i32, i32
  }
  func.func @transform_5(%arg0: i32) -> (i32, i32) {
    %c0_i32 = arith.constant 0 : i32
    %c0_i32_0 = arith.constant 0 : i32
    %c0_i32_1 = arith.constant 0 : i32
    return %c0_i32, %c0_i32_0 : i32, i32
  }
  func.func @transform_6(%arg0: i32) -> (i32, i32) {
    %c0_i32 = arith.constant 0 : i32
    %c0_i32_0 = arith.constant 0 : i32
    %c0_i32_1 = arith.constant 0 : i32
    return %c0_i32, %c0_i32_0 : i32, i32
  }
  func.func @transform_7(%arg0: i32) -> (i32, i32) {
    %c0_i32 = arith.constant 0 : i32
    %c0_i32_0 = arith.constant 0 : i32
    %c0_i32_1 = arith.constant 0 : i32
    return %c0_i32, %c0_i32_0 : i32, i32
  }
  func.func @transform_8(%arg0: i32) -> (i32, i32) {
    %c0_i32 = arith.constant 0 : i32
    %c0_i32_0 = arith.constant 0 : i32
    %c0_i32_1 = arith.constant 0 : i32
    return %c0_i32, %c0_i32_0 : i32, i32
  }
  func.func @transform_9(%arg0: i32) -> (i32, i32) {
    %c0_i32 = arith.constant 0 : i32
    %c0_i32_0 = arith.constant 0 : i32
    %c0_i32_1 = arith.constant 0 : i32
    return %c0_i32, %c0_i32_0 : i32, i32
  }
  func.func @transform_10(%arg0: i32) -> (i32, i32) {
    %c0_i32 = arith.constant 0 : i32
    %c0_i32_0 = arith.constant 0 : i32
    %c0_i32_1 = arith.constant 0 : i32
    return %c0_i32, %c0_i32_0 : i32, i32
  }
  func.func @transform_11(%arg0: i32) -> (i32, i32, i32) {
    %c0_i32 = arith.constant 0 : i32
    %c0_i32_0 = arith.constant 0 : i32
    %c0_i32_1 = arith.constant 0 : i32
    return %arg0, %c0_i32, %c0_i32_0 : i32, i32, i32
  }
}

</mosaic_0001>

<llo_original>
// kernel: jcnn_forward.1
$region0: #{jcnn_forward.1}
  #allocation0 [shape = 'u32[]', space=smem, size = 0x4, offset = 0x4, fixed_abs, tag = 'smem constant byte address 0x4 - core index']
  #allocation1 [shape = 'u32[144,128]{1,0:T(1,128)}', space=vmem, size = 0x12000, scoped, tag = 'internal scratch']
  #allocation2 [shape = 'f32[1,12,16,128]{3,2,1,0:T(8,128)}', space=vmem, size = 0x18000, scoped, tag = 'scratch operand']
  #allocation3 [shape = 'bf16[64,3200]{1,0:T(8,128)(2,1)}', space=vmem, size = 0x64000, scoped, tag = 'scratch operand']
  #allocation4 [shape = 'f32[1,4,8,128]{3,2,1,0:T(8,128)}', space=vmem, size = 0x4000, scoped, tag = 'scratch operand']
  #allocation5 [shape = 'bf16[1,4096]{1,0:T(2,128)(2,1)}', space=vmem, size = 0x4000, scoped, tag = 'scratch operand']
  %s0 = inlined_call_operand.vmem [shape: bf16[4,384,32], index: 0, kind: input, shape index: {}]
  %s1 = inlined_call_operand.vmem [shape: bf16[32,128], index: 1, kind: input, shape index: {}]
  %s2 = inlined_call_operand.vmem [shape: f32[1,128], index: 2, kind: input, shape index: {}]
  %s3 = inlined_call_operand.vmem [shape: bf16[3200,128], index: 3, kind: input, shape index: {}]
  %s4 = inlined_call_operand.vmem [shape: f32[1,128], index: 4, kind: input, shape index: {}]
  %s5 = inlined_call_operand.vmem [shape: bf16[4096,128], index: 5, kind: input, shape index: {}]
  %s6 = inlined_call_operand.vmem [shape: f32[1,128], index: 6, kind: input, shape index: {}]
  %s7 = inlined_call_operand.vmem [shape: bf16[128,128], index: 7, kind: input, shape index: {}]
  %s8 = inlined_call_operand.vmem [shape: f32[1,128], index: 8, kind: input, shape index: {}]
  %s9 = inlined_call_operand.vmem [shape: bf16[128,128], index: 9, kind: input, shape index: {}]
  %s10 = inlined_call_operand.vmem [shape: f32[1,128], index: 10, kind: input, shape index: {}]
  %s11 = inlined_call_operand.hbm [shape: f32[2,1,128], index: 11, kind: output, shape index: {}]
  %s12 = sld [smem:[#allocation0]]
  $region118: #{jcnn_forward.1} parent=0
    _
  %s14 = ssub.s32 1, %s12
  %s15 = scalar_select 0, %s14, %s12
  $region1: #{jcnn_forward.1} parent=0
    #allocation6 [shape = 'u8[393216]{0}', space=vmem, size = 0x60000, scoped, tag = 'input window, operand 0']
    #allocation7 [shape = 'u8[1024]{0}', space=vmem, size = 0x400, scoped, tag = 'output window, operand 0']
    #allocation8 [shape = 's32[2]{0}', space=sflag, size = 0x8, scoped, tag = 'scoped memory for jcnn_forward.1']
    %16 = vsyncpa [#allocation8], 0
    %s17 = scalar_lea.sflag [#allocation8], 1
    %18 = vsyncpa %s17, 0
    loop: start=0, step=1, limit=4
    $region2: #{jcnn_forward.1} parent=1 // loop_pre_header
      _
    $region3: #{jcnn_forward.1} parent=1 // loop_header
      %s20 = sphi 0, %s24
      %p21 = scmp.ge.s32.totalorder %s20, 4
      %s30 = sphi 0, %s32
      %s33 = sphi 0, %s30
      %s34 = sphi 0, %s33
      %s50 = sphi 0, %s34
      %s54 = sphi 0, %s54
      %s56 = sphi 0, %s54
      %s57 = sphi 0, %s56
      %s71 = sphi 0, %s57
      %s75 = sphi 0, %s75
      %s77 = sphi 0, %s75
      %s78 = sphi 0, %s77
      %s92 = sphi 0, %s78
      %s96 = sphi 0, %s96
      %s98 = sphi 0, %s96
      %s99 = sphi 0, %s98
      %s113 = sphi 0, %s99
      %s117 = sphi 0, %s117
      %s119 = sphi 0, %s117
      %s120 = sphi 0, %s119
      %s134 = sphi 0, %s120
      %s138 = sphi 0, %s138
      %s140 = sphi 0, %s138
      %s141 = sphi 0, %s140
      %s155 = sphi 0, %s141
      %s159 = sphi 0, %s159
      %s161 = sphi 0, %s159
      %s162 = sphi 0, %s161
      %s176 = sphi 0, %s162
      %s180 = sphi 0, %s180
      %s182 = sphi 0, %s180
      %s183 = sphi 0, %s182
      %s197 = sphi 0, %s183
      %s201 = sphi 0, %s201
      %s203 = sphi 0, %s201
      %s204 = sphi 0, %s203
      %s218 = sphi 0, %s204
      %s222 = sphi 0, %s222
      %s224 = sphi 0, %s222
      %s225 = sphi 0, %s224
      %s239 = sphi 0, %s225
      %s243 = sphi 0, %s243
      %s245 = sphi 0, %s243
      %s246 = sphi 0, %s245
      %s260 = sphi 0, %s246
      %s266 = sphi 0, %s268
      %s269 = sphi 0, %s266
      %s270 = sphi 0, %s269
      %s286 = sphi 0, %s270
    $region4: #{jcnn_forward.1} parent=1 // loop_header_branch
      %23 = sbr.rel (%p21) target = $region8
    $region5: #{jcnn_forward.1} parent=1 // loop_body
      %s25 = ssub.s32 %s20, 1
      %s26 = ssub.s32 %s20, 2
      %s27 = sadd.s32 %s20, 1
      %s28 = ssub.s32 %s20, %s27
      %p29 = scmp.eq.s32.totalorder %s28, 0
      %s31 = sadd.s32 %s30, 1
      %s32 = scalar_select %p29, %s30, %s31
      %p35 = pneg %p29
      %p36 = scmp.eq.s32.totalorder %s20, 1
      %p37 = por %p35, %p36
      %p38 = scmp.ne.s32.totalorder %s30, %s33
      %p39 = scmp.eq.s32.totalorder %s20, 0
      %p40 = por %p38, %p39
      %p41 = scmp.ne.s32.totalorder %s30, %s33
      %p42 = scmp.eq.s32.totalorder %s25, 1
      %p43 = por %p41, %p42
      %p44 = scmp.ne.s32.totalorder %s33, %s34
      %p45 = scmp.eq.s32.totalorder %s25, 0
      %p46 = por %p44, %p45
      %p47 = scmp.ne.s32.totalorder %s33, %s34
      %p48 = scmp.eq.s32.totalorder %s26, 1
      %p49 = por %p47, %p48
      %p51 = scmp.ne.s32.totalorder %s34, %s50
      %p52 = scmp.eq.s32.totalorder %s26, 0
      %p53 = por %p51, %p52
      %s55 = sadd.s32 %s54, 1
      %p58 = scmp.eq.s32.totalorder %s20, 1
      %p59 = scmp.ne.s32.totalorder %s54, %s56
      %p60 = scmp.eq.s32.totalorder %s20, 0
      %p61 = por %p59, %p60
      %p62 = scmp.ne.s32.totalorder %s54, %s56
      %p63 = scmp.eq.s32.totalorder %s25, 1
      %p64 = por %p62, %p63
      %p65 = scmp.ne.s32.totalorder %s56, %s57
      %p66 = scmp.eq.s32.totalorder %s25, 0
      %p67 = por %p65, %p66
      %p68 = scmp.ne.s32.totalorder %s56, %s57
      %p69 = scmp.eq.s32.totalorder %s26, 1
      %p70 = por %p68, %p69
      %p72 = scmp.ne.s32.totalorder %s57, %s71
      %p73 = scmp.eq.s32.totalorder %s26, 0
      %p74 = por %p72, %p73
      %s76 = sadd.s32 %s75, 1
      %p79 = scmp.eq.s32.totalorder %s20, 1
      %p80 = scmp.ne.s32.totalorder %s75, %s77
      %p81 = scmp.eq.s32.totalorder %s20, 0
      %p82 = por %p80, %p81
      %p83 = scmp.ne.s32.totalorder %s75, %s77
      %p84 = scmp.eq.s32.totalorder %s25, 1
      %p85 = por %p83, %p84
      %p86 = scmp.ne.s32.totalorder %s77, %s78
      %p87 = scmp.eq.s32.totalorder %s25, 0
      %p88 = por %p86, %p87
      %p89 = scmp.ne.s32.totalorder %s77, %s78
      %p90 = scmp.eq.s32.totalorder %s26, 1
      %p91 = por %p89, %p90
      %p93 = scmp.ne.s32.totalorder %s78, %s92
      %p94 = scmp.eq.s32.totalorder %s26, 0
      %p95 = por %p93, %p94
      %s97 = sadd.s32 %s96, 1
      %p100 = scmp.eq.s32.totalorder %s20, 1
      %p101 = scmp.ne.s32.totalorder %s96, %s98
      %p102 = scmp.eq.s32.totalorder %s20, 0
      %p103 = por %p101, %p102
      %p104 = scmp.ne.s32.totalorder %s96, %s98
      %p105 = scmp.eq.s32.totalorder %s25, 1
      %p106 = por %p104, %p105
      %p107 = scmp.ne.s32.totalorder %s98, %s99
      %p108 = scmp.eq.s32.totalorder %s25, 0
      %p109 = por %p107, %p108
      %p110 = scmp.ne.s32.totalorder %s98, %s99
      %p111 = scmp.eq.s32.totalorder %s26, 1
      %p112 = por %p110, %p111
      %p114 = scmp.ne.s32.totalorder %s99, %s113
      %p115 = scmp.eq.s32.totalorder %s26, 0
      %p116 = por %p114, %p115
      %s118 = sadd.s32 %s117, 1
      %p121 = scmp.eq.s32.totalorder %s20, 1
      %p122 = scmp.ne.s32.totalorder %s117, %s119
      %p123 = scmp.eq.s32.totalorder %s20, 0
      %p124 = por %p122, %p123
      %p125 = scmp.ne.s32.totalorder %s117, %s119
      %p126 = scmp.eq.s32.totalorder %s25, 1
      %p127 = por %p125, %p126
      %p128 = scmp.ne.s32.totalorder %s119, %s120
      %p129 = scmp.eq.s32.totalorder %s25, 0
      %p130 = por %p128, %p129
      %p131 = scmp.ne.s32.totalorder %s119, %s120
      %p132 = scmp.eq.s32.totalorder %s26, 1
      %p133 = por %p131, %p132
      %p135 = scmp.ne.s32.totalorder %s120, %s134
      %p136 = scmp.eq.s32.totalorder %s26, 0
      %p137 = por %p135, %p136
      %s139 = sadd.s32 %s138, 1
      %p142 = scmp.eq.s32.totalorder %s20, 1
      %p143 = scmp.ne.s32.totalorder %s138, %s140
      %p144 = scmp.eq.s32.totalorder %s20, 0
      %p145 = por %p143, %p144
      %p146 = scmp.ne.s32.totalorder %s138, %s140
      %p147 = scmp.eq.s32.totalorder %s25, 1
      %p148 = por %p146, %p147
      %p149 = scmp.ne.s32.totalorder %s140, %s141
      %p150 = scmp.eq.s32.totalorder %s25, 0
      %p151 = por %p149, %p150
      %p152 = scmp.ne.s32.totalorder %s140, %s141
      %p153 = scmp.eq.s32.totalorder %s26, 1
      %p154 = por %p152, %p153
      %p156 = scmp.ne.s32.totalorder %s141, %s155
      %p157 = scmp.eq.s32.totalorder %s26, 0
      %p158 = por %p156, %p157
      %s160 = sadd.s32 %s159, 1
      %p163 = scmp.eq.s32.totalorder %s20, 1
      %p164 = scmp.ne.s32.totalorder %s159, %s161
      %p165 = scmp.eq.s32.totalorder %s20, 0
      %p166 = por %p164, %p165
      %p167 = scmp.ne.s32.totalorder %s159, %s161
      %p168 = scmp.eq.s32.totalorder %s25, 1
      %p169 = por %p167, %p168
      %p170 = scmp.ne.s32.totalorder %s161, %s162
      %p171 = scmp.eq.s32.totalorder %s25, 0
      %p172 = por %p170, %p171
      %p173 = scmp.ne.s32.totalorder %s161, %s162
      %p174 = scmp.eq.s32.totalorder %s26, 1
      %p175 = por %p173, %p174
      %p177 = scmp.ne.s32.totalorder %s162, %s176
      %p178 = scmp.eq.s32.totalorder %s26, 0
      %p179 = por %p177, %p178
      %s181 = sadd.s32 %s180, 1
      %p184 = scmp.eq.s32.totalorder %s20, 1
      %p185 = scmp.ne.s32.totalorder %s180, %s182
      %p186 = scmp.eq.s32.totalorder %s20, 0
      %p187 = por %p185, %p186
      %p188 = scmp.ne.s32.totalorder %s180, %s182
      %p189 = scmp.eq.s32.totalorder %s25, 1
      %p190 = por %p188, %p189
      %p191 = scmp.ne.s32.totalorder %s182, %s183
      %p192 = scmp.eq.s32.totalorder %s25, 0
      %p193 = por %p191, %p192
      %p194 = scmp.ne.s32.totalorder %s182, %s183
      %p195 = scmp.eq.s32.totalorder %s26, 1
      %p196 = por %p194, %p195
      %p198 = scmp.ne.s32.totalorder %s183, %s197
      %p199 = scmp.eq.s32.totalorder %s26, 0
      %p200 = por %p198, %p199
      %s202 = sadd.s32 %s201, 1
      %p205 = scmp.eq.s32.totalorder %s20, 1
      %p206 = scmp.ne.s32.totalorder %s201, %s203
      %p207 = scmp.eq.s32.totalorder %s20, 0
      %p208 = por %p206, %p207
      %p209 = scmp.ne.s32.totalorder %s201, %s203
      %p210 = scmp.eq.s32.totalorder %s25, 1
      %p211 = por %p209, %p210
      %p212 = scmp.ne.s32.totalorder %s203, %s204
      %p213 = scmp.eq.s32.totalorder %s25, 0
      %p214 = por %p212, %p213
      %p215 = scmp.ne.s32.totalorder %s203, %s204
      %p216 = scmp.eq.s32.totalorder %s26, 1
      %p217 = por %p215, %p216
      %p219 = scmp.ne.s32.totalorder %s204, %s218
      %p220 = scmp.eq.s32.totalorder %s26, 0
      %p221 = por %p219, %p220
      %s223 = sadd.s32 %s222, 1
      %p226 = scmp.eq.s32.totalorder %s20, 1
      %p227 = scmp.ne.s32.totalorder %s222, %s224
      %p228 = scmp.eq.s32.totalorder %s20, 0
      %p229 = por %p227, %p228
      %p230 = scmp.ne.s32.totalorder %s222, %s224
      %p231 = scmp.eq.s32.totalorder %s25, 1
      %p232 = por %p230, %p231
      %p233 = scmp.ne.s32.totalorder %s224, %s225
      %p234 = scmp.eq.s32.totalorder %s25, 0
      %p235 = por %p233, %p234
      %p236 = scmp.ne.s32.totalorder %s224, %s225
      %p237 = scmp.eq.s32.totalorder %s26, 1
      %p238 = por %p236, %p237
      %p240 = scmp.ne.s32.totalorder %s225, %s239
      %p241 = scmp.eq.s32.totalorder %s26, 0
      %p242 = por %p240, %p241
      %s244 = sadd.s32 %s243, 1
      %p247 = scmp.eq.s32.totalorder %s20, 1
      %p248 = scmp.ne.s32.totalorder %s243, %s245
      %p249 = scmp.eq.s32.totalorder %s20, 0
      %p250 = por %p248, %p249
      %p251 = scmp.ne.s32.totalorder %s243, %s245
      %p252 = scmp.eq.s32.totalorder %s25, 1
      %p253 = por %p251, %p252
      %p254 = scmp.ne.s32.totalorder %s245, %s246
      %p255 = scmp.eq.s32.totalorder %s25, 0
      %p256 = por %p254, %p255
      %p257 = scmp.ne.s32.totalorder %s245, %s246
      %p258 = scmp.eq.s32.totalorder %s26, 1
      %p259 = por %p257, %p258
      %p261 = scmp.ne.s32.totalorder %s246, %s260
      %p262 = scmp.eq.s32.totalorder %s26, 0
      %p263 = por %p261, %p262
      %s264 = ssub.s32 %s20, %s27
      %p265 = scmp.eq.s32.totalorder %s264, 0
      %s267 = sadd.s32 %s266, 1
      %s268 = scalar_select %p265, %s266, %s267
      %p271 = pneg %p265
      %p272 = scmp.eq.s32.totalorder %s20, 1
      %p273 = por %p271, %p272
      %p274 = scmp.ne.s32.totalorder %s266, %s269
      %p275 = scmp.eq.s32.totalorder %s20, 0
      %p276 = por %p274, %p275
      %p277 = scmp.ne.s32.totalorder %s266, %s269
      %p278 = scmp.eq.s32.totalorder %s25, 1
      %p279 = por %p277, %p278
      %p280 = scmp.ne.s32.totalorder %s269, %s270
      %p281 = scmp.eq.s32.totalorder %s25, 0
      %p282 = por %p280, %p281
      %p283 = scmp.ne.s32.totalorder %s269, %s270
      %p284 = scmp.eq.s32.totalorder %s26, 1
      %p285 = por %p283, %p284
      %p287 = scmp.ne.s32.totalorder %s270, %s286
      %p288 = scmp.eq.s32.totalorder %s26, 0
      %p289 = por %p287, %p288
      %p290 = scmp.le.s32.totalorder 1, %s20
      %p291 = scmp.lt.s32.totalorder %s20, 3
      %p292 = pnand %p290, %p291
      %p293 = pneg %p292
      // Predicated region
      $region9: #{jcnn_forward.1} parent=5 // pred_check
        _
      $region10: #{jcnn_forward.1} parent=5 // pred_check_branch
        %295 = sbr.rel (%p292) target = $region12
      $region11: #{jcnn_forward.1} parent=5 // pred_region
        %s296 = ssub.s32 %s20, 1
        // Predicated region
        $region13: #{jcnn_forward.1} parent=11 // pred_check
          %p297 = pneg %p67
        $region14: #{jcnn_forward.1} parent=11 // pred_check_branch
          %299 = sbr.rel (%p297) target = $region16
        $region15: #{jcnn_forward.1} parent=11 // pred_region
          _
        $region16: #{jcnn_forward.1} parent=11 // pred_fallthru
          _
        // Predicated region
        $region17: #{jcnn_forward.1} parent=11 // pred_check
          %p300 = pneg %p88
        $region18: #{jcnn_forward.1} parent=11 // pred_check_branch
          %302 = sbr.rel (%p300) target = $region20
        $region19: #{jcnn_forward.1} parent=11 // pred_region
          _
        $region20: #{jcnn_forward.1} parent=11 // pred_fallthru
          _
        // Predicated region
        $region21: #{jcnn_forward.1} parent=11 // pred_check
          %p303 = pneg %p109
        $region22: #{jcnn_forward.1} parent=11 // pred_check_branch
          %305 = sbr.rel (%p303) target = $region24
        $region23: #{jcnn_forward.1} parent=11 // pred_region
          _
        $region24: #{jcnn_forward.1} parent=11 // pred_fallthru
          _
        // Predicated region
        $region25: #{jcnn_forward.1} parent=11 // pred_check
          %p306 = pneg %p130
        $region26: #{jcnn_forward.1} parent=11 // pred_check_branch
          %308 = sbr.rel (%p306) target = $region28
        $region27: #{jcnn_forward.1} parent=11 // pred_region
          _
        $region28: #{jcnn_forward.1} parent=11 // pred_fallthru
          _
        // Predicated region
        $region29: #{jcnn_forward.1} parent=11 // pred_check
          %p309 = pneg %p151
        $region30: #{jcnn_forward.1} parent=11 // pred_check_branch
          %311 = sbr.rel (%p309) target = $region32
        $region31: #{jcnn_forward.1} parent=11 // pred_region
          _
        $region32: #{jcnn_forward.1} parent=11 // pred_fallthru
          _
        // Predicated region
        $region33: #{jcnn_forward.1} parent=11 // pred_check
          %p312 = pneg %p172
        $region34: #{jcnn_forward.1} parent=11 // pred_check_branch
          %314 = sbr.rel (%p312) target = $region36
        $region35: #{jcnn_forward.1} parent=11 // pred_region
          _
        $region36: #{jcnn_forward.1} parent=11 // pred_fallthru
          _
        // Predicated region
        $region37: #{jcnn_forward.1} parent=11 // pred_check
          %p315 = pneg %p193
        $region38: #{jcnn_forward.1} parent=11 // pred_check_branch
          %317 = sbr.rel (%p315) target = $region40
        $region39: #{jcnn_forward.1} parent=11 // pred_region
          _
        $region40: #{jcnn_forward.1} parent=11 // pred_fallthru
          _
        // Predicated region
        $region41: #{jcnn_forward.1} parent=11 // pred_check
          %p318 = pneg %p214
        $region42: #{jcnn_forward.1} parent=11 // pred_check_branch
          %320 = sbr.rel (%p318) target = $region44
        $region43: #{jcnn_forward.1} parent=11 // pred_region
          _
        $region44: #{jcnn_forward.1} parent=11 // pred_fallthru
          _
        // Predicated region
        $region45: #{jcnn_forward.1} parent=11 // pred_check
          %p321 = pneg %p235
        $region46: #{jcnn_forward.1} parent=11 // pred_check_branch
          %323 = sbr.rel (%p321) target = $region48
        $region47: #{jcnn_forward.1} parent=11 // pred_region
          _
        $region48: #{jcnn_forward.1} parent=11 // pred_fallthru
          _
        // Predicated region
        $region49: #{jcnn_forward.1} parent=11 // pred_check
          %p324 = pneg %p256
        $region50: #{jcnn_forward.1} parent=11 // pred_check_branch
          %326 = sbr.rel (%p324) target = $region52
        $region51: #{jcnn_forward.1} parent=11 // pred_region
          _
        $region52: #{jcnn_forward.1} parent=11 // pred_fallthru
          _
      $region12: #{jcnn_forward.1} parent=5 // pred_fallthru
        _
      %p327 = scmp.lt.s32.totalorder %s20, 2
      // Predicated region
      $region53: #{jcnn_forward.1} parent=5 // pred_check
        %p328 = pneg %p327
      $region54: #{jcnn_forward.1} parent=5 // pred_check_branch
        %330 = sbr.rel (%p328) target = $region56
      $region55: #{jcnn_forward.1} parent=5 // pred_region
        // Predicated region
        $region57: #{jcnn_forward.1} parent=55 // pred_check
          %p331 = pneg %p40
        $region58: #{jcnn_forward.1} parent=55 // pred_check_branch
          %333 = sbr.rel (%p331) target = $region60
        $region59: #{jcnn_forward.1} parent=55 // pred_region
          %s334 = sand.u32 %s30, 1
          %s335 = sand.u32 %s30, 1
          %s336 = smul.addr %s335, 384
          %s337 = scalar_lea.vmem [#allocation6], %s336
          %s338 = smul.u32 24, %s20
          %s339 = smul.addr %s338, 4
          %s340 = scalar_lea.vmem %s0, %s339
          // Predicated region
          $region61: #{jcnn_forward.1} parent=59 // pred_check
            _
          $region62: #{jcnn_forward.1} parent=59 // pred_check_branch
            %342 = sbr.rel (0) target = $region64
          $region63: #{jcnn_forward.1} parent=59 // pred_region
            // Predicated region
            $region65: #{jcnn_forward.1} parent=63 // pred_check
              _
            $region66: #{jcnn_forward.1} parent=63 // pred_check_branch
              %344 = sbr.rel target = $region68
            $region67: #{jcnn_forward.1} parent=63 // pred_region
              // Predicated region
              $region80: #{jcnn_forward.1} parent=67 // pred_check
                _
              $region81: #{jcnn_forward.1} parent=67 // pred_check_branch
                %550 = sbr.rel (0) target = $region83
              $region82: #{jcnn_forward.1} parent=67 // pred_region
                loop: start=0, step=1, limit=1
                $region84: #{jcnn_forward.1} parent=82 // loop_pre_header
                  _
                $region85: #{jcnn_forward.1} parent=82 // loop_header
                  %s552 = sphi 0, %s556
                  %p553 = scmp.ge.s32.totalorder %s552, 1
                  %s557 = sphi %s340, %s340
                  %s558 = sphi %s337, %s337
                $region86: #{jcnn_forward.1} parent=82 // loop_header_branch
                  %555 = sbr.rel (%p553) target = $region90
                $region87: #{jcnn_forward.1} parent=82 // loop_body
                  _
                $region88: #{jcnn_forward.1} parent=82 // loop_footer
                  %s556 = sadd.s32 1, %s552
                $region89: #{jcnn_forward.1} parent=82 // loop_footer_branch
                  %551 = sbr.rel target = $region85
                $region90: #{jcnn_forward.1} parent=82 // loop_exit
                  _
                %s560 = ssub.s32 16, 1
                loop: start=0, step=1, limit=1
                $region91: #{jcnn_forward.1} parent=82 // loop_pre_header
                  _
                $region92: #{jcnn_forward.1} parent=82 // loop_header
                  %s562 = sphi 0, %s566
                  %p563 = scmp.ge.s32.totalorder %s562, 1
                  %s567 = sphi %s340, %s340
                  %s568 = sphi %s337, %s337
                $region93: #{jcnn_forward.1} parent=82 // loop_header_branch
                  %565 = sbr.rel (%p563) target = $region97
                $region94: #{jcnn_forward.1} parent=82 // loop_body
                  %v569 = vld [vmem:[%s567] sm:%s560]
                  %570 = vst [vmem:[%s568] sm:%s560] %v569
                  %v571 = vld [vmem:[%s567 + $0x4] sm:%s560]
                  %572 = vst [vmem:[%s568 + $0x4] sm:%s560] %v571
                  %v573 = vld [vmem:[%s567 + $0x8] sm:%s560]
                  %574 = vst [vmem:[%s568 + $0x8] sm:%s560] %v573
                  %v575 = vld [vmem:[%s567 + $0xc] sm:%s560]
                  %576 = vst [vmem:[%s568 + $0xc] sm:%s560] %v575
                  %v577 = vld [vmem:[%s567 + $0x10] sm:%s560]
                  %578 = vst [vmem:[%s568 + $0x10] sm:%s560] %v577
                  %v579 = vld [vmem:[%s567 + $0x14] sm:%s560]
                  %580 = vst [vmem:[%s568 + $0x14] sm:%s560] %v579
                  %v581 = vld [vmem:[%s567 + $0x18] sm:%s560]
                  %582 = vst [vmem:[%s568 + $0x18] sm:%s560] %v581
                  %v583 = vld [vmem:[%s567 + $0x1c] sm:%s560]
                  %584 = vst [vmem:[%s568 + $0x1c] sm:%s560] %v583
                  %v585 = vld [vmem:[%s567 + $0x20] sm:%s560]
                  %586 = vst [vmem:[%s568 + $0x20] sm:%s560] %v585
                  %v587 = vld [vmem:[%s567 + $0x24] sm:%s560]
                  %588 = vst [vmem:[%s568 + $0x24] sm:%s560] %v587
                  %v589 = vld [vmem:[%s567 + $0x28] sm:%s560]
                  %590 = vst [vmem:[%s568 + $0x28] sm:%s560] %v589
                  %v591 = vld [vmem:[%s567 + $0x2c] sm:%s560]
                  %592 = vst [vmem:[%s568 + $0x2c] sm:%s560] %v591
                  %v593 = vld [vmem:[%s567 + $0x30] sm:%s560]
                  %594 = vst [vmem:[%s568 + $0x30] sm:%s560] %v593
                  %v595 = vld [vmem:[%s567 + $0x34] sm:%s560]
                  %596 = vst [vmem:[%s568 + $0x34] sm:%s560] %v595
                  %v597 = vld [vmem:[%s567 + $0x38] sm:%s560]
                  %598 = vst [vmem:[%s568 + $0x38] sm:%s560] %v597
                  %v599 = vld [vmem:[%s567 + $0x3c] sm:%s560]
                  %600 = vst [vmem:[%s568 + $0x3c] sm:%s560] %v599
                  %v601 = vld [vmem:[%s567 + $0x40] sm:%s560]
                  %602 = vst [vmem:[%s568 + $0x40] sm:%s560] %v601
                  %v603 = vld [vmem:[%s567 + $0x44] sm:%s560]
                  %604 = vst [vmem:[%s568 + $0x44] sm:%s560] %v603
                  %v605 = vld [vmem:[%s567 + $0x48] sm:%s560]
                  %606 = vst [vmem:[%s568 + $0x48] sm:%s560] %v605
                  %v607 = vld [vmem:[%s567 + $0x4c] sm:%s560]
                  %608 = vst [vmem:[%s568 + $0x4c] sm:%s560] %v607
                  %v609 = vld [vmem:[%s567 + $0x50] sm:%s560]
                  %610 = vst [vmem:[%s568 + $0x50] sm:%s560] %v609
                  %v611 = vld [vmem:[%s567 + $0x54] sm:%s560]
                  %612 = vst [vmem:[%s568 + $0x54] sm:%s560] %v611
                  %v613 = vld [vmem:[%s567 + $0x58] sm:%s560]
                  %614 = vst [vmem:[%s568 + $0x58] sm:%s560] %v613
                  %v615 = vld [vmem:[%s567 + $0x5c] sm:%s560]
                  %616 = vst [vmem:[%s568 + $0x5c] sm:%s560] %v615
                  %v617 = vld [vmem:[%s567 + $0xc0] sm:%s560]
                  %618 = vst [vmem:[%s568 + $0x60] sm:%s560] %v617
                  %v619 = vld [vmem:[%s567 + $0xc4] sm:%s560]
                  %620 = vst [vmem:[%s568 + $0x64] sm:%s560] %v619
                  %v621 = vld [vmem:[%s567 + $0xc8] sm:%s560]
                  %622 = vst [vmem:[%s568 + $0x68] sm:%s560] %v621
                  %v623 = vld [vmem:[%s567 + $0xcc] sm:%s560]
                  %624 = vst [vmem:[%s568 + $0x6c] sm:%s560] %v623
                  %v625 = vld [vmem:[%s567 + $0xd0] sm:%s560]
                  %626 = vst [vmem:[%s568 + $0x70] sm:%s560] %v625
                  %v627 = vld [vmem:[%s567 + $0xd4] sm:%s560]
                  %628 = vst [vmem:[%s568 + $0x74] sm:%s560] %v627
                  %v629 = vld [vmem:[%s567 + $0xd8] sm:%s560]
                  %630 = vst [vmem:[%s568 + $0x78] sm:%s560] %v629
                  %v631 = vld [vmem:[%s567 + $0xdc] sm:%s560]
                  %632 = vst [vmem:[%s568 + $0x7c] sm:%s560] %v631
                  %v633 = vld [vmem:[%s567 + $0xe0] sm:%s560]
                  %634 = vst [vmem:[%s568 + $0x80] sm:%s560] %v633
                  %v635 = vld [vmem:[%s567 + $0xe4] sm:%s560]
                  %636 = vst [vmem:[%s568 + $0x84] sm:%s560] %v635
                  %v637 = vld [vmem:[%s567 + $0xe8] sm:%s560]
                  %638 = vst [vmem:[%s568 + $0x88] sm:%s560] %v637
                  %v639 = vld [vmem:[%s567 + $0xec] sm:%s560]
                  %640 = vst [vmem:[%s568 + $0x8c] sm:%s560] %v639
                  %v641 = vld [vmem:[%s567 + $0xf0] sm:%s560]
                  %642 = vst [vmem:[%s568 + $0x90] sm:%s560] %v641
                  %v643 = vld [vmem:[%s567 + $0xf4] sm:%s560]
                  %644 = vst [vmem:[%s568 + $0x94] sm:%s560] %v643
                  %v645 = vld [vmem:[%s567 + $0xf8] sm:%s560]
                  %646 = vst [vmem:[%s568 + $0x98] sm:%s560] %v645
                  %v647 = vld [vmem:[%s567 + $0xfc] sm:%s560]
                  %648 = vst [vmem:[%s568 + $0x9c] sm:%s560] %v647
                  %v649 = vld [vmem:[%s567 + $0x100] sm:%s560]
                  %650 = vst [vmem:[%s568 + $0xa0] sm:%s560] %v649
                  %v651 = vld [vmem:[%s567 + $0x104] sm:%s560]
                  %652 = vst [vmem:[%s568 + $0xa4] sm:%s560] %v651
                  %v653 = vld [vmem:[%s567 + $0x108] sm:%s560]
                  %654 = vst [vmem:[%s568 + $0xa8] sm:%s560] %v653
                  %v655 = vld [vmem:[%s567 + $0x10c] sm:%s560]
                  %656 = vst [vmem:[%s568 + $0xac] sm:%s560] %v655
                  %v657 = vld [vmem:[%s567 + $0x110] sm:%s560]
                  %658 = vst [vmem:[%s568 + $0xb0] sm:%s560] %v657
                  %v659 = vld [vmem:[%s567 + $0x114] sm:%s560]
                  %660 = vst [vmem:[%s568 + $0xb4] sm:%s560] %v659
                  %v661 = vld [vmem:[%s567 + $0x118] sm:%s560]
                  %662 = vst [vmem:[%s568 + $0xb8] sm:%s560] %v661
                  %v663 = vld [vmem:[%s567 + $0x11c] sm:%s560]
                  %664 = vst [vmem:[%s568 + $0xbc] sm:%s560] %v663
                  %v665 = vld [vmem:[%s567 + $0x180] sm:%s560]
                  %666 = vst [vmem:[%s568 + $0xc0] sm:%s560] %v665
                  %v667 = vld [vmem:[%s567 + $0x184] sm:%s560]
                  %668 = vst [vmem:[%s568 + $0xc4] sm:%s560] %v667
                  %v669 = vld [vmem:[%s567 + $0x188] sm:%s560]
                  %670 = vst [vmem:[%s568 + $0xc8] sm:%s560] %v669
                  %v671 = vld [vmem:[%s567 + $0x18c] sm:%s560]
                  %672 = vst [vmem:[%s568 + $0xcc] sm:%s560] %v671
                  %v673 = vld [vmem:[%s567 + $0x190] sm:%s560]
                  %674 = vst [vmem:[%s568 + $0xd0] sm:%s560] %v673
                  %v675 = vld [vmem:[%s567 + $0x194] sm:%s560]
                  %676 = vst [vmem:[%s568 + $0xd4] sm:%s560] %v675
                  %v677 = vld [vmem:[%s567 + $0x198] sm:%s560]
                  %678 = vst [vmem:[%s568 + $0xd8] sm:%s560] %v677
                  %v679 = vld [vmem:[%s567 + $0x19c] sm:%s560]
                  %680 = vst [vmem:[%s568 + $0xdc] sm:%s560] %v679
                  %v681 = vld [vmem:[%s567 + $0x1a0] sm:%s560]
                  %682 = vst [vmem:[%s568 + $0xe0] sm:%s560] %v681
                  %v683 = vld [vmem:[%s567 + $0x1a4] sm:%s560]
                  %684 = vst [vmem:[%s568 + $0xe4] sm:%s560] %v683
                  %v685 = vld [vmem:[%s567 + $0x1a8] sm:%s560]
                  %686 = vst [vmem:[%s568 + $0xe8] sm:%s560] %v685
                  %v687 = vld [vmem:[%s567 + $0x1ac] sm:%s560]
                  %688 = vst [vmem:[%s568 + $0xec] sm:%s560] %v687
                  %v689 = vld [vmem:[%s567 + $0x1b0] sm:%s560]
                  %690 = vst [vmem:[%s568 + $0xf0] sm:%s560] %v689
                  %v691 = vld [vmem:[%s567 + $0x1b4] sm:%s560]
                  %692 = vst [vmem:[%s568 + $0xf4] sm:%s560] %v691
                  %v693 = vld [vmem:[%s567 + $0x1b8] sm:%s560]
                  %694 = vst [vmem:[%s568 + $0xf8] sm:%s560] %v693
                  %v695 = vld [vmem:[%s567 + $0x1bc] sm:%s560]
                  %696 = vst [vmem:[%s568 + $0xfc] sm:%s560] %v695
                  %v697 = vld [vmem:[%s567 + $0x1c0] sm:%s560]
                  %698 = vst [vmem:[%s568 + $0x100] sm:%s560] %v697
                  %v699 = vld [vmem:[%s567 + $0x1c4] sm:%s560]
                  %700 = vst [vmem:[%s568 + $0x104] sm:%s560] %v699
                  %v701 = vld [vmem:[%s567 + $0x1c8] sm:%s560]
                  %702 = vst [vmem:[%s568 + $0x108] sm:%s560] %v701
                  %v703 = vld [vmem:[%s567 + $0x1cc] sm:%s560]
                  %704 = vst [vmem:[%s568 + $0x10c] sm:%s560] %v703
                  %v705 = vld [vmem:[%s567 + $0x1d0] sm:%s560]
                  %706 = vst [vmem:[%s568 + $0x110] sm:%s560] %v705
                  %v707 = vld [vmem:[%s567 + $0x1d4] sm:%s560]
                  %708 = vst [vmem:[%s568 + $0x114] sm:%s560] %v707
                  %v709 = vld [vmem:[%s567 + $0x1d8] sm:%s560]
                  %710 = vst [vmem:[%s568 + $0x118] sm:%s560] %v709
                  %v711 = vld [vmem:[%s567 + $0x1dc] sm:%s560]
                  %712 = vst [vmem:[%s568 + $0x11c] sm:%s560] %v711
                  %v713 = vld [vmem:[%s567 + $0x240] sm:%s560]
                  %714 = vst [vmem:[%s568 + $0x120] sm:%s560] %v713
                  %v715 = vld [vmem:[%s567 + $0x244] sm:%s560]
                  %716 = vst [vmem:[%s568 + $0x124] sm:%s560] %v715
                  %v717 = vld [vmem:[%s567 + $0x248] sm:%s560]
                  %718 = vst [vmem:[%s568 + $0x128] sm:%s560] %v717
                  %v719 = vld [vmem:[%s567 + $0x24c] sm:%s560]
                  %720 = vst [vmem:[%s568 + $0x12c] sm:%s560] %v719
                  %v721 = vld [vmem:[%s567 + $0x250] sm:%s560]
                  %722 = vst [vmem:[%s568 + $0x130] sm:%s560] %v721
                  %v723 = vld [vmem:[%s567 + $0x254] sm:%s560]
                  %724 = vst [vmem:[%s568 + $0x134] sm:%s560] %v723
                  %v725 = vld [vmem:[%s567 + $0x258] sm:%s560]
                  %726 = vst [vmem:[%s568 + $0x138] sm:%s560] %v725
                  %v727 = vld [vmem:[%s567 + $0x25c] sm:%s560]
                  %728 = vst [vmem:[%s568 + $0x13c] sm:%s560] %v727
                  %v729 = vld [vmem:[%s567 + $0x260] sm:%s560]
                  %730 = vst [vmem:[%s568 + $0x140] sm:%s560] %v729
                  %v731 = vld [vmem:[%s567 + $0x264] sm:%s560]
                  %732 = vst [vmem:[%s568 + $0x144] sm:%s560] %v731
                  %v733 = vld [vmem:[%s567 + $0x268] sm:%s560]
                  %734 = vst [vmem:[%s568 + $0x148] sm:%s560] %v733
                  %v735 = vld [vmem:[%s567 + $0x26c] sm:%s560]
                  %736 = vst [vmem:[%s568 + $0x14c] sm:%s560] %v735
                  %v737 = vld [vmem:[%s567 + $0x270] sm:%s560]
                  %738 = vst [vmem:[%s568 + $0x150] sm:%s560] %v737
                  %v739 = vld [vmem:[%s567 + $0x274] sm:%s560]
                  %740 = vst [vmem:[%s568 + $0x154] sm:%s560] %v739
                  %v741 = vld [vmem:[%s567 + $0x278] sm:%s560]
                  %742 = vst [vmem:[%s568 + $0x158] sm:%s560] %v741
                  %v743 = vld [vmem:[%s567 + $0x27c] sm:%s560]
                  %744 = vst [vmem:[%s568 + $0x15c] sm:%s560] %v743
                  %v745 = vld [vmem:[%s567 + $0x280] sm:%s560]
                  %746 = vst [vmem:[%s568 + $0x160] sm:%s560] %v745
                  %v747 = vld [vmem:[%s567 + $0x284] sm:%s560]
                  %748 = vst [vmem:[%s568 + $0x164] sm:%s560] %v747
                  %v749 = vld [vmem:[%s567 + $0x288] sm:%s560]
                  %750 = vst [vmem:[%s568 + $0x168] sm:%s560] %v749
                  %v751 = vld [vmem:[%s567 + $0x28c] sm:%s560]
                  %752 = vst [vmem:[%s568 + $0x16c] sm:%s560] %v751
                  %v753 = vld [vmem:[%s567 + $0x290] sm:%s560]
                  %754 = vst [vmem:[%s568 + $0x170] sm:%s560] %v753
                  %v755 = vld [vmem:[%s567 + $0x294] sm:%s560]
                  %756 = vst [vmem:[%s568 + $0x174] sm:%s560] %v755
                  %v757 = vld [vmem:[%s567 + $0x298] sm:%s560]
                  %758 = vst [vmem:[%s568 + $0x178] sm:%s560] %v757
                  %v759 = vld [vmem:[%s567 + $0x29c] sm:%s560]
                  %760 = vst [vmem:[%s568 + $0x17c] sm:%s560] %v759
                $region95: #{jcnn_forward.1} parent=82 // loop_footer
                  %s566 = sadd.s32 1, %s562
                $region96: #{jcnn_forward.1} parent=82 // loop_footer_branch
                  %561 = sbr.rel target = $region92
                $region97: #{jcnn_forward.1} parent=82 // loop_exit
                  _
              $region83: #{jcnn_forward.1} parent=67 // pred_fallthru
                _
            $region68: #{jcnn_forward.1} parent=63 // pred_fallthru
              _
            // Predicated region
            $region69: #{jcnn_forward.1} parent=63 // pred_check
              _
            $region70: #{jcnn_forward.1} parent=63 // pred_check_branch
              %346 = sbr.rel (0) target = $region72
            $region71: #{jcnn_forward.1} parent=63 // pred_region
              %s348 = ssub.s32 16, 1
              loop: start=0, step=1, limit=1
              $region73: #{jcnn_forward.1} parent=71 // loop_pre_header
                _
              $region74: #{jcnn_forward.1} parent=71 // loop_header
                %s350 = sphi 0, %s354
                %p351 = scmp.ge.s32.totalorder %s350, 1
                %s355 = sphi %s340, %s340
                %s356 = sphi %s337, %s337
              $region75: #{jcnn_forward.1} parent=71 // loop_header_branch
                %353 = sbr.rel (%p351) target = $region79
              $region76: #{jcnn_forward.1} parent=71 // loop_body
                %v357 = vld [vmem:[%s355] sm:%s348]
                %358 = vst [vmem:[%s356] sm:%s348] %v357
                %v359 = vld [vmem:[%s355 + $0x4] sm:%s348]
                %360 = vst [vmem:[%s356 + $0x4] sm:%s348] %v359
                %v361 = vld [vmem:[%s355 + $0x8] sm:%s348]
                %362 = vst [vmem:[%s356 + $0x8] sm:%s348] %v361
                %v363 = vld [vmem:[%s355 + $0xc] sm:%s348]
                %364 = vst [vmem:[%s356 + $0xc] sm:%s348] %v363
                %v365 = vld [vmem:[%s355 + $0x10] sm:%s348]
                %366 = vst [vmem:[%s356 + $0x10] sm:%s348] %v365
                %v367 = vld [vmem:[%s355 + $0x14] sm:%s348]
                %368 = vst [vmem:[%s356 + $0x14] sm:%s348] %v367
                %v369 = vld [vmem:[%s355 + $0x18] sm:%s348]
                %370 = vst [vmem:[%s356 + $0x18] sm:%s348] %v369
                %v371 = vld [vmem:[%s355 + $0x1c] sm:%s348]
                %372 = vst [vmem:[%s356 + $0x1c] sm:%s348] %v371
                %v373 = vld [vmem:[%s355 + $0x20] sm:%s348]
                %374 = vst [vmem:[%s356 + $0x20] sm:%s348] %v373
                %v375 = vld [vmem:[%s355 + $0x24] sm:%s348]
                %376 = vst [vmem:[%s356 + $0x24] sm:%s348] %v375
                %v377 = vld [vmem:[%s355 + $0x28] sm:%s348]
                %378 = vst [vmem:[%s356 + $0x28] sm:%s348] %v377
                %v379 = vld [vmem:[%s355 + $0x2c] sm:%s348]
                %380 = vst [vmem:[%s356 + $0x2c] sm:%s348] %v379
                %v381 = vld [vmem:[%s355 + $0x30] sm:%s348]
                %382 = vst [vmem:[%s356 + $0x30] sm:%s348] %v381
                %v383 = vld [vmem:[%s355 + $0x34] sm:%s348]
                %384 = vst [vmem:[%s356 + $0x34] sm:%s348] %v383
                %v385 = vld [vmem:[%s355 + $0x38] sm:%s348]
                %386 = vst [vmem:[%s356 + $0x38] sm:%s348] %v385
                %v387 = vld [vmem:[%s355 + $0x3c] sm:%s348]
                %388 = vst [vmem:[%s356 + $0x3c] sm:%s348] %v387
                %v389 = vld [vmem:[%s355 + $0x40] sm:%s348]
                %390 = vst [vmem:[%s356 + $0x40] sm:%s348] %v389
                %v391 = vld [vmem:[%s355 + $0x44] sm:%s348]
                %392 = vst [vmem:[%s356 + $0x44] sm:%s348] %v391
                %v393 = vld [vmem:[%s355 + $0x48] sm:%s348]
                %394 = vst [vmem:[%s356 + $0x48] sm:%s348] %v393
                %v395 = vld [vmem:[%s355 + $0x4c] sm:%s348]
                %396 = vst [vmem:[%s356 + $0x4c] sm:%s348] %v395
                %v397 = vld [vmem:[%s355 + $0x50] sm:%s348]
                %398 = vst [vmem:[%s356 + $0x50] sm:%s348] %v397
                %v399 = vld [vmem:[%s355 + $0x54] sm:%s348]
                %400 = vst [vmem:[%s356 + $0x54] sm:%s348] %v399
                %v401 = vld [vmem:[%s355 + $0x58] sm:%s348]
                %402 = vst [vmem:[%s356 + $0x58] sm:%s348] %v401
                %v403 = vld [vmem:[%s355 + $0x5c] sm:%s348]
                %404 = vst [vmem:[%s356 + $0x5c] sm:%s348] %v403
                %v405 = vld [vmem:[%s355 + $0xc0] sm:%s348]
                %406 = vst [vmem:[%s356 + $0x60] sm:%s348] %v405
                %v407 = vld [vmem:[%s355 + $0xc4] sm:%s348]
                %408 = vst [vmem:[%s356 + $0x64] sm:%s348] %v407
                %v409 = vld [vmem:[%s355 + $0xc8] sm:%s348]
                %410 = vst [vmem:[%s356 + $0x68] sm:%s348] %v409
                %v411 = vld [vmem:[%s355 + $0xcc] sm:%s348]
                %412 = vst [vmem:[%s356 + $0x6c] sm:%s348] %v411
                %v413 = vld [vmem:[%s355 + $0xd0] sm:%s348]
                %414 = vst [vmem:[%s356 + $0x70] sm:%s348] %v413
                %v415 = vld [vmem:[%s355 + $0xd4] sm:%s348]
                %416 = vst [vmem:[%s356 + $0x74] sm:%s348] %v415
                %v417 = vld [vmem:[%s355 + $0xd8] sm:%s348]
                %418 = vst [vmem:[%s356 + $0x78] sm:%s348] %v417
                %v419 = vld [vmem:[%s355 + $0xdc] sm:%s348]
                %420 = vst [vmem:[%s356 + $0x7c] sm:%s348] %v419
                %v421 = vld [vmem:[%s355 + $0xe0] sm:%s348]
                %422 = vst [vmem:[%s356 + $0x80] sm:%s348] %v421
                %v423 = vld [vmem:[%s355 + $0xe4] sm:%s348]
                %424 = vst [vmem:[%s356 + $0x84] sm:%s348] %v423
                %v425 = vld [vmem:[%s355 + $0xe8] sm:%s348]
                %426 = vst [vmem:[%s356 + $0x88] sm:%s348] %v425
                %v427 = vld [vmem:[%s355 + $0xec] sm:%s348]
                %428 = vst [vmem:[%s356 + $0x8c] sm:%s348] %v427
                %v429 = vld [vmem:[%s355 + $0xf0] sm:%s348]
                %430 = vst [vmem:[%s356 + $0x90] sm:%s348] %v429
                %v431 = vld [vmem:[%s355 + $0xf4] sm:%s348]
                %432 = vst [vmem:[%s356 + $0x94] sm:%s348] %v431
                %v433 = vld [vmem:[%s355 + $0xf8] sm:%s348]
                %434 = vst [vmem:[%s356 + $0x98] sm:%s348] %v433
                %v435 = vld [vmem:[%s355 + $0xfc] sm:%s348]
                %436 = vst [vmem:[%s356 + $0x9c] sm:%s348] %v435
                %v437 = vld [vmem:[%s355 + $0x100] sm:%s348]
                %438 = vst [vmem:[%s356 + $0xa0] sm:%s348] %v437
                %v439 = vld [vmem:[%s355 + $0x104] sm:%s348]
                %440 = vst [vmem:[%s356 + $0xa4] sm:%s348] %v439
                %v441 = vld [vmem:[%s355 + $0x108] sm:%s348]
                %442 = vst [vmem:[%s356 + $0xa8] sm:%s348] %v441
                %v443 = vld [vmem:[%s355 + $0x10c] sm:%s348]
                %444 = vst [vmem:[%s356 + $0xac] sm:%s348] %v443
                %v445 = vld [vmem:[%s355 + $0x110] sm:%s348]
                %446 = vst [vmem:[%s356 + $0xb0] sm:%s348] %v445
                %v447 = vld [vmem:[%s355 + $0x114] sm:%s348]
                %448 = vst [vmem:[%s356 + $0xb4] sm:%s348] %v447
                %v449 = vld [vmem:[%s355 + $0x118] sm:%s348]
                %450 = vst [vmem:[%s356 + $0xb8] sm:%s348] %v449
                %v451 = vld [vmem:[%s355 + $0x11c] sm:%s348]
                %452 = vst [vmem:[%s356 + $0xbc] sm:%s348] %v451
                %v453 = vld [vmem:[%s355 + $0x180] sm:%s348]
                %454 = vst [vmem:[%s356 + $0xc0] sm:%s348] %v453
                %v455 = vld [vmem:[%s355 + $0x184] sm:%s348]
                %456 = vst [vmem:[%s356 + $0xc4] sm:%s348] %v455
                %v457 = vld [vmem:[%s355 + $0x188] sm:%s348]
                %458 = vst [vmem:[%s356 + $0xc8] sm:%s348] %v457
                %v459 = vld [vmem:[%s355 + $0x18c] sm:%s348]
                %460 = vst [vmem:[%s356 + $0xcc] sm:%s348] %v459
                %v461 = vld [vmem:[%s355 + $0x190] sm:%s348]
                %462 = vst [vmem:[%s356 + $0xd0] sm:%s348] %v461
                %v463 = vld [vmem:[%s355 + $0x194] sm:%s348]
                %464 = vst [vmem:[%s356 + $0xd4] sm:%s348] %v463
                %v465 = vld [vmem:[%s355 + $0x198] sm:%s348]
                %466 = vst [vmem:[%s356 + $0xd8] sm:%s348] %v465
                %v467 = vld [vmem:[%s355 + $0x19c] sm:%s348]
                %468 = vst [vmem:[%s356 + $0xdc] sm:%s348] %v467
                %v469 = vld [vmem:[%s355 + $0x1a0] sm:%s348]
                %470 = vst [vmem:[%s356 + $0xe0] sm:%s348] %v469
                %v471 = vld [vmem:[%s355 + $0x1a4] sm:%s348]
                %472 = vst [vmem:[%s356 + $0xe4] sm:%s348] %v471
                %v473 = vld [vmem:[%s355 + $0x1a8] sm:%s348]
                %474 = vst [vmem:[%s356 + $0xe8] sm:%s348] %v473
                %v475 = vld [vmem:[%s355 + $0x1ac] sm:%s348]
                %476 = vst [vmem:[%s356 + $0xec] sm:%s348] %v475
                %v477 = vld [vmem:[%s355 + $0x1b0] sm:%s348]
                %478 = vst [vmem:[%s356 + $0xf0] sm:%s348] %v477
                %v479 = vld [vmem:[%s355 + $0x1b4] sm:%s348]
                %480 = vst [vmem:[%s356 + $0xf4] sm:%s348] %v479
                %v481 = vld [vmem:[%s355 + $0x1b8] sm:%s348]
                %482 = vst [vmem:[%s356 + $0xf8] sm:%s348] %v481
                %v483 = vld [vmem:[%s355 + $0x1bc] sm:%s348]
                %484 = vst [vmem:[%s356 + $0xfc] sm:%s348] %v483
                %v485 = vld [vmem:[%s355 + $0x1c0] sm:%s348]
                %486 = vst [vmem:[%s356 + $0x100] sm:%s348] %v485
                %v487 = vld [vmem:[%s355 + $0x1c4] sm:%s348]
                %488 = vst [vmem:[%s356 + $0x104] sm:%s348] %v487
                %v489 = vld [vmem:[%s355 + $0x1c8] sm:%s348]
                %490 = vst [vmem:[%s356 + $0x108] sm:%s348] %v489
                %v491 = vld [vmem:[%s355 + $0x1cc] sm:%s348]
                %492 = vst [vmem:[%s356 + $0x10c] sm:%s348] %v491
                %v493 = vld [vmem:[%s355 + $0x1d0] sm:%s348]
                %494 = vst [vmem:[%s356 + $0x110] sm:%s348] %v493
                %v495 = vld [vmem:[%s355 + $0x1d4] sm:%s348]
                %496 = vst [vmem:[%s356 + $0x114] sm:%s348] %v495
                %v497 = vld [vmem:[%s355 + $0x1d8] sm:%s348]
                %498 = vst [vmem:[%s356 + $0x118] sm:%s348] %v497
                %v499 = vld [vmem:[%s355 + $0x1dc] sm:%s348]
                %500 = vst [vmem:[%s356 + $0x11c] sm:%s348] %v499
                %v501 = vld [vmem:[%s355 + $0x240] sm:%s348]
                %502 = vst [vmem:[%s356 + $0x120] sm:%s348] %v501
                %v503 = vld [vmem:[%s355 + $0x244] sm:%s348]
                %504 = vst [vmem:[%s356 + $0x124] sm:%s348] %v503
                %v505 = vld [vmem:[%s355 + $0x248] sm:%s348]
                %506 = vst [vmem:[%s356 + $0x128] sm:%s348] %v505
                %v507 = vld [vmem:[%s355 + $0x24c] sm:%s348]
                %508 = vst [vmem:[%s356 + $0x12c] sm:%s348] %v507
                %v509 = vld [vmem:[%s355 + $0x250] sm:%s348]
                %510 = vst [vmem:[%s356 + $0x130] sm:%s348] %v509
                %v511 = vld [vmem:[%s355 + $0x254] sm:%s348]
                %512 = vst [vmem:[%s356 + $0x134] sm:%s348] %v511
                %v513 = vld [vmem:[%s355 + $0x258] sm:%s348]
                %514 = vst [vmem:[%s356 + $0x138] sm:%s348] %v513
                %v515 = vld [vmem:[%s355 + $0x25c] sm:%s348]
                %516 = vst [vmem:[%s356 + $0x13c] sm:%s348] %v515
                %v517 = vld [vmem:[%s355 + $0x260] sm:%s348]
                %518 = vst [vmem:[%s356 + $0x140] sm:%s348] %v517
                %v519 = vld [vmem:[%s355 + $0x264] sm:%s348]
                %520 = vst [vmem:[%s356 + $0x144] sm:%s348] %v519
                %v521 = vld [vmem:[%s355 + $0x268] sm:%s348]
                %522 = vst [vmem:[%s356 + $0x148] sm:%s348] %v521
                %v523 = vld [vmem:[%s355 + $0x26c] sm:%s348]
                %524 = vst [vmem:[%s356 + $0x14c] sm:%s348] %v523
                %v525 = vld [vmem:[%s355 + $0x270] sm:%s348]
                %526 = vst [vmem:[%s356 + $0x150] sm:%s348] %v525
                %v527 = vld [vmem:[%s355 + $0x274] sm:%s348]
                %528 = vst [vmem:[%s356 + $0x154] sm:%s348] %v527
                %v529 = vld [vmem:[%s355 + $0x278] sm:%s348]
                %530 = vst [vmem:[%s356 + $0x158] sm:%s348] %v529
                %v531 = vld [vmem:[%s355 + $0x27c] sm:%s348]
                %532 = vst [vmem:[%s356 + $0x15c] sm:%s348] %v531
                %v533 = vld [vmem:[%s355 + $0x280] sm:%s348]
                %534 = vst [vmem:[%s356 + $0x160] sm:%s348] %v533
                %v535 = vld [vmem:[%s355 + $0x284] sm:%s348]
                %536 = vst [vmem:[%s356 + $0x164] sm:%s348] %v535
                %v537 = vld [vmem:[%s355 + $0x288] sm:%s348]
                %538 = vst [vmem:[%s356 + $0x168] sm:%s348] %v537
                %v539 = vld [vmem:[%s355 + $0x28c] sm:%s348]
                %540 = vst [vmem:[%s356 + $0x16c] sm:%s348] %v539
                %v541 = vld [vmem:[%s355 + $0x290] sm:%s348]
                %542 = vst [vmem:[%s356 + $0x170] sm:%s348] %v541
                %v543 = vld [vmem:[%s355 + $0x294] sm:%s348]
                %544 = vst [vmem:[%s356 + $0x174] sm:%s348] %v543
                %v545 = vld [vmem:[%s355 + $0x298] sm:%s348]
                %546 = vst [vmem:[%s356 + $0x178] sm:%s348] %v545
                %v547 = vld [vmem:[%s355 + $0x29c] sm:%s348]
                %548 = vst [vmem:[%s356 + $0x17c] sm:%s348] %v547
              $region77: #{jcnn_forward.1} parent=71 // loop_footer
                %s354 = sadd.s32 1, %s350
              $region78: #{jcnn_forward.1} parent=71 // loop_footer_branch
                %349 = sbr.rel target = $region74
              $region79: #{jcnn_forward.1} parent=71 // loop_exit
                _
            $region72: #{jcnn_forward.1} parent=63 // pred_fallthru
              _
          $region64: #{jcnn_forward.1} parent=59 // pred_fallthru
            _
          %761 = vnop
        $region60: #{jcnn_forward.1} parent=55 // pred_fallthru
          _
      $region56: #{jcnn_forward.1} parent=5 // pred_fallthru
        _
      %p762 = scmp.le.s32.totalorder 1, %s20
      %p763 = scmp.lt.s32.totalorder %s20, 3
      %p764 = pnand %p762, %p763
      %p765 = pneg %p764
      // Predicated region
      $region98: #{jcnn_forward.1} parent=5 // pred_check
        _
      $region99: #{jcnn_forward.1} parent=5 // pred_check_branch
        %767 = sbr.rel (%p764) target = $region101
      $region100: #{jcnn_forward.1} parent=5 // pred_region
        %s768 = ssub.s32 %s20, 1
        %s769 = sand.u32 %s33, 1
        %s770 = sand.u32 %s33, 1
        %s771 = smul.addr %s770, 384
        %s772 = scalar_lea.vmem [#allocation6], %s771
        // Predicated region
        $region102: #{jcnn_forward.1} parent=100 // pred_check
          %p773 = pneg %p46
        $region103: #{jcnn_forward.1} parent=100 // pred_check_branch
          %775 = sbr.rel (%p773) target = $region105
        $region104: #{jcnn_forward.1} parent=100 // pred_region
          _
        $region105: #{jcnn_forward.1} parent=100 // pred_fallthru
          _
        %s776 = sand.u32 %s33, 1
        %s777 = sand.u32 %s33, 1
        %s778 = smul.addr %s777, 384
        %s779 = scalar_lea.vmem [#allocation6], %s778
        %p780 = pneg %p46
        %p781 = pneg %p43
        %p782 = pneg %p67
        %p783 = pneg %p64
        %p784 = pneg %p88
        %p785 = pneg %p85
        %p786 = pneg %p109
        %p787 = pneg %p106
        %p788 = pneg %p130
        %p789 = pneg %p127
        %p790 = pneg %p151
        %p791 = pneg %p148
        %p792 = pneg %p172
        %p793 = pneg %p169
        %p794 = pneg %p193
        %p795 = pneg %p190
        %p796 = pneg %p214
        %p797 = pneg %p211
        %p798 = pneg %p235
        %p799 = pneg %p232
        %p800 = pneg %p256
        %p801 = pneg %p253
        %p802 = pneg %p282
        %p803 = pneg %p279
        %s804 = sand.u32 %s269, 1
        %s805 = scalar_lea.sflag [#allocation8], %s804
        %s806 = sand.u32 %s269, 1
        %s807 = scalar_lea.vmem [#allocation7], %s806
        %s808 = smul.u32 24, %s25
        %v810 = vld [vmem:[%s772] sm:$0xf]
        %v811 = vld [vmem:[%s772 + $0x4] sm:$0xf]
        %v812 = vld [vmem:[%s772 + $0x8] sm:$0xf]
        %v813 = vld [vmem:[%s772 + $0xc] sm:$0xf]
        %v814 = vld [vmem:[%s772 + $0x10] sm:$0xf]
        %v815 = vld [vmem:[%s772 + $0x14] sm:$0xf]
        %v816 = vld [vmem:[%s772 + $0x18] sm:$0xf]
        %v817 = vld [vmem:[%s772 + $0x1c] sm:$0xf]
        %v818 = vld [vmem:[%s772 + $0x20] sm:$0xf]
        %v819 = vld [vmem:[%s772 + $0x24] sm:$0xf]
        %v820 = vld [vmem:[%s772 + $0x28] sm:$0xf]
        %v821 = vld [vmem:[%s772 + $0x2c] sm:$0xf]
        %v822 = vld [vmem:[%s772 + $0x30] sm:$0xf]
        %v823 = vld [vmem:[%s772 + $0x34] sm:$0xf]
        %v824 = vld [vmem:[%s772 + $0x38] sm:$0xf]
        %v825 = vld [vmem:[%s772 + $0x3c] sm:$0xf]
        %v826 = vld [vmem:[%s772 + $0x40] sm:$0xf]
        %v827 = vld [vmem:[%s772 + $0x44] sm:$0xf]
        %v828 = vld [vmem:[%s772 + $0x48] sm:$0xf]
        %v829 = vld [vmem:[%s772 + $0x4c] sm:$0xf]
        %v830 = vld [vmem:[%s772 + $0x50] sm:$0xf]
        %v831 = vld [vmem:[%s772 + $0x54] sm:$0xf]
        %v832 = vld [vmem:[%s772 + $0x58] sm:$0xf]
        %v833 = vld [vmem:[%s772 + $0x5c] sm:$0xf]
        %v834 = vld [vmem:[%s1] sm:$0xf]
        %v835 = vld [vmem:[%s1 + $0x4] sm:$0xf]
        %v836 = vld [vmem:[%s1 + $0x8] sm:$0xf]
        %v837 = vld [vmem:[%s1 + $0xc] sm:$0xf]
        %v838 = vld [vmem:[%s2] sm:$0x1]
        %v840 = vlaneseq
        %v841 = vshrl.u32 %v840, 7
        %v842 = vsub.s32 0, %v841
        %v843 = vrot.slane %v838, %v842
        %v869 = vunpack.c.l.b16 %v810
        %v870 = vunpack.c.l.b16 %v811
        %v871 = vunpack.c.l.b16 %v812
        %v872 = vunpack.c.l.b16 %v813
        %v873 = vunpack.c.l.b16 %v814
        %v874 = vunpack.c.l.b16 %v815
        %v875 = vunpack.c.l.b16 %v816
        %v876 = vunpack.c.l.b16 %v817
        %v877 = vunpack.c.l.b16 %v818
        %v878 = vunpack.c.l.b16 %v819
        %v879 = vunpack.c.l.b16 %v820
        %v880 = vunpack.c.l.b16 %v821
        %v881 = vunpack.c.l.b16 %v822
        %v882 = vunpack.c.l.b16 %v823
        %v883 = vunpack.c.l.b16 %v824
        %v884 = vunpack.c.l.b16 %v825
        %v885 = vunpack.c.l.b16 %v826
        %v886 = vunpack.c.l.b16 %v827
        %v887 = vunpack.c.l.b16 %v828
        %v888 = vunpack.c.l.b16 %v829
        %v889 = vunpack.c.l.b16 %v830
        %v890 = vunpack.c.l.b16 %v831
        %v891 = vunpack.c.l.b16 %v832
        %v892 = vunpack.c.l.b16 %v833
        %v893 = vpack.c.b16 %v870, %v869
        %v894 = vpack.c.b16 %v872, %v871
        %v895 = vpack.c.b16 %v874, %v873
        %v896 = vpack.c.b16 %v876, %v875
        %v897 = vpack.c.b16 %v878, %v877
        %v898 = vpack.c.b16 %v880, %v879
        %v899 = vpack.c.b16 %v882, %v881
        %v900 = vpack.c.b16 %v884, %v883
        %v901 = vpack.c.b16 %v886, %v885
        %v902 = vpack.c.b16 %v888, %v887
        %v903 = vpack.c.b16 %v890, %v889
        %v904 = vpack.c.b16 %v892, %v891
        %v909 = vunpack.c.l.b16 %v834
        %v910 = vunpack.c.l.b16 %v835
        %v911 = vunpack.c.l.b16 %v836
        %v912 = vunpack.c.l.b16 %v837
        %v913 = vpack.c.b16 %v910, %v909
        %v914 = vpack.c.b16 %v912, %v911
        %vm917 = vcmask 261120
        %v919 = vsel %vm917, %v893, 0
        %v922 = vsel %vm917, %v894, 0
        %v925 = vsel %vm917, %v895, 0
        %v928 = vsel %vm917, %v896, 0
        %v931 = vsel %vm917, %v897, 0
        %v934 = vsel %vm917, %v898, 0
        %v937 = vsel %vm917, %v899, 0
        %v940 = vsel %vm917, %v900, 0
        %v943 = vsel %vm917, %v901, 0
        %v946 = vsel %vm917, %v902, 0
        %v949 = vsel %vm917, %v903, 0
        %v952 = vsel %vm917, %v904, 0
        %954 = vmatprep.subr.bf16.mxu0 0
        %955 = vmatpush1.bf16.msra.mxu0 0
        %956 = vmatprep.subr.bf16.mxu0 0
        %957 = vmatpush1.bf16.msra.mxu0 0
        %958 = vmatprep.subr.bf16.mxu0 0
        %959 = vmatpush1.bf16.msra.mxu0 0
        %960 = vmatprep.subr.bf16.mxu0 0
        %961 = vmatpush1.bf16.msra.mxu0 0
        %962 = vmatprep.subr.bf16.mxu0 0
        %963 = vmatpush1.bf16.msra.mxu0 0
        %964 = vmatprep.subr.bf16.mxu0 0
        %965 = vmatpush1.bf16.msra.mxu0 0
        %966 = vmatprep.subr.bf16.mxu0 0
        %967 = vmatpush1.bf16.msra.mxu0 %v914
        %968 = vmatprep.subr.bf16.mxu0 0
        %969 = vmatpush1.bf16.msra.mxu0 %v913
        %970 = vmatprep.subr.bf16.mxu0 0
        %971 = vmatpush2.bf16.msra.mxu0 0
        %972 = vmatprep.subr.bf16.mxu0 0
        %973 = vmatpush2.bf16.msra.mxu0 0
        %974 = vmatprep.subr.bf16.mxu0 0
        %975 = vmatpush2.bf16.msra.mxu0 0
        %976 = vmatprep.subr.bf16.mxu0 0
        %977 = vmatpush2.bf16.msra.mxu0 0
        %978 = vmatprep.subr.bf16.mxu0 0
        %979 = vmatpush2.bf16.msra.mxu0 0
        %980 = vmatprep.subr.bf16.mxu0 0
        %981 = vmatpush2.bf16.msra.mxu0 0
        %982 = vmatprep.subr.bf16.mxu0 0
        %983 = vmatpush2.bf16.msra.mxu0 0
        %984 = vmatprep.subr.bf16.mxu0 0
        %985 = vmatpush2.bf16.msra.mxu0 0
        %986 = vmatprep.mubr.bf16.mxu0 0
        %987 = vmatmul.mubr.bf16.gmra.mxu0 %v919
        %v988 = vpop.f32.mrf.mxu0
        %v989 = vadd.f32 %v843, %v988
        %v990 = vpop.f32.mrf.mxu0
        %v991 = vpop.f32.mrf.mxu0
        %v992 = vadd.f32 %v843, %v991
        %v993 = vpop.f32.mrf.mxu0
        %994 = vmatprep.mubr.bf16.mxu0 0
        %995 = vmatmul.mubr.bf16.gmra.mxu0 %v922
        %v996 = vpop.f32.mrf.mxu0
        %v997 = vadd.f32 %v843, %v996
        %v998 = vpop.f32.mrf.mxu0
        %v999 = vpop.f32.mrf.mxu0
        %v1000 = vadd.f32 %v843, %v999
        %v1001 = vpop.f32.mrf.mxu0
        %1002 = vmatprep.mubr.bf16.mxu0 0
        %1003 = vmatmul.mubr.bf16.gmra.mxu0 %v925
        %v1004 = vpop.f32.mrf.mxu0
        %v1005 = vadd.f32 %v843, %v1004
        %v1006 = vpop.f32.mrf.mxu0
        %v1007 = vpop.f32.mrf.mxu0
        %v1008 = vadd.f32 %v843, %v1007
        %v1009 = vpop.f32.mrf.mxu0
        %1010 = vmatprep.mubr.bf16.mxu0 0
        %1011 = vmatmul.mubr.bf16.gmra.mxu0 %v928
        %v1012 = vpop.f32.mrf.mxu0
        %v1013 = vadd.f32 %v843, %v1012
        %v1014 = vpop.f32.mrf.mxu0
        %v1015 = vpop.f32.mrf.mxu0
        %v1016 = vadd.f32 %v843, %v1015
        %v1017 = vpop.f32.mrf.mxu0
        %1018 = vmatprep.mubr.bf16.mxu0 0
        %1019 = vmatmul.mubr.bf16.gmra.mxu0 %v931
        %v1020 = vpop.f32.mrf.mxu0
        %v1021 = vadd.f32 %v843, %v1020
        %v1022 = vpop.f32.mrf.mxu0
        %v1023 = vpop.f32.mrf.mxu0
        %v1024 = vadd.f32 %v843, %v1023
        %v1025 = vpop.f32.mrf.mxu0
        %1026 = vmatprep.mubr.bf16.mxu0 0
        %1027 = vmatmul.mubr.bf16.gmra.mxu0 %v934
        %v1028 = vpop.f32.mrf.mxu0
        %v1029 = vadd.f32 %v843, %v1028
        %v1030 = vpop.f32.mrf.mxu0
        %v1031 = vpop.f32.mrf.mxu0
        %v1032 = vadd.f32 %v843, %v1031
        %v1033 = vpop.f32.mrf.mxu0
        %1034 = vmatprep.mubr.bf16.mxu0 0
        %1035 = vmatmul.mubr.bf16.gmra.mxu0 %v937
        %v1036 = vpop.f32.mrf.mxu0
        %v1037 = vadd.f32 %v843, %v1036
        %v1038 = vpop.f32.mrf.mxu0
        %v1039 = vpop.f32.mrf.mxu0
        %v1040 = vadd.f32 %v843, %v1039
        %v1041 = vpop.f32.mrf.mxu0
        %1042 = vmatprep.mubr.bf16.mxu0 0
        %1043 = vmatmul.mubr.bf16.gmra.mxu0 %v940
        %v1044 = vpop.f32.mrf.mxu0
        %v1045 = vadd.f32 %v843, %v1044
        %v1046 = vpop.f32.mrf.mxu0
        %v1047 = vpop.f32.mrf.mxu0
        %v1048 = vadd.f32 %v843, %v1047
        %v1049 = vpop.f32.mrf.mxu0
        %1050 = vmatprep.mubr.bf16.mxu0 0
        %1051 = vmatmul.mubr.bf16.gmra.mxu0 %v943
        %v1052 = vpop.f32.mrf.mxu0
        %v1053 = vadd.f32 %v843, %v1052
        %v1054 = vpop.f32.mrf.mxu0
        %v1055 = vpop.f32.mrf.mxu0
        %v1056 = vadd.f32 %v843, %v1055
        %v1057 = vpop.f32.mrf.mxu0
        %1058 = vmatprep.mubr.bf16.mxu0 0
        %1059 = vmatmul.mubr.bf16.gmra.mxu0 %v946
        %v1060 = vpop.f32.mrf.mxu0
        %v1061 = vadd.f32 %v843, %v1060
        %v1062 = vpop.f32.mrf.mxu0
        %v1063 = vpop.f32.mrf.mxu0
        %v1064 = vadd.f32 %v843, %v1063
        %v1065 = vpop.f32.mrf.mxu0
        %1066 = vmatprep.mubr.bf16.mxu0 0
        %1067 = vmatmul.mubr.bf16.gmra.mxu0 %v949
        %v1068 = vpop.f32.mrf.mxu0
        %v1069 = vadd.f32 %v843, %v1068
        %v1070 = vpop.f32.mrf.mxu0
        %v1071 = vpop.f32.mrf.mxu0
        %v1072 = vadd.f32 %v843, %v1071
        %v1073 = vpop.f32.mrf.mxu0
        %1074 = vmatprep.mubr.bf16.mxu0 0
        %1075 = vmatmul.mubr.bf16.gmra.mxu0 %v952
        %v1076 = vpop.f32.mrf.mxu0
        %v1077 = vadd.f32 %v843, %v1076
        %v1078 = vpop.f32.mrf.mxu0
        %v1079 = vpop.f32.mrf.mxu0
        %v1080 = vadd.f32 %v843, %v1079
        %v1081 = vpop.f32.mrf.mxu0
        %1082 = vdwg.mxu0
        %v1083 = vsub.f32 0.0, %v989
        %v1084 = vsub.f32 0.0, %v992
        %v1085 = vsub.f32 0.0, %v997
        %v1086 = vsub.f32 0.0, %v1000
        %v1087 = vsub.f32 0.0, %v1005
        %v1088 = vsub.f32 0.0, %v1008
        %v1089 = vsub.f32 0.0, %v1013
        %v1090 = vsub.f32 0.0, %v1016
        %v1091 = vsub.f32 0.0, %v1021
        %v1092 = vsub.f32 0.0, %v1024
        %v1093 = vsub.f32 0.0, %v1029
        %v1094 = vsub.f32 0.0, %v1032
        %v1095 = vsub.f32 0.0, %v1037
        %v1096 = vsub.f32 0.0, %v1040
        %v1097 = vsub.f32 0.0, %v1045
        %v1098 = vsub.f32 0.0, %v1048
        %v1099 = vsub.f32 0.0, %v1053
        %v1100 = vsub.f32 0.0, %v1056
        %v1101 = vsub.f32 0.0, %v1061
        %v1102 = vsub.f32 0.0, %v1064
        %v1103 = vsub.f32 0.0, %v1069
        %v1104 = vsub.f32 0.0, %v1072
        %v1105 = vsub.f32 0.0, %v1077
        %v1106 = vsub.f32 0.0, %v1080
        %v1107 = vmul.f32 %v1083, 1.442695
        %v1108 = vpow.pop %v1107
        %v1109 = vmul.f32 %v1084, 1.442695
        %v1110 = vpow.pop %v1109
        %v1111 = vmul.f32 %v1085, 1.442695
        %v1112 = vpow.pop %v1111
        %v1113 = vmul.f32 %v1086, 1.442695
        %v1114 = vpow.pop %v1113
        %v1115 = vmul.f32 %v1087, 1.442695
        %v1116 = vpow.pop %v1115
        %v1117 = vmul.f32 %v1088, 1.442695
        %v1118 = vpow.pop %v1117
        %v1119 = vmul.f32 %v1089, 1.442695
        %v1120 = vpow.pop %v1119
        %v1121 = vmul.f32 %v1090, 1.442695
        %v1122 = vpow.pop %v1121
        %v1123 = vmul.f32 %v1091, 1.442695
        %v1124 = vpow.pop %v1123
        %v1125 = vmul.f32 %v1092, 1.442695
        %v1126 = vpow.pop %v1125
        %v1127 = vmul.f32 %v1093, 1.442695
        %v1128 = vpow.pop %v1127
        %v1129 = vmul.f32 %v1094, 1.442695
        %v1130 = vpow.pop %v1129
        %v1131 = vmul.f32 %v1095, 1.442695
        %v1132 = vpow.pop %v1131
        %v1133 = vmul.f32 %v1096, 1.442695
        %v1134 = vpow.pop %v1133
        %v1135 = vmul.f32 %v1097, 1.442695
        %v1136 = vpow.pop %v1135
        %v1137 = vmul.f32 %v1098, 1.442695
        %v1138 = vpow.pop %v1137
        %v1139 = vmul.f32 %v1099, 1.442695
        %v1140 = vpow.pop %v1139
        %v1141 = vmul.f32 %v1100, 1.442695
        %v1142 = vpow.pop %v1141
        %v1143 = vmul.f32 %v1101, 1.442695
        %v1144 = vpow.pop %v1143
        %v1145 = vmul.f32 %v1102, 1.442695
        %v1146 = vpow.pop %v1145
        %v1147 = vmul.f32 %v1103, 1.442695
        %v1148 = vpow.pop %v1147
        %v1149 = vmul.f32 %v1104, 1.442695
        %v1150 = vpow.pop %v1149
        %v1151 = vmul.f32 %v1105, 1.442695
        %v1152 = vpow.pop %v1151
        %v1153 = vmul.f32 %v1106, 1.442695
        %v1154 = vpow.pop %v1153
        %v1155 = vadd.f32 %v1108, 1.0
        %v1156 = vadd.f32 %v1110, 1.0
        %v1157 = vadd.f32 %v1112, 1.0
        %v1158 = vadd.f32 %v1114, 1.0
        %v1159 = vadd.f32 %v1116, 1.0
        %v1160 = vadd.f32 %v1118, 1.0
        %v1161 = vadd.f32 %v1120, 1.0
        %v1162 = vadd.f32 %v1122, 1.0
        %v1163 = vadd.f32 %v1124, 1.0
        %v1164 = vadd.f32 %v1126, 1.0
        %v1165 = vadd.f32 %v1128, 1.0
        %v1166 = vadd.f32 %v1130, 1.0
        %v1167 = vadd.f32 %v1132, 1.0
        %v1168 = vadd.f32 %v1134, 1.0
        %v1169 = vadd.f32 %v1136, 1.0
        %v1170 = vadd.f32 %v1138, 1.0
        %v1171 = vadd.f32 %v1140, 1.0
        %v1172 = vadd.f32 %v1142, 1.0
        %v1173 = vadd.f32 %v1144, 1.0
        %v1174 = vadd.f32 %v1146, 1.0
        %v1175 = vadd.f32 %v1148, 1.0
        %v1176 = vadd.f32 %v1150, 1.0
        %v1177 = vadd.f32 %v1152, 1.0
        %v1178 = vadd.f32 %v1154, 1.0
        %v1179 = vrcp.pop %v1155
        %v1180 = vrcp.pop %v1156
        %v1181 = vrcp.pop %v1157
        %v1182 = vrcp.pop %v1158
        %v1183 = vrcp.pop %v1159
        %v1184 = vrcp.pop %v1160
        %v1185 = vrcp.pop %v1161
        %v1186 = vrcp.pop %v1162
        %v1187 = vrcp.pop %v1163
        %v1188 = vrcp.pop %v1164
        %v1189 = vrcp.pop %v1165
        %v1190 = vrcp.pop %v1166
        %v1191 = vrcp.pop %v1167
        %v1192 = vrcp.pop %v1168
        %v1193 = vrcp.pop %v1169
        %v1194 = vrcp.pop %v1170
        %v1195 = vrcp.pop %v1171
        %v1196 = vrcp.pop %v1172
        %v1197 = vrcp.pop %v1173
        %v1198 = vrcp.pop %v1174
        %v1199 = vrcp.pop %v1175
        %v1200 = vrcp.pop %v1176
        %v1201 = vrcp.pop %v1177
        %v1202 = vrcp.pop %v1178
        %s1203 = scalar_lea.vmem %s772, 96 [#allocation6]
        %v1204 = vld [vmem:[%s1203] sm:$0xf]
        %v1205 = vld [vmem:[%s1203 + $0x4] sm:$0xf]
        %v1206 = vld [vmem:[%s1203 + $0x8] sm:$0xf]
        %v1207 = vld [vmem:[%s1203 + $0xc] sm:$0xf]
        %v1208 = vld [vmem:[%s1203 + $0x10] sm:$0xf]
        %v1209 = vld [vmem:[%s1203 + $0x14] sm:$0xf]
        %v1210 = vld [vmem:[%s1203 + $0x18] sm:$0xf]
        %v1211 = vld [vmem:[%s1203 + $0x1c] sm:$0xf]
        %v1212 = vld [vmem:[%s1203 + $0x20] sm:$0xf]
        %v1213 = vld [vmem:[%s1203 + $0x24] sm:$0xf]
        %v1214 = vld [vmem:[%s1203 + $0x28] sm:$0xf]
        %v1215 = vld [vmem:[%s1203 + $0x2c] sm:$0xf]
        %v1216 = vld [vmem:[%s1203 + $0x30] sm:$0xf]
        %v1217 = vld [vmem:[%s1203 + $0x34] sm:$0xf]
        %v1218 = vld [vmem:[%s1203 + $0x38] sm:$0xf]
        %v1219 = vld [vmem:[%s1203 + $0x3c] sm:$0xf]
        %v1220 = vld [vmem:[%s1203 + $0x40] sm:$0xf]
        %v1221 = vld [vmem:[%s1203 + $0x44] sm:$0xf]
        %v1222 = vld [vmem:[%s1203 + $0x48] sm:$0xf]
        %v1223 = vld [vmem:[%s1203 + $0x4c] sm:$0xf]
        %v1224 = vld [vmem:[%s1203 + $0x50] sm:$0xf]
        %v1225 = vld [vmem:[%s1203 + $0x54] sm:$0xf]
        %v1226 = vld [vmem:[%s1203 + $0x58] sm:$0xf]
        %v1227 = vld [vmem:[%s1203 + $0x5c] sm:$0xf]
        %v1252 = vunpack.c.l.b16 %v1204
        %v1253 = vunpack.c.l.b16 %v1205
        %v1254 = vunpack.c.l.b16 %v1206
        %v1255 = vunpack.c.l.b16 %v1207
        %v1256 = vunpack.c.l.b16 %v1208
        %v1257 = vunpack.c.l.b16 %v1209
        %v1258 = vunpack.c.l.b16 %v1210
        %v1259 = vunpack.c.l.b16 %v1211
        %v1260 = vunpack.c.l.b16 %v1212
        %v1261 = vunpack.c.l.b16 %v1213
        %v1262 = vunpack.c.l.b16 %v1214
        %v1263 = vunpack.c.l.b16 %v1215
        %v1264 = vunpack.c.l.b16 %v1216
        %v1265 = vunpack.c.l.b16 %v1217
        %v1266 = vunpack.c.l.b16 %v1218
        %v1267 = vunpack.c.l.b16 %v1219
        %v1268 = vunpack.c.l.b16 %v1220
        %v1269 = vunpack.c.l.b16 %v1221
        %v1270 = vunpack.c.l.b16 %v1222
        %v1271 = vunpack.c.l.b16 %v1223
        %v1272 = vunpack.c.l.b16 %v1224
        %v1273 = vunpack.c.l.b16 %v1225
        %v1274 = vunpack.c.l.b16 %v1226
        %v1275 = vunpack.c.l.b16 %v1227
        %v1276 = vpack.c.b16 %v1253, %v1252
        %v1277 = vpack.c.b16 %v1255, %v1254
        %v1278 = vpack.c.b16 %v1257, %v1256
        %v1279 = vpack.c.b16 %v1259, %v1258
        %v1280 = vpack.c.b16 %v1261, %v1260
        %v1281 = vpack.c.b16 %v1263, %v1262
        %v1282 = vpack.c.b16 %v1265, %v1264
        %v1283 = vpack.c.b16 %v1267, %v1266
        %v1284 = vpack.c.b16 %v1269, %v1268
        %v1285 = vpack.c.b16 %v1271, %v1270
        %v1286 = vpack.c.b16 %v1273, %v1272
        %v1287 = vpack.c.b16 %v1275, %v1274
        %v1289 = vsel %vm917, %v1276, 0
        %v1292 = vsel %vm917, %v1277, 0
        %v1295 = vsel %vm917, %v1278, 0
        %v1298 = vsel %vm917, %v1279, 0
        %v1301 = vsel %vm917, %v1280, 0
        %v1304 = vsel %vm917, %v1281, 0
        %v1307 = vsel %vm917, %v1282, 0
        %v1310 = vsel %vm917, %v1283, 0
        %v1313 = vsel %vm917, %v1284, 0
        %v1316 = vsel %vm917, %v1285, 0
        %v1319 = vsel %vm917, %v1286, 0
        %v1322 = vsel %vm917, %v1287, 0
        %1324 = vmatprep.subr.bf16.mxu0 0
        %1325 = vmatpush1.bf16.msra.mxu0 0
        %1326 = vmatprep.subr.bf16.mxu0 0
        %1327 = vmatpush1.bf16.msra.mxu0 0
        %1328 = vmatprep.subr.bf16.mxu0 0
        %1329 = vmatpush1.bf16.msra.mxu0 0
        %1330 = vmatprep.subr.bf16.mxu0 0
        %1331 = vmatpush1.bf16.msra.mxu0 0
        %1332 = vmatprep.subr.bf16.mxu0 0
        %1333 = vmatpush1.bf16.msra.mxu0 0
        %1334 = vmatprep.subr.bf16.mxu0 0
        %1335 = vmatpush1.bf16.msra.mxu0 0
        %1336 = vmatprep.subr.bf16.mxu0 0
        %1337 = vmatpush1.bf16.msra.mxu0 %v914
        %1338 = vmatprep.subr.bf16.mxu0 0
        %1339 = vmatpush1.bf16.msra.mxu0 %v913
        %1340 = vmatprep.subr.bf16.mxu0 0
        %1341 = vmatpush2.bf16.msra.mxu0 0
        %1342 = vmatprep.subr.bf16.mxu0 0
        %1343 = vmatpush2.bf16.msra.mxu0 0
        %1344 = vmatprep.subr.bf16.mxu0 0
        %1345 = vmatpush2.bf16.msra.mxu0 0
        %1346 = vmatprep.subr.bf16.mxu0 0
        %1347 = vmatpush2.bf16.msra.mxu0 0
        %1348 = vmatprep.subr.bf16.mxu0 0
        %1349 = vmatpush2.bf16.msra.mxu0 0
        %1350 = vmatprep.subr.bf16.mxu0 0
        %1351 = vmatpush2.bf16.msra.mxu0 0
        %1352 = vmatprep.subr.bf16.mxu0 0
        %1353 = vmatpush2.bf16.msra.mxu0 0
        %1354 = vmatprep.subr.bf16.mxu0 0
        %1355 = vmatpush2.bf16.msra.mxu0 0
        %1356 = vmatprep.mubr.bf16.mxu0 0
        %1357 = vmatmul.mubr.bf16.gmra.mxu0 %v1289
        %v1358 = vpop.f32.mrf.mxu0
        %v1359 = vadd.f32 %v843, %v1358
        %v1360 = vpop.f32.mrf.mxu0
        %v1361 = vpop.f32.mrf.mxu0
        %v1362 = vadd.f32 %v843, %v1361
        %v1363 = vpop.f32.mrf.mxu0
        %1364 = vmatprep.mubr.bf16.mxu0 0
        %1365 = vmatmul.mubr.bf16.gmra.mxu0 %v1292
        %v1366 = vpop.f32.mrf.mxu0
        %v1367 = vadd.f32 %v843, %v1366
        %v1368 = vpop.f32.mrf.mxu0
        %v1369 = vpop.f32.mrf.mxu0
        %v1370 = vadd.f32 %v843, %v1369
        %v1371 = vpop.f32.mrf.mxu0
        %1372 = vmatprep.mubr.bf16.mxu0 0
        %1373 = vmatmul.mubr.bf16.gmra.mxu0 %v1295
        %v1374 = vpop.f32.mrf.mxu0
        %v1375 = vadd.f32 %v843, %v1374
        %v1376 = vpop.f32.mrf.mxu0
        %v1377 = vpop.f32.mrf.mxu0
        %v1378 = vadd.f32 %v843, %v1377
        %v1379 = vpop.f32.mrf.mxu0
        %1380 = vmatprep.mubr.bf16.mxu0 0
        %1381 = vmatmul.mubr.bf16.gmra.mxu0 %v1298
        %v1382 = vpop.f32.mrf.mxu0
        %v1383 = vadd.f32 %v843, %v1382
        %v1384 = vpop.f32.mrf.mxu0
        %v1385 = vpop.f32.mrf.mxu0
        %v1386 = vadd.f32 %v843, %v1385
        %v1387 = vpop.f32.mrf.mxu0
        %1388 = vmatprep.mubr.bf16.mxu0 0
        %1389 = vmatmul.mubr.bf16.gmra.mxu0 %v1301
        %v1390 = vpop.f32.mrf.mxu0
        %v1391 = vadd.f32 %v843, %v1390
        %v1392 = vpop.f32.mrf.mxu0
        %v1393 = vpop.f32.mrf.mxu0
        %v1394 = vadd.f32 %v843, %v1393
        %v1395 = vpop.f32.mrf.mxu0
        %1396 = vmatprep.mubr.bf16.mxu0 0
        %1397 = vmatmul.mubr.bf16.gmra.mxu0 %v1304
        %v1398 = vpop.f32.mrf.mxu0
        %v1399 = vadd.f32 %v843, %v1398
        %v1400 = vpop.f32.mrf.mxu0
        %v1401 = vpop.f32.mrf.mxu0
        %v1402 = vadd.f32 %v843, %v1401
        %v1403 = vpop.f32.mrf.mxu0
        %1404 = vmatprep.mubr.bf16.mxu0 0
        %1405 = vmatmul.mubr.bf16.gmra.mxu0 %v1307
        %v1406 = vpop.f32.mrf.mxu0
        %v1407 = vadd.f32 %v843, %v1406
        %v1408 = vpop.f32.mrf.mxu0
        %v1409 = vpop.f32.mrf.mxu0
        %v1410 = vadd.f32 %v843, %v1409
        %v1411 = vpop.f32.mrf.mxu0
        %1412 = vmatprep.mubr.bf16.mxu0 0
        %1413 = vmatmul.mubr.bf16.gmra.mxu0 %v1310
        %v1414 = vpop.f32.mrf.mxu0
        %v1415 = vadd.f32 %v843, %v1414
        %v1416 = vpop.f32.mrf.mxu0
        %v1417 = vpop.f32.mrf.mxu0
        %v1418 = vadd.f32 %v843, %v1417
        %v1419 = vpop.f32.mrf.mxu0
        %1420 = vmatprep.mubr.bf16.mxu0 0
        %1421 = vmatmul.mubr.bf16.gmra.mxu0 %v1313
        %v1422 = vpop.f32.mrf.mxu0
        %v1423 = vadd.f32 %v843, %v1422
        %v1424 = vpop.f32.mrf.mxu0
        %v1425 = vpop.f32.mrf.mxu0
        %v1426 = vadd.f32 %v843, %v1425
        %v1427 = vpop.f32.mrf.mxu0
        %1428 = vmatprep.mubr.bf16.mxu0 0
        %1429 = vmatmul.mubr.bf16.gmra.mxu0 %v1316
        %v1430 = vpop.f32.mrf.mxu0
        %v1431 = vadd.f32 %v843, %v1430
        %v1432 = vpop.f32.mrf.mxu0
        %v1433 = vpop.f32.mrf.mxu0
        %v1434 = vadd.f32 %v843, %v1433
        %v1435 = vpop.f32.mrf.mxu0
        %1436 = vmatprep.mubr.bf16.mxu0 0
        %1437 = vmatmul.mubr.bf16.gmra.mxu0 %v1319
        %v1438 = vpop.f32.mrf.mxu0
        %v1439 = vadd.f32 %v843, %v1438
        %v1440 = vpop.f32.mrf.mxu0
        %v1441 = vpop.f32.mrf.mxu0
        %v1442 = vadd.f32 %v843, %v1441
        %v1443 = vpop.f32.mrf.mxu0
        %1444 = vmatprep.mubr.bf16.mxu0 0
        %1445 = vmatmul.mubr.bf16.gmra.mxu0 %v1322
        %v1446 = vpop.f32.mrf.mxu0
        %v1447 = vadd.f32 %v843, %v1446
        %v1448 = vpop.f32.mrf.mxu0
        %v1449 = vpop.f32.mrf.mxu0
        %v1450 = vadd.f32 %v843, %v1449
        %v1451 = vpop.f32.mrf.mxu0
        %1452 = vdwg.mxu0
        %v1453 = vsub.f32 0.0, %v1359
        %v1454 = vsub.f32 0.0, %v1362
        %v1455 = vsub.f32 0.0, %v1367
        %v1456 = vsub.f32 0.0, %v1370
        %v1457 = vsub.f32 0.0, %v1375
        %v1458 = vsub.f32 0.0, %v1378
        %v1459 = vsub.f32 0.0, %v1383
        %v1460 = vsub.f32 0.0, %v1386
        %v1461 = vsub.f32 0.0, %v1391
        %v1462 = vsub.f32 0.0, %v1394
        %v1463 = vsub.f32 0.0, %v1399
        %v1464 = vsub.f32 0.0, %v1402
        %v1465 = vsub.f32 0.0, %v1407
        %v1466 = vsub.f32 0.0, %v1410
        %v1467 = vsub.f32 0.0, %v1415
        %v1468 = vsub.f32 0.0, %v1418
        %v1469 = vsub.f32 0.0, %v1423
        %v1470 = vsub.f32 0.0, %v1426
        %v1471 = vsub.f32 0.0, %v1431
        %v1472 = vsub.f32 0.0, %v1434
        %v1473 = vsub.f32 0.0, %v1439
        %v1474 = vsub.f32 0.0, %v1442
        %v1475 = vsub.f32 0.0, %v1447
        %v1476 = vsub.f32 0.0, %v1450
        %v1477 = vmul.f32 %v1453, 1.442695
        %v1478 = vpow.pop %v1477
        %v1479 = vmul.f32 %v1454, 1.442695
        %v1480 = vpow.pop %v1479
        %v1481 = vmul.f32 %v1455, 1.442695
        %v1482 = vpow.pop %v1481
        %v1483 = vmul.f32 %v1456, 1.442695
        %v1484 = vpow.pop %v1483
        %v1485 = vmul.f32 %v1457, 1.442695
        %v1486 = vpow.pop %v1485
        %v1487 = vmul.f32 %v1458, 1.442695
        %v1488 = vpow.pop %v1487
        %v1489 = vmul.f32 %v1459, 1.442695
        %v1490 = vpow.pop %v1489
        %v1491 = vmul.f32 %v1460, 1.442695
        %v1492 = vpow.pop %v1491
        %v1493 = vmul.f32 %v1461, 1.442695
        %v1494 = vpow.pop %v1493
        %v1495 = vmul.f32 %v1462, 1.442695
        %v1496 = vpow.pop %v1495
        %v1497 = vmul.f32 %v1463, 1.442695
        %v1498 = vpow.pop %v1497
        %v1499 = vmul.f32 %v1464, 1.442695
        %v1500 = vpow.pop %v1499
        %v1501 = vmul.f32 %v1465, 1.442695
        %v1502 = vpow.pop %v1501
        %v1503 = vmul.f32 %v1466, 1.442695
        %v1504 = vpow.pop %v1503
        %v1505 = vmul.f32 %v1467, 1.442695
        %v1506 = vpow.pop %v1505
        %v1507 = vmul.f32 %v1468, 1.442695
        %v1508 = vpow.pop %v1507
        %v1509 = vmul.f32 %v1469, 1.442695
        %v1510 = vpow.pop %v1509
        %v1511 = vmul.f32 %v1470, 1.442695
        %v1512 = vpow.pop %v1511
        %v1513 = vmul.f32 %v1471, 1.442695
        %v1514 = vpow.pop %v1513
        %v1515 = vmul.f32 %v1472, 1.442695
        %v1516 = vpow.pop %v1515
        %v1517 = vmul.f32 %v1473, 1.442695
        %v1518 = vpow.pop %v1517
        %v1519 = vmul.f32 %v1474, 1.442695
        %v1520 = vpow.pop %v1519
        %v1521 = vmul.f32 %v1475, 1.442695
        %v1522 = vpow.pop %v1521
        %v1523 = vmul.f32 %v1476, 1.442695
        %v1524 = vpow.pop %v1523
        %v1525 = vadd.f32 %v1478, 1.0
        %v1526 = vadd.f32 %v1480, 1.0
        %v1527 = vadd.f32 %v1482, 1.0
        %v1528 = vadd.f32 %v1484, 1.0
        %v1529 = vadd.f32 %v1486, 1.0
        %v1530 = vadd.f32 %v1488, 1.0
        %v1531 = vadd.f32 %v1490, 1.0
        %v1532 = vadd.f32 %v1492, 1.0
        %v1533 = vadd.f32 %v1494, 1.0
        %v1534 = vadd.f32 %v1496, 1.0
        %v1535 = vadd.f32 %v1498, 1.0
        %v1536 = vadd.f32 %v1500, 1.0
        %v1537 = vadd.f32 %v1502, 1.0
        %v1538 = vadd.f32 %v1504, 1.0
        %v1539 = vadd.f32 %v1506, 1.0
        %v1540 = vadd.f32 %v1508, 1.0
        %v1541 = vadd.f32 %v1510, 1.0
        %v1542 = vadd.f32 %v1512, 1.0
        %v1543 = vadd.f32 %v1514, 1.0
        %v1544 = vadd.f32 %v1516, 1.0
        %v1545 = vadd.f32 %v1518, 1.0
        %v1546 = vadd.f32 %v1520, 1.0
        %v1547 = vadd.f32 %v1522, 1.0
        %v1548 = vadd.f32 %v1524, 1.0
        %v1549 = vrcp.pop %v1525
        %v1550 = vrcp.pop %v1526
        %v1551 = vrcp.pop %v1527
        %v1552 = vrcp.pop %v1528
        %v1553 = vrcp.pop %v1529
        %v1554 = vrcp.pop %v1530
        %v1555 = vrcp.pop %v1531
        %v1556 = vrcp.pop %v1532
        %v1557 = vrcp.pop %v1533
        %v1558 = vrcp.pop %v1534
        %v1559 = vrcp.pop %v1535
        %v1560 = vrcp.pop %v1536
        %v1561 = vrcp.pop %v1537
        %v1562 = vrcp.pop %v1538
        %v1563 = vrcp.pop %v1539
        %v1564 = vrcp.pop %v1540
        %v1565 = vrcp.pop %v1541
        %v1566 = vrcp.pop %v1542
        %v1567 = vrcp.pop %v1543
        %v1568 = vrcp.pop %v1544
        %v1569 = vrcp.pop %v1545
        %v1570 = vrcp.pop %v1546
        %v1571 = vrcp.pop %v1547
        %v1572 = vrcp.pop %v1548
        %v1573 = vadd.f32 %v1179, %v1549
        %v1574 = vadd.f32 %v1180, %v1550
        %v1575 = vadd.f32 %v1181, %v1551
        %v1576 = vadd.f32 %v1182, %v1552
        %v1577 = vadd.f32 %v1183, %v1553
        %v1578 = vadd.f32 %v1184, %v1554
        %v1579 = vadd.f32 %v1185, %v1555
        %v1580 = vadd.f32 %v1186, %v1556
        %v1581 = vadd.f32 %v1187, %v1557
        %v1582 = vadd.f32 %v1188, %v1558
        %v1583 = vadd.f32 %v1189, %v1559
        %v1584 = vadd.f32 %v1190, %v1560
        %v1585 = vadd.f32 %v1191, %v1561
        %v1586 = vadd.f32 %v1192, %v1562
        %v1587 = vadd.f32 %v1193, %v1563
        %v1588 = vadd.f32 %v1194, %v1564
        %v1589 = vadd.f32 %v1195, %v1565
        %v1590 = vadd.f32 %v1196, %v1566
        %v1591 = vadd.f32 %v1197, %v1567
        %v1592 = vadd.f32 %v1198, %v1568
        %v1593 = vadd.f32 %v1199, %v1569
        %v1594 = vadd.f32 %v1200, %v1570
        %v1595 = vadd.f32 %v1201, %v1571
        %v1596 = vadd.f32 %v1202, %v1572
        %s1597 = scalar_lea.vmem %s772, 192 [#allocation6]
        %v1598 = vld [vmem:[%s1597] sm:$0xf]
        %v1599 = vld [vmem:[%s1597 + $0x4] sm:$0xf]
        %v1600 = vld [vmem:[%s1597 + $0x8] sm:$0xf]
        %v1601 = vld [vmem:[%s1597 + $0xc] sm:$0xf]
        %v1602 = vld [vmem:[%s1597 + $0x10] sm:$0xf]
        %v1603 = vld [vmem:[%s1597 + $0x14] sm:$0xf]
        %v1604 = vld [vmem:[%s1597 + $0x18] sm:$0xf]
        %v1605 = vld [vmem:[%s1597 + $0x1c] sm:$0xf]
        %v1606 = vld [vmem:[%s1597 + $0x20] sm:$0xf]
        %v1607 = vld [vmem:[%s1597 + $0x24] sm:$0xf]
        %v1608 = vld [vmem:[%s1597 + $0x28] sm:$0xf]
        %v1609 = vld [vmem:[%s1597 + $0x2c] sm:$0xf]
        %v1610 = vld [vmem:[%s1597 + $0x30] sm:$0xf]
        %v1611 = vld [vmem:[%s1597 + $0x34] sm:$0xf]
        %v1612 = vld [vmem:[%s1597 + $0x38] sm:$0xf]
        %v1613 = vld [vmem:[%s1597 + $0x3c] sm:$0xf]
        %v1614 = vld [vmem:[%s1597 + $0x40] sm:$0xf]
        %v1615 = vld [vmem:[%s1597 + $0x44] sm:$0xf]
        %v1616 = vld [vmem:[%s1597 + $0x48] sm:$0xf]
        %v1617 = vld [vmem:[%s1597 + $0x4c] sm:$0xf]
        %v1618 = vld [vmem:[%s1597 + $0x50] sm:$0xf]
        %v1619 = vld [vmem:[%s1597 + $0x54] sm:$0xf]
        %v1620 = vld [vmem:[%s1597 + $0x58] sm:$0xf]
        %v1621 = vld [vmem:[%s1597 + $0x5c] sm:$0xf]
        %v1646 = vunpack.c.l.b16 %v1598
        %v1647 = vunpack.c.l.b16 %v1599
        %v1648 = vunpack.c.l.b16 %v1600
        %v1649 = vunpack.c.l.b16 %v1601
        %v1650 = vunpack.c.l.b16 %v1602
        %v1651 = vunpack.c.l.b16 %v1603
        %v1652 = vunpack.c.l.b16 %v1604
        %v1653 = vunpack.c.l.b16 %v1605
        %v1654 = vunpack.c.l.b16 %v1606
        %v1655 = vunpack.c.l.b16 %v1607
        %v1656 = vunpack.c.l.b16 %v1608
        %v1657 = vunpack.c.l.b16 %v1609
        %v1658 = vunpack.c.l.b16 %v1610
        %v1659 = vunpack.c.l.b16 %v1611
        %v1660 = vunpack.c.l.b16 %v1612
        %v1661 = vunpack.c.l.b16 %v1613
        %v1662 = vunpack.c.l.b16 %v1614
        %v1663 = vunpack.c.l.b16 %v1615
        %v1664 = vunpack.c.l.b16 %v1616
        %v1665 = vunpack.c.l.b16 %v1617
        %v1666 = vunpack.c.l.b16 %v1618
        %v1667 = vunpack.c.l.b16 %v1619
        %v1668 = vunpack.c.l.b16 %v1620
        %v1669 = vunpack.c.l.b16 %v1621
        %v1670 = vpack.c.b16 %v1647, %v1646
        %v1671 = vpack.c.b16 %v1649, %v1648
        %v1672 = vpack.c.b16 %v1651, %v1650
        %v1673 = vpack.c.b16 %v1653, %v1652
        %v1674 = vpack.c.b16 %v1655, %v1654
        %v1675 = vpack.c.b16 %v1657, %v1656
        %v1676 = vpack.c.b16 %v1659, %v1658
        %v1677 = vpack.c.b16 %v1661, %v1660
        %v1678 = vpack.c.b16 %v1663, %v1662
        %v1679 = vpack.c.b16 %v1665, %v1664
        %v1680 = vpack.c.b16 %v1667, %v1666
        %v1681 = vpack.c.b16 %v1669, %v1668
        %v1683 = vsel %vm917, %v1670, 0
        %v1686 = vsel %vm917, %v1671, 0
        %v1689 = vsel %vm917, %v1672, 0
        %v1692 = vsel %vm917, %v1673, 0
        %v1695 = vsel %vm917, %v1674, 0
        %v1698 = vsel %vm917, %v1675, 0
        %v1701 = vsel %vm917, %v1676, 0
        %v1704 = vsel %vm917, %v1677, 0
        %v1707 = vsel %vm917, %v1678, 0
        %v1710 = vsel %vm917, %v1679, 0
        %v1713 = vsel %vm917, %v1680, 0
        %v1716 = vsel %vm917, %v1681, 0
        %1718 = vmatprep.subr.bf16.mxu0 0
        %1719 = vmatpush1.bf16.msra.mxu0 0
        %1720 = vmatprep.subr.bf16.mxu0 0
        %1721 = vmatpush1.bf16.msra.mxu0 0
        %1722 = vmatprep.subr.bf16.mxu0 0
        %1723 = vmatpush1.bf16.msra.mxu0 0
        %1724 = vmatprep.subr.bf16.mxu0 0
        %1725 = vmatpush1.bf16.msra.mxu0 0
        %1726 = vmatprep.subr.bf16.mxu0 0
        %1727 = vmatpush1.bf16.msra.mxu0 0
        %1728 = vmatprep.subr.bf16.mxu0 0
        %1729 = vmatpush1.bf16.msra.mxu0 0
        %1730 = vmatprep.subr.bf16.mxu0 0
        %1731 = vmatpush1.bf16.msra.mxu0 %v914
        %1732 = vmatprep.subr.bf16.mxu0 0
        %1733 = vmatpush1.bf16.msra.mxu0 %v913
        %1734 = vmatprep.subr.bf16.mxu0 0
        %1735 = vmatpush2.bf16.msra.mxu0 0
        %1736 = vmatprep.subr.bf16.mxu0 0
        %1737 = vmatpush2.bf16.msra.mxu0 0
        %1738 = vmatprep.subr.bf16.mxu0 0
        %1739 = vmatpush2.bf16.msra.mxu0 0
        %1740 = vmatprep.subr.bf16.mxu0 0
        %1741 = vmatpush2.bf16.msra.mxu0 0
        %1742 = vmatprep.subr.bf16.mxu0 0
        %1743 = vmatpush2.bf16.msra.mxu0 0
        %1744 = vmatprep.subr.bf16.mxu0 0
        %1745 = vmatpush2.bf16.msra.mxu0 0
        %1746 = vmatprep.subr.bf16.mxu0 0
        %1747 = vmatpush2.bf16.msra.mxu0 0
        %1748 = vmatprep.subr.bf16.mxu0 0
        %1749 = vmatpush2.bf16.msra.mxu0 0
        %1750 = vmatprep.mubr.bf16.mxu0 0
        %1751 = vmatmul.mubr.bf16.gmra.mxu0 %v1683
        %v1752 = vpop.f32.mrf.mxu0
        %v1753 = vadd.f32 %v843, %v1752
        %v1754 = vpop.f32.mrf.mxu0
        %v1755 = vpop.f32.mrf.mxu0
        %v1756 = vadd.f32 %v843, %v1755
        %v1757 = vpop.f32.mrf.mxu0
        %1758 = vmatprep.mubr.bf16.mxu0 0
        %1759 = vmatmul.mubr.bf16.gmra.mxu0 %v1686
        %v1760 = vpop.f32.mrf.mxu0
        %v1761 = vadd.f32 %v843, %v1760
        %v1762 = vpop.f32.mrf.mxu0
        %v1763 = vpop.f32.mrf.mxu0
        %v1764 = vadd.f32 %v843, %v1763
        %v1765 = vpop.f32.mrf.mxu0
        %1766 = vmatprep.mubr.bf16.mxu0 0
        %1767 = vmatmul.mubr.bf16.gmra.mxu0 %v1689
        %v1768 = vpop.f32.mrf.mxu0
        %v1769 = vadd.f32 %v843, %v1768
        %v1770 = vpop.f32.mrf.mxu0
        %v1771 = vpop.f32.mrf.mxu0
        %v1772 = vadd.f32 %v843, %v1771
        %v1773 = vpop.f32.mrf.mxu0
        %1774 = vmatprep.mubr.bf16.mxu0 0
        %1775 = vmatmul.mubr.bf16.gmra.mxu0 %v1692
        %v1776 = vpop.f32.mrf.mxu0
        %v1777 = vadd.f32 %v843, %v1776
        %v1778 = vpop.f32.mrf.mxu0
        %v1779 = vpop.f32.mrf.mxu0
        %v1780 = vadd.f32 %v843, %v1779
        %v1781 = vpop.f32.mrf.mxu0
        %1782 = vmatprep.mubr.bf16.mxu0 0
        %1783 = vmatmul.mubr.bf16.gmra.mxu0 %v1695
        %v1784 = vpop.f32.mrf.mxu0
        %v1785 = vadd.f32 %v843, %v1784
        %v1786 = vpop.f32.mrf.mxu0
        %v1787 = vpop.f32.mrf.mxu0
        %v1788 = vadd.f32 %v843, %v1787
        %v1789 = vpop.f32.mrf.mxu0
        %1790 = vmatprep.mubr.bf16.mxu0 0
        %1791 = vmatmul.mubr.bf16.gmra.mxu0 %v1698
        %v1792 = vpop.f32.mrf.mxu0
        %v1793 = vadd.f32 %v843, %v1792
        %v1794 = vpop.f32.mrf.mxu0
        %v1795 = vpop.f32.mrf.mxu0
        %v1796 = vadd.f32 %v843, %v1795
        %v1797 = vpop.f32.mrf.mxu0
        %1798 = vmatprep.mubr.bf16.mxu0 0
        %1799 = vmatmul.mubr.bf16.gmra.mxu0 %v1701
        %v1800 = vpop.f32.mrf.mxu0
        %v1801 = vadd.f32 %v843, %v1800
        %v1802 = vpop.f32.mrf.mxu0
        %v1803 = vpop.f32.mrf.mxu0
        %v1804 = vadd.f32 %v843, %v1803
        %v1805 = vpop.f32.mrf.mxu0
        %1806 = vmatprep.mubr.bf16.mxu0 0
        %1807 = vmatmul.mubr.bf16.gmra.mxu0 %v1704
        %v1808 = vpop.f32.mrf.mxu0
        %v1809 = vadd.f32 %v843, %v1808
        %v1810 = vpop.f32.mrf.mxu0
        %v1811 = vpop.f32.mrf.mxu0
        %v1812 = vadd.f32 %v843, %v1811
        %v1813 = vpop.f32.mrf.mxu0
        %1814 = vmatprep.mubr.bf16.mxu0 0
        %1815 = vmatmul.mubr.bf16.gmra.mxu0 %v1707
        %v1816 = vpop.f32.mrf.mxu0
        %v1817 = vadd.f32 %v843, %v1816
        %v1818 = vpop.f32.mrf.mxu0
        %v1819 = vpop.f32.mrf.mxu0
        %v1820 = vadd.f32 %v843, %v1819
        %v1821 = vpop.f32.mrf.mxu0
        %1822 = vmatprep.mubr.bf16.mxu0 0
        %1823 = vmatmul.mubr.bf16.gmra.mxu0 %v1710
        %v1824 = vpop.f32.mrf.mxu0
        %v1825 = vadd.f32 %v843, %v1824
        %v1826 = vpop.f32.mrf.mxu0
        %v1827 = vpop.f32.mrf.mxu0
        %v1828 = vadd.f32 %v843, %v1827
        %v1829 = vpop.f32.mrf.mxu0
        %1830 = vmatprep.mubr.bf16.mxu0 0
        %1831 = vmatmul.mubr.bf16.gmra.mxu0 %v1713
        %v1832 = vpop.f32.mrf.mxu0
        %v1833 = vadd.f32 %v843, %v1832
        %v1834 = vpop.f32.mrf.mxu0
        %v1835 = vpop.f32.mrf.mxu0
        %v1836 = vadd.f32 %v843, %v1835
        %v1837 = vpop.f32.mrf.mxu0
        %1838 = vmatprep.mubr.bf16.mxu0 0
        %1839 = vmatmul.mubr.bf16.gmra.mxu0 %v1716
        %v1840 = vpop.f32.mrf.mxu0
        %v1841 = vadd.f32 %v843, %v1840
        %v1842 = vpop.f32.mrf.mxu0
        %v1843 = vpop.f32.mrf.mxu0
        %v1844 = vadd.f32 %v843, %v1843
        %v1845 = vpop.f32.mrf.mxu0
        %1846 = vdwg.mxu0
        %v1847 = vsub.f32 0.0, %v1753
        %v1848 = vsub.f32 0.0, %v1756
        %v1849 = vsub.f32 0.0, %v1761
        %v1850 = vsub.f32 0.0, %v1764
        %v1851 = vsub.f32 0.0, %v1769
        %v1852 = vsub.f32 0.0, %v1772
        %v1853 = vsub.f32 0.0, %v1777
        %v1854 = vsub.f32 0.0, %v1780
        %v1855 = vsub.f32 0.0, %v1785
        %v1856 = vsub.f32 0.0, %v1788
        %v1857 = vsub.f32 0.0, %v1793
        %v1858 = vsub.f32 0.0, %v1796
        %v1859 = vsub.f32 0.0, %v1801
        %v1860 = vsub.f32 0.0, %v1804
        %v1861 = vsub.f32 0.0, %v1809
        %v1862 = vsub.f32 0.0, %v1812
        %v1863 = vsub.f32 0.0, %v1817
        %v1864 = vsub.f32 0.0, %v1820
        %v1865 = vsub.f32 0.0, %v1825
        %v1866 = vsub.f32 0.0, %v1828
        %v1867 = vsub.f32 0.0, %v1833
        %v1868 = vsub.f32 0.0, %v1836
        %v1869 = vsub.f32 0.0, %v1841
        %v1870 = vsub.f32 0.0, %v1844
        %v1871 = vmul.f32 %v1847, 1.442695
        %v1872 = vpow.pop %v1871
        %v1873 = vmul.f32 %v1848, 1.442695
        %v1874 = vpow.pop %v1873
        %v1875 = vmul.f32 %v1849, 1.442695
        %v1876 = vpow.pop %v1875
        %v1877 = vmul.f32 %v1850, 1.442695
        %v1878 = vpow.pop %v1877
        %v1879 = vmul.f32 %v1851, 1.442695
        %v1880 = vpow.pop %v1879
        %v1881 = vmul.f32 %v1852, 1.442695
        %v1882 = vpow.pop %v1881
        %v1883 = vmul.f32 %v1853, 1.442695
        %v1884 = vpow.pop %v1883
        %v1885 = vmul.f32 %v1854, 1.442695
        %v1886 = vpow.pop %v1885
        %v1887 = vmul.f32 %v1855, 1.442695
        %v1888 = vpow.pop %v1887
        %v1889 = vmul.f32 %v1856, 1.442695
        %v1890 = vpow.pop %v1889
        %v1891 = vmul.f32 %v1857, 1.442695
        %v1892 = vpow.pop %v1891
        %v1893 = vmul.f32 %v1858, 1.442695
        %v1894 = vpow.pop %v1893
        %v1895 = vmul.f32 %v1859, 1.442695
        %v1896 = vpow.pop %v1895
        %v1897 = vmul.f32 %v1860, 1.442695
        %v1898 = vpow.pop %v1897
        %v1899 = vmul.f32 %v1861, 1.442695
        %v1900 = vpow.pop %v1899
        %v1901 = vmul.f32 %v1862, 1.442695
        %v1902 = vpow.pop %v1901
        %v1903 = vmul.f32 %v1863, 1.442695
        %v1904 = vpow.pop %v1903
        %v1905 = vmul.f32 %v1864, 1.442695
        %v1906 = vpow.pop %v1905
        %v1907 = vmul.f32 %v1865, 1.442695
        %v1908 = vpow.pop %v1907
        %v1909 = vmul.f32 %v1866, 1.442695
        %v1910 = vpow.pop %v1909
        %v1911 = vmul.f32 %v1867, 1.442695
        %v1912 = vpow.pop %v1911
        %v1913 = vmul.f32 %v1868, 1.442695
        %v1914 = vpow.pop %v1913
        %v1915 = vmul.f32 %v1869, 1.442695
        %v1916 = vpow.pop %v1915
        %v1917 = vmul.f32 %v1870, 1.442695
        %v1918 = vpow.pop %v1917
        %v1919 = vadd.f32 %v1872, 1.0
        %v1920 = vadd.f32 %v1874, 1.0
        %v1921 = vadd.f32 %v1876, 1.0
        %v1922 = vadd.f32 %v1878, 1.0
        %v1923 = vadd.f32 %v1880, 1.0
        %v1924 = vadd.f32 %v1882, 1.0
        %v1925 = vadd.f32 %v1884, 1.0
        %v1926 = vadd.f32 %v1886, 1.0
        %v1927 = vadd.f32 %v1888, 1.0
        %v1928 = vadd.f32 %v1890, 1.0
        %v1929 = vadd.f32 %v1892, 1.0
        %v1930 = vadd.f32 %v1894, 1.0
        %v1931 = vadd.f32 %v1896, 1.0
        %v1932 = vadd.f32 %v1898, 1.0
        %v1933 = vadd.f32 %v1900, 1.0
        %v1934 = vadd.f32 %v1902, 1.0
        %v1935 = vadd.f32 %v1904, 1.0
        %v1936 = vadd.f32 %v1906, 1.0
        %v1937 = vadd.f32 %v1908, 1.0
        %v1938 = vadd.f32 %v1910, 1.0
        %v1939 = vadd.f32 %v1912, 1.0
        %v1940 = vadd.f32 %v1914, 1.0
        %v1941 = vadd.f32 %v1916, 1.0
        %v1942 = vadd.f32 %v1918, 1.0
        %v1943 = vrcp.pop %v1919
        %v1944 = vrcp.pop %v1920
        %v1945 = vrcp.pop %v1921
        %v1946 = vrcp.pop %v1922
        %v1947 = vrcp.pop %v1923
        %v1948 = vrcp.pop %v1924
        %v1949 = vrcp.pop %v1925
        %v1950 = vrcp.pop %v1926
        %v1951 = vrcp.pop %v1927
        %v1952 = vrcp.pop %v1928
        %v1953 = vrcp.pop %v1929
        %v1954 = vrcp.pop %v1930
        %v1955 = vrcp.pop %v1931
        %v1956 = vrcp.pop %v1932
        %v1957 = vrcp.pop %v1933
        %v1958 = vrcp.pop %v1934
        %v1959 = vrcp.pop %v1935
        %v1960 = vrcp.pop %v1936
        %v1961 = vrcp.pop %v1937
        %v1962 = vrcp.pop %v1938
        %v1963 = vrcp.pop %v1939
        %v1964 = vrcp.pop %v1940
        %v1965 = vrcp.pop %v1941
        %v1966 = vrcp.pop %v1942
        %v1967 = vadd.f32 %v1573, %v1943
        %v1968 = vadd.f32 %v1574, %v1944
        %v1969 = vadd.f32 %v1575, %v1945
        %v1970 = vadd.f32 %v1576, %v1946
        %v1971 = vadd.f32 %v1577, %v1947
        %v1972 = vadd.f32 %v1578, %v1948
        %v1973 = vadd.f32 %v1579, %v1949
        %v1974 = vadd.f32 %v1580, %v1950
        %v1975 = vadd.f32 %v1581, %v1951
        %v1976 = vadd.f32 %v1582, %v1952
        %v1977 = vadd.f32 %v1583, %v1953
        %v1978 = vadd.f32 %v1584, %v1954
        %v1979 = vadd.f32 %v1585, %v1955
        %v1980 = vadd.f32 %v1586, %v1956
        %v1981 = vadd.f32 %v1587, %v1957
        %v1982 = vadd.f32 %v1588, %v1958
        %v1983 = vadd.f32 %v1589, %v1959
        %v1984 = vadd.f32 %v1590, %v1960
        %v1985 = vadd.f32 %v1591, %v1961
        %v1986 = vadd.f32 %v1592, %v1962
        %v1987 = vadd.f32 %v1593, %v1963
        %v1988 = vadd.f32 %v1594, %v1964
        %v1989 = vadd.f32 %v1595, %v1965
        %v1990 = vadd.f32 %v1596, %v1966
        %s1991 = scalar_lea.vmem %s772, 288 [#allocation6]
        %v1992 = vld [vmem:[%s1991] sm:$0xf]
        %v1993 = vld [vmem:[%s1991 + $0x4] sm:$0xf]
        %v1994 = vld [vmem:[%s1991 + $0x8] sm:$0xf]
        %v1995 = vld [vmem:[%s1991 + $0xc] sm:$0xf]
        %v1996 = vld [vmem:[%s1991 + $0x10] sm:$0xf]
        %v1997 = vld [vmem:[%s1991 + $0x14] sm:$0xf]
        %v1998 = vld [vmem:[%s1991 + $0x18] sm:$0xf]
        %v1999 = vld [vmem:[%s1991 + $0x1c] sm:$0xf]
        %v2000 = vld [vmem:[%s1991 + $0x20] sm:$0xf]
        %v2001 = vld [vmem:[%s1991 + $0x24] sm:$0xf]
        %v2002 = vld [vmem:[%s1991 + $0x28] sm:$0xf]
        %v2003 = vld [vmem:[%s1991 + $0x2c] sm:$0xf]
        %v2004 = vld [vmem:[%s1991 + $0x30] sm:$0xf]
        %v2005 = vld [vmem:[%s1991 + $0x34] sm:$0xf]
        %v2006 = vld [vmem:[%s1991 + $0x38] sm:$0xf]
        %v2007 = vld [vmem:[%s1991 + $0x3c] sm:$0xf]
        %v2008 = vld [vmem:[%s1991 + $0x40] sm:$0xf]
        %v2009 = vld [vmem:[%s1991 + $0x44] sm:$0xf]
        %v2010 = vld [vmem:[%s1991 + $0x48] sm:$0xf]
        %v2011 = vld [vmem:[%s1991 + $0x4c] sm:$0xf]
        %v2012 = vld [vmem:[%s1991 + $0x50] sm:$0xf]
        %v2013 = vld [vmem:[%s1991 + $0x54] sm:$0xf]
        %v2014 = vld [vmem:[%s1991 + $0x58] sm:$0xf]
        %v2015 = vld [vmem:[%s1991 + $0x5c] sm:$0xf]
        %v2040 = vunpack.c.l.b16 %v1992
        %v2041 = vunpack.c.l.b16 %v1993
        %v2042 = vunpack.c.l.b16 %v1994
        %v2043 = vunpack.c.l.b16 %v1995
        %v2044 = vunpack.c.l.b16 %v1996
        %v2045 = vunpack.c.l.b16 %v1997
        %v2046 = vunpack.c.l.b16 %v1998
        %v2047 = vunpack.c.l.b16 %v1999
        %v2048 = vunpack.c.l.b16 %v2000
        %v2049 = vunpack.c.l.b16 %v2001
        %v2050 = vunpack.c.l.b16 %v2002
        %v2051 = vunpack.c.l.b16 %v2003
        %v2052 = vunpack.c.l.b16 %v2004
        %v2053 = vunpack.c.l.b16 %v2005
        %v2054 = vunpack.c.l.b16 %v2006
        %v2055 = vunpack.c.l.b16 %v2007
        %v2056 = vunpack.c.l.b16 %v2008
        %v2057 = vunpack.c.l.b16 %v2009
        %v2058 = vunpack.c.l.b16 %v2010
        %v2059 = vunpack.c.l.b16 %v2011
        %v2060 = vunpack.c.l.b16 %v2012
        %v2061 = vunpack.c.l.b16 %v2013
        %v2062 = vunpack.c.l.b16 %v2014
        %v2063 = vunpack.c.l.b16 %v2015
        %v2064 = vpack.c.b16 %v2041, %v2040
        %v2065 = vpack.c.b16 %v2043, %v2042
        %v2066 = vpack.c.b16 %v2045, %v2044
        %v2067 = vpack.c.b16 %v2047, %v2046
        %v2068 = vpack.c.b16 %v2049, %v2048
        %v2069 = vpack.c.b16 %v2051, %v2050
        %v2070 = vpack.c.b16 %v2053, %v2052
        %v2071 = vpack.c.b16 %v2055, %v2054
        %v2072 = vpack.c.b16 %v2057, %v2056
        %v2073 = vpack.c.b16 %v2059, %v2058
        %v2074 = vpack.c.b16 %v2061, %v2060
        %v2075 = vpack.c.b16 %v2063, %v2062
        %v2077 = vsel %vm917, %v2064, 0
        %v2080 = vsel %vm917, %v2065, 0
        %v2083 = vsel %vm917, %v2066, 0
        %v2086 = vsel %vm917, %v2067, 0
        %v2089 = vsel %vm917, %v2068, 0
        %v2092 = vsel %vm917, %v2069, 0
        %v2095 = vsel %vm917, %v2070, 0
        %v2098 = vsel %vm917, %v2071, 0
        %v2101 = vsel %vm917, %v2072, 0
        %v2104 = vsel %vm917, %v2073, 0
        %v2107 = vsel %vm917, %v2074, 0
        %v2110 = vsel %vm917, %v2075, 0
        %2112 = vmatprep.subr.bf16.mxu0 0
        %2113 = vmatpush1.bf16.msra.mxu0 0
        %2114 = vmatprep.subr.bf16.mxu0 0
        %2115 = vmatpush1.bf16.msra.mxu0 0
        %2116 = vmatprep.subr.bf16.mxu0 0
        %2117 = vmatpush1.bf16.msra.mxu0 0
        %2118 = vmatprep.subr.bf16.mxu0 0
        %2119 = vmatpush1.bf16.msra.mxu0 0
        %2120 = vmatprep.subr.bf16.mxu0 0
        %2121 = vmatpush1.bf16.msra.mxu0 0
        %2122 = vmatprep.subr.bf16.mxu0 0
        %2123 = vmatpush1.bf16.msra.mxu0 0
        %2124 = vmatprep.subr.bf16.mxu0 0
        %2125 = vmatpush1.bf16.msra.mxu0 %v914
        %2126 = vmatprep.subr.bf16.mxu0 0
        %2127 = vmatpush1.bf16.msra.mxu0 %v913
        %2128 = vmatprep.subr.bf16.mxu0 0
        %2129 = vmatpush2.bf16.msra.mxu0 0
        %2130 = vmatprep.subr.bf16.mxu0 0
        %2131 = vmatpush2.bf16.msra.mxu0 0
        %2132 = vmatprep.subr.bf16.mxu0 0
        %2133 = vmatpush2.bf16.msra.mxu0 0
        %2134 = vmatprep.subr.bf16.mxu0 0
        %2135 = vmatpush2.bf16.msra.mxu0 0
        %2136 = vmatprep.subr.bf16.mxu0 0
        %2137 = vmatpush2.bf16.msra.mxu0 0
        %2138 = vmatprep.subr.bf16.mxu0 0
        %2139 = vmatpush2.bf16.msra.mxu0 0
        %2140 = vmatprep.subr.bf16.mxu0 0
        %2141 = vmatpush2.bf16.msra.mxu0 0
        %2142 = vmatprep.subr.bf16.mxu0 0
        %2143 = vmatpush2.bf16.msra.mxu0 0
        %2144 = vmatprep.mubr.bf16.mxu0 0
        %2145 = vmatmul.mubr.bf16.gmra.mxu0 %v2077
        %v2146 = vpop.f32.mrf.mxu0
        %v2147 = vadd.f32 %v843, %v2146
        %v2148 = vpop.f32.mrf.mxu0
        %v2149 = vpop.f32.mrf.mxu0
        %v2150 = vadd.f32 %v843, %v2149
        %v2151 = vpop.f32.mrf.mxu0
        %2152 = vmatprep.mubr.bf16.mxu0 0
        %2153 = vmatmul.mubr.bf16.gmra.mxu0 %v2080
        %v2154 = vpop.f32.mrf.mxu0
        %v2155 = vadd.f32 %v843, %v2154
        %v2156 = vpop.f32.mrf.mxu0
        %v2157 = vpop.f32.mrf.mxu0
        %v2158 = vadd.f32 %v843, %v2157
        %v2159 = vpop.f32.mrf.mxu0
        %2160 = vmatprep.mubr.bf16.mxu0 0
        %2161 = vmatmul.mubr.bf16.gmra.mxu0 %v2083
        %v2162 = vpop.f32.mrf.mxu0
        %v2163 = vadd.f32 %v843, %v2162
        %v2164 = vpop.f32.mrf.mxu0
        %v2165 = vpop.f32.mrf.mxu0
        %v2166 = vadd.f32 %v843, %v2165
        %v2167 = vpop.f32.mrf.mxu0
        %2168 = vmatprep.mubr.bf16.mxu0 0
        %2169 = vmatmul.mubr.bf16.gmra.mxu0 %v2086
        %v2170 = vpop.f32.mrf.mxu0
        %v2171 = vadd.f32 %v843, %v2170
        %v2172 = vpop.f32.mrf.mxu0
        %v2173 = vpop.f32.mrf.mxu0
        %v2174 = vadd.f32 %v843, %v2173
        %v2175 = vpop.f32.mrf.mxu0
        %2176 = vmatprep.mubr.bf16.mxu0 0
        %2177 = vmatmul.mubr.bf16.gmra.mxu0 %v2089
        %v2178 = vpop.f32.mrf.mxu0
        %v2179 = vadd.f32 %v843, %v2178
        %v2180 = vpop.f32.mrf.mxu0
        %v2181 = vpop.f32.mrf.mxu0
        %v2182 = vadd.f32 %v843, %v2181
        %v2183 = vpop.f32.mrf.mxu0
        %2184 = vmatprep.mubr.bf16.mxu0 0
        %2185 = vmatmul.mubr.bf16.gmra.mxu0 %v2092
        %v2186 = vpop.f32.mrf.mxu0
        %v2187 = vadd.f32 %v843, %v2186
        %v2188 = vpop.f32.mrf.mxu0
        %v2189 = vpop.f32.mrf.mxu0
        %v2190 = vadd.f32 %v843, %v2189
        %v2191 = vpop.f32.mrf.mxu0
        %2192 = vmatprep.mubr.bf16.mxu0 0
        %2193 = vmatmul.mubr.bf16.gmra.mxu0 %v2095
        %v2194 = vpop.f32.mrf.mxu0
        %v2195 = vadd.f32 %v843, %v2194
        %v2196 = vpop.f32.mrf.mxu0
        %v2197 = vpop.f32.mrf.mxu0
        %v2198 = vadd.f32 %v843, %v2197
        %v2199 = vpop.f32.mrf.mxu0
        %2200 = vmatprep.mubr.bf16.mxu0 0
        %2201 = vmatmul.mubr.bf16.gmra.mxu0 %v2098
        %v2202 = vpop.f32.mrf.mxu0
        %v2203 = vadd.f32 %v843, %v2202
        %v2204 = vpop.f32.mrf.mxu0
        %v2205 = vpop.f32.mrf.mxu0
        %v2206 = vadd.f32 %v843, %v2205
        %v2207 = vpop.f32.mrf.mxu0
        %2208 = vmatprep.mubr.bf16.mxu0 0
        %2209 = vmatmul.mubr.bf16.gmra.mxu0 %v2101
        %v2210 = vpop.f32.mrf.mxu0
        %v2211 = vadd.f32 %v843, %v2210
        %v2212 = vpop.f32.mrf.mxu0
        %v2213 = vpop.f32.mrf.mxu0
        %v2214 = vadd.f32 %v843, %v2213
        %v2215 = vpop.f32.mrf.mxu0
        %2216 = vmatprep.mubr.bf16.mxu0 0
        %2217 = vmatmul.mubr.bf16.gmra.mxu0 %v2104
        %v2218 = vpop.f32.mrf.mxu0
        %v2219 = vadd.f32 %v843, %v2218
        %v2220 = vpop.f32.mrf.mxu0
        %v2221 = vpop.f32.mrf.mxu0
        %v2222 = vadd.f32 %v843, %v2221
        %v2223 = vpop.f32.mrf.mxu0
        %2224 = vmatprep.mubr.bf16.mxu0 0
        %2225 = vmatmul.mubr.bf16.gmra.mxu0 %v2107
        %v2226 = vpop.f32.mrf.mxu0
        %v2227 = vadd.f32 %v843, %v2226
        %v2228 = vpop.f32.mrf.mxu0
        %v2229 = vpop.f32.mrf.mxu0
        %v2230 = vadd.f32 %v843, %v2229
        %v2231 = vpop.f32.mrf.mxu0
        %2232 = vmatprep.mubr.bf16.mxu0 0
        %2233 = vmatmul.mubr.bf16.gmra.mxu0 %v2110
        %v2234 = vpop.f32.mrf.mxu0
        %v2235 = vadd.f32 %v843, %v2234
        %v2236 = vpop.f32.mrf.mxu0
        %v2237 = vpop.f32.mrf.mxu0
        %v2238 = vadd.f32 %v843, %v2237
        %v2239 = vpop.f32.mrf.mxu0
        %2240 = vdwg.mxu0
        %v2241 = vsub.f32 0.0, %v2147
        %v2242 = vsub.f32 0.0, %v2150
        %v2243 = vsub.f32 0.0, %v2155
        %v2244 = vsub.f32 0.0, %v2158
        %v2245 = vsub.f32 0.0, %v2163
        %v2246 = vsub.f32 0.0, %v2166
        %v2247 = vsub.f32 0.0, %v2171
        %v2248 = vsub.f32 0.0, %v2174
        %v2249 = vsub.f32 0.0, %v2179
        %v2250 = vsub.f32 0.0, %v2182
        %v2251 = vsub.f32 0.0, %v2187
        %v2252 = vsub.f32 0.0, %v2190
        %v2253 = vsub.f32 0.0, %v2195
        %v2254 = vsub.f32 0.0, %v2198
        %v2255 = vsub.f32 0.0, %v2203
        %v2256 = vsub.f32 0.0, %v2206
        %v2257 = vsub.f32 0.0, %v2211
        %v2258 = vsub.f32 0.0, %v2214
        %v2259 = vsub.f32 0.0, %v2219
        %v2260 = vsub.f32 0.0, %v2222
        %v2261 = vsub.f32 0.0, %v2227
        %v2262 = vsub.f32 0.0, %v2230
        %v2263 = vsub.f32 0.0, %v2235
        %v2264 = vsub.f32 0.0, %v2238
        %v2265 = vmul.f32 %v2241, 1.442695
        %v2266 = vpow.pop %v2265
        %v2267 = vmul.f32 %v2242, 1.442695
        %v2268 = vpow.pop %v2267
        %v2269 = vmul.f32 %v2243, 1.442695
        %v2270 = vpow.pop %v2269
        %v2271 = vmul.f32 %v2244, 1.442695
        %v2272 = vpow.pop %v2271
        %v2273 = vmul.f32 %v2245, 1.442695
        %v2274 = vpow.pop %v2273
        %v2275 = vmul.f32 %v2246, 1.442695
        %v2276 = vpow.pop %v2275
        %v2277 = vmul.f32 %v2247, 1.442695
        %v2278 = vpow.pop %v2277
        %v2279 = vmul.f32 %v2248, 1.442695
        %v2280 = vpow.pop %v2279
        %v2281 = vmul.f32 %v2249, 1.442695
        %v2282 = vpow.pop %v2281
        %v2283 = vmul.f32 %v2250, 1.442695
        %v2284 = vpow.pop %v2283
        %v2285 = vmul.f32 %v2251, 1.442695
        %v2286 = vpow.pop %v2285
        %v2287 = vmul.f32 %v2252, 1.442695
        %v2288 = vpow.pop %v2287
        %v2289 = vmul.f32 %v2253, 1.442695
        %v2290 = vpow.pop %v2289
        %v2291 = vmul.f32 %v2254, 1.442695
        %v2292 = vpow.pop %v2291
        %v2293 = vmul.f32 %v2255, 1.442695
        %v2294 = vpow.pop %v2293
        %v2295 = vmul.f32 %v2256, 1.442695
        %v2296 = vpow.pop %v2295
        %v2297 = vmul.f32 %v2257, 1.442695
        %v2298 = vpow.pop %v2297
        %v2299 = vmul.f32 %v2258, 1.442695
        %v2300 = vpow.pop %v2299
        %v2301 = vmul.f32 %v2259, 1.442695
        %v2302 = vpow.pop %v2301
        %v2303 = vmul.f32 %v2260, 1.442695
        %v2304 = vpow.pop %v2303
        %v2305 = vmul.f32 %v2261, 1.442695
        %v2306 = vpow.pop %v2305
        %v2307 = vmul.f32 %v2262, 1.442695
        %v2308 = vpow.pop %v2307
        %v2309 = vmul.f32 %v2263, 1.442695
        %v2310 = vpow.pop %v2309
        %v2311 = vmul.f32 %v2264, 1.442695
        %v2312 = vpow.pop %v2311
        %v2313 = vadd.f32 %v2266, 1.0
        %v2314 = vadd.f32 %v2268, 1.0
        %v2315 = vadd.f32 %v2270, 1.0
        %v2316 = vadd.f32 %v2272, 1.0
        %v2317 = vadd.f32 %v2274, 1.0
        %v2318 = vadd.f32 %v2276, 1.0
        %v2319 = vadd.f32 %v2278, 1.0
        %v2320 = vadd.f32 %v2280, 1.0
        %v2321 = vadd.f32 %v2282, 1.0
        %v2322 = vadd.f32 %v2284, 1.0
        %v2323 = vadd.f32 %v2286, 1.0
        %v2324 = vadd.f32 %v2288, 1.0
        %v2325 = vadd.f32 %v2290, 1.0
        %v2326 = vadd.f32 %v2292, 1.0
        %v2327 = vadd.f32 %v2294, 1.0
        %v2328 = vadd.f32 %v2296, 1.0
        %v2329 = vadd.f32 %v2298, 1.0
        %v2330 = vadd.f32 %v2300, 1.0
        %v2331 = vadd.f32 %v2302, 1.0
        %v2332 = vadd.f32 %v2304, 1.0
        %v2333 = vadd.f32 %v2306, 1.0
        %v2334 = vadd.f32 %v2308, 1.0
        %v2335 = vadd.f32 %v2310, 1.0
        %v2336 = vadd.f32 %v2312, 1.0
        %v2337 = vrcp.pop %v2313
        %v2338 = vrcp.pop %v2314
        %v2339 = vrcp.pop %v2315
        %v2340 = vrcp.pop %v2316
        %v2341 = vrcp.pop %v2317
        %v2342 = vrcp.pop %v2318
        %v2343 = vrcp.pop %v2319
        %v2344 = vrcp.pop %v2320
        %v2345 = vrcp.pop %v2321
        %v2346 = vrcp.pop %v2322
        %v2347 = vrcp.pop %v2323
        %v2348 = vrcp.pop %v2324
        %v2349 = vrcp.pop %v2325
        %v2350 = vrcp.pop %v2326
        %v2351 = vrcp.pop %v2327
        %v2352 = vrcp.pop %v2328
        %v2353 = vrcp.pop %v2329
        %v2354 = vrcp.pop %v2330
        %v2355 = vrcp.pop %v2331
        %v2356 = vrcp.pop %v2332
        %v2357 = vrcp.pop %v2333
        %v2358 = vrcp.pop %v2334
        %v2359 = vrcp.pop %v2335
        %v2360 = vrcp.pop %v2336
        %v2361 = vadd.f32 %v1967, %v2337
        %v2362 = vadd.f32 %v1968, %v2338
        %v2363 = vadd.f32 %v1969, %v2339
        %v2364 = vadd.f32 %v1970, %v2340
        %v2365 = vadd.f32 %v1971, %v2341
        %v2366 = vadd.f32 %v1972, %v2342
        %v2367 = vadd.f32 %v1973, %v2343
        %v2368 = vadd.f32 %v1974, %v2344
        %v2369 = vadd.f32 %v1975, %v2345
        %v2370 = vadd.f32 %v1976, %v2346
        %v2371 = vadd.f32 %v1977, %v2347
        %v2372 = vadd.f32 %v1978, %v2348
        %v2373 = vadd.f32 %v1979, %v2349
        %v2374 = vadd.f32 %v1980, %v2350
        %v2375 = vadd.f32 %v1981, %v2351
        %v2376 = vadd.f32 %v1982, %v2352
        %v2377 = vadd.f32 %v1983, %v2353
        %v2378 = vadd.f32 %v1984, %v2354
        %v2379 = vadd.f32 %v1985, %v2355
        %v2380 = vadd.f32 %v1986, %v2356
        %v2381 = vadd.f32 %v1987, %v2357
        %v2382 = vadd.f32 %v1988, %v2358
        %v2383 = vadd.f32 %v1989, %v2359
        %v2384 = vadd.f32 %v1990, %v2360
        %v2385 = vmul.f32 %v2361, 0.25
        %v2386 = vmul.f32 %v2362, 0.25
        %v2387 = vmul.f32 %v2363, 0.25
        %v2388 = vmul.f32 %v2364, 0.25
        %v2389 = vmul.f32 %v2365, 0.25
        %v2390 = vmul.f32 %v2366, 0.25
        %v2391 = vmul.f32 %v2367, 0.25
        %v2392 = vmul.f32 %v2368, 0.25
        %v2393 = vmul.f32 %v2369, 0.25
        %v2394 = vmul.f32 %v2370, 0.25
        %v2395 = vmul.f32 %v2371, 0.25
        %v2396 = vmul.f32 %v2372, 0.25
        %v2397 = vmul.f32 %v2373, 0.25
        %v2398 = vmul.f32 %v2374, 0.25
        %v2399 = vmul.f32 %v2375, 0.25
        %v2400 = vmul.f32 %v2376, 0.25
        %v2401 = vmul.f32 %v2377, 0.25
        %v2402 = vmul.f32 %v2378, 0.25
        %v2403 = vmul.f32 %v2379, 0.25
        %v2404 = vmul.f32 %v2380, 0.25
        %v2405 = vmul.f32 %v2381, 0.25
        %v2406 = vmul.f32 %v2382, 0.25
        %v2407 = vmul.f32 %v2383, 0.25
        %v2408 = vmul.f32 %v2384, 0.25
        %2409 = vst [vmem:[#allocation2] sm:$0xff] %v2385
        %2410 = vst [vmem:[#allocation2 + $0x8] sm:$0xff] %v2386
        %2411 = vst [vmem:[#allocation2 + $0x10] sm:$0xff] %v2387
        %2412 = vst [vmem:[#allocation2 + $0x18] sm:$0xff] %v2388
        %2413 = vst [vmem:[#allocation2 + $0x20] sm:$0xff] %v2389
        %2414 = vst [vmem:[#allocation2 + $0x28] sm:$0xff] %v2390
        %2415 = vst [vmem:[#allocation2 + $0x30] sm:$0xff] %v2391
        %2416 = vst [vmem:[#allocation2 + $0x38] sm:$0xff] %v2392
        %2417 = vst [vmem:[#allocation2 + $0x40] sm:$0xff] %v2393
        %2418 = vst [vmem:[#allocation2 + $0x48] sm:$0xff] %v2394
        %2419 = vst [vmem:[#allocation2 + $0x50] sm:$0xff] %v2395
        %2420 = vst [vmem:[#allocation2 + $0x58] sm:$0xff] %v2396
        %2421 = vst [vmem:[#allocation2 + $0x60] sm:$0xff] %v2397
        %2422 = vst [vmem:[#allocation2 + $0x68] sm:$0xff] %v2398
        %2423 = vst [vmem:[#allocation2 + $0x70] sm:$0xff] %v2399
        %2424 = vst [vmem:[#allocation2 + $0x78] sm:$0xff] %v2400
        %2425 = vst [vmem:[#allocation2 + $0x80] sm:$0xff] %v2401
        %2426 = vst [vmem:[#allocation2 + $0x88] sm:$0xff] %v2402
        %2427 = vst [vmem:[#allocation2 + $0x90] sm:$0xff] %v2403
        %2428 = vst [vmem:[#allocation2 + $0x98] sm:$0xff] %v2404
        %2429 = vst [vmem:[#allocation2 + $0xa0] sm:$0xff] %v2405
        %2430 = vst [vmem:[#allocation2 + $0xa8] sm:$0xff] %v2406
        %2431 = vst [vmem:[#allocation2 + $0xb0] sm:$0xff] %v2407
        %2432 = vst [vmem:[#allocation2 + $0xb8] sm:$0xff] %v2408
        %v2433 = vld [vmem:[#allocation2] sm:$0xff]
        %v2434 = vld [vmem:[#allocation2 + $0x10] sm:$0xff]
        %v2435 = vld [vmem:[#allocation2 + $0x20] sm:$0xff]
        %v2436 = vld [vmem:[#allocation2 + $0x30] sm:$0xff]
        %v2437 = vld [vmem:[#allocation2 + $0x40] sm:$0xff]
        %v2438 = vld [vmem:[#allocation2 + $0x50] sm:$0xff]
        %v2439 = vld [vmem:[#allocation2 + $0x60] sm:$0xff]
        %v2440 = vld [vmem:[#allocation2 + $0x70] sm:$0xff]
        %v2441 = vpack.c.bf16 %v2434, %v2433
        %v2442 = vpack.c.bf16 %v2436, %v2435
        %v2443 = vpack.c.bf16 %v2438, %v2437
        %v2444 = vpack.c.bf16 %v2440, %v2439
        %v2449 = vunpack.c.l.b16 %v2441
        %v2450 = vunpack.c.h.b16 %v2441
        %v2451 = vunpack.c.l.b16 %v2442
        %v2452 = vunpack.c.h.b16 %v2442
        %v2453 = vunpack.c.l.b16 %v2443
        %v2454 = vunpack.c.h.b16 %v2443
        %v2455 = vunpack.c.l.b16 %v2444
        %v2456 = vunpack.c.h.b16 %v2444
        %v2457 = vpack.c.b16 %v2449, %v2449
        %v2458 = vpack.c.b16 %v2450, %v2450
        %v2459 = vpack.c.b16 %v2451, %v2451
        %v2460 = vpack.c.b16 %v2452, %v2452
        %v2461 = vpack.c.b16 %v2453, %v2453
        %v2462 = vpack.c.b16 %v2454, %v2454
        %v2463 = vpack.c.b16 %v2455, %v2455
        %v2464 = vpack.c.b16 %v2456, %v2456
        %2473 = vst [vmem:[#allocation3] sm:$0xf] %v2457
        %2474 = vst [vmem:[#allocation3 + $0x64] sm:$0xf] %v2458
        %2475 = vst [vmem:[#allocation3 + $0xc8] sm:$0xf] %v2459
        %2476 = vst [vmem:[#allocation3 + $0x12c] sm:$0xf] %v2460
        %2477 = vst [vmem:[#allocation3 + $0x190] sm:$0xf] %v2461
        %2478 = vst [vmem:[#allocation3 + $0x1f4] sm:$0xf] %v2462
        %2479 = vst [vmem:[#allocation3 + $0x258] sm:$0xf] %v2463
        %2480 = vst [vmem:[#allocation3 + $0x2bc] sm:$0xf] %v2464
        %v2481 = vld [vmem:[#allocation2 + $0x1] sm:$0xff]
        %v2482 = vld [vmem:[#allocation2 + $0x11] sm:$0xff]
        %v2483 = vld [vmem:[#allocation2 + $0x21] sm:$0xff]
        %v2484 = vld [vmem:[#allocation2 + $0x31] sm:$0xff]
        %v2485 = vld [vmem:[#allocation2 + $0x41] sm:$0xff]
        %v2486 = vld [vmem:[#allocation2 + $0x51] sm:$0xff]
        %v2487 = vld [vmem:[#allocation2 + $0x61] sm:$0xff]
        %v2488 = vld [vmem:[#allocation2 + $0x71] sm:$0xff]
        %v2489 = vpack.c.bf16 %v2482, %v2481
        %v2490 = vpack.c.bf16 %v2484, %v2483
        %v2491 = vpack.c.bf16 %v2486, %v2485
        %v2492 = vpack.c.bf16 %v2488, %v2487
        %v2497 = vunpack.c.l.b16 %v2489
        %v2498 = vunpack.c.h.b16 %v2489
        %v2499 = vunpack.c.l.b16 %v2490
        %v2500 = vunpack.c.h.b16 %v2490
        %v2501 = vunpack.c.l.b16 %v2491
        %v2502 = vunpack.c.h.b16 %v2491
        %v2503 = vunpack.c.l.b16 %v2492
        %v2504 = vunpack.c.h.b16 %v2492
        %v2505 = vpack.c.b16 %v2497, %v2497
        %v2506 = vpack.c.b16 %v2498, %v2498
        %v2507 = vpack.c.b16 %v2499, %v2499
        %v2508 = vpack.c.b16 %v2500, %v2500
        %v2509 = vpack.c.b16 %v2501, %v2501
        %v2510 = vpack.c.b16 %v2502, %v2502
        %v2511 = vpack.c.b16 %v2503, %v2503
        %v2512 = vpack.c.b16 %v2504, %v2504
        %2521 = vst [vmem:[#allocation3 + $0x4] sm:$0xf] %v2505
        %2522 = vst [vmem:[#allocation3 + $0x68] sm:$0xf] %v2506
        %2523 = vst [vmem:[#allocation3 + $0xcc] sm:$0xf] %v2507
        %2524 = vst [vmem:[#allocation3 + $0x130] sm:$0xf] %v2508
        %2525 = vst [vmem:[#allocation3 + $0x194] sm:$0xf] %v2509
        %2526 = vst [vmem:[#allocation3 + $0x1f8] sm:$0xf] %v2510
        %2527 = vst [vmem:[#allocation3 + $0x25c] sm:$0xf] %v2511
        %2528 = vst [vmem:[#allocation3 + $0x2c0] sm:$0xf] %v2512
        %v2529 = vld [vmem:[#allocation2 + $0x2] sm:$0xff]
        %v2530 = vld [vmem:[#allocation2 + $0x12] sm:$0xff]
        %v2531 = vld [vmem:[#allocation2 + $0x22] sm:$0xff]
        %v2532 = vld [vmem:[#allocation2 + $0x32] sm:$0xff]
        %v2533 = vld [vmem:[#allocation2 + $0x42] sm:$0xff]
        %v2534 = vld [vmem:[#allocation2 + $0x52] sm:$0xff]
        %v2535 = vld [vmem:[#allocation2 + $0x62] sm:$0xff]
        %v2536 = vld [vmem:[#allocation2 + $0x72] sm:$0xff]
        %v2537 = vpack.c.bf16 %v2530, %v2529
        %v2538 = vpack.c.bf16 %v2532, %v2531
        %v2539 = vpack.c.bf16 %v2534, %v2533
        %v2540 = vpack.c.bf16 %v2536, %v2535
        %v2545 = vunpack.c.l.b16 %v2537
        %v2546 = vunpack.c.h.b16 %v2537
        %v2547 = vunpack.c.l.b16 %v2538
        %v2548 = vunpack.c.h.b16 %v2538
        %v2549 = vunpack.c.l.b16 %v2539
        %v2550 = vunpack.c.h.b16 %v2539
        %v2551 = vunpack.c.l.b16 %v2540
        %v2552 = vunpack.c.h.b16 %v2540
        %v2553 = vpack.c.b16 %v2545, %v2545
        %v2554 = vpack.c.b16 %v2546, %v2546
        %v2555 = vpack.c.b16 %v2547, %v2547
        %v2556 = vpack.c.b16 %v2548, %v2548
        %v2557 = vpack.c.b16 %v2549, %v2549
        %v2558 = vpack.c.b16 %v2550, %v2550
        %v2559 = vpack.c.b16 %v2551, %v2551
        %v2560 = vpack.c.b16 %v2552, %v2552
        %2569 = vst [vmem:[#allocation3 + $0x8] sm:$0xf] %v2553
        %2570 = vst [vmem:[#allocation3 + $0x6c] sm:$0xf] %v2554
        %2571 = vst [vmem:[#allocation3 + $0xd0] sm:$0xf] %v2555
        %2572 = vst [vmem:[#allocation3 + $0x134] sm:$0xf] %v2556
        %2573 = vst [vmem:[#allocation3 + $0x198] sm:$0xf] %v2557
        %2574 = vst [vmem:[#allocation3 + $0x1fc] sm:$0xf] %v2558
        %2575 = vst [vmem:[#allocation3 + $0x260] sm:$0xf] %v2559
        %2576 = vst [vmem:[#allocation3 + $0x2c4] sm:$0xf] %v2560
        %v2577 = vld [vmem:[#allocation2 + $0x3] sm:$0xff]
        %v2578 = vld [vmem:[#allocation2 + $0x13] sm:$0xff]
        %v2579 = vld [vmem:[#allocation2 + $0x23] sm:$0xff]
        %v2580 = vld [vmem:[#allocation2 + $0x33] sm:$0xff]
        %v2581 = vld [vmem:[#allocation2 + $0x43] sm:$0xff]
        %v2582 = vld [vmem:[#allocation2 + $0x53] sm:$0xff]
        %v2583 = vld [vmem:[#allocation2 + $0x63] sm:$0xff]
        %v2584 = vld [vmem:[#allocation2 + $0x73] sm:$0xff]
        %v2585 = vpack.c.bf16 %v2578, %v2577
        %v2586 = vpack.c.bf16 %v2580, %v2579
        %v2587 = vpack.c.bf16 %v2582, %v2581
        %v2588 = vpack.c.bf16 %v2584, %v2583
        %v2593 = vunpack.c.l.b16 %v2585
        %v2594 = vunpack.c.h.b16 %v2585
        %v2595 = vunpack.c.l.b16 %v2586
        %v2596 = vunpack.c.h.b16 %v2586
        %v2597 = vunpack.c.l.b16 %v2587
        %v2598 = vunpack.c.h.b16 %v2587
        %v2599 = vunpack.c.l.b16 %v2588
        %v2600 = vunpack.c.h.b16 %v2588
        %v2601 = vpack.c.b16 %v2593, %v2593
        %v2602 = vpack.c.b16 %v2594, %v2594
        %v2603 = vpack.c.b16 %v2595, %v2595
        %v2604 = vpack.c.b16 %v2596, %v2596
        %v2605 = vpack.c.b16 %v2597, %v2597
        %v2606 = vpack.c.b16 %v2598, %v2598
        %v2607 = vpack.c.b16 %v2599, %v2599
        %v2608 = vpack.c.b16 %v2600, %v2600
        %2617 = vst [vmem:[#allocation3 + $0xc] sm:$0xf] %v2601
        %2618 = vst [vmem:[#allocation3 + $0x70] sm:$0xf] %v2602
        %2619 = vst [vmem:[#allocation3 + $0xd4] sm:$0xf] %v2603
        %2620 = vst [vmem:[#allocation3 + $0x138] sm:$0xf] %v2604
        %2621 = vst [vmem:[#allocation3 + $0x19c] sm:$0xf] %v2605
        %2622 = vst [vmem:[#allocation3 + $0x200] sm:$0xf] %v2606
        %2623 = vst [vmem:[#allocation3 + $0x264] sm:$0xf] %v2607
        %2624 = vst [vmem:[#allocation3 + $0x2c8] sm:$0xf] %v2608
        %v2625 = vld [vmem:[#allocation2 + $0x4] sm:$0xff]
        %v2626 = vld [vmem:[#allocation2 + $0x14] sm:$0xff]
        %v2627 = vld [vmem:[#allocation2 + $0x24] sm:$0xff]
        %v2628 = vld [vmem:[#allocation2 + $0x34] sm:$0xff]
        %v2629 = vld [vmem:[#allocation2 + $0x44] sm:$0xff]
        %v2630 = vld [vmem:[#allocation2 + $0x54] sm:$0xff]
        %v2631 = vld [vmem:[#allocation2 + $0x64] sm:$0xff]
        %v2632 = vld [vmem:[#allocation2 + $0x74] sm:$0xff]
        %v2633 = vpack.c.bf16 %v2626, %v2625
        %v2634 = vpack.c.bf16 %v2628, %v2627
        %v2635 = vpack.c.bf16 %v2630, %v2629
        %v2636 = vpack.c.bf16 %v2632, %v2631
        %v2641 = vunpack.c.l.b16 %v2633
        %v2642 = vunpack.c.h.b16 %v2633
        %v2643 = vunpack.c.l.b16 %v2634
        %v2644 = vunpack.c.h.b16 %v2634
        %v2645 = vunpack.c.l.b16 %v2635
        %v2646 = vunpack.c.h.b16 %v2635
        %v2647 = vunpack.c.l.b16 %v2636
        %v2648 = vunpack.c.h.b16 %v2636
        %v2649 = vpack.c.b16 %v2641, %v2641
        %v2650 = vpack.c.b16 %v2642, %v2642
        %v2651 = vpack.c.b16 %v2643, %v2643
        %v2652 = vpack.c.b16 %v2644, %v2644
        %v2653 = vpack.c.b16 %v2645, %v2645
        %v2654 = vpack.c.b16 %v2646, %v2646
        %v2655 = vpack.c.b16 %v2647, %v2647
        %v2656 = vpack.c.b16 %v2648, %v2648
        %2665 = vst [vmem:[#allocation3 + $0x10] sm:$0xf] %v2649
        %2666 = vst [vmem:[#allocation3 + $0x74] sm:$0xf] %v2650
        %2667 = vst [vmem:[#allocation3 + $0xd8] sm:$0xf] %v2651
        %2668 = vst [vmem:[#allocation3 + $0x13c] sm:$0xf] %v2652
        %2669 = vst [vmem:[#allocation3 + $0x1a0] sm:$0xf] %v2653
        %2670 = vst [vmem:[#allocation3 + $0x204] sm:$0xf] %v2654
        %2671 = vst [vmem:[#allocation3 + $0x268] sm:$0xf] %v2655
        %2672 = vst [vmem:[#allocation3 + $0x2cc] sm:$0xf] %v2656
        %s2673 = scalar_lea.vmem [#allocation2], 16
        %v2674 = vld [vmem:[%s2673] sm:$0xff]
        %v2675 = vld [vmem:[%s2673 + $0x10] sm:$0xff]
        %v2676 = vld [vmem:[%s2673 + $0x20] sm:$0xff]
        %v2677 = vld [vmem:[%s2673 + $0x30] sm:$0xff]
        %v2678 = vld [vmem:[%s2673 + $0x40] sm:$0xff]
        %v2679 = vld [vmem:[%s2673 + $0x50] sm:$0xff]
        %v2680 = vld [vmem:[%s2673 + $0x60] sm:$0xff]
        %v2681 = vld [vmem:[%s2673 + $0x70] sm:$0xff]
        %v2682 = vpack.c.bf16 %v2675, %v2674
        %v2683 = vpack.c.bf16 %v2677, %v2676
        %v2684 = vpack.c.bf16 %v2679, %v2678
        %v2685 = vpack.c.bf16 %v2681, %v2680
        %v2690 = vunpack.c.l.b16 %v2682
        %v2691 = vunpack.c.h.b16 %v2682
        %v2692 = vunpack.c.l.b16 %v2683
        %v2693 = vunpack.c.h.b16 %v2683
        %v2694 = vunpack.c.l.b16 %v2684
        %v2695 = vunpack.c.h.b16 %v2684
        %v2696 = vunpack.c.l.b16 %v2685
        %v2697 = vunpack.c.h.b16 %v2685
        %v2698 = vpack.c.b16 %v2690, %v2690
        %v2699 = vpack.c.b16 %v2691, %v2691
        %v2700 = vpack.c.b16 %v2692, %v2692
        %v2701 = vpack.c.b16 %v2693, %v2693
        %v2702 = vpack.c.b16 %v2694, %v2694
        %v2703 = vpack.c.b16 %v2695, %v2695
        %v2704 = vpack.c.b16 %v2696, %v2696
        %v2705 = vpack.c.b16 %v2697, %v2697
        %2714 = vst [vmem:[#allocation3 + $0x14] sm:$0xf] %v2698
        %2715 = vst [vmem:[#allocation3 + $0x78] sm:$0xf] %v2699
        %2716 = vst [vmem:[#allocation3 + $0xdc] sm:$0xf] %v2700
        %2717 = vst [vmem:[#allocation3 + $0x140] sm:$0xf] %v2701
        %2718 = vst [vmem:[#allocation3 + $0x1a4] sm:$0xf] %v2702
        %2719 = vst [vmem:[#allocation3 + $0x208] sm:$0xf] %v2703
        %2720 = vst [vmem:[#allocation3 + $0x26c] sm:$0xf] %v2704
        %2721 = vst [vmem:[#allocation3 + $0x2d0] sm:$0xf] %v2705
        %v2722 = vld [vmem:[%s2673 + $0x1] sm:$0xff]
        %v2723 = vld [vmem:[%s2673 + $0x11] sm:$0xff]
        %v2724 = vld [vmem:[%s2673 + $0x21] sm:$0xff]
        %v2725 = vld [vmem:[%s2673 + $0x31] sm:$0xff]
        %v2726 = vld [vmem:[%s2673 + $0x41] sm:$0xff]
        %v2727 = vld [vmem:[%s2673 + $0x51] sm:$0xff]
        %v2728 = vld [vmem:[%s2673 + $0x61] sm:$0xff]
        %v2729 = vld [vmem:[%s2673 + $0x71] sm:$0xff]
        %v2730 = vpack.c.bf16 %v2723, %v2722
        %v2731 = vpack.c.bf16 %v2725, %v2724
        %v2732 = vpack.c.bf16 %v2727, %v2726
        %v2733 = vpack.c.bf16 %v2729, %v2728
        %v2738 = vunpack.c.l.b16 %v2730
        %v2739 = vunpack.c.h.b16 %v2730
        %v2740 = vunpack.c.l.b16 %v2731
        %v2741 = vunpack.c.h.b16 %v2731
        %v2742 = vunpack.c.l.b16 %v2732
        %v2743 = vunpack.c.h.b16 %v2732
        %v2744 = vunpack.c.l.b16 %v2733
        %v2745 = vunpack.c.h.b16 %v2733
        %v2746 = vpack.c.b16 %v2738, %v2738
        %v2747 = vpack.c.b16 %v2739, %v2739
        %v2748 = vpack.c.b16 %v2740, %v2740
        %v2749 = vpack.c.b16 %v2741, %v2741
        %v2750 = vpack.c.b16 %v2742, %v2742
        %v2751 = vpack.c.b16 %v2743, %v2743
        %v2752 = vpack.c.b16 %v2744, %v2744
        %v2753 = vpack.c.b16 %v2745, %v2745
        %2762 = vst [vmem:[#allocation3 + $0x18] sm:$0xf] %v2746
        %2763 = vst [vmem:[#allocation3 + $0x7c] sm:$0xf] %v2747
        %2764 = vst [vmem:[#allocation3 + $0xe0] sm:$0xf] %v2748
        %2765 = vst [vmem:[#allocation3 + $0x144] sm:$0xf] %v2749
        %2766 = vst [vmem:[#allocation3 + $0x1a8] sm:$0xf] %v2750
        %2767 = vst [vmem:[#allocation3 + $0x20c] sm:$0xf] %v2751
        %2768 = vst [vmem:[#allocation3 + $0x270] sm:$0xf] %v2752
        %2769 = vst [vmem:[#allocation3 + $0x2d4] sm:$0xf] %v2753
        %v2770 = vld [vmem:[%s2673 + $0x2] sm:$0xff]
        %v2771 = vld [vmem:[%s2673 + $0x12] sm:$0xff]
        %v2772 = vld [vmem:[%s2673 + $0x22] sm:$0xff]
        %v2773 = vld [vmem:[%s2673 + $0x32] sm:$0xff]
        %v2774 = vld [vmem:[%s2673 + $0x42] sm:$0xff]
        %v2775 = vld [vmem:[%s2673 + $0x52] sm:$0xff]
        %v2776 = vld [vmem:[%s2673 + $0x62] sm:$0xff]
        %v2777 = vld [vmem:[%s2673 + $0x72] sm:$0xff]
        %v2778 = vpack.c.bf16 %v2771, %v2770
        %v2779 = vpack.c.bf16 %v2773, %v2772
        %v2780 = vpack.c.bf16 %v2775, %v2774
        %v2781 = vpack.c.bf16 %v2777, %v2776
        %v2786 = vunpack.c.l.b16 %v2778
        %v2787 = vunpack.c.h.b16 %v2778
        %v2788 = vunpack.c.l.b16 %v2779
        %v2789 = vunpack.c.h.b16 %v2779
        %v2790 = vunpack.c.l.b16 %v2780
        %v2791 = vunpack.c.h.b16 %v2780
        %v2792 = vunpack.c.l.b16 %v2781
        %v2793 = vunpack.c.h.b16 %v2781
        %v2794 = vpack.c.b16 %v2786, %v2786
        %v2795 = vpack.c.b16 %v2787, %v2787
        %v2796 = vpack.c.b16 %v2788, %v2788
        %v2797 = vpack.c.b16 %v2789, %v2789
        %v2798 = vpack.c.b16 %v2790, %v2790
        %v2799 = vpack.c.b16 %v2791, %v2791
        %v2800 = vpack.c.b16 %v2792, %v2792
        %v2801 = vpack.c.b16 %v2793, %v2793
        %2810 = vst [vmem:[#allocation3 + $0x1c] sm:$0xf] %v2794
        %2811 = vst [vmem:[#allocation3 + $0x80] sm:$0xf] %v2795
        %2812 = vst [vmem:[#allocation3 + $0xe4] sm:$0xf] %v2796
        %2813 = vst [vmem:[#allocation3 + $0x148] sm:$0xf] %v2797
        %2814 = vst [vmem:[#allocation3 + $0x1ac] sm:$0xf] %v2798
        %2815 = vst [vmem:[#allocation3 + $0x210] sm:$0xf] %v2799
        %2816 = vst [vmem:[#allocation3 + $0x274] sm:$0xf] %v2800
        %2817 = vst [vmem:[#allocation3 + $0x2d8] sm:$0xf] %v2801
        %v2818 = vld [vmem:[%s2673 + $0x3] sm:$0xff]
        %v2819 = vld [vmem:[%s2673 + $0x13] sm:$0xff]
        %v2820 = vld [vmem:[%s2673 + $0x23] sm:$0xff]
        %v2821 = vld [vmem:[%s2673 + $0x33] sm:$0xff]
        %v2822 = vld [vmem:[%s2673 + $0x43] sm:$0xff]
        %v2823 = vld [vmem:[%s2673 + $0x53] sm:$0xff]
        %v2824 = vld [vmem:[%s2673 + $0x63] sm:$0xff]
        %v2825 = vld [vmem:[%s2673 + $0x73] sm:$0xff]
        %v2826 = vpack.c.bf16 %v2819, %v2818
        %v2827 = vpack.c.bf16 %v2821, %v2820
        %v2828 = vpack.c.bf16 %v2823, %v2822
        %v2829 = vpack.c.bf16 %v2825, %v2824
        %v2834 = vunpack.c.l.b16 %v2826
        %v2835 = vunpack.c.h.b16 %v2826
        %v2836 = vunpack.c.l.b16 %v2827
        %v2837 = vunpack.c.h.b16 %v2827
        %v2838 = vunpack.c.l.b16 %v2828
        %v2839 = vunpack.c.h.b16 %v2828
        %v2840 = vunpack.c.l.b16 %v2829
        %v2841 = vunpack.c.h.b16 %v2829
        %v2842 = vpack.c.b16 %v2834, %v2834
        %v2843 = vpack.c.b16 %v2835, %v2835
        %v2844 = vpack.c.b16 %v2836, %v2836
        %v2845 = vpack.c.b16 %v2837, %v2837
        %v2846 = vpack.c.b16 %v2838, %v2838
        %v2847 = vpack.c.b16 %v2839, %v2839
        %v2848 = vpack.c.b16 %v2840, %v2840
        %v2849 = vpack.c.b16 %v2841, %v2841
        %2858 = vst [vmem:[#allocation3 + $0x20] sm:$0xf] %v2842
        %2859 = vst [vmem:[#allocation3 + $0x84] sm:$0xf] %v2843
        %2860 = vst [vmem:[#allocation3 + $0xe8] sm:$0xf] %v2844
        %2861 = vst [vmem:[#allocation3 + $0x14c] sm:$0xf] %v2845
        %2862 = vst [vmem:[#allocation3 + $0x1b0] sm:$0xf] %v2846
        %2863 = vst [vmem:[#allocation3 + $0x214] sm:$0xf] %v2847
        %2864 = vst [vmem:[#allocation3 + $0x278] sm:$0xf] %v2848
        %2865 = vst [vmem:[#allocation3 + $0x2dc] sm:$0xf] %v2849
        %v2866 = vld [vmem:[%s2673 + $0x4] sm:$0xff]
        %v2867 = vld [vmem:[%s2673 + $0x14] sm:$0xff]
        %v2868 = vld [vmem:[%s2673 + $0x24] sm:$0xff]
        %v2869 = vld [vmem:[%s2673 + $0x34] sm:$0xff]
        %v2870 = vld [vmem:[%s2673 + $0x44] sm:$0xff]
        %v2871 = vld [vmem:[%s2673 + $0x54] sm:$0xff]
        %v2872 = vld [vmem:[%s2673 + $0x64] sm:$0xff]
        %v2873 = vld [vmem:[%s2673 + $0x74] sm:$0xff]
        %v2874 = vpack.c.bf16 %v2867, %v2866
        %v2875 = vpack.c.bf16 %v2869, %v2868
        %v2876 = vpack.c.bf16 %v2871, %v2870
        %v2877 = vpack.c.bf16 %v2873, %v2872
        %v2882 = vunpack.c.l.b16 %v2874
        %v2883 = vunpack.c.h.b16 %v2874
        %v2884 = vunpack.c.l.b16 %v2875
        %v2885 = vunpack.c.h.b16 %v2875
        %v2886 = vunpack.c.l.b16 %v2876
        %v2887 = vunpack.c.h.b16 %v2876
        %v2888 = vunpack.c.l.b16 %v2877
        %v2889 = vunpack.c.h.b16 %v2877
        %v2890 = vpack.c.b16 %v2882, %v2882
        %v2891 = vpack.c.b16 %v2883, %v2883
        %v2892 = vpack.c.b16 %v2884, %v2884
        %v2893 = vpack.c.b16 %v2885, %v2885
        %v2894 = vpack.c.b16 %v2886, %v2886
        %v2895 = vpack.c.b16 %v2887, %v2887
        %v2896 = vpack.c.b16 %v2888, %v2888
        %v2897 = vpack.c.b16 %v2889, %v2889
        %2906 = vst [vmem:[#allocation3 + $0x24] sm:$0xf] %v2890
        %2907 = vst [vmem:[#allocation3 + $0x88] sm:$0xf] %v2891
        %2908 = vst [vmem:[#allocation3 + $0xec] sm:$0xf] %v2892
        %2909 = vst [vmem:[#allocation3 + $0x150] sm:$0xf] %v2893
        %2910 = vst [vmem:[#allocation3 + $0x1b4] sm:$0xf] %v2894
        %2911 = vst [vmem:[#allocation3 + $0x218] sm:$0xf] %v2895
        %2912 = vst [vmem:[#allocation3 + $0x27c] sm:$0xf] %v2896
        %2913 = vst [vmem:[#allocation3 + $0x2e0] sm:$0xf] %v2897
        %s2914 = scalar_lea.vmem [#allocation2], 32
        %v2915 = vld [vmem:[%s2914] sm:$0xff]
        %v2916 = vld [vmem:[%s2914 + $0x10] sm:$0xff]
        %v2917 = vld [vmem:[%s2914 + $0x20] sm:$0xff]
        %v2918 = vld [vmem:[%s2914 + $0x30] sm:$0xff]
        %v2919 = vld [vmem:[%s2914 + $0x40] sm:$0xff]
        %v2920 = vld [vmem:[%s2914 + $0x50] sm:$0xff]
        %v2921 = vld [vmem:[%s2914 + $0x60] sm:$0xff]
        %v2922 = vld [vmem:[%s2914 + $0x70] sm:$0xff]
        %v2923 = vpack.c.bf16 %v2916, %v2915
        %v2924 = vpack.c.bf16 %v2918, %v2917
        %v2925 = vpack.c.bf16 %v2920, %v2919
        %v2926 = vpack.c.bf16 %v2922, %v2921
        %v2931 = vunpack.c.l.b16 %v2923
        %v2932 = vunpack.c.h.b16 %v2923
        %v2933 = vunpack.c.l.b16 %v2924
        %v2934 = vunpack.c.h.b16 %v2924
        %v2935 = vunpack.c.l.b16 %v2925
        %v2936 = vunpack.c.h.b16 %v2925
        %v2937 = vunpack.c.l.b16 %v2926
        %v2938 = vunpack.c.h.b16 %v2926
        %v2939 = vpack.c.b16 %v2931, %v2931
        %v2940 = vpack.c.b16 %v2932, %v2932
        %v2941 = vpack.c.b16 %v2933, %v2933
        %v2942 = vpack.c.b16 %v2934, %v2934
        %v2943 = vpack.c.b16 %v2935, %v2935
        %v2944 = vpack.c.b16 %v2936, %v2936
        %v2945 = vpack.c.b16 %v2937, %v2937
        %v2946 = vpack.c.b16 %v2938, %v2938
        %2955 = vst [vmem:[#allocation3 + $0x28] sm:$0xf] %v2939
        %2956 = vst [vmem:[#allocation3 + $0x8c] sm:$0xf] %v2940
        %2957 = vst [vmem:[#allocation3 + $0xf0] sm:$0xf] %v2941
        %2958 = vst [vmem:[#allocation3 + $0x154] sm:$0xf] %v2942
        %2959 = vst [vmem:[#allocation3 + $0x1b8] sm:$0xf] %v2943
        %2960 = vst [vmem:[#allocation3 + $0x21c] sm:$0xf] %v2944
        %2961 = vst [vmem:[#allocation3 + $0x280] sm:$0xf] %v2945
        %2962 = vst [vmem:[#allocation3 + $0x2e4] sm:$0xf] %v2946
        %v2963 = vld [vmem:[%s2914 + $0x1] sm:$0xff]
        %v2964 = vld [vmem:[%s2914 + $0x11] sm:$0xff]
        %v2965 = vld [vmem:[%s2914 + $0x21] sm:$0xff]
        %v2966 = vld [vmem:[%s2914 + $0x31] sm:$0xff]
        %v2967 = vld [vmem:[%s2914 + $0x41] sm:$0xff]
        %v2968 = vld [vmem:[%s2914 + $0x51] sm:$0xff]
        %v2969 = vld [vmem:[%s2914 + $0x61] sm:$0xff]
        %v2970 = vld [vmem:[%s2914 + $0x71] sm:$0xff]
        %v2971 = vpack.c.bf16 %v2964, %v2963
        %v2972 = vpack.c.bf16 %v2966, %v2965
        %v2973 = vpack.c.bf16 %v2968, %v2967
        %v2974 = vpack.c.bf16 %v2970, %v2969
        %v2979 = vunpack.c.l.b16 %v2971
        %v2980 = vunpack.c.h.b16 %v2971
        %v2981 = vunpack.c.l.b16 %v2972
        %v2982 = vunpack.c.h.b16 %v2972
        %v2983 = vunpack.c.l.b16 %v2973
        %v2984 = vunpack.c.h.b16 %v2973
        %v2985 = vunpack.c.l.b16 %v2974
        %v2986 = vunpack.c.h.b16 %v2974
        %v2987 = vpack.c.b16 %v2979, %v2979
        %v2988 = vpack.c.b16 %v2980, %v2980
        %v2989 = vpack.c.b16 %v2981, %v2981
        %v2990 = vpack.c.b16 %v2982, %v2982
        %v2991 = vpack.c.b16 %v2983, %v2983
        %v2992 = vpack.c.b16 %v2984, %v2984
        %v2993 = vpack.c.b16 %v2985, %v2985
        %v2994 = vpack.c.b16 %v2986, %v2986
        %3003 = vst [vmem:[#allocation3 + $0x2c] sm:$0xf] %v2987
        %3004 = vst [vmem:[#allocation3 + $0x90] sm:$0xf] %v2988
        %3005 = vst [vmem:[#allocation3 + $0xf4] sm:$0xf] %v2989
        %3006 = vst [vmem:[#allocation3 + $0x158] sm:$0xf] %v2990
        %3007 = vst [vmem:[#allocation3 + $0x1bc] sm:$0xf] %v2991
        %3008 = vst [vmem:[#allocation3 + $0x220] sm:$0xf] %v2992
        %3009 = vst [vmem:[#allocation3 + $0x284] sm:$0xf] %v2993
        %3010 = vst [vmem:[#allocation3 + $0x2e8] sm:$0xf] %v2994
        %v3011 = vld [vmem:[%s2914 + $0x2] sm:$0xff]
        %v3012 = vld [vmem:[%s2914 + $0x12] sm:$0xff]
        %v3013 = vld [vmem:[%s2914 + $0x22] sm:$0xff]
        %v3014 = vld [vmem:[%s2914 + $0x32] sm:$0xff]
        %v3015 = vld [vmem:[%s2914 + $0x42] sm:$0xff]
        %v3016 = vld [vmem:[%s2914 + $0x52] sm:$0xff]
        %v3017 = vld [vmem:[%s2914 + $0x62] sm:$0xff]
        %v3018 = vld [vmem:[%s2914 + $0x72] sm:$0xff]
        %v3019 = vpack.c.bf16 %v3012, %v3011
        %v3020 = vpack.c.bf16 %v3014, %v3013
        %v3021 = vpack.c.bf16 %v3016, %v3015
        %v3022 = vpack.c.bf16 %v3018, %v3017
        %v3027 = vunpack.c.l.b16 %v3019
        %v3028 = vunpack.c.h.b16 %v3019
        %v3029 = vunpack.c.l.b16 %v3020
        %v3030 = vunpack.c.h.b16 %v3020
        %v3031 = vunpack.c.l.b16 %v3021
        %v3032 = vunpack.c.h.b16 %v3021
        %v3033 = vunpack.c.l.b16 %v3022
        %v3034 = vunpack.c.h.b16 %v3022
        %v3035 = vpack.c.b16 %v3027, %v3027
        %v3036 = vpack.c.b16 %v3028, %v3028
        %v3037 = vpack.c.b16 %v3029, %v3029
        %v3038 = vpack.c.b16 %v3030, %v3030
        %v3039 = vpack.c.b16 %v3031, %v3031
        %v3040 = vpack.c.b16 %v3032, %v3032
        %v3041 = vpack.c.b16 %v3033, %v3033
        %v3042 = vpack.c.b16 %v3034, %v3034
        %3051 = vst [vmem:[#allocation3 + $0x30] sm:$0xf] %v3035
        %3052 = vst [vmem:[#allocation3 + $0x94] sm:$0xf] %v3036
        %3053 = vst [vmem:[#allocation3 + $0xf8] sm:$0xf] %v3037
        %3054 = vst [vmem:[#allocation3 + $0x15c] sm:$0xf] %v3038
        %3055 = vst [vmem:[#allocation3 + $0x1c0] sm:$0xf] %v3039
        %3056 = vst [vmem:[#allocation3 + $0x224] sm:$0xf] %v3040
        %3057 = vst [vmem:[#allocation3 + $0x288] sm:$0xf] %v3041
        %3058 = vst [vmem:[#allocation3 + $0x2ec] sm:$0xf] %v3042
        %v3059 = vld [vmem:[%s2914 + $0x3] sm:$0xff]
        %v3060 = vld [vmem:[%s2914 + $0x13] sm:$0xff]
        %v3061 = vld [vmem:[%s2914 + $0x23] sm:$0xff]
        %v3062 = vld [vmem:[%s2914 + $0x33] sm:$0xff]
        %v3063 = vld [vmem:[%s2914 + $0x43] sm:$0xff]
        %v3064 = vld [vmem:[%s2914 + $0x53] sm:$0xff]
        %v3065 = vld [vmem:[%s2914 + $0x63] sm:$0xff]
        %v3066 = vld [vmem:[%s2914 + $0x73] sm:$0xff]
        %v3067 = vpack.c.bf16 %v3060, %v3059
        %v3068 = vpack.c.bf16 %v3062, %v3061
        %v3069 = vpack.c.bf16 %v3064, %v3063
        %v3070 = vpack.c.bf16 %v3066, %v3065
        %v3075 = vunpack.c.l.b16 %v3067
        %v3076 = vunpack.c.h.b16 %v3067
        %v3077 = vunpack.c.l.b16 %v3068
        %v3078 = vunpack.c.h.b16 %v3068
        %v3079 = vunpack.c.l.b16 %v3069
        %v3080 = vunpack.c.h.b16 %v3069
        %v3081 = vunpack.c.l.b16 %v3070
        %v3082 = vunpack.c.h.b16 %v3070
        %v3083 = vpack.c.b16 %v3075, %v3075
        %v3084 = vpack.c.b16 %v3076, %v3076
        %v3085 = vpack.c.b16 %v3077, %v3077
        %v3086 = vpack.c.b16 %v3078, %v3078
        %v3087 = vpack.c.b16 %v3079, %v3079
        %v3088 = vpack.c.b16 %v3080, %v3080
        %v3089 = vpack.c.b16 %v3081, %v3081
        %v3090 = vpack.c.b16 %v3082, %v3082
        %3099 = vst [vmem:[#allocation3 + $0x34] sm:$0xf] %v3083
        %3100 = vst [vmem:[#allocation3 + $0x98] sm:$0xf] %v3084
        %3101 = vst [vmem:[#allocation3 + $0xfc] sm:$0xf] %v3085
        %3102 = vst [vmem:[#allocation3 + $0x160] sm:$0xf] %v3086
        %3103 = vst [vmem:[#allocation3 + $0x1c4] sm:$0xf] %v3087
        %3104 = vst [vmem:[#allocation3 + $0x228] sm:$0xf] %v3088
        %3105 = vst [vmem:[#allocation3 + $0x28c] sm:$0xf] %v3089
        %3106 = vst [vmem:[#allocation3 + $0x2f0] sm:$0xf] %v3090
        %v3107 = vld [vmem:[%s2914 + $0x4] sm:$0xff]
        %v3108 = vld [vmem:[%s2914 + $0x14] sm:$0xff]
        %v3109 = vld [vmem:[%s2914 + $0x24] sm:$0xff]
        %v3110 = vld [vmem:[%s2914 + $0x34] sm:$0xff]
        %v3111 = vld [vmem:[%s2914 + $0x44] sm:$0xff]
        %v3112 = vld [vmem:[%s2914 + $0x54] sm:$0xff]
        %v3113 = vld [vmem:[%s2914 + $0x64] sm:$0xff]
        %v3114 = vld [vmem:[%s2914 + $0x74] sm:$0xff]
        %v3115 = vpack.c.bf16 %v3108, %v3107
        %v3116 = vpack.c.bf16 %v3110, %v3109
        %v3117 = vpack.c.bf16 %v3112, %v3111
        %v3118 = vpack.c.bf16 %v3114, %v3113
        %v3123 = vunpack.c.l.b16 %v3115
        %v3124 = vunpack.c.h.b16 %v3115
        %v3125 = vunpack.c.l.b16 %v3116
        %v3126 = vunpack.c.h.b16 %v3116
        %v3127 = vunpack.c.l.b16 %v3117
        %v3128 = vunpack.c.h.b16 %v3117
        %v3129 = vunpack.c.l.b16 %v3118
        %v3130 = vunpack.c.h.b16 %v3118
        %v3131 = vpack.c.b16 %v3123, %v3123
        %v3132 = vpack.c.b16 %v3124, %v3124
        %v3133 = vpack.c.b16 %v3125, %v3125
        %v3134 = vpack.c.b16 %v3126, %v3126
        %v3135 = vpack.c.b16 %v3127, %v3127
        %v3136 = vpack.c.b16 %v3128, %v3128
        %v3137 = vpack.c.b16 %v3129, %v3129
        %v3138 = vpack.c.b16 %v3130, %v3130
        %3147 = vst [vmem:[#allocation3 + $0x38] sm:$0xf] %v3131
        %3148 = vst [vmem:[#allocation3 + $0x9c] sm:$0xf] %v3132
        %3149 = vst [vmem:[#allocation3 + $0x100] sm:$0xf] %v3133
        %3150 = vst [vmem:[#allocation3 + $0x164] sm:$0xf] %v3134
        %3151 = vst [vmem:[#allocation3 + $0x1c8] sm:$0xf] %v3135
        %3152 = vst [vmem:[#allocation3 + $0x22c] sm:$0xf] %v3136
        %3153 = vst [vmem:[#allocation3 + $0x290] sm:$0xf] %v3137
        %3154 = vst [vmem:[#allocation3 + $0x2f4] sm:$0xf] %v3138
        %s3155 = scalar_lea.vmem [#allocation2], 48
        %v3156 = vld [vmem:[%s3155] sm:$0xff]
        %v3157 = vld [vmem:[%s3155 + $0x10] sm:$0xff]
        %v3158 = vld [vmem:[%s3155 + $0x20] sm:$0xff]
        %v3159 = vld [vmem:[%s3155 + $0x30] sm:$0xff]
        %v3160 = vld [vmem:[%s3155 + $0x40] sm:$0xff]
        %v3161 = vld [vmem:[%s3155 + $0x50] sm:$0xff]
        %v3162 = vld [vmem:[%s3155 + $0x60] sm:$0xff]
        %v3163 = vld [vmem:[%s3155 + $0x70] sm:$0xff]
        %v3164 = vpack.c.bf16 %v3157, %v3156
        %v3165 = vpack.c.bf16 %v3159, %v3158
        %v3166 = vpack.c.bf16 %v3161, %v3160
        %v3167 = vpack.c.bf16 %v3163, %v3162
        %v3172 = vunpack.c.l.b16 %v3164
        %v3173 = vunpack.c.h.b16 %v3164
        %v3174 = vunpack.c.l.b16 %v3165
        %v3175 = vunpack.c.h.b16 %v3165
        %v3176 = vunpack.c.l.b16 %v3166
        %v3177 = vunpack.c.h.b16 %v3166
        %v3178 = vunpack.c.l.b16 %v3167
        %v3179 = vunpack.c.h.b16 %v3167
        %v3180 = vpack.c.b16 %v3172, %v3172
        %v3181 = vpack.c.b16 %v3173, %v3173
        %v3182 = vpack.c.b16 %v3174, %v3174
        %v3183 = vpack.c.b16 %v3175, %v3175
        %v3184 = vpack.c.b16 %v3176, %v3176
        %v3185 = vpack.c.b16 %v3177, %v3177
        %v3186 = vpack.c.b16 %v3178, %v3178
        %v3187 = vpack.c.b16 %v3179, %v3179
        %3196 = vst [vmem:[#allocation3 + $0x3c] sm:$0xf] %v3180
        %3197 = vst [vmem:[#allocation3 + $0xa0] sm:$0xf] %v3181
        %3198 = vst [vmem:[#allocation3 + $0x104] sm:$0xf] %v3182
        %3199 = vst [vmem:[#allocation3 + $0x168] sm:$0xf] %v3183
        %3200 = vst [vmem:[#allocation3 + $0x1cc] sm:$0xf] %v3184
        %3201 = vst [vmem:[#allocation3 + $0x230] sm:$0xf] %v3185
        %3202 = vst [vmem:[#allocation3 + $0x294] sm:$0xf] %v3186
        %3203 = vst [vmem:[#allocation3 + $0x2f8] sm:$0xf] %v3187
        %v3204 = vld [vmem:[%s3155 + $0x1] sm:$0xff]
        %v3205 = vld [vmem:[%s3155 + $0x11] sm:$0xff]
        %v3206 = vld [vmem:[%s3155 + $0x21] sm:$0xff]
        %v3207 = vld [vmem:[%s3155 + $0x31] sm:$0xff]
        %v3208 = vld [vmem:[%s3155 + $0x41] sm:$0xff]
        %v3209 = vld [vmem:[%s3155 + $0x51] sm:$0xff]
        %v3210 = vld [vmem:[%s3155 + $0x61] sm:$0xff]
        %v3211 = vld [vmem:[%s3155 + $0x71] sm:$0xff]
        %v3212 = vpack.c.bf16 %v3205, %v3204
        %v3213 = vpack.c.bf16 %v3207, %v3206
        %v3214 = vpack.c.bf16 %v3209, %v3208
        %v3215 = vpack.c.bf16 %v3211, %v3210
        %v3220 = vunpack.c.l.b16 %v3212
        %v3221 = vunpack.c.h.b16 %v3212
        %v3222 = vunpack.c.l.b16 %v3213
        %v3223 = vunpack.c.h.b16 %v3213
        %v3224 = vunpack.c.l.b16 %v3214
        %v3225 = vunpack.c.h.b16 %v3214
        %v3226 = vunpack.c.l.b16 %v3215
        %v3227 = vunpack.c.h.b16 %v3215
        %v3228 = vpack.c.b16 %v3220, %v3220
        %v3229 = vpack.c.b16 %v3221, %v3221
        %v3230 = vpack.c.b16 %v3222, %v3222
        %v3231 = vpack.c.b16 %v3223, %v3223
        %v3232 = vpack.c.b16 %v3224, %v3224
        %v3233 = vpack.c.b16 %v3225, %v3225
        %v3234 = vpack.c.b16 %v3226, %v3226
        %v3235 = vpack.c.b16 %v3227, %v3227
        %3244 = vst [vmem:[#allocation3 + $0x40] sm:$0xf] %v3228
        %3245 = vst [vmem:[#allocation3 + $0xa4] sm:$0xf] %v3229
        %3246 = vst [vmem:[#allocation3 + $0x108] sm:$0xf] %v3230
        %3247 = vst [vmem:[#allocation3 + $0x16c] sm:$0xf] %v3231
        %3248 = vst [vmem:[#allocation3 + $0x1d0] sm:$0xf] %v3232
        %3249 = vst [vmem:[#allocation3 + $0x234] sm:$0xf] %v3233
        %3250 = vst [vmem:[#allocation3 + $0x298] sm:$0xf] %v3234
        %3251 = vst [vmem:[#allocation3 + $0x2fc] sm:$0xf] %v3235
        %v3252 = vld [vmem:[%s3155 + $0x2] sm:$0xff]
        %v3253 = vld [vmem:[%s3155 + $0x12] sm:$0xff]
        %v3254 = vld [vmem:[%s3155 + $0x22] sm:$0xff]
        %v3255 = vld [vmem:[%s3155 + $0x32] sm:$0xff]
        %v3256 = vld [vmem:[%s3155 + $0x42] sm:$0xff]
        %v3257 = vld [vmem:[%s3155 + $0x52] sm:$0xff]
        %v3258 = vld [vmem:[%s3155 + $0x62] sm:$0xff]
        %v3259 = vld [vmem:[%s3155 + $0x72] sm:$0xff]
        %v3260 = vpack.c.bf16 %v3253, %v3252
        %v3261 = vpack.c.bf16 %v3255, %v3254
        %v3262 = vpack.c.bf16 %v3257, %v3256
        %v3263 = vpack.c.bf16 %v3259, %v3258
        %v3268 = vunpack.c.l.b16 %v3260
        %v3269 = vunpack.c.h.b16 %v3260
        %v3270 = vunpack.c.l.b16 %v3261
        %v3271 = vunpack.c.h.b16 %v3261
        %v3272 = vunpack.c.l.b16 %v3262
        %v3273 = vunpack.c.h.b16 %v3262
        %v3274 = vunpack.c.l.b16 %v3263
        %v3275 = vunpack.c.h.b16 %v3263
        %v3276 = vpack.c.b16 %v3268, %v3268
        %v3277 = vpack.c.b16 %v3269, %v3269
        %v3278 = vpack.c.b16 %v3270, %v3270
        %v3279 = vpack.c.b16 %v3271, %v3271
        %v3280 = vpack.c.b16 %v3272, %v3272
        %v3281 = vpack.c.b16 %v3273, %v3273
        %v3282 = vpack.c.b16 %v3274, %v3274
        %v3283 = vpack.c.b16 %v3275, %v3275
        %3292 = vst [vmem:[#allocation3 + $0x44] sm:$0xf] %v3276
        %3293 = vst [vmem:[#allocation3 + $0xa8] sm:$0xf] %v3277
        %3294 = vst [vmem:[#allocation3 + $0x10c] sm:$0xf] %v3278
        %3295 = vst [vmem:[#allocation3 + $0x170] sm:$0xf] %v3279
        %3296 = vst [vmem:[#allocation3 + $0x1d4] sm:$0xf] %v3280
        %3297 = vst [vmem:[#allocation3 + $0x238] sm:$0xf] %v3281
        %3298 = vst [vmem:[#allocation3 + $0x29c] sm:$0xf] %v3282
        %3299 = vst [vmem:[#allocation3 + $0x300] sm:$0xf] %v3283
        %v3300 = vld [vmem:[%s3155 + $0x3] sm:$0xff]
        %v3301 = vld [vmem:[%s3155 + $0x13] sm:$0xff]
        %v3302 = vld [vmem:[%s3155 + $0x23] sm:$0xff]
        %v3303 = vld [vmem:[%s3155 + $0x33] sm:$0xff]
        %v3304 = vld [vmem:[%s3155 + $0x43] sm:$0xff]
        %v3305 = vld [vmem:[%s3155 + $0x53] sm:$0xff]
        %v3306 = vld [vmem:[%s3155 + $0x63] sm:$0xff]
        %v3307 = vld [vmem:[%s3155 + $0x73] sm:$0xff]
        %v3308 = vpack.c.bf16 %v3301, %v3300
        %v3309 = vpack.c.bf16 %v3303, %v3302
        %v3310 = vpack.c.bf16 %v3305, %v3304
        %v3311 = vpack.c.bf16 %v3307, %v3306
        %v3316 = vunpack.c.l.b16 %v3308
        %v3317 = vunpack.c.h.b16 %v3308
        %v3318 = vunpack.c.l.b16 %v3309
        %v3319 = vunpack.c.h.b16 %v3309
        %v3320 = vunpack.c.l.b16 %v3310
        %v3321 = vunpack.c.h.b16 %v3310
        %v3322 = vunpack.c.l.b16 %v3311
        %v3323 = vunpack.c.h.b16 %v3311
        %v3324 = vpack.c.b16 %v3316, %v3316
        %v3325 = vpack.c.b16 %v3317, %v3317
        %v3326 = vpack.c.b16 %v3318, %v3318
        %v3327 = vpack.c.b16 %v3319, %v3319
        %v3328 = vpack.c.b16 %v3320, %v3320
        %v3329 = vpack.c.b16 %v3321, %v3321
        %v3330 = vpack.c.b16 %v3322, %v3322
        %v3331 = vpack.c.b16 %v3323, %v3323
        %3340 = vst [vmem:[#allocation3 + $0x48] sm:$0xf] %v3324
        %3341 = vst [vmem:[#allocation3 + $0xac] sm:$0xf] %v3325
        %3342 = vst [vmem:[#allocation3 + $0x110] sm:$0xf] %v3326
        %3343 = vst [vmem:[#allocation3 + $0x174] sm:$0xf] %v3327
        %3344 = vst [vmem:[#allocation3 + $0x1d8] sm:$0xf] %v3328
        %3345 = vst [vmem:[#allocation3 + $0x23c] sm:$0xf] %v3329
        %3346 = vst [vmem:[#allocation3 + $0x2a0] sm:$0xf] %v3330
        %3347 = vst [vmem:[#allocation3 + $0x304] sm:$0xf] %v3331
        %v3348 = vld [vmem:[%s3155 + $0x4] sm:$0xff]
        %v3349 = vld [vmem:[%s3155 + $0x14] sm:$0xff]
        %v3350 = vld [vmem:[%s3155 + $0x24] sm:$0xff]
        %v3351 = vld [vmem:[%s3155 + $0x34] sm:$0xff]
        %v3352 = vld [vmem:[%s3155 + $0x44] sm:$0xff]
        %v3353 = vld [vmem:[%s3155 + $0x54] sm:$0xff]
        %v3354 = vld [vmem:[%s3155 + $0x64] sm:$0xff]
        %v3355 = vld [vmem:[%s3155 + $0x74] sm:$0xff]
        %v3356 = vpack.c.bf16 %v3349, %v3348
        %v3357 = vpack.c.bf16 %v3351, %v3350
        %v3358 = vpack.c.bf16 %v3353, %v3352
        %v3359 = vpack.c.bf16 %v3355, %v3354
        %v3364 = vunpack.c.l.b16 %v3356
        %v3365 = vunpack.c.h.b16 %v3356
        %v3366 = vunpack.c.l.b16 %v3357
        %v3367 = vunpack.c.h.b16 %v3357
        %v3368 = vunpack.c.l.b16 %v3358
        %v3369 = vunpack.c.h.b16 %v3358
        %v3370 = vunpack.c.l.b16 %v3359
        %v3371 = vunpack.c.h.b16 %v3359
        %v3372 = vpack.c.b16 %v3364, %v3364
        %v3373 = vpack.c.b16 %v3365, %v3365
        %v3374 = vpack.c.b16 %v3366, %v3366
        %v3375 = vpack.c.b16 %v3367, %v3367
        %v3376 = vpack.c.b16 %v3368, %v3368
        %v3377 = vpack.c.b16 %v3369, %v3369
        %v3378 = vpack.c.b16 %v3370, %v3370
        %v3379 = vpack.c.b16 %v3371, %v3371
        %3388 = vst [vmem:[#allocation3 + $0x4c] sm:$0xf] %v3372
        %3389 = vst [vmem:[#allocation3 + $0xb0] sm:$0xf] %v3373
        %3390 = vst [vmem:[#allocation3 + $0x114] sm:$0xf] %v3374
        %3391 = vst [vmem:[#allocation3 + $0x178] sm:$0xf] %v3375
        %3392 = vst [vmem:[#allocation3 + $0x1dc] sm:$0xf] %v3376
        %3393 = vst [vmem:[#allocation3 + $0x240] sm:$0xf] %v3377
        %3394 = vst [vmem:[#allocation3 + $0x2a4] sm:$0xf] %v3378
        %3395 = vst [vmem:[#allocation3 + $0x308] sm:$0xf] %v3379
        %s3396 = scalar_lea.vmem [#allocation2], 64
        %v3397 = vld [vmem:[%s3396] sm:$0xff]
        %v3398 = vld [vmem:[%s3396 + $0x10] sm:$0xff]
        %v3399 = vld [vmem:[%s3396 + $0x20] sm:$0xff]
        %v3400 = vld [vmem:[%s3396 + $0x30] sm:$0xff]
        %v3401 = vld [vmem:[%s3396 + $0x40] sm:$0xff]
        %v3402 = vld [vmem:[%s3396 + $0x50] sm:$0xff]
        %v3403 = vld [vmem:[%s3396 + $0x60] sm:$0xff]
        %v3404 = vld [vmem:[%s3396 + $0x70] sm:$0xff]
        %v3405 = vpack.c.bf16 %v3398, %v3397
        %v3406 = vpack.c.bf16 %v3400, %v3399
        %v3407 = vpack.c.bf16 %v3402, %v3401
        %v3408 = vpack.c.bf16 %v3404, %v3403
        %v3413 = vunpack.c.l.b16 %v3405
        %v3414 = vunpack.c.h.b16 %v3405
        %v3415 = vunpack.c.l.b16 %v3406
        %v3416 = vunpack.c.h.b16 %v3406
        %v3417 = vunpack.c.l.b16 %v3407
        %v3418 = vunpack.c.h.b16 %v3407
        %v3419 = vunpack.c.l.b16 %v3408
        %v3420 = vunpack.c.h.b16 %v3408
        %v3421 = vpack.c.b16 %v3413, %v3413
        %v3422 = vpack.c.b16 %v3414, %v3414
        %v3423 = vpack.c.b16 %v3415, %v3415
        %v3424 = vpack.c.b16 %v3416, %v3416
        %v3425 = vpack.c.b16 %v3417, %v3417
        %v3426 = vpack.c.b16 %v3418, %v3418
        %v3427 = vpack.c.b16 %v3419, %v3419
        %v3428 = vpack.c.b16 %v3420, %v3420
        %3437 = vst [vmem:[#allocation3 + $0x50] sm:$0xf] %v3421
        %3438 = vst [vmem:[#allocation3 + $0xb4] sm:$0xf] %v3422
        %3439 = vst [vmem:[#allocation3 + $0x118] sm:$0xf] %v3423
        %3440 = vst [vmem:[#allocation3 + $0x17c] sm:$0xf] %v3424
        %3441 = vst [vmem:[#allocation3 + $0x1e0] sm:$0xf] %v3425
        %3442 = vst [vmem:[#allocation3 + $0x244] sm:$0xf] %v3426
        %3443 = vst [vmem:[#allocation3 + $0x2a8] sm:$0xf] %v3427
        %3444 = vst [vmem:[#allocation3 + $0x30c] sm:$0xf] %v3428
        %v3445 = vld [vmem:[%s3396 + $0x1] sm:$0xff]
        %v3446 = vld [vmem:[%s3396 + $0x11] sm:$0xff]
        %v3447 = vld [vmem:[%s3396 + $0x21] sm:$0xff]
        %v3448 = vld [vmem:[%s3396 + $0x31] sm:$0xff]
        %v3449 = vld [vmem:[%s3396 + $0x41] sm:$0xff]
        %v3450 = vld [vmem:[%s3396 + $0x51] sm:$0xff]
        %v3451 = vld [vmem:[%s3396 + $0x61] sm:$0xff]
        %v3452 = vld [vmem:[%s3396 + $0x71] sm:$0xff]
        %v3453 = vpack.c.bf16 %v3446, %v3445
        %v3454 = vpack.c.bf16 %v3448, %v3447
        %v3455 = vpack.c.bf16 %v3450, %v3449
        %v3456 = vpack.c.bf16 %v3452, %v3451
        %v3461 = vunpack.c.l.b16 %v3453
        %v3462 = vunpack.c.h.b16 %v3453
        %v3463 = vunpack.c.l.b16 %v3454
        %v3464 = vunpack.c.h.b16 %v3454
        %v3465 = vunpack.c.l.b16 %v3455
        %v3466 = vunpack.c.h.b16 %v3455
        %v3467 = vunpack.c.l.b16 %v3456
        %v3468 = vunpack.c.h.b16 %v3456
        %v3469 = vpack.c.b16 %v3461, %v3461
        %v3470 = vpack.c.b16 %v3462, %v3462
        %v3471 = vpack.c.b16 %v3463, %v3463
        %v3472 = vpack.c.b16 %v3464, %v3464
        %v3473 = vpack.c.b16 %v3465, %v3465
        %v3474 = vpack.c.b16 %v3466, %v3466
        %v3475 = vpack.c.b16 %v3467, %v3467
        %v3476 = vpack.c.b16 %v3468, %v3468
        %3485 = vst [vmem:[#allocation3 + $0x54] sm:$0xf] %v3469
        %3486 = vst [vmem:[#allocation3 + $0xb8] sm:$0xf] %v3470
        %3487 = vst [vmem:[#allocation3 + $0x11c] sm:$0xf] %v3471
        %3488 = vst [vmem:[#allocation3 + $0x180] sm:$0xf] %v3472
        %3489 = vst [vmem:[#allocation3 + $0x1e4] sm:$0xf] %v3473
        %3490 = vst [vmem:[#allocation3 + $0x248] sm:$0xf] %v3474
        %3491 = vst [vmem:[#allocation3 + $0x2ac] sm:$0xf] %v3475
        %3492 = vst [vmem:[#allocation3 + $0x310] sm:$0xf] %v3476
        %v3493 = vld [vmem:[%s3396 + $0x2] sm:$0xff]
        %v3494 = vld [vmem:[%s3396 + $0x12] sm:$0xff]
        %v3495 = vld [vmem:[%s3396 + $0x22] sm:$0xff]
        %v3496 = vld [vmem:[%s3396 + $0x32] sm:$0xff]
        %v3497 = vld [vmem:[%s3396 + $0x42] sm:$0xff]
        %v3498 = vld [vmem:[%s3396 + $0x52] sm:$0xff]
        %v3499 = vld [vmem:[%s3396 + $0x62] sm:$0xff]
        %v3500 = vld [vmem:[%s3396 + $0x72] sm:$0xff]
        %v3501 = vpack.c.bf16 %v3494, %v3493
        %v3502 = vpack.c.bf16 %v3496, %v3495
        %v3503 = vpack.c.bf16 %v3498, %v3497
        %v3504 = vpack.c.bf16 %v3500, %v3499
        %v3509 = vunpack.c.l.b16 %v3501
        %v3510 = vunpack.c.h.b16 %v3501
        %v3511 = vunpack.c.l.b16 %v3502
        %v3512 = vunpack.c.h.b16 %v3502
        %v3513 = vunpack.c.l.b16 %v3503
        %v3514 = vunpack.c.h.b16 %v3503
        %v3515 = vunpack.c.l.b16 %v3504
        %v3516 = vunpack.c.h.b16 %v3504
        %v3517 = vpack.c.b16 %v3509, %v3509
        %v3518 = vpack.c.b16 %v3510, %v3510
        %v3519 = vpack.c.b16 %v3511, %v3511
        %v3520 = vpack.c.b16 %v3512, %v3512
        %v3521 = vpack.c.b16 %v3513, %v3513
        %v3522 = vpack.c.b16 %v3514, %v3514
        %v3523 = vpack.c.b16 %v3515, %v3515
        %v3524 = vpack.c.b16 %v3516, %v3516
        %3533 = vst [vmem:[#allocation3 + $0x58] sm:$0xf] %v3517
        %3534 = vst [vmem:[#allocation3 + $0xbc] sm:$0xf] %v3518
        %3535 = vst [vmem:[#allocation3 + $0x120] sm:$0xf] %v3519
        %3536 = vst [vmem:[#allocation3 + $0x184] sm:$0xf] %v3520
        %3537 = vst [vmem:[#allocation3 + $0x1e8] sm:$0xf] %v3521
        %3538 = vst [vmem:[#allocation3 + $0x24c] sm:$0xf] %v3522
        %3539 = vst [vmem:[#allocation3 + $0x2b0] sm:$0xf] %v3523
        %3540 = vst [vmem:[#allocation3 + $0x314] sm:$0xf] %v3524
        %v3541 = vld [vmem:[%s3396 + $0x3] sm:$0xff]
        %v3542 = vld [vmem:[%s3396 + $0x13] sm:$0xff]
        %v3543 = vld [vmem:[%s3396 + $0x23] sm:$0xff]
        %v3544 = vld [vmem:[%s3396 + $0x33] sm:$0xff]
        %v3545 = vld [vmem:[%s3396 + $0x43] sm:$0xff]
        %v3546 = vld [vmem:[%s3396 + $0x53] sm:$0xff]
        %v3547 = vld [vmem:[%s3396 + $0x63] sm:$0xff]
        %v3548 = vld [vmem:[%s3396 + $0x73] sm:$0xff]
        %v3549 = vpack.c.bf16 %v3542, %v3541
        %v3550 = vpack.c.bf16 %v3544, %v3543
        %v3551 = vpack.c.bf16 %v3546, %v3545
        %v3552 = vpack.c.bf16 %v3548, %v3547
        %v3557 = vunpack.c.l.b16 %v3549
        %v3558 = vunpack.c.h.b16 %v3549
        %v3559 = vunpack.c.l.b16 %v3550
        %v3560 = vunpack.c.h.b16 %v3550
        %v3561 = vunpack.c.l.b16 %v3551
        %v3562 = vunpack.c.h.b16 %v3551
        %v3563 = vunpack.c.l.b16 %v3552
        %v3564 = vunpack.c.h.b16 %v3552
        %v3565 = vpack.c.b16 %v3557, %v3557
        %v3566 = vpack.c.b16 %v3558, %v3558
        %v3567 = vpack.c.b16 %v3559, %v3559
        %v3568 = vpack.c.b16 %v3560, %v3560
        %v3569 = vpack.c.b16 %v3561, %v3561
        %v3570 = vpack.c.b16 %v3562, %v3562
        %v3571 = vpack.c.b16 %v3563, %v3563
        %v3572 = vpack.c.b16 %v3564, %v3564
        %3581 = vst [vmem:[#allocation3 + $0x5c] sm:$0xf] %v3565
        %3582 = vst [vmem:[#allocation3 + $0xc0] sm:$0xf] %v3566
        %3583 = vst [vmem:[#allocation3 + $0x124] sm:$0xf] %v3567
        %3584 = vst [vmem:[#allocation3 + $0x188] sm:$0xf] %v3568
        %3585 = vst [vmem:[#allocation3 + $0x1ec] sm:$0xf] %v3569
        %3586 = vst [vmem:[#allocation3 + $0x250] sm:$0xf] %v3570
        %3587 = vst [vmem:[#allocation3 + $0x2b4] sm:$0xf] %v3571
        %3588 = vst [vmem:[#allocation3 + $0x318] sm:$0xf] %v3572
        %v3589 = vld [vmem:[%s3396 + $0x4] sm:$0xff]
        %v3590 = vld [vmem:[%s3396 + $0x14] sm:$0xff]
        %v3591 = vld [vmem:[%s3396 + $0x24] sm:$0xff]
        %v3592 = vld [vmem:[%s3396 + $0x34] sm:$0xff]
        %v3593 = vld [vmem:[%s3396 + $0x44] sm:$0xff]
        %v3594 = vld [vmem:[%s3396 + $0x54] sm:$0xff]
        %v3595 = vld [vmem:[%s3396 + $0x64] sm:$0xff]
        %v3596 = vld [vmem:[%s3396 + $0x74] sm:$0xff]
        %v3597 = vpack.c.bf16 %v3590, %v3589
        %v3598 = vpack.c.bf16 %v3592, %v3591
        %v3599 = vpack.c.bf16 %v3594, %v3593
        %v3600 = vpack.c.bf16 %v3596, %v3595
        %v3605 = vunpack.c.l.b16 %v3597
        %v3606 = vunpack.c.h.b16 %v3597
        %v3607 = vunpack.c.l.b16 %v3598
        %v3608 = vunpack.c.h.b16 %v3598
        %v3609 = vunpack.c.l.b16 %v3599
        %v3610 = vunpack.c.h.b16 %v3599
        %v3611 = vunpack.c.l.b16 %v3600
        %v3612 = vunpack.c.h.b16 %v3600
        %v3613 = vpack.c.b16 %v3605, %v3605
        %v3614 = vpack.c.b16 %v3606, %v3606
        %v3615 = vpack.c.b16 %v3607, %v3607
        %v3616 = vpack.c.b16 %v3608, %v3608
        %v3617 = vpack.c.b16 %v3609, %v3609
        %v3618 = vpack.c.b16 %v3610, %v3610
        %v3619 = vpack.c.b16 %v3611, %v3611
        %v3620 = vpack.c.b16 %v3612, %v3612
        %3629 = vst [vmem:[#allocation3 + $0x60] sm:$0xf] %v3613
        %3630 = vst [vmem:[#allocation3 + $0xc4] sm:$0xf] %v3614
        %3631 = vst [vmem:[#allocation3 + $0x128] sm:$0xf] %v3615
        %3632 = vst [vmem:[#allocation3 + $0x18c] sm:$0xf] %v3616
        %3633 = vst [vmem:[#allocation3 + $0x1f0] sm:$0xf] %v3617
        %3634 = vst [vmem:[#allocation3 + $0x254] sm:$0xf] %v3618
        %3635 = vst [vmem:[#allocation3 + $0x2b8] sm:$0xf] %v3619
        %3636 = vst [vmem:[#allocation3 + $0x31c] sm:$0xf] %v3620
        %v3637 = vld [vmem:[#allocation3] sm:$0xff]
        %v3638 = vld [vmem:[#allocation3 + $0x8] sm:$0xff]
        %v3639 = vld [vmem:[#allocation3 + $0x10] sm:$0xff]
        %v3640 = vld [vmem:[#allocation3 + $0x18] sm:$0xff]
        %v3641 = vld [vmem:[#allocation3 + $0x20] sm:$0xff]
        %v3642 = vld [vmem:[#allocation3 + $0x28] sm:$0xff]
        %v3643 = vld [vmem:[#allocation3 + $0x30] sm:$0xff]
        %v3644 = vld [vmem:[#allocation3 + $0x38] sm:$0xff]
        %v3645 = vld [vmem:[#allocation3 + $0x40] sm:$0xff]
        %v3646 = vld [vmem:[#allocation3 + $0x48] sm:$0xff]
        %v3647 = vld [vmem:[#allocation3 + $0x50] sm:$0xff]
        %v3648 = vld [vmem:[#allocation3 + $0x58] sm:$0xff]
        %v3649 = vld [vmem:[#allocation3 + $0x60] sm:$0xf]
        %v3650 = vld [vmem:[#allocation3 + $0x64] sm:$0xff]
        %v3651 = vld [vmem:[#allocation3 + $0x6c] sm:$0xff]
        %v3652 = vld [vmem:[#allocation3 + $0x74] sm:$0xff]
        %v3653 = vld [vmem:[#allocation3 + $0x7c] sm:$0xff]
        %v3654 = vld [vmem:[#allocation3 + $0x84] sm:$0xff]
        %v3655 = vld [vmem:[#allocation3 + $0x8c] sm:$0xff]
        %v3656 = vld [vmem:[#allocation3 + $0x94] sm:$0xff]
        %v3657 = vld [vmem:[#allocation3 + $0x9c] sm:$0xff]
        %v3658 = vld [vmem:[#allocation3 + $0xa4] sm:$0xff]
        %v3659 = vld [vmem:[#allocation3 + $0xac] sm:$0xff]
        %v3660 = vld [vmem:[#allocation3 + $0xb4] sm:$0xff]
        %v3661 = vld [vmem:[#allocation3 + $0xbc] sm:$0xff]
        %v3662 = vld [vmem:[#allocation3 + $0xc4] sm:$0xf]
        %v3663 = vld [vmem:[#allocation3 + $0xc8] sm:$0xff]
        %v3664 = vld [vmem:[#allocation3 + $0xd0] sm:$0xff]
        %v3665 = vld [vmem:[#allocation3 + $0xd8] sm:$0xff]
        %v3666 = vld [vmem:[#allocation3 + $0xe0] sm:$0xff]
        %v3667 = vld [vmem:[#allocation3 + $0xe8] sm:$0xff]
        %v3668 = vld [vmem:[#allocation3 + $0xf0] sm:$0xff]
        %v3669 = vld [vmem:[#allocation3 + $0xf8] sm:$0xff]
        %v3670 = vld [vmem:[#allocation3 + $0x100] sm:$0xff]
        %v3671 = vld [vmem:[#allocation3 + $0x108] sm:$0xff]
        %v3672 = vld [vmem:[#allocation3 + $0x110] sm:$0xff]
        %v3673 = vld [vmem:[#allocation3 + $0x118] sm:$0xff]
        %v3674 = vld [vmem:[#allocation3 + $0x120] sm:$0xff]
        %v3675 = vld [vmem:[#allocation3 + $0x128] sm:$0xf]
        %v3676 = vld [vmem:[#allocation3 + $0x12c] sm:$0xff]
        %v3677 = vld [vmem:[#allocation3 + $0x134] sm:$0xff]
        %v3678 = vld [vmem:[#allocation3 + $0x13c] sm:$0xff]
        %v3679 = vld [vmem:[#allocation3 + $0x144] sm:$0xff]
        %v3680 = vld [vmem:[#allocation3 + $0x14c] sm:$0xff]
        %v3681 = vld [vmem:[#allocation3 + $0x154] sm:$0xff]
        %v3682 = vld [vmem:[#allocation3 + $0x15c] sm:$0xff]
        %v3683 = vld [vmem:[#allocation3 + $0x164] sm:$0xff]
        %v3684 = vld [vmem:[#allocation3 + $0x16c] sm:$0xff]
        %v3685 = vld [vmem:[#allocation3 + $0x174] sm:$0xff]
        %v3686 = vld [vmem:[#allocation3 + $0x17c] sm:$0xff]
        %v3687 = vld [vmem:[#allocation3 + $0x184] sm:$0xff]
        %v3688 = vld [vmem:[#allocation3 + $0x18c] sm:$0xf]
        %v3689 = vld [vmem:[#allocation3 + $0x190] sm:$0xff]
        %v3690 = vld [vmem:[#allocation3 + $0x198] sm:$0xff]
        %v3691 = vld [vmem:[#allocation3 + $0x1a0] sm:$0xff]
        %v3692 = vld [vmem:[#allocation3 + $0x1a8] sm:$0xff]
        %v3693 = vld [vmem:[#allocation3 + $0x1b0] sm:$0xff]
        %v3694 = vld [vmem:[#allocation3 + $0x1b8] sm:$0xff]
        %v3695 = vld [vmem:[#allocation3 + $0x1c0] sm:$0xff]
        %v3696 = vld [vmem:[#allocation3 + $0x1c8] sm:$0xff]
        %v3697 = vld [vmem:[#allocation3 + $0x1d0] sm:$0xff]
        %v3698 = vld [vmem:[#allocation3 + $0x1d8] sm:$0xff]
        %v3699 = vld [vmem:[#allocation3 + $0x1e0] sm:$0xff]
        %v3700 = vld [vmem:[#allocation3 + $0x1e8] sm:$0xff]
        %v3701 = vld [vmem:[#allocation3 + $0x1f0] sm:$0xf]
        %v3702 = vld [vmem:[#allocation3 + $0x1f4] sm:$0xff]
        %v3703 = vld [vmem:[#allocation3 + $0x1fc] sm:$0xff]
        %v3704 = vld [vmem:[#allocation3 + $0x204] sm:$0xff]
        %v3705 = vld [vmem:[#allocation3 + $0x20c] sm:$0xff]
        %v3706 = vld [vmem:[#allocation3 + $0x214] sm:$0xff]
        %v3707 = vld [vmem:[#allocation3 + $0x21c] sm:$0xff]
        %v3708 = vld [vmem:[#allocation3 + $0x224] sm:$0xff]
        %v3709 = vld [vmem:[#allocation3 + $0x22c] sm:$0xff]
        %v3710 = vld [vmem:[#allocation3 + $0x234] sm:$0xff]
        %v3711 = vld [vmem:[#allocation3 + $0x23c] sm:$0xff]
        %v3712 = vld [vmem:[#allocation3 + $0x244] sm:$0xff]
        %v3713 = vld [vmem:[#allocation3 + $0x24c] sm:$0xff]
        %v3714 = vld [vmem:[#allocation3 + $0x254] sm:$0xf]
        %v3715 = vld [vmem:[#allocation3 + $0x258] sm:$0xff]
        %v3716 = vld [vmem:[#allocation3 + $0x260] sm:$0xff]
        %v3717 = vld [vmem:[#allocation3 + $0x268] sm:$0xff]
        %v3718 = vld [vmem:[#allocation3 + $0x270] sm:$0xff]
        %v3719 = vld [vmem:[#allocation3 + $0x278] sm:$0xff]
        %v3720 = vld [vmem:[#allocation3 + $0x280] sm:$0xff]
        %v3721 = vld [vmem:[#allocation3 + $0x288] sm:$0xff]
        %v3722 = vld [vmem:[#allocation3 + $0x290] sm:$0xff]
        %v3723 = vld [vmem:[#allocation3 + $0x298] sm:$0xff]
        %v3724 = vld [vmem:[#allocation3 + $0x2a0] sm:$0xff]
        %v3725 = vld [vmem:[#allocation3 + $0x2a8] sm:$0xff]
        %v3726 = vld [vmem:[#allocation3 + $0x2b0] sm:$0xff]
        %v3727 = vld [vmem:[#allocation3 + $0x2b8] sm:$0xf]
        %v3728 = vld [vmem:[#allocation3 + $0x2bc] sm:$0xff]
        %v3729 = vld [vmem:[#allocation3 + $0x2c4] sm:$0xff]
        %v3730 = vld [vmem:[#allocation3 + $0x2cc] sm:$0xff]
        %v3731 = vld [vmem:[#allocation3 + $0x2d4] sm:$0xff]
        %v3732 = vld [vmem:[#allocation3 + $0x2dc] sm:$0xff]
        %v3733 = vld [vmem:[#allocation3 + $0x2e4] sm:$0xff]
        %v3734 = vld [vmem:[#allocation3 + $0x2ec] sm:$0xff]
        %v3735 = vld [vmem:[#allocation3 + $0x2f4] sm:$0xff]
        %v3736 = vld [vmem:[#allocation3 + $0x2fc] sm:$0xff]
        %v3737 = vld [vmem:[#allocation3 + $0x304] sm:$0xff]
        %v3738 = vld [vmem:[#allocation3 + $0x30c] sm:$0xff]
        %v3739 = vld [vmem:[#allocation3 + $0x314] sm:$0xff]
        %v3740 = vld [vmem:[#allocation3 + $0x31c] sm:$0xf]
        %v3741 = vld [vmem:[%s3] sm:$0xf]
        %v3742 = vld [vmem:[%s3 + $0x4] sm:$0xf]
        %v3743 = vld [vmem:[%s3 + $0x8] sm:$0xf]
        %v3744 = vld [vmem:[%s3 + $0xc] sm:$0xf]
        %v3745 = vld [vmem:[%s3 + $0x10] sm:$0xf]
        %v3746 = vld [vmem:[%s3 + $0x14] sm:$0xf]
        %v3747 = vld [vmem:[%s3 + $0x18] sm:$0xf]
        %v3748 = vld [vmem:[%s3 + $0x1c] sm:$0xf]
        %v3749 = vld [vmem:[%s3 + $0x20] sm:$0xf]
        %v3750 = vld [vmem:[%s3 + $0x24] sm:$0xf]
        %v3751 = vld [vmem:[%s3 + $0x28] sm:$0xf]
        %v3752 = vld [vmem:[%s3 + $0x2c] sm:$0xf]
        %v3753 = vld [vmem:[%s3 + $0x30] sm:$0xf]
        %v3754 = vld [vmem:[%s3 + $0x34] sm:$0xf]
        %v3755 = vld [vmem:[%s3 + $0x38] sm:$0xf]
        %v3756 = vld [vmem:[%s3 + $0x3c] sm:$0xf]
        %v3757 = vld [vmem:[%s3 + $0x40] sm:$0xf]
        %v3758 = vld [vmem:[%s3 + $0x44] sm:$0xf]
        %v3759 = vld [vmem:[%s3 + $0x48] sm:$0xf]
        %v3760 = vld [vmem:[%s3 + $0x4c] sm:$0xf]
        %v3761 = vld [vmem:[%s3 + $0x50] sm:$0xf]
        %v3762 = vld [vmem:[%s3 + $0x54] sm:$0xf]
        %v3763 = vld [vmem:[%s3 + $0x58] sm:$0xf]
        %v3764 = vld [vmem:[%s3 + $0x5c] sm:$0xf]
        %v3765 = vld [vmem:[%s3 + $0x60] sm:$0xf]
        %v3766 = vld [vmem:[%s3 + $0x64] sm:$0xf]
        %v3767 = vld [vmem:[%s3 + $0x68] sm:$0xf]
        %v3768 = vld [vmem:[%s3 + $0x6c] sm:$0xf]
        %v3769 = vld [vmem:[%s3 + $0x70] sm:$0xf]
        %v3770 = vld [vmem:[%s3 + $0x74] sm:$0xf]
        %v3771 = vld [vmem:[%s3 + $0x78] sm:$0xf]
        %v3772 = vld [vmem:[%s3 + $0x7c] sm:$0xf]
        %v3773 = vld [vmem:[%s3 + $0x80] sm:$0xf]
        %v3774 = vld [vmem:[%s3 + $0x84] sm:$0xf]
        %v3775 = vld [vmem:[%s3 + $0x88] sm:$0xf]
        %v3776 = vld [vmem:[%s3 + $0x8c] sm:$0xf]
        %v3777 = vld [vmem:[%s3 + $0x90] sm:$0xf]
        %v3778 = vld [vmem:[%s3 + $0x94] sm:$0xf]
        %v3779 = vld [vmem:[%s3 + $0x98] sm:$0xf]
        %v3780 = vld [vmem:[%s3 + $0x9c] sm:$0xf]
        %v3781 = vld [vmem:[%s3 + $0xa0] sm:$0xf]
        %v3782 = vld [vmem:[%s3 + $0xa4] sm:$0xf]
        %v3783 = vld [vmem:[%s3 + $0xa8] sm:$0xf]
        %v3784 = vld [vmem:[%s3 + $0xac] sm:$0xf]
        %v3785 = vld [vmem:[%s3 + $0xb0] sm:$0xf]
        %v3786 = vld [vmem:[%s3 + $0xb4] sm:$0xf]
        %v3787 = vld [vmem:[%s3 + $0xb8] sm:$0xf]
        %v3788 = vld [vmem:[%s3 + $0xbc] sm:$0xf]
        %v3789 = vld [vmem:[%s3 + $0xc0] sm:$0xf]
        %v3790 = vld [vmem:[%s3 + $0xc4] sm:$0xf]
        %v3791 = vld [vmem:[%s3 + $0xc8] sm:$0xf]
        %v3792 = vld [vmem:[%s3 + $0xcc] sm:$0xf]
        %v3793 = vld [vmem:[%s3 + $0xd0] sm:$0xf]
        %v3794 = vld [vmem:[%s3 + $0xd4] sm:$0xf]
        %v3795 = vld [vmem:[%s3 + $0xd8] sm:$0xf]
        %v3796 = vld [vmem:[%s3 + $0xdc] sm:$0xf]
        %v3797 = vld [vmem:[%s3 + $0xe0] sm:$0xf]
        %v3798 = vld [vmem:[%s3 + $0xe4] sm:$0xf]
        %v3799 = vld [vmem:[%s3 + $0xe8] sm:$0xf]
        %v3800 = vld [vmem:[%s3 + $0xec] sm:$0xf]
        %v3801 = vld [vmem:[%s3 + $0xf0] sm:$0xf]
        %v3802 = vld [vmem:[%s3 + $0xf4] sm:$0xf]
        %v3803 = vld [vmem:[%s3 + $0xf8] sm:$0xf]
        %v3804 = vld [vmem:[%s3 + $0xfc] sm:$0xf]
        %v3805 = vld [vmem:[%s3 + $0x100] sm:$0xf]
        %v3806 = vld [vmem:[%s3 + $0x104] sm:$0xf]
        %v3807 = vld [vmem:[%s3 + $0x108] sm:$0xf]
        %v3808 = vld [vmem:[%s3 + $0x10c] sm:$0xf]
        %v3809 = vld [vmem:[%s3 + $0x110] sm:$0xf]
        %v3810 = vld [vmem:[%s3 + $0x114] sm:$0xf]
        %v3811 = vld [vmem:[%s3 + $0x118] sm:$0xf]
        %v3812 = vld [vmem:[%s3 + $0x11c] sm:$0xf]
        %v3813 = vld [vmem:[%s3 + $0x120] sm:$0xf]
        %v3814 = vld [vmem:[%s3 + $0x124] sm:$0xf]
        %v3815 = vld [vmem:[%s3 + $0x128] sm:$0xf]
        %v3816 = vld [vmem:[%s3 + $0x12c] sm:$0xf]
        %v3817 = vld [vmem:[%s3 + $0x130] sm:$0xf]
        %v3818 = vld [vmem:[%s3 + $0x134] sm:$0xf]
        %v3819 = vld [vmem:[%s3 + $0x138] sm:$0xf]
        %v3820 = vld [vmem:[%s3 + $0x13c] sm:$0xf]
        %v3821 = vld [vmem:[%s3 + $0x140] sm:$0xf]
        %v3822 = vld [vmem:[%s3 + $0x144] sm:$0xf]
        %v3823 = vld [vmem:[%s3 + $0x148] sm:$0xf]
        %v3824 = vld [vmem:[%s3 + $0x14c] sm:$0xf]
        %v3825 = vld [vmem:[%s3 + $0x150] sm:$0xf]
        %v3826 = vld [vmem:[%s3 + $0x154] sm:$0xf]
        %v3827 = vld [vmem:[%s3 + $0x158] sm:$0xf]
        %v3828 = vld [vmem:[%s3 + $0x15c] sm:$0xf]
        %v3829 = vld [vmem:[%s3 + $0x160] sm:$0xf]
        %v3830 = vld [vmem:[%s3 + $0x164] sm:$0xf]
        %v3831 = vld [vmem:[%s3 + $0x168] sm:$0xf]
        %v3832 = vld [vmem:[%s3 + $0x16c] sm:$0xf]
        %v3833 = vld [vmem:[%s3 + $0x170] sm:$0xf]
        %v3834 = vld [vmem:[%s3 + $0x174] sm:$0xf]
        %v3835 = vld [vmem:[%s3 + $0x178] sm:$0xf]
        %v3836 = vld [vmem:[%s3 + $0x17c] sm:$0xf]
        %v3837 = vld [vmem:[%s3 + $0x180] sm:$0xf]
        %v3838 = vld [vmem:[%s3 + $0x184] sm:$0xf]
        %v3839 = vld [vmem:[%s3 + $0x188] sm:$0xf]
        %v3840 = vld [vmem:[%s3 + $0x18c] sm:$0xf]
        %v3841 = vld [vmem:[%s3 + $0x190] sm:$0xf]
        %v3842 = vld [vmem:[%s3 + $0x194] sm:$0xf]
        %v3843 = vld [vmem:[%s3 + $0x198] sm:$0xf]
        %v3844 = vld [vmem:[%s3 + $0x19c] sm:$0xf]
        %v3845 = vld [vmem:[%s3 + $0x1a0] sm:$0xf]
        %v3846 = vld [vmem:[%s3 + $0x1a4] sm:$0xf]
        %v3847 = vld [vmem:[%s3 + $0x1a8] sm:$0xf]
        %v3848 = vld [vmem:[%s3 + $0x1ac] sm:$0xf]
        %v3849 = vld [vmem:[%s3 + $0x1b0] sm:$0xf]
        %v3850 = vld [vmem:[%s3 + $0x1b4] sm:$0xf]
        %v3851 = vld [vmem:[%s3 + $0x1b8] sm:$0xf]
        %v3852 = vld [vmem:[%s3 + $0x1bc] sm:$0xf]
        %v3853 = vld [vmem:[%s3 + $0x1c0] sm:$0xf]
        %v3854 = vld [vmem:[%s3 + $0x1c4] sm:$0xf]
        %v3855 = vld [vmem:[%s3 + $0x1c8] sm:$0xf]
        %v3856 = vld [vmem:[%s3 + $0x1cc] sm:$0xf]
        %v3857 = vld [vmem:[%s3 + $0x1d0] sm:$0xf]
        %v3858 = vld [vmem:[%s3 + $0x1d4] sm:$0xf]
        %v3859 = vld [vmem:[%s3 + $0x1d8] sm:$0xf]
        %v3860 = vld [vmem:[%s3 + $0x1dc] sm:$0xf]
        %v3861 = vld [vmem:[%s3 + $0x1e0] sm:$0xf]
        %v3862 = vld [vmem:[%s3 + $0x1e4] sm:$0xf]
        %v3863 = vld [vmem:[%s3 + $0x1e8] sm:$0xf]
        %v3864 = vld [vmem:[%s3 + $0x1ec] sm:$0xf]
        %v3865 = vld [vmem:[%s3 + $0x1f0] sm:$0xf]
        %v3866 = vld [vmem:[%s3 + $0x1f4] sm:$0xf]
        %v3867 = vld [vmem:[%s3 + $0x1f8] sm:$0xf]
        %v3868 = vld [vmem:[%s3 + $0x1fc] sm:$0xf]
        %v3869 = vld [vmem:[%s3 + $0x200] sm:$0xf]
        %v3870 = vld [vmem:[%s3 + $0x204] sm:$0xf]
        %v3871 = vld [vmem:[%s3 + $0x208] sm:$0xf]
        %v3872 = vld [vmem:[%s3 + $0x20c] sm:$0xf]
        %v3873 = vld [vmem:[%s3 + $0x210] sm:$0xf]
        %v3874 = vld [vmem:[%s3 + $0x214] sm:$0xf]
        %v3875 = vld [vmem:[%s3 + $0x218] sm:$0xf]
        %v3876 = vld [vmem:[%s3 + $0x21c] sm:$0xf]
        %v3877 = vld [vmem:[%s3 + $0x220] sm:$0xf]
        %v3878 = vld [vmem:[%s3 + $0x224] sm:$0xf]
        %v3879 = vld [vmem:[%s3 + $0x228] sm:$0xf]
        %v3880 = vld [vmem:[%s3 + $0x22c] sm:$0xf]
        %v3881 = vld [vmem:[%s3 + $0x230] sm:$0xf]
        %v3882 = vld [vmem:[%s3 + $0x234] sm:$0xf]
        %v3883 = vld [vmem:[%s3 + $0x238] sm:$0xf]
        %v3884 = vld [vmem:[%s3 + $0x23c] sm:$0xf]
        %v3885 = vld [vmem:[%s3 + $0x240] sm:$0xf]
        %v3886 = vld [vmem:[%s3 + $0x244] sm:$0xf]
        %v3887 = vld [vmem:[%s3 + $0x248] sm:$0xf]
        %v3888 = vld [vmem:[%s3 + $0x24c] sm:$0xf]
        %v3889 = vld [vmem:[%s3 + $0x250] sm:$0xf]
        %v3890 = vld [vmem:[%s3 + $0x254] sm:$0xf]
        %v3891 = vld [vmem:[%s3 + $0x258] sm:$0xf]
        %v3892 = vld [vmem:[%s3 + $0x25c] sm:$0xf]
        %v3893 = vld [vmem:[%s3 + $0x260] sm:$0xf]
        %v3894 = vld [vmem:[%s3 + $0x264] sm:$0xf]
        %v3895 = vld [vmem:[%s3 + $0x268] sm:$0xf]
        %v3896 = vld [vmem:[%s3 + $0x26c] sm:$0xf]
        %v3897 = vld [vmem:[%s3 + $0x270] sm:$0xf]
        %v3898 = vld [vmem:[%s3 + $0x274] sm:$0xf]
        %v3899 = vld [vmem:[%s3 + $0x278] sm:$0xf]
        %v3900 = vld [vmem:[%s3 + $0x27c] sm:$0xf]
        %v3901 = vld [vmem:[%s3 + $0x280] sm:$0xf]
        %v3902 = vld [vmem:[%s3 + $0x284] sm:$0xf]
        %v3903 = vld [vmem:[%s3 + $0x288] sm:$0xf]
        %v3904 = vld [vmem:[%s3 + $0x28c] sm:$0xf]
        %v3905 = vld [vmem:[%s3 + $0x290] sm:$0xf]
        %v3906 = vld [vmem:[%s3 + $0x294] sm:$0xf]
        %v3907 = vld [vmem:[%s3 + $0x298] sm:$0xf]
        %v3908 = vld [vmem:[%s3 + $0x29c] sm:$0xf]
        %v3909 = vld [vmem:[%s3 + $0x2a0] sm:$0xf]
        %v3910 = vld [vmem:[%s3 + $0x2a4] sm:$0xf]
        %v3911 = vld [vmem:[%s3 + $0x2a8] sm:$0xf]
        %v3912 = vld [vmem:[%s3 + $0x2ac] sm:$0xf]
        %v3913 = vld [vmem:[%s3 + $0x2b0] sm:$0xf]
        %v3914 = vld [vmem:[%s3 + $0x2b4] sm:$0xf]
        %v3915 = vld [vmem:[%s3 + $0x2b8] sm:$0xf]
        %v3916 = vld [vmem:[%s3 + $0x2bc] sm:$0xf]
        %v3917 = vld [vmem:[%s3 + $0x2c0] sm:$0xf]
        %v3918 = vld [vmem:[%s3 + $0x2c4] sm:$0xf]
        %v3919 = vld [vmem:[%s3 + $0x2c8] sm:$0xf]
        %v3920 = vld [vmem:[%s3 + $0x2cc] sm:$0xf]
        %v3921 = vld [vmem:[%s3 + $0x2d0] sm:$0xf]
        %v3922 = vld [vmem:[%s3 + $0x2d4] sm:$0xf]
        %v3923 = vld [vmem:[%s3 + $0x2d8] sm:$0xf]
        %v3924 = vld [vmem:[%s3 + $0x2dc] sm:$0xf]
        %v3925 = vld [vmem:[%s3 + $0x2e0] sm:$0xf]
        %v3926 = vld [vmem:[%s3 + $0x2e4] sm:$0xf]
        %v3927 = vld [vmem:[%s3 + $0x2e8] sm:$0xf]
        %v3928 = vld [vmem:[%s3 + $0x2ec] sm:$0xf]
        %v3929 = vld [vmem:[%s3 + $0x2f0] sm:$0xf]
        %v3930 = vld [vmem:[%s3 + $0x2f4] sm:$0xf]
        %v3931 = vld [vmem:[%s3 + $0x2f8] sm:$0xf]
        %v3932 = vld [vmem:[%s3 + $0x2fc] sm:$0xf]
        %v3933 = vld [vmem:[%s3 + $0x300] sm:$0xf]
        %v3934 = vld [vmem:[%s3 + $0x304] sm:$0xf]
        %v3935 = vld [vmem:[%s3 + $0x308] sm:$0xf]
        %v3936 = vld [vmem:[%s3 + $0x30c] sm:$0xf]
        %v3937 = vld [vmem:[%s3 + $0x310] sm:$0xf]
        %v3938 = vld [vmem:[%s3 + $0x314] sm:$0xf]
        %v3939 = vld [vmem:[%s3 + $0x318] sm:$0xf]
        %v3940 = vld [vmem:[%s3 + $0x31c] sm:$0xf]
        %v3941 = vld [vmem:[%s3 + $0x320] sm:$0xf]
        %v3942 = vld [vmem:[%s3 + $0x324] sm:$0xf]
        %v3943 = vld [vmem:[%s3 + $0x328] sm:$0xf]
        %v3944 = vld [vmem:[%s3 + $0x32c] sm:$0xf]
        %v3945 = vld [vmem:[%s3 + $0x330] sm:$0xf]
        %v3946 = vld [vmem:[%s3 + $0x334] sm:$0xf]
        %v3947 = vld [vmem:[%s3 + $0x338] sm:$0xf]
        %v3948 = vld [vmem:[%s3 + $0x33c] sm:$0xf]
        %v3949 = vld [vmem:[%s3 + $0x340] sm:$0xf]
        %v3950 = vld [vmem:[%s3 + $0x344] sm:$0xf]
        %v3951 = vld [vmem:[%s3 + $0x348] sm:$0xf]
        %v3952 = vld [vmem:[%s3 + $0x34c] sm:$0xf]
        %v3953 = vld [vmem:[%s3 + $0x350] sm:$0xf]
        %v3954 = vld [vmem:[%s3 + $0x354] sm:$0xf]
        %v3955 = vld [vmem:[%s3 + $0x358] sm:$0xf]
        %v3956 = vld [vmem:[%s3 + $0x35c] sm:$0xf]
        %v3957 = vld [vmem:[%s3 + $0x360] sm:$0xf]
        %v3958 = vld [vmem:[%s3 + $0x364] sm:$0xf]
        %v3959 = vld [vmem:[%s3 + $0x368] sm:$0xf]
        %v3960 = vld [vmem:[%s3 + $0x36c] sm:$0xf]
        %v3961 = vld [vmem:[%s3 + $0x370] sm:$0xf]
        %v3962 = vld [vmem:[%s3 + $0x374] sm:$0xf]
        %v3963 = vld [vmem:[%s3 + $0x378] sm:$0xf]
        %v3964 = vld [vmem:[%s3 + $0x37c] sm:$0xf]
        %v3965 = vld [vmem:[%s3 + $0x380] sm:$0xf]
        %v3966 = vld [vmem:[%s3 + $0x384] sm:$0xf]
        %v3967 = vld [vmem:[%s3 + $0x388] sm:$0xf]
        %v3968 = vld [vmem:[%s3 + $0x38c] sm:$0xf]
        %v3969 = vld [vmem:[%s3 + $0x390] sm:$0xf]
        %v3970 = vld [vmem:[%s3 + $0x394] sm:$0xf]
        %v3971 = vld [vmem:[%s3 + $0x398] sm:$0xf]
        %v3972 = vld [vmem:[%s3 + $0x39c] sm:$0xf]
        %v3973 = vld [vmem:[%s3 + $0x3a0] sm:$0xf]
        %v3974 = vld [vmem:[%s3 + $0x3a4] sm:$0xf]
        %v3975 = vld [vmem:[%s3 + $0x3a8] sm:$0xf]
        %v3976 = vld [vmem:[%s3 + $0x3ac] sm:$0xf]
        %v3977 = vld [vmem:[%s3 + $0x3b0] sm:$0xf]
        %v3978 = vld [vmem:[%s3 + $0x3b4] sm:$0xf]
        %v3979 = vld [vmem:[%s3 + $0x3b8] sm:$0xf]
        %v3980 = vld [vmem:[%s3 + $0x3bc] sm:$0xf]
        %v3981 = vld [vmem:[%s3 + $0x3c0] sm:$0xf]
        %v3982 = vld [vmem:[%s3 + $0x3c4] sm:$0xf]
        %v3983 = vld [vmem:[%s3 + $0x3c8] sm:$0xf]
        %v3984 = vld [vmem:[%s3 + $0x3cc] sm:$0xf]
        %v3985 = vld [vmem:[%s3 + $0x3d0] sm:$0xf]
        %v3986 = vld [vmem:[%s3 + $0x3d4] sm:$0xf]
        %v3987 = vld [vmem:[%s3 + $0x3d8] sm:$0xf]
        %v3988 = vld [vmem:[%s3 + $0x3dc] sm:$0xf]
        %v3989 = vld [vmem:[%s3 + $0x3e0] sm:$0xf]
        %v3990 = vld [vmem:[%s3 + $0x3e4] sm:$0xf]
        %v3991 = vld [vmem:[%s3 + $0x3e8] sm:$0xf]
        %v3992 = vld [vmem:[%s3 + $0x3ec] sm:$0xf]
        %v3993 = vld [vmem:[%s3 + $0x3f0] sm:$0xf]
        %v3994 = vld [vmem:[%s3 + $0x3f4] sm:$0xf]
        %v3995 = vld [vmem:[%s3 + $0x3f8] sm:$0xf]
        %v3996 = vld [vmem:[%s3 + $0x3fc] sm:$0xf]
        %v3997 = vld [vmem:[%s3 + $0x400] sm:$0xf]
        %v3998 = vld [vmem:[%s3 + $0x404] sm:$0xf]
        %v3999 = vld [vmem:[%s3 + $0x408] sm:$0xf]
        %v4000 = vld [vmem:[%s3 + $0x40c] sm:$0xf]
        %v4001 = vld [vmem:[%s3 + $0x410] sm:$0xf]
        %v4002 = vld [vmem:[%s3 + $0x414] sm:$0xf]
        %v4003 = vld [vmem:[%s3 + $0x418] sm:$0xf]
        %v4004 = vld [vmem:[%s3 + $0x41c] sm:$0xf]
        %v4005 = vld [vmem:[%s3 + $0x420] sm:$0xf]
        %v4006 = vld [vmem:[%s3 + $0x424] sm:$0xf]
        %v4007 = vld [vmem:[%s3 + $0x428] sm:$0xf]
        %v4008 = vld [vmem:[%s3 + $0x42c] sm:$0xf]
        %v4009 = vld [vmem:[%s3 + $0x430] sm:$0xf]
        %v4010 = vld [vmem:[%s3 + $0x434] sm:$0xf]
        %v4011 = vld [vmem:[%s3 + $0x438] sm:$0xf]
        %v4012 = vld [vmem:[%s3 + $0x43c] sm:$0xf]
        %v4013 = vld [vmem:[%s3 + $0x440] sm:$0xf]
        %v4014 = vld [vmem:[%s3 + $0x444] sm:$0xf]
        %v4015 = vld [vmem:[%s3 + $0x448] sm:$0xf]
        %v4016 = vld [vmem:[%s3 + $0x44c] sm:$0xf]
        %v4017 = vld [vmem:[%s3 + $0x450] sm:$0xf]
        %v4018 = vld [vmem:[%s3 + $0x454] sm:$0xf]
        %v4019 = vld [vmem:[%s3 + $0x458] sm:$0xf]
        %v4020 = vld [vmem:[%s3 + $0x45c] sm:$0xf]
        %v4021 = vld [vmem:[%s3 + $0x460] sm:$0xf]
        %v4022 = vld [vmem:[%s3 + $0x464] sm:$0xf]
        %v4023 = vld [vmem:[%s3 + $0x468] sm:$0xf]
        %v4024 = vld [vmem:[%s3 + $0x46c] sm:$0xf]
        %v4025 = vld [vmem:[%s3 + $0x470] sm:$0xf]
        %v4026 = vld [vmem:[%s3 + $0x474] sm:$0xf]
        %v4027 = vld [vmem:[%s3 + $0x478] sm:$0xf]
        %v4028 = vld [vmem:[%s3 + $0x47c] sm:$0xf]
        %v4029 = vld [vmem:[%s3 + $0x480] sm:$0xf]
        %v4030 = vld [vmem:[%s3 + $0x484] sm:$0xf]
        %v4031 = vld [vmem:[%s3 + $0x488] sm:$0xf]
        %v4032 = vld [vmem:[%s3 + $0x48c] sm:$0xf]
        %v4033 = vld [vmem:[%s3 + $0x490] sm:$0xf]
        %v4034 = vld [vmem:[%s3 + $0x494] sm:$0xf]
        %v4035 = vld [vmem:[%s3 + $0x498] sm:$0xf]
        %v4036 = vld [vmem:[%s3 + $0x49c] sm:$0xf]
        %v4037 = vld [vmem:[%s3 + $0x4a0] sm:$0xf]
        %v4038 = vld [vmem:[%s3 + $0x4a4] sm:$0xf]
        %v4039 = vld [vmem:[%s3 + $0x4a8] sm:$0xf]
        %v4040 = vld [vmem:[%s3 + $0x4ac] sm:$0xf]
        %v4041 = vld [vmem:[%s3 + $0x4b0] sm:$0xf]
        %v4042 = vld [vmem:[%s3 + $0x4b4] sm:$0xf]
        %v4043 = vld [vmem:[%s3 + $0x4b8] sm:$0xf]
        %v4044 = vld [vmem:[%s3 + $0x4bc] sm:$0xf]
        %v4045 = vld [vmem:[%s3 + $0x4c0] sm:$0xf]
        %v4046 = vld [vmem:[%s3 + $0x4c4] sm:$0xf]
        %v4047 = vld [vmem:[%s3 + $0x4c8] sm:$0xf]
        %v4048 = vld [vmem:[%s3 + $0x4cc] sm:$0xf]
        %v4049 = vld [vmem:[%s3 + $0x4d0] sm:$0xf]
        %v4050 = vld [vmem:[%s3 + $0x4d4] sm:$0xf]
        %v4051 = vld [vmem:[%s3 + $0x4d8] sm:$0xf]
        %v4052 = vld [vmem:[%s3 + $0x4dc] sm:$0xf]
        %v4053 = vld [vmem:[%s3 + $0x4e0] sm:$0xf]
        %v4054 = vld [vmem:[%s3 + $0x4e4] sm:$0xf]
        %v4055 = vld [vmem:[%s3 + $0x4e8] sm:$0xf]
        %v4056 = vld [vmem:[%s3 + $0x4ec] sm:$0xf]
        %v4057 = vld [vmem:[%s3 + $0x4f0] sm:$0xf]
        %v4058 = vld [vmem:[%s3 + $0x4f4] sm:$0xf]
        %v4059 = vld [vmem:[%s3 + $0x4f8] sm:$0xf]
        %v4060 = vld [vmem:[%s3 + $0x4fc] sm:$0xf]
        %v4061 = vld [vmem:[%s3 + $0x500] sm:$0xf]
        %v4062 = vld [vmem:[%s3 + $0x504] sm:$0xf]
        %v4063 = vld [vmem:[%s3 + $0x508] sm:$0xf]
        %v4064 = vld [vmem:[%s3 + $0x50c] sm:$0xf]
        %v4065 = vld [vmem:[%s3 + $0x510] sm:$0xf]
        %v4066 = vld [vmem:[%s3 + $0x514] sm:$0xf]
        %v4067 = vld [vmem:[%s3 + $0x518] sm:$0xf]
        %v4068 = vld [vmem:[%s3 + $0x51c] sm:$0xf]
        %v4069 = vld [vmem:[%s3 + $0x520] sm:$0xf]
        %v4070 = vld [vmem:[%s3 + $0x524] sm:$0xf]
        %v4071 = vld [vmem:[%s3 + $0x528] sm:$0xf]
        %v4072 = vld [vmem:[%s3 + $0x52c] sm:$0xf]
        %v4073 = vld [vmem:[%s3 + $0x530] sm:$0xf]
        %v4074 = vld [vmem:[%s3 + $0x534] sm:$0xf]
        %v4075 = vld [vmem:[%s3 + $0x538] sm:$0xf]
        %v4076 = vld [vmem:[%s3 + $0x53c] sm:$0xf]
        %v4077 = vld [vmem:[%s3 + $0x540] sm:$0xf]
        %v4078 = vld [vmem:[%s3 + $0x544] sm:$0xf]
        %v4079 = vld [vmem:[%s3 + $0x548] sm:$0xf]
        %v4080 = vld [vmem:[%s3 + $0x54c] sm:$0xf]
        %v4081 = vld [vmem:[%s3 + $0x550] sm:$0xf]
        %v4082 = vld [vmem:[%s3 + $0x554] sm:$0xf]
        %v4083 = vld [vmem:[%s3 + $0x558] sm:$0xf]
        %v4084 = vld [vmem:[%s3 + $0x55c] sm:$0xf]
        %v4085 = vld [vmem:[%s3 + $0x560] sm:$0xf]
        %v4086 = vld [vmem:[%s3 + $0x564] sm:$0xf]
        %v4087 = vld [vmem:[%s3 + $0x568] sm:$0xf]
        %v4088 = vld [vmem:[%s3 + $0x56c] sm:$0xf]
        %v4089 = vld [vmem:[%s3 + $0x570] sm:$0xf]
        %v4090 = vld [vmem:[%s3 + $0x574] sm:$0xf]
        %v4091 = vld [vmem:[%s3 + $0x578] sm:$0xf]
        %v4092 = vld [vmem:[%s3 + $0x57c] sm:$0xf]
        %v4093 = vld [vmem:[%s3 + $0x580] sm:$0xf]
        %v4094 = vld [vmem:[%s3 + $0x584] sm:$0xf]
        %v4095 = vld [vmem:[%s3 + $0x588] sm:$0xf]
        %v4096 = vld [vmem:[%s3 + $0x58c] sm:$0xf]
        %v4097 = vld [vmem:[%s3 + $0x590] sm:$0xf]
        %v4098 = vld [vmem:[%s3 + $0x594] sm:$0xf]
        %v4099 = vld [vmem:[%s3 + $0x598] sm:$0xf]
        %v4100 = vld [vmem:[%s3 + $0x59c] sm:$0xf]
        %v4101 = vld [vmem:[%s3 + $0x5a0] sm:$0xf]
        %v4102 = vld [vmem:[%s3 + $0x5a4] sm:$0xf]
        %v4103 = vld [vmem:[%s3 + $0x5a8] sm:$0xf]
        %v4104 = vld [vmem:[%s3 + $0x5ac] sm:$0xf]
        %v4105 = vld [vmem:[%s3 + $0x5b0] sm:$0xf]
        %v4106 = vld [vmem:[%s3 + $0x5b4] sm:$0xf]
        %v4107 = vld [vmem:[%s3 + $0x5b8] sm:$0xf]
        %v4108 = vld [vmem:[%s3 + $0x5bc] sm:$0xf]
        %v4109 = vld [vmem:[%s3 + $0x5c0] sm:$0xf]
        %v4110 = vld [vmem:[%s3 + $0x5c4] sm:$0xf]
        %v4111 = vld [vmem:[%s3 + $0x5c8] sm:$0xf]
        %v4112 = vld [vmem:[%s3 + $0x5cc] sm:$0xf]
        %v4113 = vld [vmem:[%s3 + $0x5d0] sm:$0xf]
        %v4114 = vld [vmem:[%s3 + $0x5d4] sm:$0xf]
        %v4115 = vld [vmem:[%s3 + $0x5d8] sm:$0xf]
        %v4116 = vld [vmem:[%s3 + $0x5dc] sm:$0xf]
        %v4117 = vld [vmem:[%s3 + $0x5e0] sm:$0xf]
        %v4118 = vld [vmem:[%s3 + $0x5e4] sm:$0xf]
        %v4119 = vld [vmem:[%s3 + $0x5e8] sm:$0xf]
        %v4120 = vld [vmem:[%s3 + $0x5ec] sm:$0xf]
        %v4121 = vld [vmem:[%s3 + $0x5f0] sm:$0xf]
        %v4122 = vld [vmem:[%s3 + $0x5f4] sm:$0xf]
        %v4123 = vld [vmem:[%s3 + $0x5f8] sm:$0xf]
        %v4124 = vld [vmem:[%s3 + $0x5fc] sm:$0xf]
        %v4125 = vld [vmem:[%s3 + $0x600] sm:$0xf]
        %v4126 = vld [vmem:[%s3 + $0x604] sm:$0xf]
        %v4127 = vld [vmem:[%s3 + $0x608] sm:$0xf]
        %v4128 = vld [vmem:[%s3 + $0x60c] sm:$0xf]
        %v4129 = vld [vmem:[%s3 + $0x610] sm:$0xf]
        %v4130 = vld [vmem:[%s3 + $0x614] sm:$0xf]
        %v4131 = vld [vmem:[%s3 + $0x618] sm:$0xf]
        %v4132 = vld [vmem:[%s3 + $0x61c] sm:$0xf]
        %v4133 = vld [vmem:[%s3 + $0x620] sm:$0xf]
        %v4134 = vld [vmem:[%s3 + $0x624] sm:$0xf]
        %v4135 = vld [vmem:[%s3 + $0x628] sm:$0xf]
        %v4136 = vld [vmem:[%s3 + $0x62c] sm:$0xf]
        %v4137 = vld [vmem:[%s3 + $0x630] sm:$0xf]
        %v4138 = vld [vmem:[%s3 + $0x634] sm:$0xf]
        %v4139 = vld [vmem:[%s3 + $0x638] sm:$0xf]
        %v4140 = vld [vmem:[%s3 + $0x63c] sm:$0xf]
        %v4141 = vld [vmem:[%s4] sm:$0x1]
        %v4143 = vlaneseq
        %v4144 = vshrl.u32 %v4143, 7
        %v4145 = vsub.s32 0, %v4144
        %v4146 = vrot.slane %v4141, %v4145
        %v4252 = vunpack.c.l.b16 %v3637
        %v4253 = vunpack.c.h.b16 %v3637
        %v4254 = vunpack.c.l.b16 %v3638
        %v4255 = vunpack.c.h.b16 %v3638
        %v4256 = vunpack.c.l.b16 %v3639
        %v4257 = vunpack.c.h.b16 %v3639
        %v4258 = vunpack.c.l.b16 %v3640
        %v4259 = vunpack.c.h.b16 %v3640
        %v4260 = vunpack.c.l.b16 %v3641
        %v4261 = vunpack.c.h.b16 %v3641
        %v4262 = vunpack.c.l.b16 %v3642
        %v4263 = vunpack.c.h.b16 %v3642
        %v4264 = vunpack.c.l.b16 %v3643
        %v4265 = vunpack.c.h.b16 %v3643
        %v4266 = vunpack.c.l.b16 %v3644
        %v4267 = vunpack.c.h.b16 %v3644
        %v4268 = vunpack.c.l.b16 %v3645
        %v4269 = vunpack.c.h.b16 %v3645
        %v4270 = vunpack.c.l.b16 %v3646
        %v4271 = vunpack.c.h.b16 %v3646
        %v4272 = vunpack.c.l.b16 %v3647
        %v4273 = vunpack.c.h.b16 %v3647
        %v4274 = vunpack.c.l.b16 %v3648
        %v4275 = vunpack.c.h.b16 %v3648
        %v4276 = vunpack.c.l.b16 %v3649
        %v4277 = vunpack.c.l.b16 %v3650
        %v4278 = vunpack.c.h.b16 %v3650
        %v4279 = vunpack.c.l.b16 %v3651
        %v4280 = vunpack.c.h.b16 %v3651
        %v4281 = vunpack.c.l.b16 %v3652
        %v4282 = vunpack.c.h.b16 %v3652
        %v4283 = vunpack.c.l.b16 %v3653
        %v4284 = vunpack.c.h.b16 %v3653
        %v4285 = vunpack.c.l.b16 %v3654
        %v4286 = vunpack.c.h.b16 %v3654
        %v4287 = vunpack.c.l.b16 %v3655
        %v4288 = vunpack.c.h.b16 %v3655
        %v4289 = vunpack.c.l.b16 %v3656
        %v4290 = vunpack.c.h.b16 %v3656
        %v4291 = vunpack.c.l.b16 %v3657
        %v4292 = vunpack.c.h.b16 %v3657
        %v4293 = vunpack.c.l.b16 %v3658
        %v4294 = vunpack.c.h.b16 %v3658
        %v4295 = vunpack.c.l.b16 %v3659
        %v4296 = vunpack.c.h.b16 %v3659
        %v4297 = vunpack.c.l.b16 %v3660
        %v4298 = vunpack.c.h.b16 %v3660
        %v4299 = vunpack.c.l.b16 %v3661
        %v4300 = vunpack.c.h.b16 %v3661
        %v4301 = vunpack.c.l.b16 %v3662
        %v4302 = vunpack.c.l.b16 %v3663
        %v4303 = vunpack.c.h.b16 %v3663
        %v4304 = vunpack.c.l.b16 %v3664
        %v4305 = vunpack.c.h.b16 %v3664
        %v4306 = vunpack.c.l.b16 %v3665
        %v4307 = vunpack.c.h.b16 %v3665
        %v4308 = vunpack.c.l.b16 %v3666
        %v4309 = vunpack.c.h.b16 %v3666
        %v4310 = vunpack.c.l.b16 %v3667
        %v4311 = vunpack.c.h.b16 %v3667
        %v4312 = vunpack.c.l.b16 %v3668
        %v4313 = vunpack.c.h.b16 %v3668
        %v4314 = vunpack.c.l.b16 %v3669
        %v4315 = vunpack.c.h.b16 %v3669
        %v4316 = vunpack.c.l.b16 %v3670
        %v4317 = vunpack.c.h.b16 %v3670
        %v4318 = vunpack.c.l.b16 %v3671
        %v4319 = vunpack.c.h.b16 %v3671
        %v4320 = vunpack.c.l.b16 %v3672
        %v4321 = vunpack.c.h.b16 %v3672
        %v4322 = vunpack.c.l.b16 %v3673
        %v4323 = vunpack.c.h.b16 %v3673
        %v4324 = vunpack.c.l.b16 %v3674
        %v4325 = vunpack.c.h.b16 %v3674
        %v4326 = vunpack.c.l.b16 %v3675
        %v4327 = vunpack.c.l.b16 %v3676
        %v4328 = vunpack.c.h.b16 %v3676
        %v4329 = vunpack.c.l.b16 %v3677
        %v4330 = vunpack.c.h.b16 %v3677
        %v4331 = vunpack.c.l.b16 %v3678
        %v4332 = vunpack.c.h.b16 %v3678
        %v4333 = vunpack.c.l.b16 %v3679
        %v4334 = vunpack.c.h.b16 %v3679
        %v4335 = vunpack.c.l.b16 %v3680
        %v4336 = vunpack.c.h.b16 %v3680
        %v4337 = vunpack.c.l.b16 %v3681
        %v4338 = vunpack.c.h.b16 %v3681
        %v4339 = vunpack.c.l.b16 %v3682
        %v4340 = vunpack.c.h.b16 %v3682
        %v4341 = vunpack.c.l.b16 %v3683
        %v4342 = vunpack.c.h.b16 %v3683
        %v4343 = vunpack.c.l.b16 %v3684
        %v4344 = vunpack.c.h.b16 %v3684
        %v4345 = vunpack.c.l.b16 %v3685
        %v4346 = vunpack.c.h.b16 %v3685
        %v4347 = vunpack.c.l.b16 %v3686
        %v4348 = vunpack.c.h.b16 %v3686
        %v4349 = vunpack.c.l.b16 %v3687
        %v4350 = vunpack.c.h.b16 %v3687
        %v4351 = vunpack.c.l.b16 %v3688
        %v4352 = vunpack.c.l.b16 %v3689
        %v4353 = vunpack.c.h.b16 %v3689
        %v4354 = vunpack.c.l.b16 %v3690
        %v4355 = vunpack.c.h.b16 %v3690
        %v4356 = vunpack.c.l.b16 %v3691
        %v4357 = vunpack.c.h.b16 %v3691
        %v4358 = vunpack.c.l.b16 %v3692
        %v4359 = vunpack.c.h.b16 %v3692
        %v4360 = vunpack.c.l.b16 %v3693
        %v4361 = vunpack.c.h.b16 %v3693
        %v4362 = vunpack.c.l.b16 %v3694
        %v4363 = vunpack.c.h.b16 %v3694
        %v4364 = vunpack.c.l.b16 %v3695
        %v4365 = vunpack.c.h.b16 %v3695
        %v4366 = vunpack.c.l.b16 %v3696
        %v4367 = vunpack.c.h.b16 %v3696
        %v4368 = vunpack.c.l.b16 %v3697
        %v4369 = vunpack.c.h.b16 %v3697
        %v4370 = vunpack.c.l.b16 %v3698
        %v4371 = vunpack.c.h.b16 %v3698
        %v4372 = vunpack.c.l.b16 %v3699
        %v4373 = vunpack.c.h.b16 %v3699
        %v4374 = vunpack.c.l.b16 %v3700
        %v4375 = vunpack.c.h.b16 %v3700
        %v4376 = vunpack.c.l.b16 %v3701
        %v4377 = vunpack.c.l.b16 %v3702
        %v4378 = vunpack.c.h.b16 %v3702
        %v4379 = vunpack.c.l.b16 %v3703
        %v4380 = vunpack.c.h.b16 %v3703
        %v4381 = vunpack.c.l.b16 %v3704
        %v4382 = vunpack.c.h.b16 %v3704
        %v4383 = vunpack.c.l.b16 %v3705
        %v4384 = vunpack.c.h.b16 %v3705
        %v4385 = vunpack.c.l.b16 %v3706
        %v4386 = vunpack.c.h.b16 %v3706
        %v4387 = vunpack.c.l.b16 %v3707
        %v4388 = vunpack.c.h.b16 %v3707
        %v4389 = vunpack.c.l.b16 %v3708
        %v4390 = vunpack.c.h.b16 %v3708
        %v4391 = vunpack.c.l.b16 %v3709
        %v4392 = vunpack.c.h.b16 %v3709
        %v4393 = vunpack.c.l.b16 %v3710
        %v4394 = vunpack.c.h.b16 %v3710
        %v4395 = vunpack.c.l.b16 %v3711
        %v4396 = vunpack.c.h.b16 %v3711
        %v4397 = vunpack.c.l.b16 %v3712
        %v4398 = vunpack.c.h.b16 %v3712
        %v4399 = vunpack.c.l.b16 %v3713
        %v4400 = vunpack.c.h.b16 %v3713
        %v4401 = vunpack.c.l.b16 %v3714
        %v4402 = vunpack.c.l.b16 %v3715
        %v4403 = vunpack.c.h.b16 %v3715
        %v4404 = vunpack.c.l.b16 %v3716
        %v4405 = vunpack.c.h.b16 %v3716
        %v4406 = vunpack.c.l.b16 %v3717
        %v4407 = vunpack.c.h.b16 %v3717
        %v4408 = vunpack.c.l.b16 %v3718
        %v4409 = vunpack.c.h.b16 %v3718
        %v4410 = vunpack.c.l.b16 %v3719
        %v4411 = vunpack.c.h.b16 %v3719
        %v4412 = vunpack.c.l.b16 %v3720
        %v4413 = vunpack.c.h.b16 %v3720
        %v4414 = vunpack.c.l.b16 %v3721
        %v4415 = vunpack.c.h.b16 %v3721
        %v4416 = vunpack.c.l.b16 %v3722
        %v4417 = vunpack.c.h.b16 %v3722
        %v4418 = vunpack.c.l.b16 %v3723
        %v4419 = vunpack.c.h.b16 %v3723
        %v4420 = vunpack.c.l.b16 %v3724
        %v4421 = vunpack.c.h.b16 %v3724
        %v4422 = vunpack.c.l.b16 %v3725
        %v4423 = vunpack.c.h.b16 %v3725
        %v4424 = vunpack.c.l.b16 %v3726
        %v4425 = vunpack.c.h.b16 %v3726
        %v4426 = vunpack.c.l.b16 %v3727
        %v4427 = vunpack.c.l.b16 %v3728
        %v4428 = vunpack.c.h.b16 %v3728
        %v4429 = vunpack.c.l.b16 %v3729
        %v4430 = vunpack.c.h.b16 %v3729
        %v4431 = vunpack.c.l.b16 %v3730
        %v4432 = vunpack.c.h.b16 %v3730
        %v4433 = vunpack.c.l.b16 %v3731
        %v4434 = vunpack.c.h.b16 %v3731
        %v4435 = vunpack.c.l.b16 %v3732
        %v4436 = vunpack.c.h.b16 %v3732
        %v4437 = vunpack.c.l.b16 %v3733
        %v4438 = vunpack.c.h.b16 %v3733
        %v4439 = vunpack.c.l.b16 %v3734
        %v4440 = vunpack.c.h.b16 %v3734
        %v4441 = vunpack.c.l.b16 %v3735
        %v4442 = vunpack.c.h.b16 %v3735
        %v4443 = vunpack.c.l.b16 %v3736
        %v4444 = vunpack.c.h.b16 %v3736
        %v4445 = vunpack.c.l.b16 %v3737
        %v4446 = vunpack.c.h.b16 %v3737
        %v4447 = vunpack.c.l.b16 %v3738
        %v4448 = vunpack.c.h.b16 %v3738
        %v4449 = vunpack.c.l.b16 %v3739
        %v4450 = vunpack.c.h.b16 %v3739
        %v4451 = vunpack.c.l.b16 %v3740
        %v4452 = vpack.c.b16 %v4277, %v4252
        %v4453 = vpack.c.b16 %v4278, %v4253
        %v4454 = vpack.c.b16 %v4279, %v4254
        %v4455 = vpack.c.b16 %v4280, %v4255
        %v4456 = vpack.c.b16 %v4281, %v4256
        %v4457 = vpack.c.b16 %v4282, %v4257
        %v4458 = vpack.c.b16 %v4283, %v4258
        %v4459 = vpack.c.b16 %v4284, %v4259
        %v4460 = vpack.c.b16 %v4285, %v4260
        %v4461 = vpack.c.b16 %v4286, %v4261
        %v4462 = vpack.c.b16 %v4287, %v4262
        %v4463 = vpack.c.b16 %v4288, %v4263
        %v4464 = vpack.c.b16 %v4289, %v4264
        %v4465 = vpack.c.b16 %v4290, %v4265
        %v4466 = vpack.c.b16 %v4291, %v4266
        %v4467 = vpack.c.b16 %v4292, %v4267
        %v4468 = vpack.c.b16 %v4293, %v4268
        %v4469 = vpack.c.b16 %v4294, %v4269
        %v4470 = vpack.c.b16 %v4295, %v4270
        %v4471 = vpack.c.b16 %v4296, %v4271
        %v4472 = vpack.c.b16 %v4297, %v4272
        %v4473 = vpack.c.b16 %v4298, %v4273
        %v4474 = vpack.c.b16 %v4299, %v4274
        %v4475 = vpack.c.b16 %v4300, %v4275
        %v4476 = vpack.c.b16 %v4301, %v4276
        %v4477 = vpack.c.b16 %v4327, %v4302
        %v4478 = vpack.c.b16 %v4328, %v4303
        %v4479 = vpack.c.b16 %v4329, %v4304
        %v4480 = vpack.c.b16 %v4330, %v4305
        %v4481 = vpack.c.b16 %v4331, %v4306
        %v4482 = vpack.c.b16 %v4332, %v4307
        %v4483 = vpack.c.b16 %v4333, %v4308
        %v4484 = vpack.c.b16 %v4334, %v4309
        %v4485 = vpack.c.b16 %v4335, %v4310
        %v4486 = vpack.c.b16 %v4336, %v4311
        %v4487 = vpack.c.b16 %v4337, %v4312
        %v4488 = vpack.c.b16 %v4338, %v4313
        %v4489 = vpack.c.b16 %v4339, %v4314
        %v4490 = vpack.c.b16 %v4340, %v4315
        %v4491 = vpack.c.b16 %v4341, %v4316
        %v4492 = vpack.c.b16 %v4342, %v4317
        %v4493 = vpack.c.b16 %v4343, %v4318
        %v4494 = vpack.c.b16 %v4344, %v4319
        %v4495 = vpack.c.b16 %v4345, %v4320
        %v4496 = vpack.c.b16 %v4346, %v4321
        %v4497 = vpack.c.b16 %v4347, %v4322
        %v4498 = vpack.c.b16 %v4348, %v4323
        %v4499 = vpack.c.b16 %v4349, %v4324
        %v4500 = vpack.c.b16 %v4350, %v4325
        %v4501 = vpack.c.b16 %v4351, %v4326
        %v4502 = vpack.c.b16 %v4377, %v4352
        %v4503 = vpack.c.b16 %v4378, %v4353
        %v4504 = vpack.c.b16 %v4379, %v4354
        %v4505 = vpack.c.b16 %v4380, %v4355
        %v4506 = vpack.c.b16 %v4381, %v4356
        %v4507 = vpack.c.b16 %v4382, %v4357
        %v4508 = vpack.c.b16 %v4383, %v4358
        %v4509 = vpack.c.b16 %v4384, %v4359
        %v4510 = vpack.c.b16 %v4385, %v4360
        %v4511 = vpack.c.b16 %v4386, %v4361
        %v4512 = vpack.c.b16 %v4387, %v4362
        %v4513 = vpack.c.b16 %v4388, %v4363
        %v4514 = vpack.c.b16 %v4389, %v4364
        %v4515 = vpack.c.b16 %v4390, %v4365
        %v4516 = vpack.c.b16 %v4391, %v4366
        %v4517 = vpack.c.b16 %v4392, %v4367
        %v4518 = vpack.c.b16 %v4393, %v4368
        %v4519 = vpack.c.b16 %v4394, %v4369
        %v4520 = vpack.c.b16 %v4395, %v4370
        %v4521 = vpack.c.b16 %v4396, %v4371
        %v4522 = vpack.c.b16 %v4397, %v4372
        %v4523 = vpack.c.b16 %v4398, %v4373
        %v4524 = vpack.c.b16 %v4399, %v4374
        %v4525 = vpack.c.b16 %v4400, %v4375
        %v4526 = vpack.c.b16 %v4401, %v4376
        %v4527 = vpack.c.b16 %v4427, %v4402
        %v4528 = vpack.c.b16 %v4428, %v4403
        %v4529 = vpack.c.b16 %v4429, %v4404
        %v4530 = vpack.c.b16 %v4430, %v4405
        %v4531 = vpack.c.b16 %v4431, %v4406
        %v4532 = vpack.c.b16 %v4432, %v4407
        %v4533 = vpack.c.b16 %v4433, %v4408
        %v4534 = vpack.c.b16 %v4434, %v4409
        %v4535 = vpack.c.b16 %v4435, %v4410
        %v4536 = vpack.c.b16 %v4436, %v4411
        %v4537 = vpack.c.b16 %v4437, %v4412
        %v4538 = vpack.c.b16 %v4438, %v4413
        %v4539 = vpack.c.b16 %v4439, %v4414
        %v4540 = vpack.c.b16 %v4440, %v4415
        %v4541 = vpack.c.b16 %v4441, %v4416
        %v4542 = vpack.c.b16 %v4442, %v4417
        %v4543 = vpack.c.b16 %v4443, %v4418
        %v4544 = vpack.c.b16 %v4444, %v4419
        %v4545 = vpack.c.b16 %v4445, %v4420
        %v4546 = vpack.c.b16 %v4446, %v4421
        %v4547 = vpack.c.b16 %v4447, %v4422
        %v4548 = vpack.c.b16 %v4448, %v4423
        %v4549 = vpack.c.b16 %v4449, %v4424
        %v4550 = vpack.c.b16 %v4450, %v4425
        %v4551 = vpack.c.b16 %v4451, %v4426
        %v5052 = vunpack.c.l.b16 %v3741
        %v5053 = vunpack.c.l.b16 %v3742
        %v5054 = vunpack.c.l.b16 %v3743
        %v5055 = vunpack.c.l.b16 %v3744
        %v5056 = vunpack.c.l.b16 %v3745
        %v5057 = vunpack.c.l.b16 %v3746
        %v5058 = vunpack.c.l.b16 %v3747
        %v5059 = vunpack.c.l.b16 %v3748
        %v5060 = vunpack.c.l.b16 %v3749
        %v5061 = vunpack.c.l.b16 %v3750
        %v5062 = vunpack.c.l.b16 %v3751
        %v5063 = vunpack.c.l.b16 %v3752
        %v5064 = vunpack.c.l.b16 %v3753
        %v5065 = vunpack.c.l.b16 %v3754
        %v5066 = vunpack.c.l.b16 %v3755
        %v5067 = vunpack.c.l.b16 %v3756
        %v5068 = vunpack.c.l.b16 %v3757
        %v5069 = vunpack.c.l.b16 %v3758
        %v5070 = vunpack.c.l.b16 %v3759
        %v5071 = vunpack.c.l.b16 %v3760
        %v5072 = vunpack.c.l.b16 %v3761
        %v5073 = vunpack.c.l.b16 %v3762
        %v5074 = vunpack.c.l.b16 %v3763
        %v5075 = vunpack.c.l.b16 %v3764
        %v5076 = vunpack.c.l.b16 %v3765
        %v5077 = vunpack.c.l.b16 %v3766
        %v5078 = vunpack.c.l.b16 %v3767
        %v5079 = vunpack.c.l.b16 %v3768
        %v5080 = vunpack.c.l.b16 %v3769
        %v5081 = vunpack.c.l.b16 %v3770
        %v5082 = vunpack.c.l.b16 %v3771
        %v5083 = vunpack.c.l.b16 %v3772
        %v5084 = vunpack.c.l.b16 %v3773
        %v5085 = vunpack.c.l.b16 %v3774
        %v5086 = vunpack.c.l.b16 %v3775
        %v5087 = vunpack.c.l.b16 %v3776
        %v5088 = vunpack.c.l.b16 %v3777
        %v5089 = vunpack.c.l.b16 %v3778
        %v5090 = vunpack.c.l.b16 %v3779
        %v5091 = vunpack.c.l.b16 %v3780
        %v5092 = vunpack.c.l.b16 %v3781
        %v5093 = vunpack.c.l.b16 %v3782
        %v5094 = vunpack.c.l.b16 %v3783
        %v5095 = vunpack.c.l.b16 %v3784
        %v5096 = vunpack.c.l.b16 %v3785
        %v5097 = vunpack.c.l.b16 %v3786
        %v5098 = vunpack.c.l.b16 %v3787
        %v5099 = vunpack.c.l.b16 %v3788
        %v5100 = vunpack.c.l.b16 %v3789
        %v5101 = vunpack.c.l.b16 %v3790
        %v5102 = vunpack.c.l.b16 %v3791
        %v5103 = vunpack.c.l.b16 %v3792
        %v5104 = vunpack.c.l.b16 %v3793
        %v5105 = vunpack.c.l.b16 %v3794
        %v5106 = vunpack.c.l.b16 %v3795
        %v5107 = vunpack.c.l.b16 %v3796
        %v5108 = vunpack.c.l.b16 %v3797
        %v5109 = vunpack.c.l.b16 %v3798
        %v5110 = vunpack.c.l.b16 %v3799
        %v5111 = vunpack.c.l.b16 %v3800
        %v5112 = vunpack.c.l.b16 %v3801
        %v5113 = vunpack.c.l.b16 %v3802
        %v5114 = vunpack.c.l.b16 %v3803
        %v5115 = vunpack.c.l.b16 %v3804
        %v5116 = vunpack.c.l.b16 %v3805
        %v5117 = vunpack.c.l.b16 %v3806
        %v5118 = vunpack.c.l.b16 %v3807
        %v5119 = vunpack.c.l.b16 %v3808
        %v5120 = vunpack.c.l.b16 %v3809
        %v5121 = vunpack.c.l.b16 %v3810
        %v5122 = vunpack.c.l.b16 %v3811
        %v5123 = vunpack.c.l.b16 %v3812
        %v5124 = vunpack.c.l.b16 %v3813
        %v5125 = vunpack.c.l.b16 %v3814
        %v5126 = vunpack.c.l.b16 %v3815
        %v5127 = vunpack.c.l.b16 %v3816
        %v5128 = vunpack.c.l.b16 %v3817
        %v5129 = vunpack.c.l.b16 %v3818
        %v5130 = vunpack.c.l.b16 %v3819
        %v5131 = vunpack.c.l.b16 %v3820
        %v5132 = vunpack.c.l.b16 %v3821
        %v5133 = vunpack.c.l.b16 %v3822
        %v5134 = vunpack.c.l.b16 %v3823
        %v5135 = vunpack.c.l.b16 %v3824
        %v5136 = vunpack.c.l.b16 %v3825
        %v5137 = vunpack.c.l.b16 %v3826
        %v5138 = vunpack.c.l.b16 %v3827
        %v5139 = vunpack.c.l.b16 %v3828
        %v5140 = vunpack.c.l.b16 %v3829
        %v5141 = vunpack.c.l.b16 %v3830
        %v5142 = vunpack.c.l.b16 %v3831
        %v5143 = vunpack.c.l.b16 %v3832
        %v5144 = vunpack.c.l.b16 %v3833
        %v5145 = vunpack.c.l.b16 %v3834
        %v5146 = vunpack.c.l.b16 %v3835
        %v5147 = vunpack.c.l.b16 %v3836
        %v5148 = vunpack.c.l.b16 %v3837
        %v5149 = vunpack.c.l.b16 %v3838
        %v5150 = vunpack.c.l.b16 %v3839
        %v5151 = vunpack.c.l.b16 %v3840
        %v5152 = vunpack.c.l.b16 %v3841
        %v5153 = vunpack.c.l.b16 %v3842
        %v5154 = vunpack.c.l.b16 %v3843
        %v5155 = vunpack.c.l.b16 %v3844
        %v5156 = vunpack.c.l.b16 %v3845
        %v5157 = vunpack.c.l.b16 %v3846
        %v5158 = vunpack.c.l.b16 %v3847
        %v5159 = vunpack.c.l.b16 %v3848
        %v5160 = vunpack.c.l.b16 %v3849
        %v5161 = vunpack.c.l.b16 %v3850
        %v5162 = vunpack.c.l.b16 %v3851
        %v5163 = vunpack.c.l.b16 %v3852
        %v5164 = vunpack.c.l.b16 %v3853
        %v5165 = vunpack.c.l.b16 %v3854
        %v5166 = vunpack.c.l.b16 %v3855
        %v5167 = vunpack.c.l.b16 %v3856
        %v5168 = vunpack.c.l.b16 %v3857
        %v5169 = vunpack.c.l.b16 %v3858
        %v5170 = vunpack.c.l.b16 %v3859
        %v5171 = vunpack.c.l.b16 %v3860
        %v5172 = vunpack.c.l.b16 %v3861
        %v5173 = vunpack.c.l.b16 %v3862
        %v5174 = vunpack.c.l.b16 %v3863
        %v5175 = vunpack.c.l.b16 %v3864
        %v5176 = vunpack.c.l.b16 %v3865
        %v5177 = vunpack.c.l.b16 %v3866
        %v5178 = vunpack.c.l.b16 %v3867
        %v5179 = vunpack.c.l.b16 %v3868
        %v5180 = vunpack.c.l.b16 %v3869
        %v5181 = vunpack.c.l.b16 %v3870
        %v5182 = vunpack.c.l.b16 %v3871
        %v5183 = vunpack.c.l.b16 %v3872
        %v5184 = vunpack.c.l.b16 %v3873
        %v5185 = vunpack.c.l.b16 %v3874
        %v5186 = vunpack.c.l.b16 %v3875
        %v5187 = vunpack.c.l.b16 %v3876
        %v5188 = vunpack.c.l.b16 %v3877
        %v5189 = vunpack.c.l.b16 %v3878
        %v5190 = vunpack.c.l.b16 %v3879
        %v5191 = vunpack.c.l.b16 %v3880
        %v5192 = vunpack.c.l.b16 %v3881
        %v5193 = vunpack.c.l.b16 %v3882
        %v5194 = vunpack.c.l.b16 %v3883
        %v5195 = vunpack.c.l.b16 %v3884
        %v5196 = vunpack.c.l.b16 %v3885
        %v5197 = vunpack.c.l.b16 %v3886
        %v5198 = vunpack.c.l.b16 %v3887
        %v5199 = vunpack.c.l.b16 %v3888
        %v5200 = vunpack.c.l.b16 %v3889
        %v5201 = vunpack.c.l.b16 %v3890
        %v5202 = vunpack.c.l.b16 %v3891
        %v5203 = vunpack.c.l.b16 %v3892
        %v5204 = vunpack.c.l.b16 %v3893
        %v5205 = vunpack.c.l.b16 %v3894
        %v5206 = vunpack.c.l.b16 %v3895
        %v5207 = vunpack.c.l.b16 %v3896
        %v5208 = vunpack.c.l.b16 %v3897
        %v5209 = vunpack.c.l.b16 %v3898
        %v5210 = vunpack.c.l.b16 %v3899
        %v5211 = vunpack.c.l.b16 %v3900
        %v5212 = vunpack.c.l.b16 %v3901
        %v5213 = vunpack.c.l.b16 %v3902
        %v5214 = vunpack.c.l.b16 %v3903
        %v5215 = vunpack.c.l.b16 %v3904
        %v5216 = vunpack.c.l.b16 %v3905
        %v5217 = vunpack.c.l.b16 %v3906
        %v5218 = vunpack.c.l.b16 %v3907
        %v5219 = vunpack.c.l.b16 %v3908
        %v5220 = vunpack.c.l.b16 %v3909
        %v5221 = vunpack.c.l.b16 %v3910
        %v5222 = vunpack.c.l.b16 %v3911
        %v5223 = vunpack.c.l.b16 %v3912
        %v5224 = vunpack.c.l.b16 %v3913
        %v5225 = vunpack.c.l.b16 %v3914
        %v5226 = vunpack.c.l.b16 %v3915
        %v5227 = vunpack.c.l.b16 %v3916
        %v5228 = vunpack.c.l.b16 %v3917
        %v5229 = vunpack.c.l.b16 %v3918
        %v5230 = vunpack.c.l.b16 %v3919
        %v5231 = vunpack.c.l.b16 %v3920
        %v5232 = vunpack.c.l.b16 %v3921
        %v5233 = vunpack.c.l.b16 %v3922
        %v5234 = vunpack.c.l.b16 %v3923
        %v5235 = vunpack.c.l.b16 %v3924
        %v5236 = vunpack.c.l.b16 %v3925
        %v5237 = vunpack.c.l.b16 %v3926
        %v5238 = vunpack.c.l.b16 %v3927
        %v5239 = vunpack.c.l.b16 %v3928
        %v5240 = vunpack.c.l.b16 %v3929
        %v5241 = vunpack.c.l.b16 %v3930
        %v5242 = vunpack.c.l.b16 %v3931
        %v5243 = vunpack.c.l.b16 %v3932
        %v5244 = vunpack.c.l.b16 %v3933
        %v5245 = vunpack.c.l.b16 %v3934
        %v5246 = vunpack.c.l.b16 %v3935
        %v5247 = vunpack.c.l.b16 %v3936
        %v5248 = vunpack.c.l.b16 %v3937
        %v5249 = vunpack.c.l.b16 %v3938
        %v5250 = vunpack.c.l.b16 %v3939
        %v5251 = vunpack.c.l.b16 %v3940
        %v5252 = vunpack.c.l.b16 %v3941
        %v5253 = vunpack.c.l.b16 %v3942
        %v5254 = vunpack.c.l.b16 %v3943
        %v5255 = vunpack.c.l.b16 %v3944
        %v5256 = vunpack.c.l.b16 %v3945
        %v5257 = vunpack.c.l.b16 %v3946
        %v5258 = vunpack.c.l.b16 %v3947
        %v5259 = vunpack.c.l.b16 %v3948
        %v5260 = vunpack.c.l.b16 %v3949
        %v5261 = vunpack.c.l.b16 %v3950
        %v5262 = vunpack.c.l.b16 %v3951
        %v5263 = vunpack.c.l.b16 %v3952
        %v5264 = vunpack.c.l.b16 %v3953
        %v5265 = vunpack.c.l.b16 %v3954
        %v5266 = vunpack.c.l.b16 %v3955
        %v5267 = vunpack.c.l.b16 %v3956
        %v5268 = vunpack.c.l.b16 %v3957
        %v5269 = vunpack.c.l.b16 %v3958
        %v5270 = vunpack.c.l.b16 %v3959
        %v5271 = vunpack.c.l.b16 %v3960
        %v5272 = vunpack.c.l.b16 %v3961
        %v5273 = vunpack.c.l.b16 %v3962
        %v5274 = vunpack.c.l.b16 %v3963
        %v5275 = vunpack.c.l.b16 %v3964
        %v5276 = vunpack.c.l.b16 %v3965
        %v5277 = vunpack.c.l.b16 %v3966
        %v5278 = vunpack.c.l.b16 %v3967
        %v5279 = vunpack.c.l.b16 %v3968
        %v5280 = vunpack.c.l.b16 %v3969
        %v5281 = vunpack.c.l.b16 %v3970
        %v5282 = vunpack.c.l.b16 %v3971
        %v5283 = vunpack.c.l.b16 %v3972
        %v5284 = vunpack.c.l.b16 %v3973
        %v5285 = vunpack.c.l.b16 %v3974
        %v5286 = vunpack.c.l.b16 %v3975
        %v5287 = vunpack.c.l.b16 %v3976
        %v5288 = vunpack.c.l.b16 %v3977
        %v5289 = vunpack.c.l.b16 %v3978
        %v5290 = vunpack.c.l.b16 %v3979
        %v5291 = vunpack.c.l.b16 %v3980
        %v5292 = vunpack.c.l.b16 %v3981
        %v5293 = vunpack.c.l.b16 %v3982
        %v5294 = vunpack.c.l.b16 %v3983
        %v5295 = vunpack.c.l.b16 %v3984
        %v5296 = vunpack.c.l.b16 %v3985
        %v5297 = vunpack.c.l.b16 %v3986
        %v5298 = vunpack.c.l.b16 %v3987
        %v5299 = vunpack.c.l.b16 %v3988
        %v5300 = vunpack.c.l.b16 %v3989
        %v5301 = vunpack.c.l.b16 %v3990
        %v5302 = vunpack.c.l.b16 %v3991
        %v5303 = vunpack.c.l.b16 %v3992
        %v5304 = vunpack.c.l.b16 %v3993
        %v5305 = vunpack.c.l.b16 %v3994
        %v5306 = vunpack.c.l.b16 %v3995
        %v5307 = vunpack.c.l.b16 %v3996
        %v5308 = vunpack.c.l.b16 %v3997
        %v5309 = vunpack.c.l.b16 %v3998
        %v5310 = vunpack.c.l.b16 %v3999
        %v5311 = vunpack.c.l.b16 %v4000
        %v5312 = vunpack.c.l.b16 %v4001
        %v5313 = vunpack.c.l.b16 %v4002
        %v5314 = vunpack.c.l.b16 %v4003
        %v5315 = vunpack.c.l.b16 %v4004
        %v5316 = vunpack.c.l.b16 %v4005
        %v5317 = vunpack.c.l.b16 %v4006
        %v5318 = vunpack.c.l.b16 %v4007
        %v5319 = vunpack.c.l.b16 %v4008
        %v5320 = vunpack.c.l.b16 %v4009
        %v5321 = vunpack.c.l.b16 %v4010
        %v5322 = vunpack.c.l.b16 %v4011
        %v5323 = vunpack.c.l.b16 %v4012
        %v5324 = vunpack.c.l.b16 %v4013
        %v5325 = vunpack.c.l.b16 %v4014
        %v5326 = vunpack.c.l.b16 %v4015
        %v5327 = vunpack.c.l.b16 %v4016
        %v5328 = vunpack.c.l.b16 %v4017
        %v5329 = vunpack.c.l.b16 %v4018
        %v5330 = vunpack.c.l.b16 %v4019
        %v5331 = vunpack.c.l.b16 %v4020
        %v5332 = vunpack.c.l.b16 %v4021
        %v5333 = vunpack.c.l.b16 %v4022
        %v5334 = vunpack.c.l.b16 %v4023
        %v5335 = vunpack.c.l.b16 %v4024
        %v5336 = vunpack.c.l.b16 %v4025
        %v5337 = vunpack.c.l.b16 %v4026
        %v5338 = vunpack.c.l.b16 %v4027
        %v5339 = vunpack.c.l.b16 %v4028
        %v5340 = vunpack.c.l.b16 %v4029
        %v5341 = vunpack.c.l.b16 %v4030
        %v5342 = vunpack.c.l.b16 %v4031
        %v5343 = vunpack.c.l.b16 %v4032
        %v5344 = vunpack.c.l.b16 %v4033
        %v5345 = vunpack.c.l.b16 %v4034
        %v5346 = vunpack.c.l.b16 %v4035
        %v5347 = vunpack.c.l.b16 %v4036
        %v5348 = vunpack.c.l.b16 %v4037
        %v5349 = vunpack.c.l.b16 %v4038
        %v5350 = vunpack.c.l.b16 %v4039
        %v5351 = vunpack.c.l.b16 %v4040
        %v5352 = vunpack.c.l.b16 %v4041
        %v5353 = vunpack.c.l.b16 %v4042
        %v5354 = vunpack.c.l.b16 %v4043
        %v5355 = vunpack.c.l.b16 %v4044
        %v5356 = vunpack.c.l.b16 %v4045
        %v5357 = vunpack.c.l.b16 %v4046
        %v5358 = vunpack.c.l.b16 %v4047
        %v5359 = vunpack.c.l.b16 %v4048
        %v5360 = vunpack.c.l.b16 %v4049
        %v5361 = vunpack.c.l.b16 %v4050
        %v5362 = vunpack.c.l.b16 %v4051
        %v5363 = vunpack.c.l.b16 %v4052
        %v5364 = vunpack.c.l.b16 %v4053
        %v5365 = vunpack.c.l.b16 %v4054
        %v5366 = vunpack.c.l.b16 %v4055
        %v5367 = vunpack.c.l.b16 %v4056
        %v5368 = vunpack.c.l.b16 %v4057
        %v5369 = vunpack.c.l.b16 %v4058
        %v5370 = vunpack.c.l.b16 %v4059
        %v5371 = vunpack.c.l.b16 %v4060
        %v5372 = vunpack.c.l.b16 %v4061
        %v5373 = vunpack.c.l.b16 %v4062
        %v5374 = vunpack.c.l.b16 %v4063
        %v5375 = vunpack.c.l.b16 %v4064
        %v5376 = vunpack.c.l.b16 %v4065
        %v5377 = vunpack.c.l.b16 %v4066
        %v5378 = vunpack.c.l.b16 %v4067
        %v5379 = vunpack.c.l.b16 %v4068
        %v5380 = vunpack.c.l.b16 %v4069
        %v5381 = vunpack.c.l.b16 %v4070
        %v5382 = vunpack.c.l.b16 %v4071
        %v5383 = vunpack.c.l.b16 %v4072
        %v5384 = vunpack.c.l.b16 %v4073
        %v5385 = vunpack.c.l.b16 %v4074
        %v5386 = vunpack.c.l.b16 %v4075
        %v5387 = vunpack.c.l.b16 %v4076
        %v5388 = vunpack.c.l.b16 %v4077
        %v5389 = vunpack.c.l.b16 %v4078
        %v5390 = vunpack.c.l.b16 %v4079
        %v5391 = vunpack.c.l.b16 %v4080
        %v5392 = vunpack.c.l.b16 %v4081
        %v5393 = vunpack.c.l.b16 %v4082
        %v5394 = vunpack.c.l.b16 %v4083
        %v5395 = vunpack.c.l.b16 %v4084
        %v5396 = vunpack.c.l.b16 %v4085
        %v5397 = vunpack.c.l.b16 %v4086
        %v5398 = vunpack.c.l.b16 %v4087
        %v5399 = vunpack.c.l.b16 %v4088
        %v5400 = vunpack.c.l.b16 %v4089
        %v5401 = vunpack.c.l.b16 %v4090
        %v5402 = vunpack.c.l.b16 %v4091
        %v5403 = vunpack.c.l.b16 %v4092
        %v5404 = vunpack.c.l.b16 %v4093
        %v5405 = vunpack.c.l.b16 %v4094
        %v5406 = vunpack.c.l.b16 %v4095
        %v5407 = vunpack.c.l.b16 %v4096
        %v5408 = vunpack.c.l.b16 %v4097
        %v5409 = vunpack.c.l.b16 %v4098
        %v5410 = vunpack.c.l.b16 %v4099
        %v5411 = vunpack.c.l.b16 %v4100
        %v5412 = vunpack.c.l.b16 %v4101
        %v5413 = vunpack.c.l.b16 %v4102
        %v5414 = vunpack.c.l.b16 %v4103
        %v5415 = vunpack.c.l.b16 %v4104
        %v5416 = vunpack.c.l.b16 %v4105
        %v5417 = vunpack.c.l.b16 %v4106
        %v5418 = vunpack.c.l.b16 %v4107
        %v5419 = vunpack.c.l.b16 %v4108
        %v5420 = vunpack.c.l.b16 %v4109
        %v5421 = vunpack.c.l.b16 %v4110
        %v5422 = vunpack.c.l.b16 %v4111
        %v5423 = vunpack.c.l.b16 %v4112
        %v5424 = vunpack.c.l.b16 %v4113
        %v5425 = vunpack.c.l.b16 %v4114
        %v5426 = vunpack.c.l.b16 %v4115
        %v5427 = vunpack.c.l.b16 %v4116
        %v5428 = vunpack.c.l.b16 %v4117
        %v5429 = vunpack.c.l.b16 %v4118
        %v5430 = vunpack.c.l.b16 %v4119
        %v5431 = vunpack.c.l.b16 %v4120
        %v5432 = vunpack.c.l.b16 %v4121
        %v5433 = vunpack.c.l.b16 %v4122
        %v5434 = vunpack.c.l.b16 %v4123
        %v5435 = vunpack.c.l.b16 %v4124
        %v5436 = vunpack.c.l.b16 %v4125
        %v5437 = vunpack.c.l.b16 %v4126
        %v5438 = vunpack.c.l.b16 %v4127
        %v5439 = vunpack.c.l.b16 %v4128
        %v5440 = vunpack.c.l.b16 %v4129
        %v5441 = vunpack.c.l.b16 %v4130
        %v5442 = vunpack.c.l.b16 %v4131
        %v5443 = vunpack.c.l.b16 %v4132
        %v5444 = vunpack.c.l.b16 %v4133
        %v5445 = vunpack.c.l.b16 %v4134
        %v5446 = vunpack.c.l.b16 %v4135
        %v5447 = vunpack.c.l.b16 %v4136
        %v5448 = vunpack.c.l.b16 %v4137
        %v5449 = vunpack.c.l.b16 %v4138
        %v5450 = vunpack.c.l.b16 %v4139
        %v5451 = vunpack.c.l.b16 %v4140
        %v5452 = vpack.c.b16 %v5053, %v5052
        %v5453 = vpack.c.b16 %v5055, %v5054
        %v5454 = vpack.c.b16 %v5057, %v5056
        %v5455 = vpack.c.b16 %v5059, %v5058
        %v5456 = vpack.c.b16 %v5061, %v5060
        %v5457 = vpack.c.b16 %v5063, %v5062
        %v5458 = vpack.c.b16 %v5065, %v5064
        %v5459 = vpack.c.b16 %v5067, %v5066
        %v5460 = vpack.c.b16 %v5069, %v5068
        %v5461 = vpack.c.b16 %v5071, %v5070
        %v5462 = vpack.c.b16 %v5073, %v5072
        %v5463 = vpack.c.b16 %v5075, %v5074
        %v5464 = vpack.c.b16 %v5077, %v5076
        %v5465 = vpack.c.b16 %v5079, %v5078
        %v5466 = vpack.c.b16 %v5081, %v5080
        %v5467 = vpack.c.b16 %v5083, %v5082
        %v5468 = vpack.c.b16 %v5085, %v5084
        %v5469 = vpack.c.b16 %v5087, %v5086
        %v5470 = vpack.c.b16 %v5089, %v5088
        %v5471 = vpack.c.b16 %v5091, %v5090
        %v5472 = vpack.c.b16 %v5093, %v5092
        %v5473 = vpack.c.b16 %v5095, %v5094
        %v5474 = vpack.c.b16 %v5097, %v5096
        %v5475 = vpack.c.b16 %v5099, %v5098
        %v5476 = vpack.c.b16 %v5101, %v5100
        %v5477 = vpack.c.b16 %v5103, %v5102
        %v5478 = vpack.c.b16 %v5105, %v5104
        %v5479 = vpack.c.b16 %v5107, %v5106
        %v5480 = vpack.c.b16 %v5109, %v5108
        %v5481 = vpack.c.b16 %v5111, %v5110
        %v5482 = vpack.c.b16 %v5113, %v5112
        %v5483 = vpack.c.b16 %v5115, %v5114
        %v5484 = vpack.c.b16 %v5117, %v5116
        %v5485 = vpack.c.b16 %v5119, %v5118
        %v5486 = vpack.c.b16 %v5121, %v5120
        %v5487 = vpack.c.b16 %v5123, %v5122
        %v5488 = vpack.c.b16 %v5125, %v5124
        %v5489 = vpack.c.b16 %v5127, %v5126
        %v5490 = vpack.c.b16 %v5129, %v5128
        %v5491 = vpack.c.b16 %v5131, %v5130
        %v5492 = vpack.c.b16 %v5133, %v5132
        %v5493 = vpack.c.b16 %v5135, %v5134
        %v5494 = vpack.c.b16 %v5137, %v5136
        %v5495 = vpack.c.b16 %v5139, %v5138
        %v5496 = vpack.c.b16 %v5141, %v5140
        %v5497 = vpack.c.b16 %v5143, %v5142
        %v5498 = vpack.c.b16 %v5145, %v5144
        %v5499 = vpack.c.b16 %v5147, %v5146
        %v5500 = vpack.c.b16 %v5149, %v5148
        %v5501 = vpack.c.b16 %v5151, %v5150
        %v5502 = vpack.c.b16 %v5153, %v5152
        %v5503 = vpack.c.b16 %v5155, %v5154
        %v5504 = vpack.c.b16 %v5157, %v5156
        %v5505 = vpack.c.b16 %v5159, %v5158
        %v5506 = vpack.c.b16 %v5161, %v5160
        %v5507 = vpack.c.b16 %v5163, %v5162
        %v5508 = vpack.c.b16 %v5165, %v5164
        %v5509 = vpack.c.b16 %v5167, %v5166
        %v5510 = vpack.c.b16 %v5169, %v5168
        %v5511 = vpack.c.b16 %v5171, %v5170
        %v5512 = vpack.c.b16 %v5173, %v5172
        %v5513 = vpack.c.b16 %v5175, %v5174
        %v5514 = vpack.c.b16 %v5177, %v5176
        %v5515 = vpack.c.b16 %v5179, %v5178
        %v5516 = vpack.c.b16 %v5181, %v5180
        %v5517 = vpack.c.b16 %v5183, %v5182
        %v5518 = vpack.c.b16 %v5185, %v5184
        %v5519 = vpack.c.b16 %v5187, %v5186
        %v5520 = vpack.c.b16 %v5189, %v5188
        %v5521 = vpack.c.b16 %v5191, %v5190
        %v5522 = vpack.c.b16 %v5193, %v5192
        %v5523 = vpack.c.b16 %v5195, %v5194
        %v5524 = vpack.c.b16 %v5197, %v5196
        %v5525 = vpack.c.b16 %v5199, %v5198
        %v5526 = vpack.c.b16 %v5201, %v5200
        %v5527 = vpack.c.b16 %v5203, %v5202
        %v5528 = vpack.c.b16 %v5205, %v5204
        %v5529 = vpack.c.b16 %v5207, %v5206
        %v5530 = vpack.c.b16 %v5209, %v5208
        %v5531 = vpack.c.b16 %v5211, %v5210
        %v5532 = vpack.c.b16 %v5213, %v5212
        %v5533 = vpack.c.b16 %v5215, %v5214
        %v5534 = vpack.c.b16 %v5217, %v5216
        %v5535 = vpack.c.b16 %v5219, %v5218
        %v5536 = vpack.c.b16 %v5221, %v5220
        %v5537 = vpack.c.b16 %v5223, %v5222
        %v5538 = vpack.c.b16 %v5225, %v5224
        %v5539 = vpack.c.b16 %v5227, %v5226
        %v5540 = vpack.c.b16 %v5229, %v5228
        %v5541 = vpack.c.b16 %v5231, %v5230
        %v5542 = vpack.c.b16 %v5233, %v5232
        %v5543 = vpack.c.b16 %v5235, %v5234
        %v5544 = vpack.c.b16 %v5237, %v5236
        %v5545 = vpack.c.b16 %v5239, %v5238
        %v5546 = vpack.c.b16 %v5241, %v5240
        %v5547 = vpack.c.b16 %v5243, %v5242
        %v5548 = vpack.c.b16 %v5245, %v5244
        %v5549 = vpack.c.b16 %v5247, %v5246
        %v5550 = vpack.c.b16 %v5249, %v5248
        %v5551 = vpack.c.b16 %v5251, %v5250
        %v5552 = vpack.c.b16 %v5253, %v5252
        %v5553 = vpack.c.b16 %v5255, %v5254
        %v5554 = vpack.c.b16 %v5257, %v5256
        %v5555 = vpack.c.b16 %v5259, %v5258
        %v5556 = vpack.c.b16 %v5261, %v5260
        %v5557 = vpack.c.b16 %v5263, %v5262
        %v5558 = vpack.c.b16 %v5265, %v5264
        %v5559 = vpack.c.b16 %v5267, %v5266
        %v5560 = vpack.c.b16 %v5269, %v5268
        %v5561 = vpack.c.b16 %v5271, %v5270
        %v5562 = vpack.c.b16 %v5273, %v5272
        %v5563 = vpack.c.b16 %v5275, %v5274
        %v5564 = vpack.c.b16 %v5277, %v5276
        %v5565 = vpack.c.b16 %v5279, %v5278
        %v5566 = vpack.c.b16 %v5281, %v5280
        %v5567 = vpack.c.b16 %v5283, %v5282
        %v5568 = vpack.c.b16 %v5285, %v5284
        %v5569 = vpack.c.b16 %v5287, %v5286
        %v5570 = vpack.c.b16 %v5289, %v5288
        %v5571 = vpack.c.b16 %v5291, %v5290
        %v5572 = vpack.c.b16 %v5293, %v5292
        %v5573 = vpack.c.b16 %v5295, %v5294
        %v5574 = vpack.c.b16 %v5297, %v5296
        %v5575 = vpack.c.b16 %v5299, %v5298
        %v5576 = vpack.c.b16 %v5301, %v5300
        %v5577 = vpack.c.b16 %v5303, %v5302
        %v5578 = vpack.c.b16 %v5305, %v5304
        %v5579 = vpack.c.b16 %v5307, %v5306
        %v5580 = vpack.c.b16 %v5309, %v5308
        %v5581 = vpack.c.b16 %v5311, %v5310
        %v5582 = vpack.c.b16 %v5313, %v5312
        %v5583 = vpack.c.b16 %v5315, %v5314
        %v5584 = vpack.c.b16 %v5317, %v5316
        %v5585 = vpack.c.b16 %v5319, %v5318
        %v5586 = vpack.c.b16 %v5321, %v5320
        %v5587 = vpack.c.b16 %v5323, %v5322
        %v5588 = vpack.c.b16 %v5325, %v5324
        %v5589 = vpack.c.b16 %v5327, %v5326
        %v5590 = vpack.c.b16 %v5329, %v5328
        %v5591 = vpack.c.b16 %v5331, %v5330
        %v5592 = vpack.c.b16 %v5333, %v5332
        %v5593 = vpack.c.b16 %v5335, %v5334
        %v5594 = vpack.c.b16 %v5337, %v5336
        %v5595 = vpack.c.b16 %v5339, %v5338
        %v5596 = vpack.c.b16 %v5341, %v5340
        %v5597 = vpack.c.b16 %v5343, %v5342
        %v5598 = vpack.c.b16 %v5345, %v5344
        %v5599 = vpack.c.b16 %v5347, %v5346
        %v5600 = vpack.c.b16 %v5349, %v5348
        %v5601 = vpack.c.b16 %v5351, %v5350
        %v5602 = vpack.c.b16 %v5353, %v5352
        %v5603 = vpack.c.b16 %v5355, %v5354
        %v5604 = vpack.c.b16 %v5357, %v5356
        %v5605 = vpack.c.b16 %v5359, %v5358
        %v5606 = vpack.c.b16 %v5361, %v5360
        %v5607 = vpack.c.b16 %v5363, %v5362
        %v5608 = vpack.c.b16 %v5365, %v5364
        %v5609 = vpack.c.b16 %v5367, %v5366
        %v5610 = vpack.c.b16 %v5369, %v5368
        %v5611 = vpack.c.b16 %v5371, %v5370
        %v5612 = vpack.c.b16 %v5373, %v5372
        %v5613 = vpack.c.b16 %v5375, %v5374
        %v5614 = vpack.c.b16 %v5377, %v5376
        %v5615 = vpack.c.b16 %v5379, %v5378
        %v5616 = vpack.c.b16 %v5381, %v5380
        %v5617 = vpack.c.b16 %v5383, %v5382
        %v5618 = vpack.c.b16 %v5385, %v5384
        %v5619 = vpack.c.b16 %v5387, %v5386
        %v5620 = vpack.c.b16 %v5389, %v5388
        %v5621 = vpack.c.b16 %v5391, %v5390
        %v5622 = vpack.c.b16 %v5393, %v5392
        %v5623 = vpack.c.b16 %v5395, %v5394
        %v5624 = vpack.c.b16 %v5397, %v5396
        %v5625 = vpack.c.b16 %v5399, %v5398
        %v5626 = vpack.c.b16 %v5401, %v5400
        %v5627 = vpack.c.b16 %v5403, %v5402
        %v5628 = vpack.c.b16 %v5405, %v5404
        %v5629 = vpack.c.b16 %v5407, %v5406
        %v5630 = vpack.c.b16 %v5409, %v5408
        %v5631 = vpack.c.b16 %v5411, %v5410
        %v5632 = vpack.c.b16 %v5413, %v5412
        %v5633 = vpack.c.b16 %v5415, %v5414
        %v5634 = vpack.c.b16 %v5417, %v5416
        %v5635 = vpack.c.b16 %v5419, %v5418
        %v5636 = vpack.c.b16 %v5421, %v5420
        %v5637 = vpack.c.b16 %v5423, %v5422
        %v5638 = vpack.c.b16 %v5425, %v5424
        %v5639 = vpack.c.b16 %v5427, %v5426
        %v5640 = vpack.c.b16 %v5429, %v5428
        %v5641 = vpack.c.b16 %v5431, %v5430
        %v5642 = vpack.c.b16 %v5433, %v5432
        %v5643 = vpack.c.b16 %v5435, %v5434
        %v5644 = vpack.c.b16 %v5437, %v5436
        %v5645 = vpack.c.b16 %v5439, %v5438
        %v5646 = vpack.c.b16 %v5441, %v5440
        %v5647 = vpack.c.b16 %v5443, %v5442
        %v5648 = vpack.c.b16 %v5445, %v5444
        %v5649 = vpack.c.b16 %v5447, %v5446
        %v5650 = vpack.c.b16 %v5449, %v5448
        %v5651 = vpack.c.b16 %v5451, %v5450
        %5852 = vmatprep.subr.bf16.mxu0 0
        %5853 = vmatpush1.bf16.msra.mxu0 %v5459
        %5854 = vmatprep.subr.bf16.mxu0 0
        %5855 = vmatpush1.bf16.msra.mxu0 %v5458
        %5856 = vmatprep.subr.bf16.mxu0 0
        %5857 = vmatpush1.bf16.msra.mxu0 %v5457
        %5858 = vmatprep.subr.bf16.mxu0 0
        %5859 = vmatpush1.bf16.msra.mxu0 %v5456
        %5860 = vmatprep.subr.bf16.mxu0 0
        %5861 = vmatpush1.bf16.msra.mxu0 %v5455
        %5862 = vmatprep.subr.bf16.mxu0 0
        %5863 = vmatpush1.bf16.msra.mxu0 %v5454
        %5864 = vmatprep.subr.bf16.mxu0 0
        %5865 = vmatpush1.bf16.msra.mxu0 %v5453
        %5866 = vmatprep.subr.bf16.mxu0 0
        %5867 = vmatpush1.bf16.msra.mxu0 %v5452
        %5868 = vmatprep.subr.bf16.mxu0 0
        %5869 = vmatpush2.bf16.msra.mxu0 %v5467
        %5870 = vmatprep.subr.bf16.mxu0 0
        %5871 = vmatpush2.bf16.msra.mxu0 %v5466
        %5872 = vmatprep.subr.bf16.mxu0 0
        %5873 = vmatpush2.bf16.msra.mxu0 %v5465
        %5874 = vmatprep.subr.bf16.mxu0 0
        %5875 = vmatpush2.bf16.msra.mxu0 %v5464
        %5876 = vmatprep.subr.bf16.mxu0 0
        %5877 = vmatpush2.bf16.msra.mxu0 %v5463
        %5878 = vmatprep.subr.bf16.mxu0 0
        %5879 = vmatpush2.bf16.msra.mxu0 %v5462
        %5880 = vmatprep.subr.bf16.mxu0 0
        %5881 = vmatpush2.bf16.msra.mxu0 %v5461
        %5882 = vmatprep.subr.bf16.mxu0 0
        %5883 = vmatpush2.bf16.msra.mxu0 %v5460
        %5884 = vmatprep.mubr.bf16.mxu0 %v4453
        %5885 = vmatmul.mubr.bf16.gmra.mxu0 %v4452
        %v5886 = vpop.f32.mrf.mxu0
        %v5887 = vadd.f32 %v4146, %v5886
        %v5888 = vpop.f32.mrf.mxu0
        %v5889 = vpop.f32.mrf.mxu0
        %v5890 = vadd.f32 %v4146, %v5889
        %v5891 = vpop.f32.mrf.mxu0
        %5892 = vmatprep.mubr.bf16.mxu0 %v4478
        %5893 = vmatmul.mubr.bf16.gmra.mxu0 %v4477
        %v5894 = vpop.f32.mrf.mxu0
        %v5895 = vadd.f32 %v4146, %v5894
        %v5896 = vpop.f32.mrf.mxu0
        %v5897 = vpop.f32.mrf.mxu0
        %v5898 = vadd.f32 %v4146, %v5897
        %v5899 = vpop.f32.mrf.mxu0
        %5900 = vmatprep.mubr.bf16.mxu0 %v4503
        %5901 = vmatmul.mubr.bf16.gmra.mxu0 %v4502
        %v5902 = vpop.f32.mrf.mxu0
        %v5903 = vadd.f32 %v4146, %v5902
        %v5904 = vpop.f32.mrf.mxu0
        %v5905 = vpop.f32.mrf.mxu0
        %v5906 = vadd.f32 %v4146, %v5905
        %v5907 = vpop.f32.mrf.mxu0
        %5908 = vmatprep.mubr.bf16.mxu0 %v4528
        %5909 = vmatmul.mubr.bf16.gmra.mxu0 %v4527
        %v5910 = vpop.f32.mrf.mxu0
        %v5911 = vadd.f32 %v4146, %v5910
        %v5912 = vpop.f32.mrf.mxu0
        %v5913 = vpop.f32.mrf.mxu0
        %v5914 = vadd.f32 %v4146, %v5913
        %v5915 = vpop.f32.mrf.mxu0
        %5916 = vdwg.mxu0
        %5917 = vmatprep.subr.bf16.mxu0 0
        %5918 = vmatpush1.bf16.msra.mxu0 %v5475
        %5919 = vmatprep.subr.bf16.mxu0 0
        %5920 = vmatpush1.bf16.msra.mxu0 %v5474
        %5921 = vmatprep.subr.bf16.mxu0 0
        %5922 = vmatpush1.bf16.msra.mxu0 %v5473
        %5923 = vmatprep.subr.bf16.mxu0 0
        %5924 = vmatpush1.bf16.msra.mxu0 %v5472
        %5925 = vmatprep.subr.bf16.mxu0 0
        %5926 = vmatpush1.bf16.msra.mxu0 %v5471
        %5927 = vmatprep.subr.bf16.mxu0 0
        %5928 = vmatpush1.bf16.msra.mxu0 %v5470
        %5929 = vmatprep.subr.bf16.mxu0 0
        %5930 = vmatpush1.bf16.msra.mxu0 %v5469
        %5931 = vmatprep.subr.bf16.mxu0 0
        %5932 = vmatpush1.bf16.msra.mxu0 %v5468
        %5933 = vmatprep.subr.bf16.mxu0 0
        %5934 = vmatpush2.bf16.msra.mxu0 %v5483
        %5935 = vmatprep.subr.bf16.mxu0 0
        %5936 = vmatpush2.bf16.msra.mxu0 %v5482
        %5937 = vmatprep.subr.bf16.mxu0 0
        %5938 = vmatpush2.bf16.msra.mxu0 %v5481
        %5939 = vmatprep.subr.bf16.mxu0 0
        %5940 = vmatpush2.bf16.msra.mxu0 %v5480
        %5941 = vmatprep.subr.bf16.mxu0 0
        %5942 = vmatpush2.bf16.msra.mxu0 %v5479
        %5943 = vmatprep.subr.bf16.mxu0 0
        %5944 = vmatpush2.bf16.msra.mxu0 %v5478
        %5945 = vmatprep.subr.bf16.mxu0 0
        %5946 = vmatpush2.bf16.msra.mxu0 %v5477
        %5947 = vmatprep.subr.bf16.mxu0 0
        %5948 = vmatpush2.bf16.msra.mxu0 %v5476
        %5949 = vmatprep.mubr.bf16.mxu0 %v4455
        %5950 = vmatmul.mubr.bf16.gmra.mxu0 %v4454
        %v5951 = vpop.f32.mrf.mxu0
        %v5952 = vadd.f32 %v5887, %v5951
        %v5953 = vpop.f32.mrf.mxu0
        %v5954 = vpop.f32.mrf.mxu0
        %v5955 = vadd.f32 %v5890, %v5954
        %v5956 = vpop.f32.mrf.mxu0
        %5957 = vmatprep.mubr.bf16.mxu0 %v4480
        %5958 = vmatmul.mubr.bf16.gmra.mxu0 %v4479
        %v5959 = vpop.f32.mrf.mxu0
        %v5960 = vadd.f32 %v5895, %v5959
        %v5961 = vpop.f32.mrf.mxu0
        %v5962 = vpop.f32.mrf.mxu0
        %v5963 = vadd.f32 %v5898, %v5962
        %v5964 = vpop.f32.mrf.mxu0
        %5965 = vmatprep.mubr.bf16.mxu0 %v4505
        %5966 = vmatmul.mubr.bf16.gmra.mxu0 %v4504
        %v5967 = vpop.f32.mrf.mxu0
        %v5968 = vadd.f32 %v5903, %v5967
        %v5969 = vpop.f32.mrf.mxu0
        %v5970 = vpop.f32.mrf.mxu0
        %v5971 = vadd.f32 %v5906, %v5970
        %v5972 = vpop.f32.mrf.mxu0
        %5973 = vmatprep.mubr.bf16.mxu0 %v4530
        %5974 = vmatmul.mubr.bf16.gmra.mxu0 %v4529
        %v5975 = vpop.f32.mrf.mxu0
        %v5976 = vadd.f32 %v5911, %v5975
        %v5977 = vpop.f32.mrf.mxu0
        %v5978 = vpop.f32.mrf.mxu0
        %v5979 = vadd.f32 %v5914, %v5978
        %v5980 = vpop.f32.mrf.mxu0
        %5981 = vdwg.mxu0
        %5982 = vmatprep.subr.bf16.mxu0 0
        %5983 = vmatpush1.bf16.msra.mxu0 %v5491
        %5984 = vmatprep.subr.bf16.mxu0 0
        %5985 = vmatpush1.bf16.msra.mxu0 %v5490
        %5986 = vmatprep.subr.bf16.mxu0 0
        %5987 = vmatpush1.bf16.msra.mxu0 %v5489
        %5988 = vmatprep.subr.bf16.mxu0 0
        %5989 = vmatpush1.bf16.msra.mxu0 %v5488
        %5990 = vmatprep.subr.bf16.mxu0 0
        %5991 = vmatpush1.bf16.msra.mxu0 %v5487
        %5992 = vmatprep.subr.bf16.mxu0 0
        %5993 = vmatpush1.bf16.msra.mxu0 %v5486
        %5994 = vmatprep.subr.bf16.mxu0 0
        %5995 = vmatpush1.bf16.msra.mxu0 %v5485
        %5996 = vmatprep.subr.bf16.mxu0 0
        %5997 = vmatpush1.bf16.msra.mxu0 %v5484
        %5998 = vmatprep.subr.bf16.mxu0 0
        %5999 = vmatpush2.bf16.msra.mxu0 %v5499
        %6000 = vmatprep.subr.bf16.mxu0 0
        %6001 = vmatpush2.bf16.msra.mxu0 %v5498
        %6002 = vmatprep.subr.bf16.mxu0 0
        %6003 = vmatpush2.bf16.msra.mxu0 %v5497
        %6004 = vmatprep.subr.bf16.mxu0 0
        %6005 = vmatpush2.bf16.msra.mxu0 %v5496
        %6006 = vmatprep.subr.bf16.mxu0 0
        %6007 = vmatpush2.bf16.msra.mxu0 %v5495
        %6008 = vmatprep.subr.bf16.mxu0 0
        %6009 = vmatpush2.bf16.msra.mxu0 %v5494
        %6010 = vmatprep.subr.bf16.mxu0 0
        %6011 = vmatpush2.bf16.msra.mxu0 %v5493
        %6012 = vmatprep.subr.bf16.mxu0 0
        %6013 = vmatpush2.bf16.msra.mxu0 %v5492
        %6014 = vmatprep.mubr.bf16.mxu0 %v4457
        %6015 = vmatmul.mubr.bf16.gmra.mxu0 %v4456
        %v6016 = vpop.f32.mrf.mxu0
        %v6017 = vadd.f32 %v5952, %v6016
        %v6018 = vpop.f32.mrf.mxu0
        %v6019 = vpop.f32.mrf.mxu0
        %v6020 = vadd.f32 %v5955, %v6019
        %v6021 = vpop.f32.mrf.mxu0
        %6022 = vmatprep.mubr.bf16.mxu0 %v4482
        %6023 = vmatmul.mubr.bf16.gmra.mxu0 %v4481
        %v6024 = vpop.f32.mrf.mxu0
        %v6025 = vadd.f32 %v5960, %v6024
        %v6026 = vpop.f32.mrf.mxu0
        %v6027 = vpop.f32.mrf.mxu0
        %v6028 = vadd.f32 %v5963, %v6027
        %v6029 = vpop.f32.mrf.mxu0
        %6030 = vmatprep.mubr.bf16.mxu0 %v4507
        %6031 = vmatmul.mubr.bf16.gmra.mxu0 %v4506
        %v6032 = vpop.f32.mrf.mxu0
        %v6033 = vadd.f32 %v5968, %v6032
        %v6034 = vpop.f32.mrf.mxu0
        %v6035 = vpop.f32.mrf.mxu0
        %v6036 = vadd.f32 %v5971, %v6035
        %v6037 = vpop.f32.mrf.mxu0
        %6038 = vmatprep.mubr.bf16.mxu0 %v4532
        %6039 = vmatmul.mubr.bf16.gmra.mxu0 %v4531
        %v6040 = vpop.f32.mrf.mxu0
        %v6041 = vadd.f32 %v5976, %v6040
        %v6042 = vpop.f32.mrf.mxu0
        %v6043 = vpop.f32.mrf.mxu0
        %v6044 = vadd.f32 %v5979, %v6043
        %v6045 = vpop.f32.mrf.mxu0
        %6046 = vdwg.mxu0
        %6047 = vmatprep.subr.bf16.mxu0 0
        %6048 = vmatpush1.bf16.msra.mxu0 %v5507
        %6049 = vmatprep.subr.bf16.mxu0 0
        %6050 = vmatpush1.bf16.msra.mxu0 %v5506
        %6051 = vmatprep.subr.bf16.mxu0 0
        %6052 = vmatpush1.bf16.msra.mxu0 %v5505
        %6053 = vmatprep.subr.bf16.mxu0 0
        %6054 = vmatpush1.bf16.msra.mxu0 %v5504
        %6055 = vmatprep.subr.bf16.mxu0 0
        %6056 = vmatpush1.bf16.msra.mxu0 %v5503
        %6057 = vmatprep.subr.bf16.mxu0 0
        %6058 = vmatpush1.bf16.msra.mxu0 %v5502
        %6059 = vmatprep.subr.bf16.mxu0 0
        %6060 = vmatpush1.bf16.msra.mxu0 %v5501
        %6061 = vmatprep.subr.bf16.mxu0 0
        %6062 = vmatpush1.bf16.msra.mxu0 %v5500
        %6063 = vmatprep.subr.bf16.mxu0 0
        %6064 = vmatpush2.bf16.msra.mxu0 %v5515
        %6065 = vmatprep.subr.bf16.mxu0 0
        %6066 = vmatpush2.bf16.msra.mxu0 %v5514
        %6067 = vmatprep.subr.bf16.mxu0 0
        %6068 = vmatpush2.bf16.msra.mxu0 %v5513
        %6069 = vmatprep.subr.bf16.mxu0 0
        %6070 = vmatpush2.bf16.msra.mxu0 %v5512
        %6071 = vmatprep.subr.bf16.mxu0 0
        %6072 = vmatpush2.bf16.msra.mxu0 %v5511
        %6073 = vmatprep.subr.bf16.mxu0 0
        %6074 = vmatpush2.bf16.msra.mxu0 %v5510
        %6075 = vmatprep.subr.bf16.mxu0 0
        %6076 = vmatpush2.bf16.msra.mxu0 %v5509
        %6077 = vmatprep.subr.bf16.mxu0 0
        %6078 = vmatpush2.bf16.msra.mxu0 %v5508
        %6079 = vmatprep.mubr.bf16.mxu0 %v4459
        %6080 = vmatmul.mubr.bf16.gmra.mxu0 %v4458
        %v6081 = vpop.f32.mrf.mxu0
        %v6082 = vadd.f32 %v6017, %v6081
        %v6083 = vpop.f32.mrf.mxu0
        %v6084 = vpop.f32.mrf.mxu0
        %v6085 = vadd.f32 %v6020, %v6084
        %v6086 = vpop.f32.mrf.mxu0
        %6087 = vmatprep.mubr.bf16.mxu0 %v4484
        %6088 = vmatmul.mubr.bf16.gmra.mxu0 %v4483
        %v6089 = vpop.f32.mrf.mxu0
        %v6090 = vadd.f32 %v6025, %v6089
        %v6091 = vpop.f32.mrf.mxu0
        %v6092 = vpop.f32.mrf.mxu0
        %v6093 = vadd.f32 %v6028, %v6092
        %v6094 = vpop.f32.mrf.mxu0
        %6095 = vmatprep.mubr.bf16.mxu0 %v4509
        %6096 = vmatmul.mubr.bf16.gmra.mxu0 %v4508
        %v6097 = vpop.f32.mrf.mxu0
        %v6098 = vadd.f32 %v6033, %v6097
        %v6099 = vpop.f32.mrf.mxu0
        %v6100 = vpop.f32.mrf.mxu0
        %v6101 = vadd.f32 %v6036, %v6100
        %v6102 = vpop.f32.mrf.mxu0
        %6103 = vmatprep.mubr.bf16.mxu0 %v4534
        %6104 = vmatmul.mubr.bf16.gmra.mxu0 %v4533
        %v6105 = vpop.f32.mrf.mxu0
        %v6106 = vadd.f32 %v6041, %v6105
        %v6107 = vpop.f32.mrf.mxu0
        %v6108 = vpop.f32.mrf.mxu0
        %v6109 = vadd.f32 %v6044, %v6108
        %v6110 = vpop.f32.mrf.mxu0
        %6111 = vdwg.mxu0
        %6112 = vmatprep.subr.bf16.mxu0 0
        %6113 = vmatpush1.bf16.msra.mxu0 %v5523
        %6114 = vmatprep.subr.bf16.mxu0 0
        %6115 = vmatpush1.bf16.msra.mxu0 %v5522
        %6116 = vmatprep.subr.bf16.mxu0 0
        %6117 = vmatpush1.bf16.msra.mxu0 %v5521
        %6118 = vmatprep.subr.bf16.mxu0 0
        %6119 = vmatpush1.bf16.msra.mxu0 %v5520
        %6120 = vmatprep.subr.bf16.mxu0 0
        %6121 = vmatpush1.bf16.msra.mxu0 %v5519
        %6122 = vmatprep.subr.bf16.mxu0 0
        %6123 = vmatpush1.bf16.msra.mxu0 %v5518
        %6124 = vmatprep.subr.bf16.mxu0 0
        %6125 = vmatpush1.bf16.msra.mxu0 %v5517
        %6126 = vmatprep.subr.bf16.mxu0 0
        %6127 = vmatpush1.bf16.msra.mxu0 %v5516
        %6128 = vmatprep.subr.bf16.mxu0 0
        %6129 = vmatpush2.bf16.msra.mxu0 %v5531
        %6130 = vmatprep.subr.bf16.mxu0 0
        %6131 = vmatpush2.bf16.msra.mxu0 %v5530
        %6132 = vmatprep.subr.bf16.mxu0 0
        %6133 = vmatpush2.bf16.msra.mxu0 %v5529
        %6134 = vmatprep.subr.bf16.mxu0 0
        %6135 = vmatpush2.bf16.msra.mxu0 %v5528
        %6136 = vmatprep.subr.bf16.mxu0 0
        %6137 = vmatpush2.bf16.msra.mxu0 %v5527
        %6138 = vmatprep.subr.bf16.mxu0 0
        %6139 = vmatpush2.bf16.msra.mxu0 %v5526
        %6140 = vmatprep.subr.bf16.mxu0 0
        %6141 = vmatpush2.bf16.msra.mxu0 %v5525
        %6142 = vmatprep.subr.bf16.mxu0 0
        %6143 = vmatpush2.bf16.msra.mxu0 %v5524
        %6144 = vmatprep.mubr.bf16.mxu0 %v4461
        %6145 = vmatmul.mubr.bf16.gmra.mxu0 %v4460
        %v6146 = vpop.f32.mrf.mxu0
        %v6147 = vadd.f32 %v6082, %v6146
        %v6148 = vpop.f32.mrf.mxu0
        %v6149 = vpop.f32.mrf.mxu0
        %v6150 = vadd.f32 %v6085, %v6149
        %v6151 = vpop.f32.mrf.mxu0
        %6152 = vmatprep.mubr.bf16.mxu0 %v4486
        %6153 = vmatmul.mubr.bf16.gmra.mxu0 %v4485
        %v6154 = vpop.f32.mrf.mxu0
        %v6155 = vadd.f32 %v6090, %v6154
        %v6156 = vpop.f32.mrf.mxu0
        %v6157 = vpop.f32.mrf.mxu0
        %v6158 = vadd.f32 %v6093, %v6157
        %v6159 = vpop.f32.mrf.mxu0
        %6160 = vmatprep.mubr.bf16.mxu0 %v4511
        %6161 = vmatmul.mubr.bf16.gmra.mxu0 %v4510
        %v6162 = vpop.f32.mrf.mxu0
        %v6163 = vadd.f32 %v6098, %v6162
        %v6164 = vpop.f32.mrf.mxu0
        %v6165 = vpop.f32.mrf.mxu0
        %v6166 = vadd.f32 %v6101, %v6165
        %v6167 = vpop.f32.mrf.mxu0
        %6168 = vmatprep.mubr.bf16.mxu0 %v4536
        %6169 = vmatmul.mubr.bf16.gmra.mxu0 %v4535
        %v6170 = vpop.f32.mrf.mxu0
        %v6171 = vadd.f32 %v6106, %v6170
        %v6172 = vpop.f32.mrf.mxu0
        %v6173 = vpop.f32.mrf.mxu0
        %v6174 = vadd.f32 %v6109, %v6173
        %v6175 = vpop.f32.mrf.mxu0
        %6176 = vdwg.mxu0
        %6177 = vmatprep.subr.bf16.mxu0 0
        %6178 = vmatpush1.bf16.msra.mxu0 %v5539
        %6179 = vmatprep.subr.bf16.mxu0 0
        %6180 = vmatpush1.bf16.msra.mxu0 %v5538
        %6181 = vmatprep.subr.bf16.mxu0 0
        %6182 = vmatpush1.bf16.msra.mxu0 %v5537
        %6183 = vmatprep.subr.bf16.mxu0 0
        %6184 = vmatpush1.bf16.msra.mxu0 %v5536
        %6185 = vmatprep.subr.bf16.mxu0 0
        %6186 = vmatpush1.bf16.msra.mxu0 %v5535
        %6187 = vmatprep.subr.bf16.mxu0 0
        %6188 = vmatpush1.bf16.msra.mxu0 %v5534
        %6189 = vmatprep.subr.bf16.mxu0 0
        %6190 = vmatpush1.bf16.msra.mxu0 %v5533
        %6191 = vmatprep.subr.bf16.mxu0 0
        %6192 = vmatpush1.bf16.msra.mxu0 %v5532
        %6193 = vmatprep.subr.bf16.mxu0 0
        %6194 = vmatpush2.bf16.msra.mxu0 %v5547
        %6195 = vmatprep.subr.bf16.mxu0 0
        %6196 = vmatpush2.bf16.msra.mxu0 %v5546
        %6197 = vmatprep.subr.bf16.mxu0 0
        %6198 = vmatpush2.bf16.msra.mxu0 %v5545
        %6199 = vmatprep.subr.bf16.mxu0 0
        %6200 = vmatpush2.bf16.msra.mxu0 %v5544
        %6201 = vmatprep.subr.bf16.mxu0 0
        %6202 = vmatpush2.bf16.msra.mxu0 %v5543
        %6203 = vmatprep.subr.bf16.mxu0 0
        %6204 = vmatpush2.bf16.msra.mxu0 %v5542
        %6205 = vmatprep.subr.bf16.mxu0 0
        %6206 = vmatpush2.bf16.msra.mxu0 %v5541
        %6207 = vmatprep.subr.bf16.mxu0 0
        %6208 = vmatpush2.bf16.msra.mxu0 %v5540
        %6209 = vmatprep.mubr.bf16.mxu0 %v4463
        %6210 = vmatmul.mubr.bf16.gmra.mxu0 %v4462
        %v6211 = vpop.f32.mrf.mxu0
        %v6212 = vadd.f32 %v6147, %v6211
        %v6213 = vpop.f32.mrf.mxu0
        %v6214 = vpop.f32.mrf.mxu0
        %v6215 = vadd.f32 %v6150, %v6214
        %v6216 = vpop.f32.mrf.mxu0
        %6217 = vmatprep.mubr.bf16.mxu0 %v4488
        %6218 = vmatmul.mubr.bf16.gmra.mxu0 %v4487
        %v6219 = vpop.f32.mrf.mxu0
        %v6220 = vadd.f32 %v6155, %v6219
        %v6221 = vpop.f32.mrf.mxu0
        %v6222 = vpop.f32.mrf.mxu0
        %v6223 = vadd.f32 %v6158, %v6222
        %v6224 = vpop.f32.mrf.mxu0
        %6225 = vmatprep.mubr.bf16.mxu0 %v4513
        %6226 = vmatmul.mubr.bf16.gmra.mxu0 %v4512
        %v6227 = vpop.f32.mrf.mxu0
        %v6228 = vadd.f32 %v6163, %v6227
        %v6229 = vpop.f32.mrf.mxu0
        %v6230 = vpop.f32.mrf.mxu0
        %v6231 = vadd.f32 %v6166, %v6230
        %v6232 = vpop.f32.mrf.mxu0
        %6233 = vmatprep.mubr.bf16.mxu0 %v4538
        %6234 = vmatmul.mubr.bf16.gmra.mxu0 %v4537
        %v6235 = vpop.f32.mrf.mxu0
        %v6236 = vadd.f32 %v6171, %v6235
        %v6237 = vpop.f32.mrf.mxu0
        %v6238 = vpop.f32.mrf.mxu0
        %v6239 = vadd.f32 %v6174, %v6238
        %v6240 = vpop.f32.mrf.mxu0
        %6241 = vdwg.mxu0
        %6242 = vmatprep.subr.bf16.mxu0 0
        %6243 = vmatpush1.bf16.msra.mxu0 %v5555
        %6244 = vmatprep.subr.bf16.mxu0 0
        %6245 = vmatpush1.bf16.msra.mxu0 %v5554
        %6246 = vmatprep.subr.bf16.mxu0 0
        %6247 = vmatpush1.bf16.msra.mxu0 %v5553
        %6248 = vmatprep.subr.bf16.mxu0 0
        %6249 = vmatpush1.bf16.msra.mxu0 %v5552
        %6250 = vmatprep.subr.bf16.mxu0 0
        %6251 = vmatpush1.bf16.msra.mxu0 %v5551
        %6252 = vmatprep.subr.bf16.mxu0 0
        %6253 = vmatpush1.bf16.msra.mxu0 %v5550
        %6254 = vmatprep.subr.bf16.mxu0 0
        %6255 = vmatpush1.bf16.msra.mxu0 %v5549
        %6256 = vmatprep.subr.bf16.mxu0 0
        %6257 = vmatpush1.bf16.msra.mxu0 %v5548
        %6258 = vmatprep.subr.bf16.mxu0 0
        %6259 = vmatpush2.bf16.msra.mxu0 %v5563
        %6260 = vmatprep.subr.bf16.mxu0 0
        %6261 = vmatpush2.bf16.msra.mxu0 %v5562
        %6262 = vmatprep.subr.bf16.mxu0 0
        %6263 = vmatpush2.bf16.msra.mxu0 %v5561
        %6264 = vmatprep.subr.bf16.mxu0 0
        %6265 = vmatpush2.bf16.msra.mxu0 %v5560
        %6266 = vmatprep.subr.bf16.mxu0 0
        %6267 = vmatpush2.bf16.msra.mxu0 %v5559
        %6268 = vmatprep.subr.bf16.mxu0 0
        %6269 = vmatpush2.bf16.msra.mxu0 %v5558
        %6270 = vmatprep.subr.bf16.mxu0 0
        %6271 = vmatpush2.bf16.msra.mxu0 %v5557
        %6272 = vmatprep.subr.bf16.mxu0 0
        %6273 = vmatpush2.bf16.msra.mxu0 %v5556
        %6274 = vmatprep.mubr.bf16.mxu0 %v4465
        %6275 = vmatmul.mubr.bf16.gmra.mxu0 %v4464
        %v6276 = vpop.f32.mrf.mxu0
        %v6277 = vadd.f32 %v6212, %v6276
        %v6278 = vpop.f32.mrf.mxu0
        %v6279 = vpop.f32.mrf.mxu0
        %v6280 = vadd.f32 %v6215, %v6279
        %v6281 = vpop.f32.mrf.mxu0
        %6282 = vmatprep.mubr.bf16.mxu0 %v4490
        %6283 = vmatmul.mubr.bf16.gmra.mxu0 %v4489
        %v6284 = vpop.f32.mrf.mxu0
        %v6285 = vadd.f32 %v6220, %v6284
        %v6286 = vpop.f32.mrf.mxu0
        %v6287 = vpop.f32.mrf.mxu0
        %v6288 = vadd.f32 %v6223, %v6287
        %v6289 = vpop.f32.mrf.mxu0
        %6290 = vmatprep.mubr.bf16.mxu0 %v4515
        %6291 = vmatmul.mubr.bf16.gmra.mxu0 %v4514
        %v6292 = vpop.f32.mrf.mxu0
        %v6293 = vadd.f32 %v6228, %v6292
        %v6294 = vpop.f32.mrf.mxu0
        %v6295 = vpop.f32.mrf.mxu0
        %v6296 = vadd.f32 %v6231, %v6295
        %v6297 = vpop.f32.mrf.mxu0
        %6298 = vmatprep.mubr.bf16.mxu0 %v4540
        %6299 = vmatmul.mubr.bf16.gmra.mxu0 %v4539
        %v6300 = vpop.f32.mrf.mxu0
        %v6301 = vadd.f32 %v6236, %v6300
        %v6302 = vpop.f32.mrf.mxu0
        %v6303 = vpop.f32.mrf.mxu0
        %v6304 = vadd.f32 %v6239, %v6303
        %v6305 = vpop.f32.mrf.mxu0
        %6306 = vdwg.mxu0
        %6307 = vmatprep.subr.bf16.mxu0 0
        %6308 = vmatpush1.bf16.msra.mxu0 %v5571
        %6309 = vmatprep.subr.bf16.mxu0 0
        %6310 = vmatpush1.bf16.msra.mxu0 %v5570
        %6311 = vmatprep.subr.bf16.mxu0 0
        %6312 = vmatpush1.bf16.msra.mxu0 %v5569
        %6313 = vmatprep.subr.bf16.mxu0 0
        %6314 = vmatpush1.bf16.msra.mxu0 %v5568
        %6315 = vmatprep.subr.bf16.mxu0 0
        %6316 = vmatpush1.bf16.msra.mxu0 %v5567
        %6317 = vmatprep.subr.bf16.mxu0 0
        %6318 = vmatpush1.bf16.msra.mxu0 %v5566
        %6319 = vmatprep.subr.bf16.mxu0 0
        %6320 = vmatpush1.bf16.msra.mxu0 %v5565
        %6321 = vmatprep.subr.bf16.mxu0 0
        %6322 = vmatpush1.bf16.msra.mxu0 %v5564
        %6323 = vmatprep.subr.bf16.mxu0 0
        %6324 = vmatpush2.bf16.msra.mxu0 %v5579
        %6325 = vmatprep.subr.bf16.mxu0 0
        %6326 = vmatpush2.bf16.msra.mxu0 %v5578
        %6327 = vmatprep.subr.bf16.mxu0 0
        %6328 = vmatpush2.bf16.msra.mxu0 %v5577
        %6329 = vmatprep.subr.bf16.mxu0 0
        %6330 = vmatpush2.bf16.msra.mxu0 %v5576
        %6331 = vmatprep.subr.bf16.mxu0 0
        %6332 = vmatpush2.bf16.msra.mxu0 %v5575
        %6333 = vmatprep.subr.bf16.mxu0 0
        %6334 = vmatpush2.bf16.msra.mxu0 %v5574
        %6335 = vmatprep.subr.bf16.mxu0 0
        %6336 = vmatpush2.bf16.msra.mxu0 %v5573
        %6337 = vmatprep.subr.bf16.mxu0 0
        %6338 = vmatpush2.bf16.msra.mxu0 %v5572
        %6339 = vmatprep.mubr.bf16.mxu0 %v4467
        %6340 = vmatmul.mubr.bf16.gmra.mxu0 %v4466
        %v6341 = vpop.f32.mrf.mxu0
        %v6342 = vadd.f32 %v6277, %v6341
        %v6343 = vpop.f32.mrf.mxu0
        %v6344 = vpop.f32.mrf.mxu0
        %v6345 = vadd.f32 %v6280, %v6344
        %v6346 = vpop.f32.mrf.mxu0
        %6347 = vmatprep.mubr.bf16.mxu0 %v4492
        %6348 = vmatmul.mubr.bf16.gmra.mxu0 %v4491
        %v6349 = vpop.f32.mrf.mxu0
        %v6350 = vadd.f32 %v6285, %v6349
        %v6351 = vpop.f32.mrf.mxu0
        %v6352 = vpop.f32.mrf.mxu0
        %v6353 = vadd.f32 %v6288, %v6352
        %v6354 = vpop.f32.mrf.mxu0
        %6355 = vmatprep.mubr.bf16.mxu0 %v4517
        %6356 = vmatmul.mubr.bf16.gmra.mxu0 %v4516
        %v6357 = vpop.f32.mrf.mxu0
        %v6358 = vadd.f32 %v6293, %v6357
        %v6359 = vpop.f32.mrf.mxu0
        %v6360 = vpop.f32.mrf.mxu0
        %v6361 = vadd.f32 %v6296, %v6360
        %v6362 = vpop.f32.mrf.mxu0
        %6363 = vmatprep.mubr.bf16.mxu0 %v4542
        %6364 = vmatmul.mubr.bf16.gmra.mxu0 %v4541
        %v6365 = vpop.f32.mrf.mxu0
        %v6366 = vadd.f32 %v6301, %v6365
        %v6367 = vpop.f32.mrf.mxu0
        %v6368 = vpop.f32.mrf.mxu0
        %v6369 = vadd.f32 %v6304, %v6368
        %v6370 = vpop.f32.mrf.mxu0
        %6371 = vdwg.mxu0
        %6372 = vmatprep.subr.bf16.mxu0 0
        %6373 = vmatpush1.bf16.msra.mxu0 %v5587
        %6374 = vmatprep.subr.bf16.mxu0 0
        %6375 = vmatpush1.bf16.msra.mxu0 %v5586
        %6376 = vmatprep.subr.bf16.mxu0 0
        %6377 = vmatpush1.bf16.msra.mxu0 %v5585
        %6378 = vmatprep.subr.bf16.mxu0 0
        %6379 = vmatpush1.bf16.msra.mxu0 %v5584
        %6380 = vmatprep.subr.bf16.mxu0 0
        %6381 = vmatpush1.bf16.msra.mxu0 %v5583
        %6382 = vmatprep.subr.bf16.mxu0 0
        %6383 = vmatpush1.bf16.msra.mxu0 %v5582
        %6384 = vmatprep.subr.bf16.mxu0 0
        %6385 = vmatpush1.bf16.msra.mxu0 %v5581
        %6386 = vmatprep.subr.bf16.mxu0 0
        %6387 = vmatpush1.bf16.msra.mxu0 %v5580
        %6388 = vmatprep.subr.bf16.mxu0 0
        %6389 = vmatpush2.bf16.msra.mxu0 %v5595
        %6390 = vmatprep.subr.bf16.mxu0 0
        %6391 = vmatpush2.bf16.msra.mxu0 %v5594
        %6392 = vmatprep.subr.bf16.mxu0 0
        %6393 = vmatpush2.bf16.msra.mxu0 %v5593
        %6394 = vmatprep.subr.bf16.mxu0 0
        %6395 = vmatpush2.bf16.msra.mxu0 %v5592
        %6396 = vmatprep.subr.bf16.mxu0 0
        %6397 = vmatpush2.bf16.msra.mxu0 %v5591
        %6398 = vmatprep.subr.bf16.mxu0 0
        %6399 = vmatpush2.bf16.msra.mxu0 %v5590
        %6400 = vmatprep.subr.bf16.mxu0 0
        %6401 = vmatpush2.bf16.msra.mxu0 %v5589
        %6402 = vmatprep.subr.bf16.mxu0 0
        %6403 = vmatpush2.bf16.msra.mxu0 %v5588
        %6404 = vmatprep.mubr.bf16.mxu0 %v4469
        %6405 = vmatmul.mubr.bf16.gmra.mxu0 %v4468
        %v6406 = vpop.f32.mrf.mxu0
        %v6407 = vadd.f32 %v6342, %v6406
        %v6408 = vpop.f32.mrf.mxu0
        %v6409 = vpop.f32.mrf.mxu0
        %v6410 = vadd.f32 %v6345, %v6409
        %v6411 = vpop.f32.mrf.mxu0
        %6412 = vmatprep.mubr.bf16.mxu0 %v4494
        %6413 = vmatmul.mubr.bf16.gmra.mxu0 %v4493
        %v6414 = vpop.f32.mrf.mxu0
        %v6415 = vadd.f32 %v6350, %v6414
        %v6416 = vpop.f32.mrf.mxu0
        %v6417 = vpop.f32.mrf.mxu0
        %v6418 = vadd.f32 %v6353, %v6417
        %v6419 = vpop.f32.mrf.mxu0
        %6420 = vmatprep.mubr.bf16.mxu0 %v4519
        %6421 = vmatmul.mubr.bf16.gmra.mxu0 %v4518
        %v6422 = vpop.f32.mrf.mxu0
        %v6423 = vadd.f32 %v6358, %v6422
        %v6424 = vpop.f32.mrf.mxu0
        %v6425 = vpop.f32.mrf.mxu0
        %v6426 = vadd.f32 %v6361, %v6425
        %v6427 = vpop.f32.mrf.mxu0
        %6428 = vmatprep.mubr.bf16.mxu0 %v4544
        %6429 = vmatmul.mubr.bf16.gmra.mxu0 %v4543
        %v6430 = vpop.f32.mrf.mxu0
        %v6431 = vadd.f32 %v6366, %v6430
        %v6432 = vpop.f32.mrf.mxu0
        %v6433 = vpop.f32.mrf.mxu0
        %v6434 = vadd.f32 %v6369, %v6433
        %v6435 = vpop.f32.mrf.mxu0
        %6436 = vdwg.mxu0
        %6437 = vmatprep.subr.bf16.mxu0 0
        %6438 = vmatpush1.bf16.msra.mxu0 %v5603
        %6439 = vmatprep.subr.bf16.mxu0 0
        %6440 = vmatpush1.bf16.msra.mxu0 %v5602
        %6441 = vmatprep.subr.bf16.mxu0 0
        %6442 = vmatpush1.bf16.msra.mxu0 %v5601
        %6443 = vmatprep.subr.bf16.mxu0 0
        %6444 = vmatpush1.bf16.msra.mxu0 %v5600
        %6445 = vmatprep.subr.bf16.mxu0 0
        %6446 = vmatpush1.bf16.msra.mxu0 %v5599
        %6447 = vmatprep.subr.bf16.mxu0 0
        %6448 = vmatpush1.bf16.msra.mxu0 %v5598
        %6449 = vmatprep.subr.bf16.mxu0 0
        %6450 = vmatpush1.bf16.msra.mxu0 %v5597
        %6451 = vmatprep.subr.bf16.mxu0 0
        %6452 = vmatpush1.bf16.msra.mxu0 %v5596
        %6453 = vmatprep.subr.bf16.mxu0 0
        %6454 = vmatpush2.bf16.msra.mxu0 %v5611
        %6455 = vmatprep.subr.bf16.mxu0 0
        %6456 = vmatpush2.bf16.msra.mxu0 %v5610
        %6457 = vmatprep.subr.bf16.mxu0 0
        %6458 = vmatpush2.bf16.msra.mxu0 %v5609
        %6459 = vmatprep.subr.bf16.mxu0 0
        %6460 = vmatpush2.bf16.msra.mxu0 %v5608
        %6461 = vmatprep.subr.bf16.mxu0 0
        %6462 = vmatpush2.bf16.msra.mxu0 %v5607
        %6463 = vmatprep.subr.bf16.mxu0 0
        %6464 = vmatpush2.bf16.msra.mxu0 %v5606
        %6465 = vmatprep.subr.bf16.mxu0 0
        %6466 = vmatpush2.bf16.msra.mxu0 %v5605
        %6467 = vmatprep.subr.bf16.mxu0 0
        %6468 = vmatpush2.bf16.msra.mxu0 %v5604
        %6469 = vmatprep.mubr.bf16.mxu0 %v4471
        %6470 = vmatmul.mubr.bf16.gmra.mxu0 %v4470
        %v6471 = vpop.f32.mrf.mxu0
        %v6472 = vadd.f32 %v6407, %v6471
        %v6473 = vpop.f32.mrf.mxu0
        %v6474 = vpop.f32.mrf.mxu0
        %v6475 = vadd.f32 %v6410, %v6474
        %v6476 = vpop.f32.mrf.mxu0
        %6477 = vmatprep.mubr.bf16.mxu0 %v4496
        %6478 = vmatmul.mubr.bf16.gmra.mxu0 %v4495
        %v6479 = vpop.f32.mrf.mxu0
        %v6480 = vadd.f32 %v6415, %v6479
        %v6481 = vpop.f32.mrf.mxu0
        %v6482 = vpop.f32.mrf.mxu0
        %v6483 = vadd.f32 %v6418, %v6482
        %v6484 = vpop.f32.mrf.mxu0
        %6485 = vmatprep.mubr.bf16.mxu0 %v4521
        %6486 = vmatmul.mubr.bf16.gmra.mxu0 %v4520
        %v6487 = vpop.f32.mrf.mxu0
        %v6488 = vadd.f32 %v6423, %v6487
        %v6489 = vpop.f32.mrf.mxu0
        %v6490 = vpop.f32.mrf.mxu0
        %v6491 = vadd.f32 %v6426, %v6490
        %v6492 = vpop.f32.mrf.mxu0
        %6493 = vmatprep.mubr.bf16.mxu0 %v4546
        %6494 = vmatmul.mubr.bf16.gmra.mxu0 %v4545
        %v6495 = vpop.f32.mrf.mxu0
        %v6496 = vadd.f32 %v6431, %v6495
        %v6497 = vpop.f32.mrf.mxu0
        %v6498 = vpop.f32.mrf.mxu0
        %v6499 = vadd.f32 %v6434, %v6498
        %v6500 = vpop.f32.mrf.mxu0
        %6501 = vdwg.mxu0
        %6502 = vmatprep.subr.bf16.mxu0 0
        %6503 = vmatpush1.bf16.msra.mxu0 %v5619
        %6504 = vmatprep.subr.bf16.mxu0 0
        %6505 = vmatpush1.bf16.msra.mxu0 %v5618
        %6506 = vmatprep.subr.bf16.mxu0 0
        %6507 = vmatpush1.bf16.msra.mxu0 %v5617
        %6508 = vmatprep.subr.bf16.mxu0 0
        %6509 = vmatpush1.bf16.msra.mxu0 %v5616
        %6510 = vmatprep.subr.bf16.mxu0 0
        %6511 = vmatpush1.bf16.msra.mxu0 %v5615
        %6512 = vmatprep.subr.bf16.mxu0 0
        %6513 = vmatpush1.bf16.msra.mxu0 %v5614
        %6514 = vmatprep.subr.bf16.mxu0 0
        %6515 = vmatpush1.bf16.msra.mxu0 %v5613
        %6516 = vmatprep.subr.bf16.mxu0 0
        %6517 = vmatpush1.bf16.msra.mxu0 %v5612
        %6518 = vmatprep.subr.bf16.mxu0 0
        %6519 = vmatpush2.bf16.msra.mxu0 %v5627
        %6520 = vmatprep.subr.bf16.mxu0 0
        %6521 = vmatpush2.bf16.msra.mxu0 %v5626
        %6522 = vmatprep.subr.bf16.mxu0 0
        %6523 = vmatpush2.bf16.msra.mxu0 %v5625
        %6524 = vmatprep.subr.bf16.mxu0 0
        %6525 = vmatpush2.bf16.msra.mxu0 %v5624
        %6526 = vmatprep.subr.bf16.mxu0 0
        %6527 = vmatpush2.bf16.msra.mxu0 %v5623
        %6528 = vmatprep.subr.bf16.mxu0 0
        %6529 = vmatpush2.bf16.msra.mxu0 %v5622
        %6530 = vmatprep.subr.bf16.mxu0 0
        %6531 = vmatpush2.bf16.msra.mxu0 %v5621
        %6532 = vmatprep.subr.bf16.mxu0 0
        %6533 = vmatpush2.bf16.msra.mxu0 %v5620
        %6534 = vmatprep.mubr.bf16.mxu0 %v4473
        %6535 = vmatmul.mubr.bf16.gmra.mxu0 %v4472
        %v6536 = vpop.f32.mrf.mxu0
        %v6537 = vadd.f32 %v6472, %v6536
        %v6538 = vpop.f32.mrf.mxu0
        %v6539 = vpop.f32.mrf.mxu0
        %v6540 = vadd.f32 %v6475, %v6539
        %v6541 = vpop.f32.mrf.mxu0
        %6542 = vmatprep.mubr.bf16.mxu0 %v4498
        %6543 = vmatmul.mubr.bf16.gmra.mxu0 %v4497
        %v6544 = vpop.f32.mrf.mxu0
        %v6545 = vadd.f32 %v6480, %v6544
        %v6546 = vpop.f32.mrf.mxu0
        %v6547 = vpop.f32.mrf.mxu0
        %v6548 = vadd.f32 %v6483, %v6547
        %v6549 = vpop.f32.mrf.mxu0
        %6550 = vmatprep.mubr.bf16.mxu0 %v4523
        %6551 = vmatmul.mubr.bf16.gmra.mxu0 %v4522
        %v6552 = vpop.f32.mrf.mxu0
        %v6553 = vadd.f32 %v6488, %v6552
        %v6554 = vpop.f32.mrf.mxu0
        %v6555 = vpop.f32.mrf.mxu0
        %v6556 = vadd.f32 %v6491, %v6555
        %v6557 = vpop.f32.mrf.mxu0
        %6558 = vmatprep.mubr.bf16.mxu0 %v4548
        %6559 = vmatmul.mubr.bf16.gmra.mxu0 %v4547
        %v6560 = vpop.f32.mrf.mxu0
        %v6561 = vadd.f32 %v6496, %v6560
        %v6562 = vpop.f32.mrf.mxu0
        %v6563 = vpop.f32.mrf.mxu0
        %v6564 = vadd.f32 %v6499, %v6563
        %v6565 = vpop.f32.mrf.mxu0
        %6566 = vdwg.mxu0
        %6567 = vmatprep.subr.bf16.mxu0 0
        %6568 = vmatpush1.bf16.msra.mxu0 %v5635
        %6569 = vmatprep.subr.bf16.mxu0 0
        %6570 = vmatpush1.bf16.msra.mxu0 %v5634
        %6571 = vmatprep.subr.bf16.mxu0 0
        %6572 = vmatpush1.bf16.msra.mxu0 %v5633
        %6573 = vmatprep.subr.bf16.mxu0 0
        %6574 = vmatpush1.bf16.msra.mxu0 %v5632
        %6575 = vmatprep.subr.bf16.mxu0 0
        %6576 = vmatpush1.bf16.msra.mxu0 %v5631
        %6577 = vmatprep.subr.bf16.mxu0 0
        %6578 = vmatpush1.bf16.msra.mxu0 %v5630
        %6579 = vmatprep.subr.bf16.mxu0 0
        %6580 = vmatpush1.bf16.msra.mxu0 %v5629
        %6581 = vmatprep.subr.bf16.mxu0 0
        %6582 = vmatpush1.bf16.msra.mxu0 %v5628
        %6583 = vmatprep.subr.bf16.mxu0 0
        %6584 = vmatpush2.bf16.msra.mxu0 %v5643
        %6585 = vmatprep.subr.bf16.mxu0 0
        %6586 = vmatpush2.bf16.msra.mxu0 %v5642
        %6587 = vmatprep.subr.bf16.mxu0 0
        %6588 = vmatpush2.bf16.msra.mxu0 %v5641
        %6589 = vmatprep.subr.bf16.mxu0 0
        %6590 = vmatpush2.bf16.msra.mxu0 %v5640
        %6591 = vmatprep.subr.bf16.mxu0 0
        %6592 = vmatpush2.bf16.msra.mxu0 %v5639
        %6593 = vmatprep.subr.bf16.mxu0 0
        %6594 = vmatpush2.bf16.msra.mxu0 %v5638
        %6595 = vmatprep.subr.bf16.mxu0 0
        %6596 = vmatpush2.bf16.msra.mxu0 %v5637
        %6597 = vmatprep.subr.bf16.mxu0 0
        %6598 = vmatpush2.bf16.msra.mxu0 %v5636
        %6599 = vmatprep.mubr.bf16.mxu0 %v4475
        %6600 = vmatmul.mubr.bf16.gmra.mxu0 %v4474
        %v6601 = vpop.f32.mrf.mxu0
        %v6602 = vadd.f32 %v6537, %v6601
        %v6603 = vpop.f32.mrf.mxu0
        %v6604 = vpop.f32.mrf.mxu0
        %v6605 = vadd.f32 %v6540, %v6604
        %v6606 = vpop.f32.mrf.mxu0
        %6607 = vmatprep.mubr.bf16.mxu0 %v4500
        %6608 = vmatmul.mubr.bf16.gmra.mxu0 %v4499
        %v6609 = vpop.f32.mrf.mxu0
        %v6610 = vadd.f32 %v6545, %v6609
        %v6611 = vpop.f32.mrf.mxu0
        %v6612 = vpop.f32.mrf.mxu0
        %v6613 = vadd.f32 %v6548, %v6612
        %v6614 = vpop.f32.mrf.mxu0
        %6615 = vmatprep.mubr.bf16.mxu0 %v4525
        %6616 = vmatmul.mubr.bf16.gmra.mxu0 %v4524
        %v6617 = vpop.f32.mrf.mxu0
        %v6618 = vadd.f32 %v6553, %v6617
        %v6619 = vpop.f32.mrf.mxu0
        %v6620 = vpop.f32.mrf.mxu0
        %v6621 = vadd.f32 %v6556, %v6620
        %v6622 = vpop.f32.mrf.mxu0
        %6623 = vmatprep.mubr.bf16.mxu0 %v4550
        %6624 = vmatmul.mubr.bf16.gmra.mxu0 %v4549
        %v6625 = vpop.f32.mrf.mxu0
        %v6626 = vadd.f32 %v6561, %v6625
        %v6627 = vpop.f32.mrf.mxu0
        %v6628 = vpop.f32.mrf.mxu0
        %v6629 = vadd.f32 %v6564, %v6628
        %v6630 = vpop.f32.mrf.mxu0
        %6631 = vdwg.mxu0
        %6632 = vmatprep.subr.bf16.mxu0 0
        %6633 = vmatpush1.bf16.msra.mxu0 %v5651
        %6634 = vmatprep.subr.bf16.mxu0 0
        %6635 = vmatpush1.bf16.msra.mxu0 %v5650
        %6636 = vmatprep.subr.bf16.mxu0 0
        %6637 = vmatpush1.bf16.msra.mxu0 %v5649
        %6638 = vmatprep.subr.bf16.mxu0 0
        %6639 = vmatpush1.bf16.msra.mxu0 %v5648
        %6640 = vmatprep.subr.bf16.mxu0 0
        %6641 = vmatpush1.bf16.msra.mxu0 %v5647
        %6642 = vmatprep.subr.bf16.mxu0 0
        %6643 = vmatpush1.bf16.msra.mxu0 %v5646
        %6644 = vmatprep.subr.bf16.mxu0 0
        %6645 = vmatpush1.bf16.msra.mxu0 %v5645
        %6646 = vmatprep.subr.bf16.mxu0 0
        %6647 = vmatpush1.bf16.msra.mxu0 %v5644
        %6648 = vmatprep.subr.bf16.mxu0 0
        %6649 = vmatpush2.bf16.msra.mxu0 0
        %6650 = vmatprep.subr.bf16.mxu0 0
        %6651 = vmatpush2.bf16.msra.mxu0 0
        %6652 = vmatprep.subr.bf16.mxu0 0
        %6653 = vmatpush2.bf16.msra.mxu0 0
        %6654 = vmatprep.subr.bf16.mxu0 0
        %6655 = vmatpush2.bf16.msra.mxu0 0
        %6656 = vmatprep.subr.bf16.mxu0 0
        %6657 = vmatpush2.bf16.msra.mxu0 0
        %6658 = vmatprep.subr.bf16.mxu0 0
        %6659 = vmatpush2.bf16.msra.mxu0 0
        %6660 = vmatprep.subr.bf16.mxu0 0
        %6661 = vmatpush2.bf16.msra.mxu0 0
        %6662 = vmatprep.subr.bf16.mxu0 0
        %6663 = vmatpush2.bf16.msra.mxu0 0
        %6664 = vmatprep.mubr.bf16.mxu0 0
        %6665 = vmatmul.mubr.bf16.gmra.mxu0 %v4476
        %v6666 = vpop.f32.mrf.mxu0
        %v6667 = vadd.f32 %v6602, %v6666
        %v6668 = vpop.f32.mrf.mxu0
        %v6669 = vpop.f32.mrf.mxu0
        %v6670 = vadd.f32 %v6605, %v6669
        %v6671 = vpop.f32.mrf.mxu0
        %6672 = vmatprep.mubr.bf16.mxu0 0
        %6673 = vmatmul.mubr.bf16.gmra.mxu0 %v4501
        %v6674 = vpop.f32.mrf.mxu0
        %v6675 = vadd.f32 %v6610, %v6674
        %v6676 = vpop.f32.mrf.mxu0
        %v6677 = vpop.f32.mrf.mxu0
        %v6678 = vadd.f32 %v6613, %v6677
        %v6679 = vpop.f32.mrf.mxu0
        %6680 = vmatprep.mubr.bf16.mxu0 0
        %6681 = vmatmul.mubr.bf16.gmra.mxu0 %v4526
        %v6682 = vpop.f32.mrf.mxu0
        %v6683 = vadd.f32 %v6618, %v6682
        %v6684 = vpop.f32.mrf.mxu0
        %v6685 = vpop.f32.mrf.mxu0
        %v6686 = vadd.f32 %v6621, %v6685
        %v6687 = vpop.f32.mrf.mxu0
        %6688 = vmatprep.mubr.bf16.mxu0 0
        %6689 = vmatmul.mubr.bf16.gmra.mxu0 %v4551
        %v6690 = vpop.f32.mrf.mxu0
        %v6691 = vadd.f32 %v6626, %v6690
        %v6692 = vpop.f32.mrf.mxu0
        %v6693 = vpop.f32.mrf.mxu0
        %v6694 = vadd.f32 %v6629, %v6693
        %v6695 = vpop.f32.mrf.mxu0
        %6696 = vdwg.mxu0
        %v6697 = vsub.f32 0.0, %v6667
        %v6698 = vsub.f32 0.0, %v6670
        %v6699 = vsub.f32 0.0, %v6675
        %v6700 = vsub.f32 0.0, %v6678
        %v6701 = vsub.f32 0.0, %v6683
        %v6702 = vsub.f32 0.0, %v6686
        %v6703 = vsub.f32 0.0, %v6691
        %v6704 = vsub.f32 0.0, %v6694
        %v6705 = vmul.f32 %v6697, 1.442695
        %v6706 = vpow.pop %v6705
        %v6707 = vmul.f32 %v6698, 1.442695
        %v6708 = vpow.pop %v6707
        %v6709 = vmul.f32 %v6699, 1.442695
        %v6710 = vpow.pop %v6709
        %v6711 = vmul.f32 %v6700, 1.442695
        %v6712 = vpow.pop %v6711
        %v6713 = vmul.f32 %v6701, 1.442695
        %v6714 = vpow.pop %v6713
        %v6715 = vmul.f32 %v6702, 1.442695
        %v6716 = vpow.pop %v6715
        %v6717 = vmul.f32 %v6703, 1.442695
        %v6718 = vpow.pop %v6717
        %v6719 = vmul.f32 %v6704, 1.442695
        %v6720 = vpow.pop %v6719
        %v6721 = vadd.f32 %v6706, 1.0
        %v6722 = vadd.f32 %v6708, 1.0
        %v6723 = vadd.f32 %v6710, 1.0
        %v6724 = vadd.f32 %v6712, 1.0
        %v6725 = vadd.f32 %v6714, 1.0
        %v6726 = vadd.f32 %v6716, 1.0
        %v6727 = vadd.f32 %v6718, 1.0
        %v6728 = vadd.f32 %v6720, 1.0
        %v6729 = vrcp.pop %v6721
        %v6730 = vrcp.pop %v6722
        %v6731 = vrcp.pop %v6723
        %v6732 = vrcp.pop %v6724
        %v6733 = vrcp.pop %v6725
        %v6734 = vrcp.pop %v6726
        %v6735 = vrcp.pop %v6727
        %v6736 = vrcp.pop %v6728
        %v6737 = vadd.f32 %v6729, %v6730
        %v6738 = vadd.f32 %v6731, %v6732
        %v6739 = vadd.f32 %v6733, %v6734
        %v6740 = vadd.f32 %v6735, %v6736
        %6741 = vst [vmem:[#allocation4] sm:$0xff] %v6737
        %6742 = vst [vmem:[#allocation4 + $0x8] sm:$0xff] %v6738
        %6743 = vst [vmem:[#allocation4 + $0x10] sm:$0xff] %v6739
        %6744 = vst [vmem:[#allocation4 + $0x18] sm:$0xff] %v6740
        %v6745 = vld [vmem:[#allocation4] sm:$0x1]
        %v6746 = vpack.c.bf16 %v6745, %v6745
        %vm6747 = vcmask 1040384
        %vm6748 = vsmask.f32 256
        %vm6749 = vmand %vm6747, %vm6748
        %v6750 = vld [vmem:[#allocation5] sm:$0x1]
        %v6751 = vsel %vm6749, %v6746, %v6750
        %6752 = vst [vmem:[#allocation5] sm:$0x1] %v6751
        %v6753 = vld [vmem:[#allocation4 + $0x1] sm:$0x1]
        %v6754 = vpack.c.bf16 %v6753, %v6753
        %v6755 = vld [vmem:[#allocation5 + $0x1] sm:$0x1]
        %v6756 = vsel %vm6749, %v6754, %v6755
        %6757 = vst [vmem:[#allocation5 + $0x1] sm:$0x1] %v6756
        %v6758 = vld [vmem:[#allocation4 + $0x2] sm:$0x1]
        %v6759 = vpack.c.bf16 %v6758, %v6758
        %v6760 = vld [vmem:[#allocation5 + $0x2] sm:$0x1]
        %v6761 = vsel %vm6749, %v6759, %v6760
        %6762 = vst [vmem:[#allocation5 + $0x2] sm:$0x1] %v6761
        %v6763 = vld [vmem:[#allocation4 + $0x3] sm:$0x1]
        %v6764 = vpack.c.bf16 %v6763, %v6763
        %v6765 = vld [vmem:[#allocation5 + $0x3] sm:$0x1]
        %v6766 = vsel %vm6749, %v6764, %v6765
        %6767 = vst [vmem:[#allocation5 + $0x3] sm:$0x1] %v6766
        %v6768 = vld [vmem:[#allocation4 + $0x4] sm:$0x1]
        %v6769 = vpack.c.bf16 %v6768, %v6768
        %v6770 = vld [vmem:[#allocation5 + $0x4] sm:$0x1]
        %v6771 = vsel %vm6749, %v6769, %v6770
        %6772 = vst [vmem:[#allocation5 + $0x4] sm:$0x1] %v6771
        %v6773 = vld [vmem:[#allocation4 + $0x5] sm:$0x1]
        %v6774 = vpack.c.bf16 %v6773, %v6773
        %v6775 = vld [vmem:[#allocation5 + $0x5] sm:$0x1]
        %v6776 = vsel %vm6749, %v6774, %v6775
        %6777 = vst [vmem:[#allocation5 + $0x5] sm:$0x1] %v6776
        %v6778 = vld [vmem:[#allocation4 + $0x6] sm:$0x1]
        %v6779 = vpack.c.bf16 %v6778, %v6778
        %v6780 = vld [vmem:[#allocation5 + $0x6] sm:$0x1]
        %v6781 = vsel %vm6749, %v6779, %v6780
        %6782 = vst [vmem:[#allocation5 + $0x6] sm:$0x1] %v6781
        %v6783 = vld [vmem:[#allocation4 + $0x7] sm:$0x1]
        %v6784 = vpack.c.bf16 %v6783, %v6783
        %v6785 = vld [vmem:[#allocation5 + $0x7] sm:$0x1]
        %v6786 = vsel %vm6749, %v6784, %v6785
        %6787 = vst [vmem:[#allocation5 + $0x7] sm:$0x1] %v6786
        %s6788 = scalar_lea.vmem [#allocation4], 8
        %v6789 = vld [vmem:[%s6788] sm:$0x1]
        %v6790 = vpack.c.bf16 %v6789, %v6789
        %v6791 = vld [vmem:[#allocation5 + $0x8] sm:$0x1]
        %v6792 = vsel %vm6749, %v6790, %v6791
        %6793 = vst [vmem:[#allocation5 + $0x8] sm:$0x1] %v6792
        %v6794 = vld [vmem:[%s6788 + $0x1] sm:$0x1]
        %v6795 = vpack.c.bf16 %v6794, %v6794
        %v6796 = vld [vmem:[#allocation5 + $0x9] sm:$0x1]
        %v6797 = vsel %vm6749, %v6795, %v6796
        %6798 = vst [vmem:[#allocation5 + $0x9] sm:$0x1] %v6797
        %v6799 = vld [vmem:[%s6788 + $0x2] sm:$0x1]
        %v6800 = vpack.c.bf16 %v6799, %v6799
        %v6801 = vld [vmem:[#allocation5 + $0xa] sm:$0x1]
        %v6802 = vsel %vm6749, %v6800, %v6801
        %6803 = vst [vmem:[#allocation5 + $0xa] sm:$0x1] %v6802
        %v6804 = vld [vmem:[%s6788 + $0x3] sm:$0x1]
        %v6805 = vpack.c.bf16 %v6804, %v6804
        %v6806 = vld [vmem:[#allocation5 + $0xb] sm:$0x1]
        %v6807 = vsel %vm6749, %v6805, %v6806
        %6808 = vst [vmem:[#allocation5 + $0xb] sm:$0x1] %v6807
        %v6809 = vld [vmem:[%s6788 + $0x4] sm:$0x1]
        %v6810 = vpack.c.bf16 %v6809, %v6809
        %v6811 = vld [vmem:[#allocation5 + $0xc] sm:$0x1]
        %v6812 = vsel %vm6749, %v6810, %v6811
        %6813 = vst [vmem:[#allocation5 + $0xc] sm:$0x1] %v6812
        %v6814 = vld [vmem:[%s6788 + $0x5] sm:$0x1]
        %v6815 = vpack.c.bf16 %v6814, %v6814
        %v6816 = vld [vmem:[#allocation5 + $0xd] sm:$0x1]
        %v6817 = vsel %vm6749, %v6815, %v6816
        %6818 = vst [vmem:[#allocation5 + $0xd] sm:$0x1] %v6817
        %v6819 = vld [vmem:[%s6788 + $0x6] sm:$0x1]
        %v6820 = vpack.c.bf16 %v6819, %v6819
        %v6821 = vld [vmem:[#allocation5 + $0xe] sm:$0x1]
        %v6822 = vsel %vm6749, %v6820, %v6821
        %6823 = vst [vmem:[#allocation5 + $0xe] sm:$0x1] %v6822
        %v6824 = vld [vmem:[%s6788 + $0x7] sm:$0x1]
        %v6825 = vpack.c.bf16 %v6824, %v6824
        %v6826 = vld [vmem:[#allocation5 + $0xf] sm:$0x1]
        %v6827 = vsel %vm6749, %v6825, %v6826
        %6828 = vst [vmem:[#allocation5 + $0xf] sm:$0x1] %v6827
        %s6829 = scalar_lea.vmem [#allocation4], 16
        %v6830 = vld [vmem:[%s6829] sm:$0x1]
        %v6831 = vpack.c.bf16 %v6830, %v6830
        %v6832 = vld [vmem:[#allocation5 + $0x10] sm:$0x1]
        %v6833 = vsel %vm6749, %v6831, %v6832
        %6834 = vst [vmem:[#allocation5 + $0x10] sm:$0x1] %v6833
        %v6835 = vld [vmem:[%s6829 + $0x1] sm:$0x1]
        %v6836 = vpack.c.bf16 %v6835, %v6835
        %v6837 = vld [vmem:[#allocation5 + $0x11] sm:$0x1]
        %v6838 = vsel %vm6749, %v6836, %v6837
        %6839 = vst [vmem:[#allocation5 + $0x11] sm:$0x1] %v6838
        %v6840 = vld [vmem:[%s6829 + $0x2] sm:$0x1]
        %v6841 = vpack.c.bf16 %v6840, %v6840
        %v6842 = vld [vmem:[#allocation5 + $0x12] sm:$0x1]
        %v6843 = vsel %vm6749, %v6841, %v6842
        %6844 = vst [vmem:[#allocation5 + $0x12] sm:$0x1] %v6843
        %v6845 = vld [vmem:[%s6829 + $0x3] sm:$0x1]
        %v6846 = vpack.c.bf16 %v6845, %v6845
        %v6847 = vld [vmem:[#allocation5 + $0x13] sm:$0x1]
        %v6848 = vsel %vm6749, %v6846, %v6847
        %6849 = vst [vmem:[#allocation5 + $0x13] sm:$0x1] %v6848
        %v6850 = vld [vmem:[%s6829 + $0x4] sm:$0x1]
        %v6851 = vpack.c.bf16 %v6850, %v6850
        %v6852 = vld [vmem:[#allocation5 + $0x14] sm:$0x1]
        %v6853 = vsel %vm6749, %v6851, %v6852
        %6854 = vst [vmem:[#allocation5 + $0x14] sm:$0x1] %v6853
        %v6855 = vld [vmem:[%s6829 + $0x5] sm:$0x1]
        %v6856 = vpack.c.bf16 %v6855, %v6855
        %v6857 = vld [vmem:[#allocation5 + $0x15] sm:$0x1]
        %v6858 = vsel %vm6749, %v6856, %v6857
        %6859 = vst [vmem:[#allocation5 + $0x15] sm:$0x1] %v6858
        %v6860 = vld [vmem:[%s6829 + $0x6] sm:$0x1]
        %v6861 = vpack.c.bf16 %v6860, %v6860
        %v6862 = vld [vmem:[#allocation5 + $0x16] sm:$0x1]
        %v6863 = vsel %vm6749, %v6861, %v6862
        %6864 = vst [vmem:[#allocation5 + $0x16] sm:$0x1] %v6863
        %v6865 = vld [vmem:[%s6829 + $0x7] sm:$0x1]
        %v6866 = vpack.c.bf16 %v6865, %v6865
        %v6867 = vld [vmem:[#allocation5 + $0x17] sm:$0x1]
        %v6868 = vsel %vm6749, %v6866, %v6867
        %6869 = vst [vmem:[#allocation5 + $0x17] sm:$0x1] %v6868
        %s6870 = scalar_lea.vmem [#allocation4], 24
        %v6871 = vld [vmem:[%s6870] sm:$0x1]
        %v6872 = vpack.c.bf16 %v6871, %v6871
        %v6873 = vld [vmem:[#allocation5 + $0x18] sm:$0x1]
        %v6874 = vsel %vm6749, %v6872, %v6873
        %6875 = vst [vmem:[#allocation5 + $0x18] sm:$0x1] %v6874
        %v6876 = vld [vmem:[%s6870 + $0x1] sm:$0x1]
        %v6877 = vpack.c.bf16 %v6876, %v6876
        %v6878 = vld [vmem:[#allocation5 + $0x19] sm:$0x1]
        %v6879 = vsel %vm6749, %v6877, %v6878
        %6880 = vst [vmem:[#allocation5 + $0x19] sm:$0x1] %v6879
        %v6881 = vld [vmem:[%s6870 + $0x2] sm:$0x1]
        %v6882 = vpack.c.bf16 %v6881, %v6881
        %v6883 = vld [vmem:[#allocation5 + $0x1a] sm:$0x1]
        %v6884 = vsel %vm6749, %v6882, %v6883
        %6885 = vst [vmem:[#allocation5 + $0x1a] sm:$0x1] %v6884
        %v6886 = vld [vmem:[%s6870 + $0x3] sm:$0x1]
        %v6887 = vpack.c.bf16 %v6886, %v6886
        %v6888 = vld [vmem:[#allocation5 + $0x1b] sm:$0x1]
        %v6889 = vsel %vm6749, %v6887, %v6888
        %6890 = vst [vmem:[#allocation5 + $0x1b] sm:$0x1] %v6889
        %v6891 = vld [vmem:[%s6870 + $0x4] sm:$0x1]
        %v6892 = vpack.c.bf16 %v6891, %v6891
        %v6893 = vld [vmem:[#allocation5 + $0x1c] sm:$0x1]
        %v6894 = vsel %vm6749, %v6892, %v6893
        %6895 = vst [vmem:[#allocation5 + $0x1c] sm:$0x1] %v6894
        %v6896 = vld [vmem:[%s6870 + $0x5] sm:$0x1]
        %v6897 = vpack.c.bf16 %v6896, %v6896
        %v6898 = vld [vmem:[#allocation5 + $0x1d] sm:$0x1]
        %v6899 = vsel %vm6749, %v6897, %v6898
        %6900 = vst [vmem:[#allocation5 + $0x1d] sm:$0x1] %v6899
        %v6901 = vld [vmem:[%s6870 + $0x6] sm:$0x1]
        %v6902 = vpack.c.bf16 %v6901, %v6901
        %v6903 = vld [vmem:[#allocation5 + $0x1e] sm:$0x1]
        %v6904 = vsel %vm6749, %v6902, %v6903
        %6905 = vst [vmem:[#allocation5 + $0x1e] sm:$0x1] %v6904
        %v6906 = vld [vmem:[%s6870 + $0x7] sm:$0x1]
        %v6907 = vpack.c.bf16 %v6906, %v6906
        %v6908 = vld [vmem:[#allocation5 + $0x1f] sm:$0x1]
        %v6909 = vsel %vm6749, %v6907, %v6908
        %6910 = vst [vmem:[#allocation5 + $0x1f] sm:$0x1] %v6909
        %v6911 = vld [vmem:[#allocation5] sm:$0xff]
        %v6912 = vld [vmem:[#allocation5 + $0x8] sm:$0xff]
        %v6913 = vld [vmem:[#allocation5 + $0x10] sm:$0xff]
        %v6914 = vld [vmem:[#allocation5 + $0x18] sm:$0xff]
        %v6915 = vld [vmem:[%s5] sm:$0xf]
        %v6916 = vld [vmem:[%s5 + $0x4] sm:$0xf]
        %v6917 = vld [vmem:[%s5 + $0x8] sm:$0xf]
        %v6918 = vld [vmem:[%s5 + $0xc] sm:$0xf]
        %v6919 = vld [vmem:[%s5 + $0x10] sm:$0xf]
        %v6920 = vld [vmem:[%s5 + $0x14] sm:$0xf]
        %v6921 = vld [vmem:[%s5 + $0x18] sm:$0xf]
        %v6922 = vld [vmem:[%s5 + $0x1c] sm:$0xf]
        %v6923 = vld [vmem:[%s5 + $0x20] sm:$0xf]
        %v6924 = vld [vmem:[%s5 + $0x24] sm:$0xf]
        %v6925 = vld [vmem:[%s5 + $0x28] sm:$0xf]
        %v6926 = vld [vmem:[%s5 + $0x2c] sm:$0xf]
        %v6927 = vld [vmem:[%s5 + $0x30] sm:$0xf]
        %v6928 = vld [vmem:[%s5 + $0x34] sm:$0xf]
        %v6929 = vld [vmem:[%s5 + $0x38] sm:$0xf]
        %v6930 = vld [vmem:[%s5 + $0x3c] sm:$0xf]
        %v6931 = vld [vmem:[%s5 + $0x40] sm:$0xf]
        %v6932 = vld [vmem:[%s5 + $0x44] sm:$0xf]
        %v6933 = vld [vmem:[%s5 + $0x48] sm:$0xf]
        %v6934 = vld [vmem:[%s5 + $0x4c] sm:$0xf]
        %v6935 = vld [vmem:[%s5 + $0x50] sm:$0xf]
        %v6936 = vld [vmem:[%s5 + $0x54] sm:$0xf]
        %v6937 = vld [vmem:[%s5 + $0x58] sm:$0xf]
        %v6938 = vld [vmem:[%s5 + $0x5c] sm:$0xf]
        %v6939 = vld [vmem:[%s5 + $0x60] sm:$0xf]
        %v6940 = vld [vmem:[%s5 + $0x64] sm:$0xf]
        %v6941 = vld [vmem:[%s5 + $0x68] sm:$0xf]
        %v6942 = vld [vmem:[%s5 + $0x6c] sm:$0xf]
        %v6943 = vld [vmem:[%s5 + $0x70] sm:$0xf]
        %v6944 = vld [vmem:[%s5 + $0x74] sm:$0xf]
        %v6945 = vld [vmem:[%s5 + $0x78] sm:$0xf]
        %v6946 = vld [vmem:[%s5 + $0x7c] sm:$0xf]
        %v6947 = vld [vmem:[%s5 + $0x80] sm:$0xf]
        %v6948 = vld [vmem:[%s5 + $0x84] sm:$0xf]
        %v6949 = vld [vmem:[%s5 + $0x88] sm:$0xf]
        %v6950 = vld [vmem:[%s5 + $0x8c] sm:$0xf]
        %v6951 = vld [vmem:[%s5 + $0x90] sm:$0xf]
        %v6952 = vld [vmem:[%s5 + $0x94] sm:$0xf]
        %v6953 = vld [vmem:[%s5 + $0x98] sm:$0xf]
        %v6954 = vld [vmem:[%s5 + $0x9c] sm:$0xf]
        %v6955 = vld [vmem:[%s5 + $0xa0] sm:$0xf]
        %v6956 = vld [vmem:[%s5 + $0xa4] sm:$0xf]
        %v6957 = vld [vmem:[%s5 + $0xa8] sm:$0xf]
        %v6958 = vld [vmem:[%s5 + $0xac] sm:$0xf]
        %v6959 = vld [vmem:[%s5 + $0xb0] sm:$0xf]
        %v6960 = vld [vmem:[%s5 + $0xb4] sm:$0xf]
        %v6961 = vld [vmem:[%s5 + $0xb8] sm:$0xf]
        %v6962 = vld [vmem:[%s5 + $0xbc] sm:$0xf]
        %v6963 = vld [vmem:[%s5 + $0xc0] sm:$0xf]
        %v6964 = vld [vmem:[%s5 + $0xc4] sm:$0xf]
        %v6965 = vld [vmem:[%s5 + $0xc8] sm:$0xf]
        %v6966 = vld [vmem:[%s5 + $0xcc] sm:$0xf]
        %v6967 = vld [vmem:[%s5 + $0xd0] sm:$0xf]
        %v6968 = vld [vmem:[%s5 + $0xd4] sm:$0xf]
        %v6969 = vld [vmem:[%s5 + $0xd8] sm:$0xf]
        %v6970 = vld [vmem:[%s5 + $0xdc] sm:$0xf]
        %v6971 = vld [vmem:[%s5 + $0xe0] sm:$0xf]
        %v6972 = vld [vmem:[%s5 + $0xe4] sm:$0xf]
        %v6973 = vld [vmem:[%s5 + $0xe8] sm:$0xf]
        %v6974 = vld [vmem:[%s5 + $0xec] sm:$0xf]
        %v6975 = vld [vmem:[%s5 + $0xf0] sm:$0xf]
        %v6976 = vld [vmem:[%s5 + $0xf4] sm:$0xf]
        %v6977 = vld [vmem:[%s5 + $0xf8] sm:$0xf]
        %v6978 = vld [vmem:[%s5 + $0xfc] sm:$0xf]
        %v6979 = vld [vmem:[%s5 + $0x100] sm:$0xf]
        %v6980 = vld [vmem:[%s5 + $0x104] sm:$0xf]
        %v6981 = vld [vmem:[%s5 + $0x108] sm:$0xf]
        %v6982 = vld [vmem:[%s5 + $0x10c] sm:$0xf]
        %v6983 = vld [vmem:[%s5 + $0x110] sm:$0xf]
        %v6984 = vld [vmem:[%s5 + $0x114] sm:$0xf]
        %v6985 = vld [vmem:[%s5 + $0x118] sm:$0xf]
        %v6986 = vld [vmem:[%s5 + $0x11c] sm:$0xf]
        %v6987 = vld [vmem:[%s5 + $0x120] sm:$0xf]
        %v6988 = vld [vmem:[%s5 + $0x124] sm:$0xf]
        %v6989 = vld [vmem:[%s5 + $0x128] sm:$0xf]
        %v6990 = vld [vmem:[%s5 + $0x12c] sm:$0xf]
        %v6991 = vld [vmem:[%s5 + $0x130] sm:$0xf]
        %v6992 = vld [vmem:[%s5 + $0x134] sm:$0xf]
        %v6993 = vld [vmem:[%s5 + $0x138] sm:$0xf]
        %v6994 = vld [vmem:[%s5 + $0x13c] sm:$0xf]
        %v6995 = vld [vmem:[%s5 + $0x140] sm:$0xf]
        %v6996 = vld [vmem:[%s5 + $0x144] sm:$0xf]
        %v6997 = vld [vmem:[%s5 + $0x148] sm:$0xf]
        %v6998 = vld [vmem:[%s5 + $0x14c] sm:$0xf]
        %v6999 = vld [vmem:[%s5 + $0x150] sm:$0xf]
        %v7000 = vld [vmem:[%s5 + $0x154] sm:$0xf]
        %v7001 = vld [vmem:[%s5 + $0x158] sm:$0xf]
        %v7002 = vld [vmem:[%s5 + $0x15c] sm:$0xf]
        %v7003 = vld [vmem:[%s5 + $0x160] sm:$0xf]
        %v7004 = vld [vmem:[%s5 + $0x164] sm:$0xf]
        %v7005 = vld [vmem:[%s5 + $0x168] sm:$0xf]
        %v7006 = vld [vmem:[%s5 + $0x16c] sm:$0xf]
        %v7007 = vld [vmem:[%s5 + $0x170] sm:$0xf]
        %v7008 = vld [vmem:[%s5 + $0x174] sm:$0xf]
        %v7009 = vld [vmem:[%s5 + $0x178] sm:$0xf]
        %v7010 = vld [vmem:[%s5 + $0x17c] sm:$0xf]
        %v7011 = vld [vmem:[%s5 + $0x180] sm:$0xf]
        %v7012 = vld [vmem:[%s5 + $0x184] sm:$0xf]
        %v7013 = vld [vmem:[%s5 + $0x188] sm:$0xf]
        %v7014 = vld [vmem:[%s5 + $0x18c] sm:$0xf]
        %v7015 = vld [vmem:[%s5 + $0x190] sm:$0xf]
        %v7016 = vld [vmem:[%s5 + $0x194] sm:$0xf]
        %v7017 = vld [vmem:[%s5 + $0x198] sm:$0xf]
        %v7018 = vld [vmem:[%s5 + $0x19c] sm:$0xf]
        %v7019 = vld [vmem:[%s5 + $0x1a0] sm:$0xf]
        %v7020 = vld [vmem:[%s5 + $0x1a4] sm:$0xf]
        %v7021 = vld [vmem:[%s5 + $0x1a8] sm:$0xf]
        %v7022 = vld [vmem:[%s5 + $0x1ac] sm:$0xf]
        %v7023 = vld [vmem:[%s5 + $0x1b0] sm:$0xf]
        %v7024 = vld [vmem:[%s5 + $0x1b4] sm:$0xf]
        %v7025 = vld [vmem:[%s5 + $0x1b8] sm:$0xf]
        %v7026 = vld [vmem:[%s5 + $0x1bc] sm:$0xf]
        %v7027 = vld [vmem:[%s5 + $0x1c0] sm:$0xf]
        %v7028 = vld [vmem:[%s5 + $0x1c4] sm:$0xf]
        %v7029 = vld [vmem:[%s5 + $0x1c8] sm:$0xf]
        %v7030 = vld [vmem:[%s5 + $0x1cc] sm:$0xf]
        %v7031 = vld [vmem:[%s5 + $0x1d0] sm:$0xf]
        %v7032 = vld [vmem:[%s5 + $0x1d4] sm:$0xf]
        %v7033 = vld [vmem:[%s5 + $0x1d8] sm:$0xf]
        %v7034 = vld [vmem:[%s5 + $0x1dc] sm:$0xf]
        %v7035 = vld [vmem:[%s5 + $0x1e0] sm:$0xf]
        %v7036 = vld [vmem:[%s5 + $0x1e4] sm:$0xf]
        %v7037 = vld [vmem:[%s5 + $0x1e8] sm:$0xf]
        %v7038 = vld [vmem:[%s5 + $0x1ec] sm:$0xf]
        %v7039 = vld [vmem:[%s5 + $0x1f0] sm:$0xf]
        %v7040 = vld [vmem:[%s5 + $0x1f4] sm:$0xf]
        %v7041 = vld [vmem:[%s5 + $0x1f8] sm:$0xf]
        %v7042 = vld [vmem:[%s5 + $0x1fc] sm:$0xf]
        %v7043 = vld [vmem:[%s5 + $0x200] sm:$0xf]
        %v7044 = vld [vmem:[%s5 + $0x204] sm:$0xf]
        %v7045 = vld [vmem:[%s5 + $0x208] sm:$0xf]
        %v7046 = vld [vmem:[%s5 + $0x20c] sm:$0xf]
        %v7047 = vld [vmem:[%s5 + $0x210] sm:$0xf]
        %v7048 = vld [vmem:[%s5 + $0x214] sm:$0xf]
        %v7049 = vld [vmem:[%s5 + $0x218] sm:$0xf]
        %v7050 = vld [vmem:[%s5 + $0x21c] sm:$0xf]
        %v7051 = vld [vmem:[%s5 + $0x220] sm:$0xf]
        %v7052 = vld [vmem:[%s5 + $0x224] sm:$0xf]
        %v7053 = vld [vmem:[%s5 + $0x228] sm:$0xf]
        %v7054 = vld [vmem:[%s5 + $0x22c] sm:$0xf]
        %v7055 = vld [vmem:[%s5 + $0x230] sm:$0xf]
        %v7056 = vld [vmem:[%s5 + $0x234] sm:$0xf]
        %v7057 = vld [vmem:[%s5 + $0x238] sm:$0xf]
        %v7058 = vld [vmem:[%s5 + $0x23c] sm:$0xf]
        %v7059 = vld [vmem:[%s5 + $0x240] sm:$0xf]
        %v7060 = vld [vmem:[%s5 + $0x244] sm:$0xf]
        %v7061 = vld [vmem:[%s5 + $0x248] sm:$0xf]
        %v7062 = vld [vmem:[%s5 + $0x24c] sm:$0xf]
        %v7063 = vld [vmem:[%s5 + $0x250] sm:$0xf]
        %v7064 = vld [vmem:[%s5 + $0x254] sm:$0xf]
        %v7065 = vld [vmem:[%s5 + $0x258] sm:$0xf]
        %v7066 = vld [vmem:[%s5 + $0x25c] sm:$0xf]
        %v7067 = vld [vmem:[%s5 + $0x260] sm:$0xf]
        %v7068 = vld [vmem:[%s5 + $0x264] sm:$0xf]
        %v7069 = vld [vmem:[%s5 + $0x268] sm:$0xf]
        %v7070 = vld [vmem:[%s5 + $0x26c] sm:$0xf]
        %v7071 = vld [vmem:[%s5 + $0x270] sm:$0xf]
        %v7072 = vld [vmem:[%s5 + $0x274] sm:$0xf]
        %v7073 = vld [vmem:[%s5 + $0x278] sm:$0xf]
        %v7074 = vld [vmem:[%s5 + $0x27c] sm:$0xf]
        %v7075 = vld [vmem:[%s5 + $0x280] sm:$0xf]
        %v7076 = vld [vmem:[%s5 + $0x284] sm:$0xf]
        %v7077 = vld [vmem:[%s5 + $0x288] sm:$0xf]
        %v7078 = vld [vmem:[%s5 + $0x28c] sm:$0xf]
        %v7079 = vld [vmem:[%s5 + $0x290] sm:$0xf]
        %v7080 = vld [vmem:[%s5 + $0x294] sm:$0xf]
        %v7081 = vld [vmem:[%s5 + $0x298] sm:$0xf]
        %v7082 = vld [vmem:[%s5 + $0x29c] sm:$0xf]
        %v7083 = vld [vmem:[%s5 + $0x2a0] sm:$0xf]
        %v7084 = vld [vmem:[%s5 + $0x2a4] sm:$0xf]
        %v7085 = vld [vmem:[%s5 + $0x2a8] sm:$0xf]
        %v7086 = vld [vmem:[%s5 + $0x2ac] sm:$0xf]
        %v7087 = vld [vmem:[%s5 + $0x2b0] sm:$0xf]
        %v7088 = vld [vmem:[%s5 + $0x2b4] sm:$0xf]
        %v7089 = vld [vmem:[%s5 + $0x2b8] sm:$0xf]
        %v7090 = vld [vmem:[%s5 + $0x2bc] sm:$0xf]
        %v7091 = vld [vmem:[%s5 + $0x2c0] sm:$0xf]
        %v7092 = vld [vmem:[%s5 + $0x2c4] sm:$0xf]
        %v7093 = vld [vmem:[%s5 + $0x2c8] sm:$0xf]
        %v7094 = vld [vmem:[%s5 + $0x2cc] sm:$0xf]
        %v7095 = vld [vmem:[%s5 + $0x2d0] sm:$0xf]
        %v7096 = vld [vmem:[%s5 + $0x2d4] sm:$0xf]
        %v7097 = vld [vmem:[%s5 + $0x2d8] sm:$0xf]
        %v7098 = vld [vmem:[%s5 + $0x2dc] sm:$0xf]
        %v7099 = vld [vmem:[%s5 + $0x2e0] sm:$0xf]
        %v7100 = vld [vmem:[%s5 + $0x2e4] sm:$0xf]
        %v7101 = vld [vmem:[%s5 + $0x2e8] sm:$0xf]
        %v7102 = vld [vmem:[%s5 + $0x2ec] sm:$0xf]
        %v7103 = vld [vmem:[%s5 + $0x2f0] sm:$0xf]
        %v7104 = vld [vmem:[%s5 + $0x2f4] sm:$0xf]
        %v7105 = vld [vmem:[%s5 + $0x2f8] sm:$0xf]
        %v7106 = vld [vmem:[%s5 + $0x2fc] sm:$0xf]
        %v7107 = vld [vmem:[%s5 + $0x300] sm:$0xf]
        %v7108 = vld [vmem:[%s5 + $0x304] sm:$0xf]
        %v7109 = vld [vmem:[%s5 + $0x308] sm:$0xf]
        %v7110 = vld [vmem:[%s5 + $0x30c] sm:$0xf]
        %v7111 = vld [vmem:[%s5 + $0x310] sm:$0xf]
        %v7112 = vld [vmem:[%s5 + $0x314] sm:$0xf]
        %v7113 = vld [vmem:[%s5 + $0x318] sm:$0xf]
        %v7114 = vld [vmem:[%s5 + $0x31c] sm:$0xf]
        %v7115 = vld [vmem:[%s5 + $0x320] sm:$0xf]
        %v7116 = vld [vmem:[%s5 + $0x324] sm:$0xf]
        %v7117 = vld [vmem:[%s5 + $0x328] sm:$0xf]
        %v7118 = vld [vmem:[%s5 + $0x32c] sm:$0xf]
        %v7119 = vld [vmem:[%s5 + $0x330] sm:$0xf]
        %v7120 = vld [vmem:[%s5 + $0x334] sm:$0xf]
        %v7121 = vld [vmem:[%s5 + $0x338] sm:$0xf]
        %v7122 = vld [vmem:[%s5 + $0x33c] sm:$0xf]
        %v7123 = vld [vmem:[%s5 + $0x340] sm:$0xf]
        %v7124 = vld [vmem:[%s5 + $0x344] sm:$0xf]
        %v7125 = vld [vmem:[%s5 + $0x348] sm:$0xf]
        %v7126 = vld [vmem:[%s5 + $0x34c] sm:$0xf]
        %v7127 = vld [vmem:[%s5 + $0x350] sm:$0xf]
        %v7128 = vld [vmem:[%s5 + $0x354] sm:$0xf]
        %v7129 = vld [vmem:[%s5 + $0x358] sm:$0xf]
        %v7130 = vld [vmem:[%s5 + $0x35c] sm:$0xf]
        %v7131 = vld [vmem:[%s5 + $0x360] sm:$0xf]
        %v7132 = vld [vmem:[%s5 + $0x364] sm:$0xf]
        %v7133 = vld [vmem:[%s5 + $0x368] sm:$0xf]
        %v7134 = vld [vmem:[%s5 + $0x36c] sm:$0xf]
        %v7135 = vld [vmem:[%s5 + $0x370] sm:$0xf]
        %v7136 = vld [vmem:[%s5 + $0x374] sm:$0xf]
        %v7137 = vld [vmem:[%s5 + $0x378] sm:$0xf]
        %v7138 = vld [vmem:[%s5 + $0x37c] sm:$0xf]
        %v7139 = vld [vmem:[%s5 + $0x380] sm:$0xf]
        %v7140 = vld [vmem:[%s5 + $0x384] sm:$0xf]
        %v7141 = vld [vmem:[%s5 + $0x388] sm:$0xf]
        %v7142 = vld [vmem:[%s5 + $0x38c] sm:$0xf]
        %v7143 = vld [vmem:[%s5 + $0x390] sm:$0xf]
        %v7144 = vld [vmem:[%s5 + $0x394] sm:$0xf]
        %v7145 = vld [vmem:[%s5 + $0x398] sm:$0xf]
        %v7146 = vld [vmem:[%s5 + $0x39c] sm:$0xf]
        %v7147 = vld [vmem:[%s5 + $0x3a0] sm:$0xf]
        %v7148 = vld [vmem:[%s5 + $0x3a4] sm:$0xf]
        %v7149 = vld [vmem:[%s5 + $0x3a8] sm:$0xf]
        %v7150 = vld [vmem:[%s5 + $0x3ac] sm:$0xf]
        %v7151 = vld [vmem:[%s5 + $0x3b0] sm:$0xf]
        %v7152 = vld [vmem:[%s5 + $0x3b4] sm:$0xf]
        %v7153 = vld [vmem:[%s5 + $0x3b8] sm:$0xf]
        %v7154 = vld [vmem:[%s5 + $0x3bc] sm:$0xf]
        %v7155 = vld [vmem:[%s5 + $0x3c0] sm:$0xf]
        %v7156 = vld [vmem:[%s5 + $0x3c4] sm:$0xf]
        %v7157 = vld [vmem:[%s5 + $0x3c8] sm:$0xf]
        %v7158 = vld [vmem:[%s5 + $0x3cc] sm:$0xf]
        %v7159 = vld [vmem:[%s5 + $0x3d0] sm:$0xf]
        %v7160 = vld [vmem:[%s5 + $0x3d4] sm:$0xf]
        %v7161 = vld [vmem:[%s5 + $0x3d8] sm:$0xf]
        %v7162 = vld [vmem:[%s5 + $0x3dc] sm:$0xf]
        %v7163 = vld [vmem:[%s5 + $0x3e0] sm:$0xf]
        %v7164 = vld [vmem:[%s5 + $0x3e4] sm:$0xf]
        %v7165 = vld [vmem:[%s5 + $0x3e8] sm:$0xf]
        %v7166 = vld [vmem:[%s5 + $0x3ec] sm:$0xf]
        %v7167 = vld [vmem:[%s5 + $0x3f0] sm:$0xf]
        %v7168 = vld [vmem:[%s5 + $0x3f4] sm:$0xf]
        %v7169 = vld [vmem:[%s5 + $0x3f8] sm:$0xf]
        %v7170 = vld [vmem:[%s5 + $0x3fc] sm:$0xf]
        %v7171 = vld [vmem:[%s5 + $0x400] sm:$0xf]
        %v7172 = vld [vmem:[%s5 + $0x404] sm:$0xf]
        %v7173 = vld [vmem:[%s5 + $0x408] sm:$0xf]
        %v7174 = vld [vmem:[%s5 + $0x40c] sm:$0xf]
        %v7175 = vld [vmem:[%s5 + $0x410] sm:$0xf]
        %v7176 = vld [vmem:[%s5 + $0x414] sm:$0xf]
        %v7177 = vld [vmem:[%s5 + $0x418] sm:$0xf]
        %v7178 = vld [vmem:[%s5 + $0x41c] sm:$0xf]
        %v7179 = vld [vmem:[%s5 + $0x420] sm:$0xf]
        %v7180 = vld [vmem:[%s5 + $0x424] sm:$0xf]
        %v7181 = vld [vmem:[%s5 + $0x428] sm:$0xf]
        %v7182 = vld [vmem:[%s5 + $0x42c] sm:$0xf]
        %v7183 = vld [vmem:[%s5 + $0x430] sm:$0xf]
        %v7184 = vld [vmem:[%s5 + $0x434] sm:$0xf]
        %v7185 = vld [vmem:[%s5 + $0x438] sm:$0xf]
        %v7186 = vld [vmem:[%s5 + $0x43c] sm:$0xf]
        %v7187 = vld [vmem:[%s5 + $0x440] sm:$0xf]
        %v7188 = vld [vmem:[%s5 + $0x444] sm:$0xf]
        %v7189 = vld [vmem:[%s5 + $0x448] sm:$0xf]
        %v7190 = vld [vmem:[%s5 + $0x44c] sm:$0xf]
        %v7191 = vld [vmem:[%s5 + $0x450] sm:$0xf]
        %v7192 = vld [vmem:[%s5 + $0x454] sm:$0xf]
        %v7193 = vld [vmem:[%s5 + $0x458] sm:$0xf]
        %v7194 = vld [vmem:[%s5 + $0x45c] sm:$0xf]
        %v7195 = vld [vmem:[%s5 + $0x460] sm:$0xf]
        %v7196 = vld [vmem:[%s5 + $0x464] sm:$0xf]
        %v7197 = vld [vmem:[%s5 + $0x468] sm:$0xf]
        %v7198 = vld [vmem:[%s5 + $0x46c] sm:$0xf]
        %v7199 = vld [vmem:[%s5 + $0x470] sm:$0xf]
        %v7200 = vld [vmem:[%s5 + $0x474] sm:$0xf]
        %v7201 = vld [vmem:[%s5 + $0x478] sm:$0xf]
        %v7202 = vld [vmem:[%s5 + $0x47c] sm:$0xf]
        %v7203 = vld [vmem:[%s5 + $0x480] sm:$0xf]
        %v7204 = vld [vmem:[%s5 + $0x484] sm:$0xf]
        %v7205 = vld [vmem:[%s5 + $0x488] sm:$0xf]
        %v7206 = vld [vmem:[%s5 + $0x48c] sm:$0xf]
        %v7207 = vld [vmem:[%s5 + $0x490] sm:$0xf]
        %v7208 = vld [vmem:[%s5 + $0x494] sm:$0xf]
        %v7209 = vld [vmem:[%s5 + $0x498] sm:$0xf]
        %v7210 = vld [vmem:[%s5 + $0x49c] sm:$0xf]
        %v7211 = vld [vmem:[%s5 + $0x4a0] sm:$0xf]
        %v7212 = vld [vmem:[%s5 + $0x4a4] sm:$0xf]
        %v7213 = vld [vmem:[%s5 + $0x4a8] sm:$0xf]
        %v7214 = vld [vmem:[%s5 + $0x4ac] sm:$0xf]
        %v7215 = vld [vmem:[%s5 + $0x4b0] sm:$0xf]
        %v7216 = vld [vmem:[%s5 + $0x4b4] sm:$0xf]
        %v7217 = vld [vmem:[%s5 + $0x4b8] sm:$0xf]
        %v7218 = vld [vmem:[%s5 + $0x4bc] sm:$0xf]
        %v7219 = vld [vmem:[%s5 + $0x4c0] sm:$0xf]
        %v7220 = vld [vmem:[%s5 + $0x4c4] sm:$0xf]
        %v7221 = vld [vmem:[%s5 + $0x4c8] sm:$0xf]
        %v7222 = vld [vmem:[%s5 + $0x4cc] sm:$0xf]
        %v7223 = vld [vmem:[%s5 + $0x4d0] sm:$0xf]
        %v7224 = vld [vmem:[%s5 + $0x4d4] sm:$0xf]
        %v7225 = vld [vmem:[%s5 + $0x4d8] sm:$0xf]
        %v7226 = vld [vmem:[%s5 + $0x4dc] sm:$0xf]
        %v7227 = vld [vmem:[%s5 + $0x4e0] sm:$0xf]
        %v7228 = vld [vmem:[%s5 + $0x4e4] sm:$0xf]
        %v7229 = vld [vmem:[%s5 + $0x4e8] sm:$0xf]
        %v7230 = vld [vmem:[%s5 + $0x4ec] sm:$0xf]
        %v7231 = vld [vmem:[%s5 + $0x4f0] sm:$0xf]
        %v7232 = vld [vmem:[%s5 + $0x4f4] sm:$0xf]
        %v7233 = vld [vmem:[%s5 + $0x4f8] sm:$0xf]
        %v7234 = vld [vmem:[%s5 + $0x4fc] sm:$0xf]
        %v7235 = vld [vmem:[%s5 + $0x500] sm:$0xf]
        %v7236 = vld [vmem:[%s5 + $0x504] sm:$0xf]
        %v7237 = vld [vmem:[%s5 + $0x508] sm:$0xf]
        %v7238 = vld [vmem:[%s5 + $0x50c] sm:$0xf]
        %v7239 = vld [vmem:[%s5 + $0x510] sm:$0xf]
        %v7240 = vld [vmem:[%s5 + $0x514] sm:$0xf]
        %v7241 = vld [vmem:[%s5 + $0x518] sm:$0xf]
        %v7242 = vld [vmem:[%s5 + $0x51c] sm:$0xf]
        %v7243 = vld [vmem:[%s5 + $0x520] sm:$0xf]
        %v7244 = vld [vmem:[%s5 + $0x524] sm:$0xf]
        %v7245 = vld [vmem:[%s5 + $0x528] sm:$0xf]
        %v7246 = vld [vmem:[%s5 + $0x52c] sm:$0xf]
        %v7247 = vld [vmem:[%s5 + $0x530] sm:$0xf]
        %v7248 = vld [vmem:[%s5 + $0x534] sm:$0xf]
        %v7249 = vld [vmem:[%s5 + $0x538] sm:$0xf]
        %v7250 = vld [vmem:[%s5 + $0x53c] sm:$0xf]
        %v7251 = vld [vmem:[%s5 + $0x540] sm:$0xf]
        %v7252 = vld [vmem:[%s5 + $0x544] sm:$0xf]
        %v7253 = vld [vmem:[%s5 + $0x548] sm:$0xf]
        %v7254 = vld [vmem:[%s5 + $0x54c] sm:$0xf]
        %v7255 = vld [vmem:[%s5 + $0x550] sm:$0xf]
        %v7256 = vld [vmem:[%s5 + $0x554] sm:$0xf]
        %v7257 = vld [vmem:[%s5 + $0x558] sm:$0xf]
        %v7258 = vld [vmem:[%s5 + $0x55c] sm:$0xf]
        %v7259 = vld [vmem:[%s5 + $0x560] sm:$0xf]
        %v7260 = vld [vmem:[%s5 + $0x564] sm:$0xf]
        %v7261 = vld [vmem:[%s5 + $0x568] sm:$0xf]
        %v7262 = vld [vmem:[%s5 + $0x56c] sm:$0xf]
        %v7263 = vld [vmem:[%s5 + $0x570] sm:$0xf]
        %v7264 = vld [vmem:[%s5 + $0x574] sm:$0xf]
        %v7265 = vld [vmem:[%s5 + $0x578] sm:$0xf]
        %v7266 = vld [vmem:[%s5 + $0x57c] sm:$0xf]
        %v7267 = vld [vmem:[%s5 + $0x580] sm:$0xf]
        %v7268 = vld [vmem:[%s5 + $0x584] sm:$0xf]
        %v7269 = vld [vmem:[%s5 + $0x588] sm:$0xf]
        %v7270 = vld [vmem:[%s5 + $0x58c] sm:$0xf]
        %v7271 = vld [vmem:[%s5 + $0x590] sm:$0xf]
        %v7272 = vld [vmem:[%s5 + $0x594] sm:$0xf]
        %v7273 = vld [vmem:[%s5 + $0x598] sm:$0xf]
        %v7274 = vld [vmem:[%s5 + $0x59c] sm:$0xf]
        %v7275 = vld [vmem:[%s5 + $0x5a0] sm:$0xf]
        %v7276 = vld [vmem:[%s5 + $0x5a4] sm:$0xf]
        %v7277 = vld [vmem:[%s5 + $0x5a8] sm:$0xf]
        %v7278 = vld [vmem:[%s5 + $0x5ac] sm:$0xf]
        %v7279 = vld [vmem:[%s5 + $0x5b0] sm:$0xf]
        %v7280 = vld [vmem:[%s5 + $0x5b4] sm:$0xf]
        %v7281 = vld [vmem:[%s5 + $0x5b8] sm:$0xf]
        %v7282 = vld [vmem:[%s5 + $0x5bc] sm:$0xf]
        %v7283 = vld [vmem:[%s5 + $0x5c0] sm:$0xf]
        %v7284 = vld [vmem:[%s5 + $0x5c4] sm:$0xf]
        %v7285 = vld [vmem:[%s5 + $0x5c8] sm:$0xf]
        %v7286 = vld [vmem:[%s5 + $0x5cc] sm:$0xf]
        %v7287 = vld [vmem:[%s5 + $0x5d0] sm:$0xf]
        %v7288 = vld [vmem:[%s5 + $0x5d4] sm:$0xf]
        %v7289 = vld [vmem:[%s5 + $0x5d8] sm:$0xf]
        %v7290 = vld [vmem:[%s5 + $0x5dc] sm:$0xf]
        %v7291 = vld [vmem:[%s5 + $0x5e0] sm:$0xf]
        %v7292 = vld [vmem:[%s5 + $0x5e4] sm:$0xf]
        %v7293 = vld [vmem:[%s5 + $0x5e8] sm:$0xf]
        %v7294 = vld [vmem:[%s5 + $0x5ec] sm:$0xf]
        %v7295 = vld [vmem:[%s5 + $0x5f0] sm:$0xf]
        %v7296 = vld [vmem:[%s5 + $0x5f4] sm:$0xf]
        %v7297 = vld [vmem:[%s5 + $0x5f8] sm:$0xf]
        %v7298 = vld [vmem:[%s5 + $0x5fc] sm:$0xf]
        %v7299 = vld [vmem:[%s5 + $0x600] sm:$0xf]
        %v7300 = vld [vmem:[%s5 + $0x604] sm:$0xf]
        %v7301 = vld [vmem:[%s5 + $0x608] sm:$0xf]
        %v7302 = vld [vmem:[%s5 + $0x60c] sm:$0xf]
        %v7303 = vld [vmem:[%s5 + $0x610] sm:$0xf]
        %v7304 = vld [vmem:[%s5 + $0x614] sm:$0xf]
        %v7305 = vld [vmem:[%s5 + $0x618] sm:$0xf]
        %v7306 = vld [vmem:[%s5 + $0x61c] sm:$0xf]
        %v7307 = vld [vmem:[%s5 + $0x620] sm:$0xf]
        %v7308 = vld [vmem:[%s5 + $0x624] sm:$0xf]
        %v7309 = vld [vmem:[%s5 + $0x628] sm:$0xf]
        %v7310 = vld [vmem:[%s5 + $0x62c] sm:$0xf]
        %v7311 = vld [vmem:[%s5 + $0x630] sm:$0xf]
        %v7312 = vld [vmem:[%s5 + $0x634] sm:$0xf]
        %v7313 = vld [vmem:[%s5 + $0x638] sm:$0xf]
        %v7314 = vld [vmem:[%s5 + $0x63c] sm:$0xf]
        %v7315 = vld [vmem:[%s5 + $0x640] sm:$0xf]
        %v7316 = vld [vmem:[%s5 + $0x644] sm:$0xf]
        %v7317 = vld [vmem:[%s5 + $0x648] sm:$0xf]
        %v7318 = vld [vmem:[%s5 + $0x64c] sm:$0xf]
        %v7319 = vld [vmem:[%s5 + $0x650] sm:$0xf]
        %v7320 = vld [vmem:[%s5 + $0x654] sm:$0xf]
        %v7321 = vld [vmem:[%s5 + $0x658] sm:$0xf]
        %v7322 = vld [vmem:[%s5 + $0x65c] sm:$0xf]
        %v7323 = vld [vmem:[%s5 + $0x660] sm:$0xf]
        %v7324 = vld [vmem:[%s5 + $0x664] sm:$0xf]
        %v7325 = vld [vmem:[%s5 + $0x668] sm:$0xf]
        %v7326 = vld [vmem:[%s5 + $0x66c] sm:$0xf]
        %v7327 = vld [vmem:[%s5 + $0x670] sm:$0xf]
        %v7328 = vld [vmem:[%s5 + $0x674] sm:$0xf]
        %v7329 = vld [vmem:[%s5 + $0x678] sm:$0xf]
        %v7330 = vld [vmem:[%s5 + $0x67c] sm:$0xf]
        %v7331 = vld [vmem:[%s5 + $0x680] sm:$0xf]
        %v7332 = vld [vmem:[%s5 + $0x684] sm:$0xf]
        %v7333 = vld [vmem:[%s5 + $0x688] sm:$0xf]
        %v7334 = vld [vmem:[%s5 + $0x68c] sm:$0xf]
        %v7335 = vld [vmem:[%s5 + $0x690] sm:$0xf]
        %v7336 = vld [vmem:[%s5 + $0x694] sm:$0xf]
        %v7337 = vld [vmem:[%s5 + $0x698] sm:$0xf]
        %v7338 = vld [vmem:[%s5 + $0x69c] sm:$0xf]
        %v7339 = vld [vmem:[%s5 + $0x6a0] sm:$0xf]
        %v7340 = vld [vmem:[%s5 + $0x6a4] sm:$0xf]
        %v7341 = vld [vmem:[%s5 + $0x6a8] sm:$0xf]
        %v7342 = vld [vmem:[%s5 + $0x6ac] sm:$0xf]
        %v7343 = vld [vmem:[%s5 + $0x6b0] sm:$0xf]
        %v7344 = vld [vmem:[%s5 + $0x6b4] sm:$0xf]
        %v7345 = vld [vmem:[%s5 + $0x6b8] sm:$0xf]
        %v7346 = vld [vmem:[%s5 + $0x6bc] sm:$0xf]
        %v7347 = vld [vmem:[%s5 + $0x6c0] sm:$0xf]
        %v7348 = vld [vmem:[%s5 + $0x6c4] sm:$0xf]
        %v7349 = vld [vmem:[%s5 + $0x6c8] sm:$0xf]
        %v7350 = vld [vmem:[%s5 + $0x6cc] sm:$0xf]
        %v7351 = vld [vmem:[%s5 + $0x6d0] sm:$0xf]
        %v7352 = vld [vmem:[%s5 + $0x6d4] sm:$0xf]
        %v7353 = vld [vmem:[%s5 + $0x6d8] sm:$0xf]
        %v7354 = vld [vmem:[%s5 + $0x6dc] sm:$0xf]
        %v7355 = vld [vmem:[%s5 + $0x6e0] sm:$0xf]
        %v7356 = vld [vmem:[%s5 + $0x6e4] sm:$0xf]
        %v7357 = vld [vmem:[%s5 + $0x6e8] sm:$0xf]
        %v7358 = vld [vmem:[%s5 + $0x6ec] sm:$0xf]
        %v7359 = vld [vmem:[%s5 + $0x6f0] sm:$0xf]
        %v7360 = vld [vmem:[%s5 + $0x6f4] sm:$0xf]
        %v7361 = vld [vmem:[%s5 + $0x6f8] sm:$0xf]
        %v7362 = vld [vmem:[%s5 + $0x6fc] sm:$0xf]
        %v7363 = vld [vmem:[%s5 + $0x700] sm:$0xf]
        %v7364 = vld [vmem:[%s5 + $0x704] sm:$0xf]
        %v7365 = vld [vmem:[%s5 + $0x708] sm:$0xf]
        %v7366 = vld [vmem:[%s5 + $0x70c] sm:$0xf]
        %v7367 = vld [vmem:[%s5 + $0x710] sm:$0xf]
        %v7368 = vld [vmem:[%s5 + $0x714] sm:$0xf]
        %v7369 = vld [vmem:[%s5 + $0x718] sm:$0xf]
        %v7370 = vld [vmem:[%s5 + $0x71c] sm:$0xf]
        %v7371 = vld [vmem:[%s5 + $0x720] sm:$0xf]
        %v7372 = vld [vmem:[%s5 + $0x724] sm:$0xf]
        %v7373 = vld [vmem:[%s5 + $0x728] sm:$0xf]
        %v7374 = vld [vmem:[%s5 + $0x72c] sm:$0xf]
        %v7375 = vld [vmem:[%s5 + $0x730] sm:$0xf]
        %v7376 = vld [vmem:[%s5 + $0x734] sm:$0xf]
        %v7377 = vld [vmem:[%s5 + $0x738] sm:$0xf]
        %v7378 = vld [vmem:[%s5 + $0x73c] sm:$0xf]
        %v7379 = vld [vmem:[%s5 + $0x740] sm:$0xf]
        %v7380 = vld [vmem:[%s5 + $0x744] sm:$0xf]
        %v7381 = vld [vmem:[%s5 + $0x748] sm:$0xf]
        %v7382 = vld [vmem:[%s5 + $0x74c] sm:$0xf]
        %v7383 = vld [vmem:[%s5 + $0x750] sm:$0xf]
        %v7384 = vld [vmem:[%s5 + $0x754] sm:$0xf]
        %v7385 = vld [vmem:[%s5 + $0x758] sm:$0xf]
        %v7386 = vld [vmem:[%s5 + $0x75c] sm:$0xf]
        %v7387 = vld [vmem:[%s5 + $0x760] sm:$0xf]
        %v7388 = vld [vmem:[%s5 + $0x764] sm:$0xf]
        %v7389 = vld [vmem:[%s5 + $0x768] sm:$0xf]
        %v7390 = vld [vmem:[%s5 + $0x76c] sm:$0xf]
        %v7391 = vld [vmem:[%s5 + $0x770] sm:$0xf]
        %v7392 = vld [vmem:[%s5 + $0x774] sm:$0xf]
        %v7393 = vld [vmem:[%s5 + $0x778] sm:$0xf]
        %v7394 = vld [vmem:[%s5 + $0x77c] sm:$0xf]
        %v7395 = vld [vmem:[%s5 + $0x780] sm:$0xf]
        %v7396 = vld [vmem:[%s5 + $0x784] sm:$0xf]
        %v7397 = vld [vmem:[%s5 + $0x788] sm:$0xf]
        %v7398 = vld [vmem:[%s5 + $0x78c] sm:$0xf]
        %v7399 = vld [vmem:[%s5 + $0x790] sm:$0xf]
        %v7400 = vld [vmem:[%s5 + $0x794] sm:$0xf]
        %v7401 = vld [vmem:[%s5 + $0x798] sm:$0xf]
        %v7402 = vld [vmem:[%s5 + $0x79c] sm:$0xf]
        %v7403 = vld [vmem:[%s5 + $0x7a0] sm:$0xf]
        %v7404 = vld [vmem:[%s5 + $0x7a4] sm:$0xf]
        %v7405 = vld [vmem:[%s5 + $0x7a8] sm:$0xf]
        %v7406 = vld [vmem:[%s5 + $0x7ac] sm:$0xf]
        %v7407 = vld [vmem:[%s5 + $0x7b0] sm:$0xf]
        %v7408 = vld [vmem:[%s5 + $0x7b4] sm:$0xf]
        %v7409 = vld [vmem:[%s5 + $0x7b8] sm:$0xf]
        %v7410 = vld [vmem:[%s5 + $0x7bc] sm:$0xf]
        %v7411 = vld [vmem:[%s5 + $0x7c0] sm:$0xf]
        %v7412 = vld [vmem:[%s5 + $0x7c4] sm:$0xf]
        %v7413 = vld [vmem:[%s5 + $0x7c8] sm:$0xf]
        %v7414 = vld [vmem:[%s5 + $0x7cc] sm:$0xf]
        %v7415 = vld [vmem:[%s5 + $0x7d0] sm:$0xf]
        %v7416 = vld [vmem:[%s5 + $0x7d4] sm:$0xf]
        %v7417 = vld [vmem:[%s5 + $0x7d8] sm:$0xf]
        %v7418 = vld [vmem:[%s5 + $0x7dc] sm:$0xf]
        %v7419 = vld [vmem:[%s5 + $0x7e0] sm:$0xf]
        %v7420 = vld [vmem:[%s5 + $0x7e4] sm:$0xf]
        %v7421 = vld [vmem:[%s5 + $0x7e8] sm:$0xf]
        %v7422 = vld [vmem:[%s5 + $0x7ec] sm:$0xf]
        %v7423 = vld [vmem:[%s5 + $0x7f0] sm:$0xf]
        %v7424 = vld [vmem:[%s5 + $0x7f4] sm:$0xf]
        %v7425 = vld [vmem:[%s5 + $0x7f8] sm:$0xf]
        %v7426 = vld [vmem:[%s5 + $0x7fc] sm:$0xf]
        %v7427 = vld [vmem:[%s6] sm:$0x1]
        %v7432 = vcombine.high %v6911, %v6911
        %v7434 = vunpack.c.l.s4 1966171168
        %v7435 = vunpack.c.0.s8 %v7434
        %v7436 = vlaneseq
        %v7437 = vshrl.u32 %v7436, 7
        %v7438 = vsub.s32 %v7435, %v7437
        %v7439 = vrot.slane %v6911, %v7438
        %v7441 = vunpack.c.l.s4 1966171168
        %v7442 = vunpack.c.0.s8 %v7441
        %v7443 = vlaneseq
        %v7444 = vshrl.u32 %v7443, 7
        %v7445 = vsub.s32 %v7442, %v7444
        %v7446 = vrot.slane %v7432, %v7445
        %v7447 = vcombine.high %v7439, %v7439
        %v7448 = vcombine.high %v7446, %v7446
        %v7450 = vunpack.c.l.s4 1966171168
        %v7451 = vunpack.c.0.s8 %v7450
        %v7452 = vlaneseq
        %v7453 = vshrl.u32 %v7452, 7
        %v7454 = vsub.s32 %v7451, %v7453
        %v7455 = vrot.slane %v7439, %v7454
        %v7457 = vunpack.c.l.s4 1966171168
        %v7458 = vunpack.c.0.s8 %v7457
        %v7459 = vlaneseq
        %v7460 = vshrl.u32 %v7459, 7
        %v7461 = vsub.s32 %v7458, %v7460
        %v7462 = vrot.slane %v7446, %v7461
        %v7464 = vunpack.c.l.s4 1966171168
        %v7465 = vunpack.c.0.s8 %v7464
        %v7466 = vlaneseq
        %v7467 = vshrl.u32 %v7466, 7
        %v7468 = vsub.s32 %v7465, %v7467
        %v7469 = vrot.slane %v7447, %v7468
        %v7471 = vunpack.c.l.s4 1966171168
        %v7472 = vunpack.c.0.s8 %v7471
        %v7473 = vlaneseq
        %v7474 = vshrl.u32 %v7473, 7
        %v7475 = vsub.s32 %v7472, %v7474
        %v7476 = vrot.slane %v7448, %v7475
        %v7477 = vcombine.high %v7455, %v7455
        %v7478 = vcombine.high %v7462, %v7462
        %v7479 = vcombine.high %v7469, %v7469
        %v7480 = vcombine.high %v7476, %v7476
        %v7481 = vcombine.high %v6912, %v6912
        %v7483 = vunpack.c.l.s4 1966171168
        %v7484 = vunpack.c.0.s8 %v7483
        %v7485 = vlaneseq
        %v7486 = vshrl.u32 %v7485, 7
        %v7487 = vsub.s32 %v7484, %v7486
        %v7488 = vrot.slane %v6912, %v7487
        %v7490 = vunpack.c.l.s4 1966171168
        %v7491 = vunpack.c.0.s8 %v7490
        %v7492 = vlaneseq
        %v7493 = vshrl.u32 %v7492, 7
        %v7494 = vsub.s32 %v7491, %v7493
        %v7495 = vrot.slane %v7481, %v7494
        %v7496 = vcombine.high %v7488, %v7488
        %v7497 = vcombine.high %v7495, %v7495
        %v7499 = vunpack.c.l.s4 1966171168
        %v7500 = vunpack.c.0.s8 %v7499
        %v7501 = vlaneseq
        %v7502 = vshrl.u32 %v7501, 7
        %v7503 = vsub.s32 %v7500, %v7502
        %v7504 = vrot.slane %v7488, %v7503
        %v7506 = vunpack.c.l.s4 1966171168
        %v7507 = vunpack.c.0.s8 %v7506
        %v7508 = vlaneseq
        %v7509 = vshrl.u32 %v7508, 7
        %v7510 = vsub.s32 %v7507, %v7509
        %v7511 = vrot.slane %v7495, %v7510
        %v7513 = vunpack.c.l.s4 1966171168
        %v7514 = vunpack.c.0.s8 %v7513
        %v7515 = vlaneseq
        %v7516 = vshrl.u32 %v7515, 7
        %v7517 = vsub.s32 %v7514, %v7516
        %v7518 = vrot.slane %v7496, %v7517
        %v7520 = vunpack.c.l.s4 1966171168
        %v7521 = vunpack.c.0.s8 %v7520
        %v7522 = vlaneseq
        %v7523 = vshrl.u32 %v7522, 7
        %v7524 = vsub.s32 %v7521, %v7523
        %v7525 = vrot.slane %v7497, %v7524
        %v7526 = vcombine.high %v7504, %v7504
        %v7527 = vcombine.high %v7511, %v7511
        %v7528 = vcombine.high %v7518, %v7518
        %v7529 = vcombine.high %v7525, %v7525
        %v7530 = vcombine.high %v6913, %v6913
        %v7532 = vunpack.c.l.s4 1966171168
        %v7533 = vunpack.c.0.s8 %v7532
        %v7534 = vlaneseq
        %v7535 = vshrl.u32 %v7534, 7
        %v7536 = vsub.s32 %v7533, %v7535
        %v7537 = vrot.slane %v6913, %v7536
        %v7539 = vunpack.c.l.s4 1966171168
        %v7540 = vunpack.c.0.s8 %v7539
        %v7541 = vlaneseq
        %v7542 = vshrl.u32 %v7541, 7
        %v7543 = vsub.s32 %v7540, %v7542
        %v7544 = vrot.slane %v7530, %v7543
        %v7545 = vcombine.high %v7537, %v7537
        %v7546 = vcombine.high %v7544, %v7544
        %v7548 = vunpack.c.l.s4 1966171168
        %v7549 = vunpack.c.0.s8 %v7548
        %v7550 = vlaneseq
        %v7551 = vshrl.u32 %v7550, 7
        %v7552 = vsub.s32 %v7549, %v7551
        %v7553 = vrot.slane %v7537, %v7552
        %v7555 = vunpack.c.l.s4 1966171168
        %v7556 = vunpack.c.0.s8 %v7555
        %v7557 = vlaneseq
        %v7558 = vshrl.u32 %v7557, 7
        %v7559 = vsub.s32 %v7556, %v7558
        %v7560 = vrot.slane %v7544, %v7559
        %v7562 = vunpack.c.l.s4 1966171168
        %v7563 = vunpack.c.0.s8 %v7562
        %v7564 = vlaneseq
        %v7565 = vshrl.u32 %v7564, 7
        %v7566 = vsub.s32 %v7563, %v7565
        %v7567 = vrot.slane %v7545, %v7566
        %v7569 = vunpack.c.l.s4 1966171168
        %v7570 = vunpack.c.0.s8 %v7569
        %v7571 = vlaneseq
        %v7572 = vshrl.u32 %v7571, 7
        %v7573 = vsub.s32 %v7570, %v7572
        %v7574 = vrot.slane %v7546, %v7573
        %v7575 = vcombine.high %v7553, %v7553
        %v7576 = vcombine.high %v7560, %v7560
        %v7577 = vcombine.high %v7567, %v7567
        %v7578 = vcombine.high %v7574, %v7574
        %v7579 = vcombine.high %v6914, %v6914
        %v7581 = vunpack.c.l.s4 1966171168
        %v7582 = vunpack.c.0.s8 %v7581
        %v7583 = vlaneseq
        %v7584 = vshrl.u32 %v7583, 7
        %v7585 = vsub.s32 %v7582, %v7584
        %v7586 = vrot.slane %v6914, %v7585
        %v7588 = vunpack.c.l.s4 1966171168
        %v7589 = vunpack.c.0.s8 %v7588
        %v7590 = vlaneseq
        %v7591 = vshrl.u32 %v7590, 7
        %v7592 = vsub.s32 %v7589, %v7591
        %v7593 = vrot.slane %v7579, %v7592
        %v7594 = vcombine.high %v7586, %v7586
        %v7595 = vcombine.high %v7593, %v7593
        %v7597 = vunpack.c.l.s4 1966171168
        %v7598 = vunpack.c.0.s8 %v7597
        %v7599 = vlaneseq
        %v7600 = vshrl.u32 %v7599, 7
        %v7601 = vsub.s32 %v7598, %v7600
        %v7602 = vrot.slane %v7586, %v7601
        %v7604 = vunpack.c.l.s4 1966171168
        %v7605 = vunpack.c.0.s8 %v7604
        %v7606 = vlaneseq
        %v7607 = vshrl.u32 %v7606, 7
        %v7608 = vsub.s32 %v7605, %v7607
        %v7609 = vrot.slane %v7593, %v7608
        %v7611 = vunpack.c.l.s4 1966171168
        %v7612 = vunpack.c.0.s8 %v7611
        %v7613 = vlaneseq
        %v7614 = vshrl.u32 %v7613, 7
        %v7615 = vsub.s32 %v7612, %v7614
        %v7616 = vrot.slane %v7594, %v7615
        %v7618 = vunpack.c.l.s4 1966171168
        %v7619 = vunpack.c.0.s8 %v7618
        %v7620 = vlaneseq
        %v7621 = vshrl.u32 %v7620, 7
        %v7622 = vsub.s32 %v7619, %v7621
        %v7623 = vrot.slane %v7595, %v7622
        %v7624 = vcombine.high %v7602, %v7602
        %v7625 = vcombine.high %v7609, %v7609
        %v7626 = vcombine.high %v7616, %v7616
        %v7627 = vcombine.high %v7623, %v7623
        %v8172 = vunpack.c.l.b16 %v6915
        %v8173 = vunpack.c.l.b16 %v6916
        %v8174 = vunpack.c.l.b16 %v6917
        %v8175 = vunpack.c.l.b16 %v6918
        %v8176 = vunpack.c.l.b16 %v6919
        %v8177 = vunpack.c.l.b16 %v6920
        %v8178 = vunpack.c.l.b16 %v6921
        %v8179 = vunpack.c.l.b16 %v6922
        %v8180 = vunpack.c.l.b16 %v6923
        %v8181 = vunpack.c.l.b16 %v6924
        %v8182 = vunpack.c.l.b16 %v6925
        %v8183 = vunpack.c.l.b16 %v6926
        %v8184 = vunpack.c.l.b16 %v6927
        %v8185 = vunpack.c.l.b16 %v6928
        %v8186 = vunpack.c.l.b16 %v6929
        %v8187 = vunpack.c.l.b16 %v6930
        %v8188 = vunpack.c.l.b16 %v6931
        %v8189 = vunpack.c.l.b16 %v6932
        %v8190 = vunpack.c.l.b16 %v6933
        %v8191 = vunpack.c.l.b16 %v6934
        %v8192 = vunpack.c.l.b16 %v6935
        %v8193 = vunpack.c.l.b16 %v6936
        %v8194 = vunpack.c.l.b16 %v6937
        %v8195 = vunpack.c.l.b16 %v6938
        %v8196 = vunpack.c.l.b16 %v6939
        %v8197 = vunpack.c.l.b16 %v6940
        %v8198 = vunpack.c.l.b16 %v6941
        %v8199 = vunpack.c.l.b16 %v6942
        %v8200 = vunpack.c.l.b16 %v6943
        %v8201 = vunpack.c.l.b16 %v6944
        %v8202 = vunpack.c.l.b16 %v6945
        %v8203 = vunpack.c.l.b16 %v6946
        %v8204 = vunpack.c.l.b16 %v6947
        %v8205 = vunpack.c.l.b16 %v6948
        %v8206 = vunpack.c.l.b16 %v6949
        %v8207 = vunpack.c.l.b16 %v6950
        %v8208 = vunpack.c.l.b16 %v6951
        %v8209 = vunpack.c.l.b16 %v6952
        %v8210 = vunpack.c.l.b16 %v6953
        %v8211 = vunpack.c.l.b16 %v6954
        %v8212 = vunpack.c.l.b16 %v6955
        %v8213 = vunpack.c.l.b16 %v6956
        %v8214 = vunpack.c.l.b16 %v6957
        %v8215 = vunpack.c.l.b16 %v6958
        %v8216 = vunpack.c.l.b16 %v6959
        %v8217 = vunpack.c.l.b16 %v6960
        %v8218 = vunpack.c.l.b16 %v6961
        %v8219 = vunpack.c.l.b16 %v6962
        %v8220 = vunpack.c.l.b16 %v6963
        %v8221 = vunpack.c.l.b16 %v6964
        %v8222 = vunpack.c.l.b16 %v6965
        %v8223 = vunpack.c.l.b16 %v6966
        %v8224 = vunpack.c.l.b16 %v6967
        %v8225 = vunpack.c.l.b16 %v6968
        %v8226 = vunpack.c.l.b16 %v6969
        %v8227 = vunpack.c.l.b16 %v6970
        %v8228 = vunpack.c.l.b16 %v6971
        %v8229 = vunpack.c.l.b16 %v6972
        %v8230 = vunpack.c.l.b16 %v6973
        %v8231 = vunpack.c.l.b16 %v6974
        %v8232 = vunpack.c.l.b16 %v6975
        %v8233 = vunpack.c.l.b16 %v6976
        %v8234 = vunpack.c.l.b16 %v6977
        %v8235 = vunpack.c.l.b16 %v6978
        %v8236 = vunpack.c.l.b16 %v6979
        %v8237 = vunpack.c.l.b16 %v6980
        %v8238 = vunpack.c.l.b16 %v6981
        %v8239 = vunpack.c.l.b16 %v6982
        %v8240 = vunpack.c.l.b16 %v6983
        %v8241 = vunpack.c.l.b16 %v6984
        %v8242 = vunpack.c.l.b16 %v6985
        %v8243 = vunpack.c.l.b16 %v6986
        %v8244 = vunpack.c.l.b16 %v6987
        %v8245 = vunpack.c.l.b16 %v6988
        %v8246 = vunpack.c.l.b16 %v6989
        %v8247 = vunpack.c.l.b16 %v6990
        %v8248 = vunpack.c.l.b16 %v6991
        %v8249 = vunpack.c.l.b16 %v6992
        %v8250 = vunpack.c.l.b16 %v6993
        %v8251 = vunpack.c.l.b16 %v6994
        %v8252 = vunpack.c.l.b16 %v6995
        %v8253 = vunpack.c.l.b16 %v6996
        %v8254 = vunpack.c.l.b16 %v6997
        %v8255 = vunpack.c.l.b16 %v6998
        %v8256 = vunpack.c.l.b16 %v6999
        %v8257 = vunpack.c.l.b16 %v7000
        %v8258 = vunpack.c.l.b16 %v7001
        %v8259 = vunpack.c.l.b16 %v7002
        %v8260 = vunpack.c.l.b16 %v7003
        %v8261 = vunpack.c.l.b16 %v7004
        %v8262 = vunpack.c.l.b16 %v7005
        %v8263 = vunpack.c.l.b16 %v7006
        %v8264 = vunpack.c.l.b16 %v7007
        %v8265 = vunpack.c.l.b16 %v7008
        %v8266 = vunpack.c.l.b16 %v7009
        %v8267 = vunpack.c.l.b16 %v7010
        %v8268 = vunpack.c.l.b16 %v7011
        %v8269 = vunpack.c.l.b16 %v7012
        %v8270 = vunpack.c.l.b16 %v7013
        %v8271 = vunpack.c.l.b16 %v7014
        %v8272 = vunpack.c.l.b16 %v7015
        %v8273 = vunpack.c.l.b16 %v7016
        %v8274 = vunpack.c.l.b16 %v7017
        %v8275 = vunpack.c.l.b16 %v7018
        %v8276 = vunpack.c.l.b16 %v7019
        %v8277 = vunpack.c.l.b16 %v7020
        %v8278 = vunpack.c.l.b16 %v7021
        %v8279 = vunpack.c.l.b16 %v7022
        %v8280 = vunpack.c.l.b16 %v7023
        %v8281 = vunpack.c.l.b16 %v7024
        %v8282 = vunpack.c.l.b16 %v7025
        %v8283 = vunpack.c.l.b16 %v7026
        %v8284 = vunpack.c.l.b16 %v7027
        %v8285 = vunpack.c.l.b16 %v7028
        %v8286 = vunpack.c.l.b16 %v7029
        %v8287 = vunpack.c.l.b16 %v7030
        %v8288 = vunpack.c.l.b16 %v7031
        %v8289 = vunpack.c.l.b16 %v7032
        %v8290 = vunpack.c.l.b16 %v7033
        %v8291 = vunpack.c.l.b16 %v7034
        %v8292 = vunpack.c.l.b16 %v7035
        %v8293 = vunpack.c.l.b16 %v7036
        %v8294 = vunpack.c.l.b16 %v7037
        %v8295 = vunpack.c.l.b16 %v7038
        %v8296 = vunpack.c.l.b16 %v7039
        %v8297 = vunpack.c.l.b16 %v7040
        %v8298 = vunpack.c.l.b16 %v7041
        %v8299 = vunpack.c.l.b16 %v7042
        %v8300 = vunpack.c.l.b16 %v7043
        %v8301 = vunpack.c.l.b16 %v7044
        %v8302 = vunpack.c.l.b16 %v7045
        %v8303 = vunpack.c.l.b16 %v7046
        %v8304 = vunpack.c.l.b16 %v7047
        %v8305 = vunpack.c.l.b16 %v7048
        %v8306 = vunpack.c.l.b16 %v7049
        %v8307 = vunpack.c.l.b16 %v7050
        %v8308 = vunpack.c.l.b16 %v7051
        %v8309 = vunpack.c.l.b16 %v7052
        %v8310 = vunpack.c.l.b16 %v7053
        %v8311 = vunpack.c.l.b16 %v7054
        %v8312 = vunpack.c.l.b16 %v7055
        %v8313 = vunpack.c.l.b16 %v7056
        %v8314 = vunpack.c.l.b16 %v7057
        %v8315 = vunpack.c.l.b16 %v7058
        %v8316 = vunpack.c.l.b16 %v7059
        %v8317 = vunpack.c.l.b16 %v7060
        %v8318 = vunpack.c.l.b16 %v7061
        %v8319 = vunpack.c.l.b16 %v7062
        %v8320 = vunpack.c.l.b16 %v7063
        %v8321 = vunpack.c.l.b16 %v7064
        %v8322 = vunpack.c.l.b16 %v7065
        %v8323 = vunpack.c.l.b16 %v7066
        %v8324 = vunpack.c.l.b16 %v7067
        %v8325 = vunpack.c.l.b16 %v7068
        %v8326 = vunpack.c.l.b16 %v7069
        %v8327 = vunpack.c.l.b16 %v7070
        %v8328 = vunpack.c.l.b16 %v7071
        %v8329 = vunpack.c.l.b16 %v7072
        %v8330 = vunpack.c.l.b16 %v7073
        %v8331 = vunpack.c.l.b16 %v7074
        %v8332 = vunpack.c.l.b16 %v7075
        %v8333 = vunpack.c.l.b16 %v7076
        %v8334 = vunpack.c.l.b16 %v7077
        %v8335 = vunpack.c.l.b16 %v7078
        %v8336 = vunpack.c.l.b16 %v7079
        %v8337 = vunpack.c.l.b16 %v7080
        %v8338 = vunpack.c.l.b16 %v7081
        %v8339 = vunpack.c.l.b16 %v7082
        %v8340 = vunpack.c.l.b16 %v7083
        %v8341 = vunpack.c.l.b16 %v7084
        %v8342 = vunpack.c.l.b16 %v7085
        %v8343 = vunpack.c.l.b16 %v7086
        %v8344 = vunpack.c.l.b16 %v7087
        %v8345 = vunpack.c.l.b16 %v7088
        %v8346 = vunpack.c.l.b16 %v7089
        %v8347 = vunpack.c.l.b16 %v7090
        %v8348 = vunpack.c.l.b16 %v7091
        %v8349 = vunpack.c.l.b16 %v7092
        %v8350 = vunpack.c.l.b16 %v7093
        %v8351 = vunpack.c.l.b16 %v7094
        %v8352 = vunpack.c.l.b16 %v7095
        %v8353 = vunpack.c.l.b16 %v7096
        %v8354 = vunpack.c.l.b16 %v7097
        %v8355 = vunpack.c.l.b16 %v7098
        %v8356 = vunpack.c.l.b16 %v7099
        %v8357 = vunpack.c.l.b16 %v7100
        %v8358 = vunpack.c.l.b16 %v7101
        %v8359 = vunpack.c.l.b16 %v7102
        %v8360 = vunpack.c.l.b16 %v7103
        %v8361 = vunpack.c.l.b16 %v7104
        %v8362 = vunpack.c.l.b16 %v7105
        %v8363 = vunpack.c.l.b16 %v7106
        %v8364 = vunpack.c.l.b16 %v7107
        %v8365 = vunpack.c.l.b16 %v7108
        %v8366 = vunpack.c.l.b16 %v7109
        %v8367 = vunpack.c.l.b16 %v7110
        %v8368 = vunpack.c.l.b16 %v7111
        %v8369 = vunpack.c.l.b16 %v7112
        %v8370 = vunpack.c.l.b16 %v7113
        %v8371 = vunpack.c.l.b16 %v7114
        %v8372 = vunpack.c.l.b16 %v7115
        %v8373 = vunpack.c.l.b16 %v7116
        %v8374 = vunpack.c.l.b16 %v7117
        %v8375 = vunpack.c.l.b16 %v7118
        %v8376 = vunpack.c.l.b16 %v7119
        %v8377 = vunpack.c.l.b16 %v7120
        %v8378 = vunpack.c.l.b16 %v7121
        %v8379 = vunpack.c.l.b16 %v7122
        %v8380 = vunpack.c.l.b16 %v7123
        %v8381 = vunpack.c.l.b16 %v7124
        %v8382 = vunpack.c.l.b16 %v7125
        %v8383 = vunpack.c.l.b16 %v7126
        %v8384 = vunpack.c.l.b16 %v7127
        %v8385 = vunpack.c.l.b16 %v7128
        %v8386 = vunpack.c.l.b16 %v7129
        %v8387 = vunpack.c.l.b16 %v7130
        %v8388 = vunpack.c.l.b16 %v7131
        %v8389 = vunpack.c.l.b16 %v7132
        %v8390 = vunpack.c.l.b16 %v7133
        %v8391 = vunpack.c.l.b16 %v7134
        %v8392 = vunpack.c.l.b16 %v7135
        %v8393 = vunpack.c.l.b16 %v7136
        %v8394 = vunpack.c.l.b16 %v7137
        %v8395 = vunpack.c.l.b16 %v7138
        %v8396 = vunpack.c.l.b16 %v7139
        %v8397 = vunpack.c.l.b16 %v7140
        %v8398 = vunpack.c.l.b16 %v7141
        %v8399 = vunpack.c.l.b16 %v7142
        %v8400 = vunpack.c.l.b16 %v7143
        %v8401 = vunpack.c.l.b16 %v7144
        %v8402 = vunpack.c.l.b16 %v7145
        %v8403 = vunpack.c.l.b16 %v7146
        %v8404 = vunpack.c.l.b16 %v7147
        %v8405 = vunpack.c.l.b16 %v7148
        %v8406 = vunpack.c.l.b16 %v7149
        %v8407 = vunpack.c.l.b16 %v7150
        %v8408 = vunpack.c.l.b16 %v7151
        %v8409 = vunpack.c.l.b16 %v7152
        %v8410 = vunpack.c.l.b16 %v7153
        %v8411 = vunpack.c.l.b16 %v7154
        %v8412 = vunpack.c.l.b16 %v7155
        %v8413 = vunpack.c.l.b16 %v7156
        %v8414 = vunpack.c.l.b16 %v7157
        %v8415 = vunpack.c.l.b16 %v7158
        %v8416 = vunpack.c.l.b16 %v7159
        %v8417 = vunpack.c.l.b16 %v7160
        %v8418 = vunpack.c.l.b16 %v7161
        %v8419 = vunpack.c.l.b16 %v7162
        %v8420 = vunpack.c.l.b16 %v7163
        %v8421 = vunpack.c.l.b16 %v7164
        %v8422 = vunpack.c.l.b16 %v7165
        %v8423 = vunpack.c.l.b16 %v7166
        %v8424 = vunpack.c.l.b16 %v7167
        %v8425 = vunpack.c.l.b16 %v7168
        %v8426 = vunpack.c.l.b16 %v7169
        %v8427 = vunpack.c.l.b16 %v7170
        %v8428 = vunpack.c.l.b16 %v7171
        %v8429 = vunpack.c.l.b16 %v7172
        %v8430 = vunpack.c.l.b16 %v7173
        %v8431 = vunpack.c.l.b16 %v7174
        %v8432 = vunpack.c.l.b16 %v7175
        %v8433 = vunpack.c.l.b16 %v7176
        %v8434 = vunpack.c.l.b16 %v7177
        %v8435 = vunpack.c.l.b16 %v7178
        %v8436 = vunpack.c.l.b16 %v7179
        %v8437 = vunpack.c.l.b16 %v7180
        %v8438 = vunpack.c.l.b16 %v7181
        %v8439 = vunpack.c.l.b16 %v7182
        %v8440 = vunpack.c.l.b16 %v7183
        %v8441 = vunpack.c.l.b16 %v7184
        %v8442 = vunpack.c.l.b16 %v7185
        %v8443 = vunpack.c.l.b16 %v7186
        %v8444 = vunpack.c.l.b16 %v7187
        %v8445 = vunpack.c.l.b16 %v7188
        %v8446 = vunpack.c.l.b16 %v7189
        %v8447 = vunpack.c.l.b16 %v7190
        %v8448 = vunpack.c.l.b16 %v7191
        %v8449 = vunpack.c.l.b16 %v7192
        %v8450 = vunpack.c.l.b16 %v7193
        %v8451 = vunpack.c.l.b16 %v7194
        %v8452 = vunpack.c.l.b16 %v7195
        %v8453 = vunpack.c.l.b16 %v7196
        %v8454 = vunpack.c.l.b16 %v7197
        %v8455 = vunpack.c.l.b16 %v7198
        %v8456 = vunpack.c.l.b16 %v7199
        %v8457 = vunpack.c.l.b16 %v7200
        %v8458 = vunpack.c.l.b16 %v7201
        %v8459 = vunpack.c.l.b16 %v7202
        %v8460 = vunpack.c.l.b16 %v7203
        %v8461 = vunpack.c.l.b16 %v7204
        %v8462 = vunpack.c.l.b16 %v7205
        %v8463 = vunpack.c.l.b16 %v7206
        %v8464 = vunpack.c.l.b16 %v7207
        %v8465 = vunpack.c.l.b16 %v7208
        %v8466 = vunpack.c.l.b16 %v7209
        %v8467 = vunpack.c.l.b16 %v7210
        %v8468 = vunpack.c.l.b16 %v7211
        %v8469 = vunpack.c.l.b16 %v7212
        %v8470 = vunpack.c.l.b16 %v7213
        %v8471 = vunpack.c.l.b16 %v7214
        %v8472 = vunpack.c.l.b16 %v7215
        %v8473 = vunpack.c.l.b16 %v7216
        %v8474 = vunpack.c.l.b16 %v7217
        %v8475 = vunpack.c.l.b16 %v7218
        %v8476 = vunpack.c.l.b16 %v7219
        %v8477 = vunpack.c.l.b16 %v7220
        %v8478 = vunpack.c.l.b16 %v7221
        %v8479 = vunpack.c.l.b16 %v7222
        %v8480 = vunpack.c.l.b16 %v7223
        %v8481 = vunpack.c.l.b16 %v7224
        %v8482 = vunpack.c.l.b16 %v7225
        %v8483 = vunpack.c.l.b16 %v7226
        %v8484 = vunpack.c.l.b16 %v7227
        %v8485 = vunpack.c.l.b16 %v7228
        %v8486 = vunpack.c.l.b16 %v7229
        %v8487 = vunpack.c.l.b16 %v7230
        %v8488 = vunpack.c.l.b16 %v7231
        %v8489 = vunpack.c.l.b16 %v7232
        %v8490 = vunpack.c.l.b16 %v7233
        %v8491 = vunpack.c.l.b16 %v7234
        %v8492 = vunpack.c.l.b16 %v7235
        %v8493 = vunpack.c.l.b16 %v7236
        %v8494 = vunpack.c.l.b16 %v7237
        %v8495 = vunpack.c.l.b16 %v7238
        %v8496 = vunpack.c.l.b16 %v7239
        %v8497 = vunpack.c.l.b16 %v7240
        %v8498 = vunpack.c.l.b16 %v7241
        %v8499 = vunpack.c.l.b16 %v7242
        %v8500 = vunpack.c.l.b16 %v7243
        %v8501 = vunpack.c.l.b16 %v7244
        %v8502 = vunpack.c.l.b16 %v7245
        %v8503 = vunpack.c.l.b16 %v7246
        %v8504 = vunpack.c.l.b16 %v7247
        %v8505 = vunpack.c.l.b16 %v7248
        %v8506 = vunpack.c.l.b16 %v7249
        %v8507 = vunpack.c.l.b16 %v7250
        %v8508 = vunpack.c.l.b16 %v7251
        %v8509 = vunpack.c.l.b16 %v7252
        %v8510 = vunpack.c.l.b16 %v7253
        %v8511 = vunpack.c.l.b16 %v7254
        %v8512 = vunpack.c.l.b16 %v7255
        %v8513 = vunpack.c.l.b16 %v7256
        %v8514 = vunpack.c.l.b16 %v7257
        %v8515 = vunpack.c.l.b16 %v7258
        %v8516 = vunpack.c.l.b16 %v7259
        %v8517 = vunpack.c.l.b16 %v7260
        %v8518 = vunpack.c.l.b16 %v7261
        %v8519 = vunpack.c.l.b16 %v7262
        %v8520 = vunpack.c.l.b16 %v7263
        %v8521 = vunpack.c.l.b16 %v7264
        %v8522 = vunpack.c.l.b16 %v7265
        %v8523 = vunpack.c.l.b16 %v7266
        %v8524 = vunpack.c.l.b16 %v7267
        %v8525 = vunpack.c.l.b16 %v7268
        %v8526 = vunpack.c.l.b16 %v7269
        %v8527 = vunpack.c.l.b16 %v7270
        %v8528 = vunpack.c.l.b16 %v7271
        %v8529 = vunpack.c.l.b16 %v7272
        %v8530 = vunpack.c.l.b16 %v7273
        %v8531 = vunpack.c.l.b16 %v7274
        %v8532 = vunpack.c.l.b16 %v7275
        %v8533 = vunpack.c.l.b16 %v7276
        %v8534 = vunpack.c.l.b16 %v7277
        %v8535 = vunpack.c.l.b16 %v7278
        %v8536 = vunpack.c.l.b16 %v7279
        %v8537 = vunpack.c.l.b16 %v7280
        %v8538 = vunpack.c.l.b16 %v7281
        %v8539 = vunpack.c.l.b16 %v7282
        %v8540 = vunpack.c.l.b16 %v7283
        %v8541 = vunpack.c.l.b16 %v7284
        %v8542 = vunpack.c.l.b16 %v7285
        %v8543 = vunpack.c.l.b16 %v7286
        %v8544 = vunpack.c.l.b16 %v7287
        %v8545 = vunpack.c.l.b16 %v7288
        %v8546 = vunpack.c.l.b16 %v7289
        %v8547 = vunpack.c.l.b16 %v7290
        %v8548 = vunpack.c.l.b16 %v7291
        %v8549 = vunpack.c.l.b16 %v7292
        %v8550 = vunpack.c.l.b16 %v7293
        %v8551 = vunpack.c.l.b16 %v7294
        %v8552 = vunpack.c.l.b16 %v7295
        %v8553 = vunpack.c.l.b16 %v7296
        %v8554 = vunpack.c.l.b16 %v7297
        %v8555 = vunpack.c.l.b16 %v7298
        %v8556 = vunpack.c.l.b16 %v7299
        %v8557 = vunpack.c.l.b16 %v7300
        %v8558 = vunpack.c.l.b16 %v7301
        %v8559 = vunpack.c.l.b16 %v7302
        %v8560 = vunpack.c.l.b16 %v7303
        %v8561 = vunpack.c.l.b16 %v7304
        %v8562 = vunpack.c.l.b16 %v7305
        %v8563 = vunpack.c.l.b16 %v7306
        %v8564 = vunpack.c.l.b16 %v7307
        %v8565 = vunpack.c.l.b16 %v7308
        %v8566 = vunpack.c.l.b16 %v7309
        %v8567 = vunpack.c.l.b16 %v7310
        %v8568 = vunpack.c.l.b16 %v7311
        %v8569 = vunpack.c.l.b16 %v7312
        %v8570 = vunpack.c.l.b16 %v7313
        %v8571 = vunpack.c.l.b16 %v7314
        %v8572 = vunpack.c.l.b16 %v7315
        %v8573 = vunpack.c.l.b16 %v7316
        %v8574 = vunpack.c.l.b16 %v7317
        %v8575 = vunpack.c.l.b16 %v7318
        %v8576 = vunpack.c.l.b16 %v7319
        %v8577 = vunpack.c.l.b16 %v7320
        %v8578 = vunpack.c.l.b16 %v7321
        %v8579 = vunpack.c.l.b16 %v7322
        %v8580 = vunpack.c.l.b16 %v7323
        %v8581 = vunpack.c.l.b16 %v7324
        %v8582 = vunpack.c.l.b16 %v7325
        %v8583 = vunpack.c.l.b16 %v7326
        %v8584 = vunpack.c.l.b16 %v7327
        %v8585 = vunpack.c.l.b16 %v7328
        %v8586 = vunpack.c.l.b16 %v7329
        %v8587 = vunpack.c.l.b16 %v7330
        %v8588 = vunpack.c.l.b16 %v7331
        %v8589 = vunpack.c.l.b16 %v7332
        %v8590 = vunpack.c.l.b16 %v7333
        %v8591 = vunpack.c.l.b16 %v7334
        %v8592 = vunpack.c.l.b16 %v7335
        %v8593 = vunpack.c.l.b16 %v7336
        %v8594 = vunpack.c.l.b16 %v7337
        %v8595 = vunpack.c.l.b16 %v7338
        %v8596 = vunpack.c.l.b16 %v7339
        %v8597 = vunpack.c.l.b16 %v7340
        %v8598 = vunpack.c.l.b16 %v7341
        %v8599 = vunpack.c.l.b16 %v7342
        %v8600 = vunpack.c.l.b16 %v7343
        %v8601 = vunpack.c.l.b16 %v7344
        %v8602 = vunpack.c.l.b16 %v7345
        %v8603 = vunpack.c.l.b16 %v7346
        %v8604 = vunpack.c.l.b16 %v7347
        %v8605 = vunpack.c.l.b16 %v7348
        %v8606 = vunpack.c.l.b16 %v7349
        %v8607 = vunpack.c.l.b16 %v7350
        %v8608 = vunpack.c.l.b16 %v7351
        %v8609 = vunpack.c.l.b16 %v7352
        %v8610 = vunpack.c.l.b16 %v7353
        %v8611 = vunpack.c.l.b16 %v7354
        %v8612 = vunpack.c.l.b16 %v7355
        %v8613 = vunpack.c.l.b16 %v7356
        %v8614 = vunpack.c.l.b16 %v7357
        %v8615 = vunpack.c.l.b16 %v7358
        %v8616 = vunpack.c.l.b16 %v7359
        %v8617 = vunpack.c.l.b16 %v7360
        %v8618 = vunpack.c.l.b16 %v7361
        %v8619 = vunpack.c.l.b16 %v7362
        %v8620 = vunpack.c.l.b16 %v7363
        %v8621 = vunpack.c.l.b16 %v7364
        %v8622 = vunpack.c.l.b16 %v7365
        %v8623 = vunpack.c.l.b16 %v7366
        %v8624 = vunpack.c.l.b16 %v7367
        %v8625 = vunpack.c.l.b16 %v7368
        %v8626 = vunpack.c.l.b16 %v7369
        %v8627 = vunpack.c.l.b16 %v7370
        %v8628 = vunpack.c.l.b16 %v7371
        %v8629 = vunpack.c.l.b16 %v7372
        %v8630 = vunpack.c.l.b16 %v7373
        %v8631 = vunpack.c.l.b16 %v7374
        %v8632 = vunpack.c.l.b16 %v7375
        %v8633 = vunpack.c.l.b16 %v7376
        %v8634 = vunpack.c.l.b16 %v7377
        %v8635 = vunpack.c.l.b16 %v7378
        %v8636 = vunpack.c.l.b16 %v7379
        %v8637 = vunpack.c.l.b16 %v7380
        %v8638 = vunpack.c.l.b16 %v7381
        %v8639 = vunpack.c.l.b16 %v7382
        %v8640 = vunpack.c.l.b16 %v7383
        %v8641 = vunpack.c.l.b16 %v7384
        %v8642 = vunpack.c.l.b16 %v7385
        %v8643 = vunpack.c.l.b16 %v7386
        %v8644 = vunpack.c.l.b16 %v7387
        %v8645 = vunpack.c.l.b16 %v7388
        %v8646 = vunpack.c.l.b16 %v7389
        %v8647 = vunpack.c.l.b16 %v7390
        %v8648 = vunpack.c.l.b16 %v7391
        %v8649 = vunpack.c.l.b16 %v7392
        %v8650 = vunpack.c.l.b16 %v7393
        %v8651 = vunpack.c.l.b16 %v7394
        %v8652 = vunpack.c.l.b16 %v7395
        %v8653 = vunpack.c.l.b16 %v7396
        %v8654 = vunpack.c.l.b16 %v7397
        %v8655 = vunpack.c.l.b16 %v7398
        %v8656 = vunpack.c.l.b16 %v7399
        %v8657 = vunpack.c.l.b16 %v7400
        %v8658 = vunpack.c.l.b16 %v7401
        %v8659 = vunpack.c.l.b16 %v7402
        %v8660 = vunpack.c.l.b16 %v7403
        %v8661 = vunpack.c.l.b16 %v7404
        %v8662 = vunpack.c.l.b16 %v7405
        %v8663 = vunpack.c.l.b16 %v7406
        %v8664 = vunpack.c.l.b16 %v7407
        %v8665 = vunpack.c.l.b16 %v7408
        %v8666 = vunpack.c.l.b16 %v7409
        %v8667 = vunpack.c.l.b16 %v7410
        %v8668 = vunpack.c.l.b16 %v7411
        %v8669 = vunpack.c.l.b16 %v7412
        %v8670 = vunpack.c.l.b16 %v7413
        %v8671 = vunpack.c.l.b16 %v7414
        %v8672 = vunpack.c.l.b16 %v7415
        %v8673 = vunpack.c.l.b16 %v7416
        %v8674 = vunpack.c.l.b16 %v7417
        %v8675 = vunpack.c.l.b16 %v7418
        %v8676 = vunpack.c.l.b16 %v7419
        %v8677 = vunpack.c.l.b16 %v7420
        %v8678 = vunpack.c.l.b16 %v7421
        %v8679 = vunpack.c.l.b16 %v7422
        %v8680 = vunpack.c.l.b16 %v7423
        %v8681 = vunpack.c.l.b16 %v7424
        %v8682 = vunpack.c.l.b16 %v7425
        %v8683 = vunpack.c.l.b16 %v7426
        %v8684 = vpack.c.b16 %v8173, %v8172
        %v8685 = vpack.c.b16 %v8175, %v8174
        %v8686 = vpack.c.b16 %v8177, %v8176
        %v8687 = vpack.c.b16 %v8179, %v8178
        %v8688 = vpack.c.b16 %v8181, %v8180
        %v8689 = vpack.c.b16 %v8183, %v8182
        %v8690 = vpack.c.b16 %v8185, %v8184
        %v8691 = vpack.c.b16 %v8187, %v8186
        %v8692 = vpack.c.b16 %v8189, %v8188
        %v8693 = vpack.c.b16 %v8191, %v8190
        %v8694 = vpack.c.b16 %v8193, %v8192
        %v8695 = vpack.c.b16 %v8195, %v8194
        %v8696 = vpack.c.b16 %v8197, %v8196
        %v8697 = vpack.c.b16 %v8199, %v8198
        %v8698 = vpack.c.b16 %v8201, %v8200
        %v8699 = vpack.c.b16 %v8203, %v8202
        %v8700 = vpack.c.b16 %v8205, %v8204
        %v8701 = vpack.c.b16 %v8207, %v8206
        %v8702 = vpack.c.b16 %v8209, %v8208
        %v8703 = vpack.c.b16 %v8211, %v8210
        %v8704 = vpack.c.b16 %v8213, %v8212
        %v8705 = vpack.c.b16 %v8215, %v8214
        %v8706 = vpack.c.b16 %v8217, %v8216
        %v8707 = vpack.c.b16 %v8219, %v8218
        %v8708 = vpack.c.b16 %v8221, %v8220
        %v8709 = vpack.c.b16 %v8223, %v8222
        %v8710 = vpack.c.b16 %v8225, %v8224
        %v8711 = vpack.c.b16 %v8227, %v8226
        %v8712 = vpack.c.b16 %v8229, %v8228
        %v8713 = vpack.c.b16 %v8231, %v8230
        %v8714 = vpack.c.b16 %v8233, %v8232
        %v8715 = vpack.c.b16 %v8235, %v8234
        %v8716 = vpack.c.b16 %v8237, %v8236
        %v8717 = vpack.c.b16 %v8239, %v8238
        %v8718 = vpack.c.b16 %v8241, %v8240
        %v8719 = vpack.c.b16 %v8243, %v8242
        %v8720 = vpack.c.b16 %v8245, %v8244
        %v8721 = vpack.c.b16 %v8247, %v8246
        %v8722 = vpack.c.b16 %v8249, %v8248
        %v8723 = vpack.c.b16 %v8251, %v8250
        %v8724 = vpack.c.b16 %v8253, %v8252
        %v8725 = vpack.c.b16 %v8255, %v8254
        %v8726 = vpack.c.b16 %v8257, %v8256
        %v8727 = vpack.c.b16 %v8259, %v8258
        %v8728 = vpack.c.b16 %v8261, %v8260
        %v8729 = vpack.c.b16 %v8263, %v8262
        %v8730 = vpack.c.b16 %v8265, %v8264
        %v8731 = vpack.c.b16 %v8267, %v8266
        %v8732 = vpack.c.b16 %v8269, %v8268
        %v8733 = vpack.c.b16 %v8271, %v8270
        %v8734 = vpack.c.b16 %v8273, %v8272
        %v8735 = vpack.c.b16 %v8275, %v8274
        %v8736 = vpack.c.b16 %v8277, %v8276
        %v8737 = vpack.c.b16 %v8279, %v8278
        %v8738 = vpack.c.b16 %v8281, %v8280
        %v8739 = vpack.c.b16 %v8283, %v8282
        %v8740 = vpack.c.b16 %v8285, %v8284
        %v8741 = vpack.c.b16 %v8287, %v8286
        %v8742 = vpack.c.b16 %v8289, %v8288
        %v8743 = vpack.c.b16 %v8291, %v8290
        %v8744 = vpack.c.b16 %v8293, %v8292
        %v8745 = vpack.c.b16 %v8295, %v8294
        %v8746 = vpack.c.b16 %v8297, %v8296
        %v8747 = vpack.c.b16 %v8299, %v8298
        %v8748 = vpack.c.b16 %v8301, %v8300
        %v8749 = vpack.c.b16 %v8303, %v8302
        %v8750 = vpack.c.b16 %v8305, %v8304
        %v8751 = vpack.c.b16 %v8307, %v8306
        %v8752 = vpack.c.b16 %v8309, %v8308
        %v8753 = vpack.c.b16 %v8311, %v8310
        %v8754 = vpack.c.b16 %v8313, %v8312
        %v8755 = vpack.c.b16 %v8315, %v8314
        %v8756 = vpack.c.b16 %v8317, %v8316
        %v8757 = vpack.c.b16 %v8319, %v8318
        %v8758 = vpack.c.b16 %v8321, %v8320
        %v8759 = vpack.c.b16 %v8323, %v8322
        %v8760 = vpack.c.b16 %v8325, %v8324
        %v8761 = vpack.c.b16 %v8327, %v8326
        %v8762 = vpack.c.b16 %v8329, %v8328
        %v8763 = vpack.c.b16 %v8331, %v8330
        %v8764 = vpack.c.b16 %v8333, %v8332
        %v8765 = vpack.c.b16 %v8335, %v8334
        %v8766 = vpack.c.b16 %v8337, %v8336
        %v8767 = vpack.c.b16 %v8339, %v8338
        %v8768 = vpack.c.b16 %v8341, %v8340
        %v8769 = vpack.c.b16 %v8343, %v8342
        %v8770 = vpack.c.b16 %v8345, %v8344
        %v8771 = vpack.c.b16 %v8347, %v8346
        %v8772 = vpack.c.b16 %v8349, %v8348
        %v8773 = vpack.c.b16 %v8351, %v8350
        %v8774 = vpack.c.b16 %v8353, %v8352
        %v8775 = vpack.c.b16 %v8355, %v8354
        %v8776 = vpack.c.b16 %v8357, %v8356
        %v8777 = vpack.c.b16 %v8359, %v8358
        %v8778 = vpack.c.b16 %v8361, %v8360
        %v8779 = vpack.c.b16 %v8363, %v8362
        %v8780 = vpack.c.b16 %v8365, %v8364
        %v8781 = vpack.c.b16 %v8367, %v8366
        %v8782 = vpack.c.b16 %v8369, %v8368
        %v8783 = vpack.c.b16 %v8371, %v8370
        %v8784 = vpack.c.b16 %v8373, %v8372
        %v8785 = vpack.c.b16 %v8375, %v8374
        %v8786 = vpack.c.b16 %v8377, %v8376
        %v8787 = vpack.c.b16 %v8379, %v8378
        %v8788 = vpack.c.b16 %v8381, %v8380
        %v8789 = vpack.c.b16 %v8383, %v8382
        %v8790 = vpack.c.b16 %v8385, %v8384
        %v8791 = vpack.c.b16 %v8387, %v8386
        %v8792 = vpack.c.b16 %v8389, %v8388
        %v8793 = vpack.c.b16 %v8391, %v8390
        %v8794 = vpack.c.b16 %v8393, %v8392
        %v8795 = vpack.c.b16 %v8395, %v8394
        %v8796 = vpack.c.b16 %v8397, %v8396
        %v8797 = vpack.c.b16 %v8399, %v8398
        %v8798 = vpack.c.b16 %v8401, %v8400
        %v8799 = vpack.c.b16 %v8403, %v8402
        %v8800 = vpack.c.b16 %v8405, %v8404
        %v8801 = vpack.c.b16 %v8407, %v8406
        %v8802 = vpack.c.b16 %v8409, %v8408
        %v8803 = vpack.c.b16 %v8411, %v8410
        %v8804 = vpack.c.b16 %v8413, %v8412
        %v8805 = vpack.c.b16 %v8415, %v8414
        %v8806 = vpack.c.b16 %v8417, %v8416
        %v8807 = vpack.c.b16 %v8419, %v8418
        %v8808 = vpack.c.b16 %v8421, %v8420
        %v8809 = vpack.c.b16 %v8423, %v8422
        %v8810 = vpack.c.b16 %v8425, %v8424
        %v8811 = vpack.c.b16 %v8427, %v8426
        %v8812 = vpack.c.b16 %v8429, %v8428
        %v8813 = vpack.c.b16 %v8431, %v8430
        %v8814 = vpack.c.b16 %v8433, %v8432
        %v8815 = vpack.c.b16 %v8435, %v8434
        %v8816 = vpack.c.b16 %v8437, %v8436
        %v8817 = vpack.c.b16 %v8439, %v8438
        %v8818 = vpack.c.b16 %v8441, %v8440
        %v8819 = vpack.c.b16 %v8443, %v8442
        %v8820 = vpack.c.b16 %v8445, %v8444
        %v8821 = vpack.c.b16 %v8447, %v8446
        %v8822 = vpack.c.b16 %v8449, %v8448
        %v8823 = vpack.c.b16 %v8451, %v8450
        %v8824 = vpack.c.b16 %v8453, %v8452
        %v8825 = vpack.c.b16 %v8455, %v8454
        %v8826 = vpack.c.b16 %v8457, %v8456
        %v8827 = vpack.c.b16 %v8459, %v8458
        %v8828 = vpack.c.b16 %v8461, %v8460
        %v8829 = vpack.c.b16 %v8463, %v8462
        %v8830 = vpack.c.b16 %v8465, %v8464
        %v8831 = vpack.c.b16 %v8467, %v8466
        %v8832 = vpack.c.b16 %v8469, %v8468
        %v8833 = vpack.c.b16 %v8471, %v8470
        %v8834 = vpack.c.b16 %v8473, %v8472
        %v8835 = vpack.c.b16 %v8475, %v8474
        %v8836 = vpack.c.b16 %v8477, %v8476
        %v8837 = vpack.c.b16 %v8479, %v8478
        %v8838 = vpack.c.b16 %v8481, %v8480
        %v8839 = vpack.c.b16 %v8483, %v8482
        %v8840 = vpack.c.b16 %v8485, %v8484
        %v8841 = vpack.c.b16 %v8487, %v8486
        %v8842 = vpack.c.b16 %v8489, %v8488
        %v8843 = vpack.c.b16 %v8491, %v8490
        %v8844 = vpack.c.b16 %v8493, %v8492
        %v8845 = vpack.c.b16 %v8495, %v8494
        %v8846 = vpack.c.b16 %v8497, %v8496
        %v8847 = vpack.c.b16 %v8499, %v8498
        %v8848 = vpack.c.b16 %v8501, %v8500
        %v8849 = vpack.c.b16 %v8503, %v8502
        %v8850 = vpack.c.b16 %v8505, %v8504
        %v8851 = vpack.c.b16 %v8507, %v8506
        %v8852 = vpack.c.b16 %v8509, %v8508
        %v8853 = vpack.c.b16 %v8511, %v8510
        %v8854 = vpack.c.b16 %v8513, %v8512
        %v8855 = vpack.c.b16 %v8515, %v8514
        %v8856 = vpack.c.b16 %v8517, %v8516
        %v8857 = vpack.c.b16 %v8519, %v8518
        %v8858 = vpack.c.b16 %v8521, %v8520
        %v8859 = vpack.c.b16 %v8523, %v8522
        %v8860 = vpack.c.b16 %v8525, %v8524
        %v8861 = vpack.c.b16 %v8527, %v8526
        %v8862 = vpack.c.b16 %v8529, %v8528
        %v8863 = vpack.c.b16 %v8531, %v8530
        %v8864 = vpack.c.b16 %v8533, %v8532
        %v8865 = vpack.c.b16 %v8535, %v8534
        %v8866 = vpack.c.b16 %v8537, %v8536
        %v8867 = vpack.c.b16 %v8539, %v8538
        %v8868 = vpack.c.b16 %v8541, %v8540
        %v8869 = vpack.c.b16 %v8543, %v8542
        %v8870 = vpack.c.b16 %v8545, %v8544
        %v8871 = vpack.c.b16 %v8547, %v8546
        %v8872 = vpack.c.b16 %v8549, %v8548
        %v8873 = vpack.c.b16 %v8551, %v8550
        %v8874 = vpack.c.b16 %v8553, %v8552
        %v8875 = vpack.c.b16 %v8555, %v8554
        %v8876 = vpack.c.b16 %v8557, %v8556
        %v8877 = vpack.c.b16 %v8559, %v8558
        %v8878 = vpack.c.b16 %v8561, %v8560
        %v8879 = vpack.c.b16 %v8563, %v8562
        %v8880 = vpack.c.b16 %v8565, %v8564
        %v8881 = vpack.c.b16 %v8567, %v8566
        %v8882 = vpack.c.b16 %v8569, %v8568
        %v8883 = vpack.c.b16 %v8571, %v8570
        %v8884 = vpack.c.b16 %v8573, %v8572
        %v8885 = vpack.c.b16 %v8575, %v8574
        %v8886 = vpack.c.b16 %v8577, %v8576
        %v8887 = vpack.c.b16 %v8579, %v8578
        %v8888 = vpack.c.b16 %v8581, %v8580
        %v8889 = vpack.c.b16 %v8583, %v8582
        %v8890 = vpack.c.b16 %v8585, %v8584
        %v8891 = vpack.c.b16 %v8587, %v8586
        %v8892 = vpack.c.b16 %v8589, %v8588
        %v8893 = vpack.c.b16 %v8591, %v8590
        %v8894 = vpack.c.b16 %v8593, %v8592
        %v8895 = vpack.c.b16 %v8595, %v8594
        %v8896 = vpack.c.b16 %v8597, %v8596
        %v8897 = vpack.c.b16 %v8599, %v8598
        %v8898 = vpack.c.b16 %v8601, %v8600
        %v8899 = vpack.c.b16 %v8603, %v8602
        %v8900 = vpack.c.b16 %v8605, %v8604
        %v8901 = vpack.c.b16 %v8607, %v8606
        %v8902 = vpack.c.b16 %v8609, %v8608
        %v8903 = vpack.c.b16 %v8611, %v8610
        %v8904 = vpack.c.b16 %v8613, %v8612
        %v8905 = vpack.c.b16 %v8615, %v8614
        %v8906 = vpack.c.b16 %v8617, %v8616
        %v8907 = vpack.c.b16 %v8619, %v8618
        %v8908 = vpack.c.b16 %v8621, %v8620
        %v8909 = vpack.c.b16 %v8623, %v8622
        %v8910 = vpack.c.b16 %v8625, %v8624
        %v8911 = vpack.c.b16 %v8627, %v8626
        %v8912 = vpack.c.b16 %v8629, %v8628
        %v8913 = vpack.c.b16 %v8631, %v8630
        %v8914 = vpack.c.b16 %v8633, %v8632
        %v8915 = vpack.c.b16 %v8635, %v8634
        %v8916 = vpack.c.b16 %v8637, %v8636
        %v8917 = vpack.c.b16 %v8639, %v8638
        %v8918 = vpack.c.b16 %v8641, %v8640
        %v8919 = vpack.c.b16 %v8643, %v8642
        %v8920 = vpack.c.b16 %v8645, %v8644
        %v8921 = vpack.c.b16 %v8647, %v8646
        %v8922 = vpack.c.b16 %v8649, %v8648
        %v8923 = vpack.c.b16 %v8651, %v8650
        %v8924 = vpack.c.b16 %v8653, %v8652
        %v8925 = vpack.c.b16 %v8655, %v8654
        %v8926 = vpack.c.b16 %v8657, %v8656
        %v8927 = vpack.c.b16 %v8659, %v8658
        %v8928 = vpack.c.b16 %v8661, %v8660
        %v8929 = vpack.c.b16 %v8663, %v8662
        %v8930 = vpack.c.b16 %v8665, %v8664
        %v8931 = vpack.c.b16 %v8667, %v8666
        %v8932 = vpack.c.b16 %v8669, %v8668
        %v8933 = vpack.c.b16 %v8671, %v8670
        %v8934 = vpack.c.b16 %v8673, %v8672
        %v8935 = vpack.c.b16 %v8675, %v8674
        %v8936 = vpack.c.b16 %v8677, %v8676
        %v8937 = vpack.c.b16 %v8679, %v8678
        %v8938 = vpack.c.b16 %v8681, %v8680
        %v8939 = vpack.c.b16 %v8683, %v8682
        %9196 = vmatprep.subr.bf16.mxu0 0
        %9197 = vmatpush1.bf16.msra.mxu0 %v8691
        %9198 = vmatprep.subr.bf16.mxu0 0
        %9199 = vmatpush1.bf16.msra.mxu0 %v8690
        %9200 = vmatprep.subr.bf16.mxu0 0
        %9201 = vmatpush1.bf16.msra.mxu0 %v8689
        %9202 = vmatprep.subr.bf16.mxu0 0
        %9203 = vmatpush1.bf16.msra.mxu0 %v8688
        %9204 = vmatprep.subr.bf16.mxu0 0
        %9205 = vmatpush1.bf16.msra.mxu0 %v8687
        %9206 = vmatprep.subr.bf16.mxu0 0
        %9207 = vmatpush1.bf16.msra.mxu0 %v8686
        %9208 = vmatprep.subr.bf16.mxu0 0
        %9209 = vmatpush1.bf16.msra.mxu0 %v8685
        %9210 = vmatprep.subr.bf16.mxu0 0
        %9211 = vmatpush1.bf16.msra.mxu0 %v8684
        %9212 = vmatprep.subr.bf16.mxu0 0
        %9213 = vmatpush2.bf16.msra.mxu0 %v8699
        %9214 = vmatprep.subr.bf16.mxu0 0
        %9215 = vmatpush2.bf16.msra.mxu0 %v8698
        %9216 = vmatprep.subr.bf16.mxu0 0
        %9217 = vmatpush2.bf16.msra.mxu0 %v8697
        %9218 = vmatprep.subr.bf16.mxu0 0
        %9219 = vmatpush2.bf16.msra.mxu0 %v8696
        %9220 = vmatprep.subr.bf16.mxu0 0
        %9221 = vmatpush2.bf16.msra.mxu0 %v8695
        %9222 = vmatprep.subr.bf16.mxu0 0
        %9223 = vmatpush2.bf16.msra.mxu0 %v8694
        %9224 = vmatprep.subr.bf16.mxu0 0
        %9225 = vmatpush2.bf16.msra.mxu0 %v8693
        %9226 = vmatprep.subr.bf16.mxu0 0
        %9227 = vmatpush2.bf16.msra.mxu0 %v8692
        %9228 = vmatprep.mubr.bf16.mxu0 %v7469
        %9229 = vmatmul.mubr.bf16.gmra.mxu0 %v7455
        %v9230 = vpop.f32.mrf.mxu0
        %v9231 = vadd.f32 %v7427, %v9230
        %v9232 = vpop.f32.mrf.mxu0
        %v9233 = vpop.f32.mrf.mxu0
        %v9234 = vpop.f32.mrf.mxu0
        %9235 = vdwg.mxu0
        %9236 = vmatprep.subr.bf16.mxu0 0
        %9237 = vmatpush1.bf16.msra.mxu0 %v8707
        %9238 = vmatprep.subr.bf16.mxu0 0
        %9239 = vmatpush1.bf16.msra.mxu0 %v8706
        %9240 = vmatprep.subr.bf16.mxu0 0
        %9241 = vmatpush1.bf16.msra.mxu0 %v8705
        %9242 = vmatprep.subr.bf16.mxu0 0
        %9243 = vmatpush1.bf16.msra.mxu0 %v8704
        %9244 = vmatprep.subr.bf16.mxu0 0
        %9245 = vmatpush1.bf16.msra.mxu0 %v8703
        %9246 = vmatprep.subr.bf16.mxu0 0
        %9247 = vmatpush1.bf16.msra.mxu0 %v8702
        %9248 = vmatprep.subr.bf16.mxu0 0
        %9249 = vmatpush1.bf16.msra.mxu0 %v8701
        %9250 = vmatprep.subr.bf16.mxu0 0
        %9251 = vmatpush1.bf16.msra.mxu0 %v8700
        %9252 = vmatprep.subr.bf16.mxu0 0
        %9253 = vmatpush2.bf16.msra.mxu0 %v8715
        %9254 = vmatprep.subr.bf16.mxu0 0
        %9255 = vmatpush2.bf16.msra.mxu0 %v8714
        %9256 = vmatprep.subr.bf16.mxu0 0
        %9257 = vmatpush2.bf16.msra.mxu0 %v8713
        %9258 = vmatprep.subr.bf16.mxu0 0
        %9259 = vmatpush2.bf16.msra.mxu0 %v8712
        %9260 = vmatprep.subr.bf16.mxu0 0
        %9261 = vmatpush2.bf16.msra.mxu0 %v8711
        %9262 = vmatprep.subr.bf16.mxu0 0
        %9263 = vmatpush2.bf16.msra.mxu0 %v8710
        %9264 = vmatprep.subr.bf16.mxu0 0
        %9265 = vmatpush2.bf16.msra.mxu0 %v8709
        %9266 = vmatprep.subr.bf16.mxu0 0
        %9267 = vmatpush2.bf16.msra.mxu0 %v8708
        %9268 = vmatprep.mubr.bf16.mxu0 %v7479
        %9269 = vmatmul.mubr.bf16.gmra.mxu0 %v7477
        %v9270 = vpop.f32.mrf.mxu0
        %v9271 = vadd.f32 %v9231, %v9270
        %v9272 = vpop.f32.mrf.mxu0
        %v9273 = vpop.f32.mrf.mxu0
        %v9274 = vpop.f32.mrf.mxu0
        %9275 = vdwg.mxu0
        %9276 = vmatprep.subr.bf16.mxu0 0
        %9277 = vmatpush1.bf16.msra.mxu0 %v8723
        %9278 = vmatprep.subr.bf16.mxu0 0
        %9279 = vmatpush1.bf16.msra.mxu0 %v8722
        %9280 = vmatprep.subr.bf16.mxu0 0
        %9281 = vmatpush1.bf16.msra.mxu0 %v8721
        %9282 = vmatprep.subr.bf16.mxu0 0
        %9283 = vmatpush1.bf16.msra.mxu0 %v8720
        %9284 = vmatprep.subr.bf16.mxu0 0
        %9285 = vmatpush1.bf16.msra.mxu0 %v8719
        %9286 = vmatprep.subr.bf16.mxu0 0
        %9287 = vmatpush1.bf16.msra.mxu0 %v8718
        %9288 = vmatprep.subr.bf16.mxu0 0
        %9289 = vmatpush1.bf16.msra.mxu0 %v8717
        %9290 = vmatprep.subr.bf16.mxu0 0
        %9291 = vmatpush1.bf16.msra.mxu0 %v8716
        %9292 = vmatprep.subr.bf16.mxu0 0
        %9293 = vmatpush2.bf16.msra.mxu0 %v8731
        %9294 = vmatprep.subr.bf16.mxu0 0
        %9295 = vmatpush2.bf16.msra.mxu0 %v8730
        %9296 = vmatprep.subr.bf16.mxu0 0
        %9297 = vmatpush2.bf16.msra.mxu0 %v8729
        %9298 = vmatprep.subr.bf16.mxu0 0
        %9299 = vmatpush2.bf16.msra.mxu0 %v8728
        %9300 = vmatprep.subr.bf16.mxu0 0
        %9301 = vmatpush2.bf16.msra.mxu0 %v8727
        %9302 = vmatprep.subr.bf16.mxu0 0
        %9303 = vmatpush2.bf16.msra.mxu0 %v8726
        %9304 = vmatprep.subr.bf16.mxu0 0
        %9305 = vmatpush2.bf16.msra.mxu0 %v8725
        %9306 = vmatprep.subr.bf16.mxu0 0
        %9307 = vmatpush2.bf16.msra.mxu0 %v8724
        %9308 = vmatprep.mubr.bf16.mxu0 %v7476
        %9309 = vmatmul.mubr.bf16.gmra.mxu0 %v7462
        %v9310 = vpop.f32.mrf.mxu0
        %v9311 = vadd.f32 %v9271, %v9310
        %v9312 = vpop.f32.mrf.mxu0
        %v9313 = vpop.f32.mrf.mxu0
        %v9314 = vpop.f32.mrf.mxu0
        %9315 = vdwg.mxu0
        %9316 = vmatprep.subr.bf16.mxu0 0
        %9317 = vmatpush1.bf16.msra.mxu0 %v8739
        %9318 = vmatprep.subr.bf16.mxu0 0
        %9319 = vmatpush1.bf16.msra.mxu0 %v8738
        %9320 = vmatprep.subr.bf16.mxu0 0
        %9321 = vmatpush1.bf16.msra.mxu0 %v8737
        %9322 = vmatprep.subr.bf16.mxu0 0
        %9323 = vmatpush1.bf16.msra.mxu0 %v8736
        %9324 = vmatprep.subr.bf16.mxu0 0
        %9325 = vmatpush1.bf16.msra.mxu0 %v8735
        %9326 = vmatprep.subr.bf16.mxu0 0
        %9327 = vmatpush1.bf16.msra.mxu0 %v8734
        %9328 = vmatprep.subr.bf16.mxu0 0
        %9329 = vmatpush1.bf16.msra.mxu0 %v8733
        %9330 = vmatprep.subr.bf16.mxu0 0
        %9331 = vmatpush1.bf16.msra.mxu0 %v8732
        %9332 = vmatprep.subr.bf16.mxu0 0
        %9333 = vmatpush2.bf16.msra.mxu0 %v8747
        %9334 = vmatprep.subr.bf16.mxu0 0
        %9335 = vmatpush2.bf16.msra.mxu0 %v8746
        %9336 = vmatprep.subr.bf16.mxu0 0
        %9337 = vmatpush2.bf16.msra.mxu0 %v8745
        %9338 = vmatprep.subr.bf16.mxu0 0
        %9339 = vmatpush2.bf16.msra.mxu0 %v8744
        %9340 = vmatprep.subr.bf16.mxu0 0
        %9341 = vmatpush2.bf16.msra.mxu0 %v8743
        %9342 = vmatprep.subr.bf16.mxu0 0
        %9343 = vmatpush2.bf16.msra.mxu0 %v8742
        %9344 = vmatprep.subr.bf16.mxu0 0
        %9345 = vmatpush2.bf16.msra.mxu0 %v8741
        %9346 = vmatprep.subr.bf16.mxu0 0
        %9347 = vmatpush2.bf16.msra.mxu0 %v8740
        %9348 = vmatprep.mubr.bf16.mxu0 %v7480
        %9349 = vmatmul.mubr.bf16.gmra.mxu0 %v7478
        %v9350 = vpop.f32.mrf.mxu0
        %v9351 = vadd.f32 %v9311, %v9350
        %v9352 = vpop.f32.mrf.mxu0
        %v9353 = vpop.f32.mrf.mxu0
        %v9354 = vpop.f32.mrf.mxu0
        %9355 = vdwg.mxu0
        %9356 = vmatprep.subr.bf16.mxu0 0
        %9357 = vmatpush1.bf16.msra.mxu0 %v8755
        %9358 = vmatprep.subr.bf16.mxu0 0
        %9359 = vmatpush1.bf16.msra.mxu0 %v8754
        %9360 = vmatprep.subr.bf16.mxu0 0
        %9361 = vmatpush1.bf16.msra.mxu0 %v8753
        %9362 = vmatprep.subr.bf16.mxu0 0
        %9363 = vmatpush1.bf16.msra.mxu0 %v8752
        %9364 = vmatprep.subr.bf16.mxu0 0
        %9365 = vmatpush1.bf16.msra.mxu0 %v8751
        %9366 = vmatprep.subr.bf16.mxu0 0
        %9367 = vmatpush1.bf16.msra.mxu0 %v8750
        %9368 = vmatprep.subr.bf16.mxu0 0
        %9369 = vmatpush1.bf16.msra.mxu0 %v8749
        %9370 = vmatprep.subr.bf16.mxu0 0
        %9371 = vmatpush1.bf16.msra.mxu0 %v8748
        %9372 = vmatprep.subr.bf16.mxu0 0
        %9373 = vmatpush2.bf16.msra.mxu0 %v8763
        %9374 = vmatprep.subr.bf16.mxu0 0
        %9375 = vmatpush2.bf16.msra.mxu0 %v8762
        %9376 = vmatprep.subr.bf16.mxu0 0
        %9377 = vmatpush2.bf16.msra.mxu0 %v8761
        %9378 = vmatprep.subr.bf16.mxu0 0
        %9379 = vmatpush2.bf16.msra.mxu0 %v8760
        %9380 = vmatprep.subr.bf16.mxu0 0
        %9381 = vmatpush2.bf16.msra.mxu0 %v8759
        %9382 = vmatprep.subr.bf16.mxu0 0
        %9383 = vmatpush2.bf16.msra.mxu0 %v8758
        %9384 = vmatprep.subr.bf16.mxu0 0
        %9385 = vmatpush2.bf16.msra.mxu0 %v8757
        %9386 = vmatprep.subr.bf16.mxu0 0
        %9387 = vmatpush2.bf16.msra.mxu0 %v8756
        %9388 = vmatprep.mubr.bf16.mxu0 %v7518
        %9389 = vmatmul.mubr.bf16.gmra.mxu0 %v7504
        %v9390 = vpop.f32.mrf.mxu0
        %v9391 = vadd.f32 %v9351, %v9390
        %v9392 = vpop.f32.mrf.mxu0
        %v9393 = vpop.f32.mrf.mxu0
        %v9394 = vpop.f32.mrf.mxu0
        %9395 = vdwg.mxu0
        %9396 = vmatprep.subr.bf16.mxu0 0
        %9397 = vmatpush1.bf16.msra.mxu0 %v8771
        %9398 = vmatprep.subr.bf16.mxu0 0
        %9399 = vmatpush1.bf16.msra.mxu0 %v8770
        %9400 = vmatprep.subr.bf16.mxu0 0
        %9401 = vmatpush1.bf16.msra.mxu0 %v8769
        %9402 = vmatprep.subr.bf16.mxu0 0
        %9403 = vmatpush1.bf16.msra.mxu0 %v8768
        %9404 = vmatprep.subr.bf16.mxu0 0
        %9405 = vmatpush1.bf16.msra.mxu0 %v8767
        %9406 = vmatprep.subr.bf16.mxu0 0
        %9407 = vmatpush1.bf16.msra.mxu0 %v8766
        %9408 = vmatprep.subr.bf16.mxu0 0
        %9409 = vmatpush1.bf16.msra.mxu0 %v8765
        %9410 = vmatprep.subr.bf16.mxu0 0
        %9411 = vmatpush1.bf16.msra.mxu0 %v8764
        %9412 = vmatprep.subr.bf16.mxu0 0
        %9413 = vmatpush2.bf16.msra.mxu0 %v8779
        %9414 = vmatprep.subr.bf16.mxu0 0
        %9415 = vmatpush2.bf16.msra.mxu0 %v8778
        %9416 = vmatprep.subr.bf16.mxu0 0
        %9417 = vmatpush2.bf16.msra.mxu0 %v8777
        %9418 = vmatprep.subr.bf16.mxu0 0
        %9419 = vmatpush2.bf16.msra.mxu0 %v8776
        %9420 = vmatprep.subr.bf16.mxu0 0
        %9421 = vmatpush2.bf16.msra.mxu0 %v8775
        %9422 = vmatprep.subr.bf16.mxu0 0
        %9423 = vmatpush2.bf16.msra.mxu0 %v8774
        %9424 = vmatprep.subr.bf16.mxu0 0
        %9425 = vmatpush2.bf16.msra.mxu0 %v8773
        %9426 = vmatprep.subr.bf16.mxu0 0
        %9427 = vmatpush2.bf16.msra.mxu0 %v8772
        %9428 = vmatprep.mubr.bf16.mxu0 %v7528
        %9429 = vmatmul.mubr.bf16.gmra.mxu0 %v7526
        %v9430 = vpop.f32.mrf.mxu0
        %v9431 = vadd.f32 %v9391, %v9430
        %v9432 = vpop.f32.mrf.mxu0
        %v9433 = vpop.f32.mrf.mxu0
        %v9434 = vpop.f32.mrf.mxu0
        %9435 = vdwg.mxu0
        %9436 = vmatprep.subr.bf16.mxu0 0
        %9437 = vmatpush1.bf16.msra.mxu0 %v8787
        %9438 = vmatprep.subr.bf16.mxu0 0
        %9439 = vmatpush1.bf16.msra.mxu0 %v8786
        %9440 = vmatprep.subr.bf16.mxu0 0
        %9441 = vmatpush1.bf16.msra.mxu0 %v8785
        %9442 = vmatprep.subr.bf16.mxu0 0
        %9443 = vmatpush1.bf16.msra.mxu0 %v8784
        %9444 = vmatprep.subr.bf16.mxu0 0
        %9445 = vmatpush1.bf16.msra.mxu0 %v8783
        %9446 = vmatprep.subr.bf16.mxu0 0
        %9447 = vmatpush1.bf16.msra.mxu0 %v8782
        %9448 = vmatprep.subr.bf16.mxu0 0
        %9449 = vmatpush1.bf16.msra.mxu0 %v8781
        %9450 = vmatprep.subr.bf16.mxu0 0
        %9451 = vmatpush1.bf16.msra.mxu0 %v8780
        %9452 = vmatprep.subr.bf16.mxu0 0
        %9453 = vmatpush2.bf16.msra.mxu0 %v8795
        %9454 = vmatprep.subr.bf16.mxu0 0
        %9455 = vmatpush2.bf16.msra.mxu0 %v8794
        %9456 = vmatprep.subr.bf16.mxu0 0
        %9457 = vmatpush2.bf16.msra.mxu0 %v8793
        %9458 = vmatprep.subr.bf16.mxu0 0
        %9459 = vmatpush2.bf16.msra.mxu0 %v8792
        %9460 = vmatprep.subr.bf16.mxu0 0
        %9461 = vmatpush2.bf16.msra.mxu0 %v8791
        %9462 = vmatprep.subr.bf16.mxu0 0
        %9463 = vmatpush2.bf16.msra.mxu0 %v8790
        %9464 = vmatprep.subr.bf16.mxu0 0
        %9465 = vmatpush2.bf16.msra.mxu0 %v8789
        %9466 = vmatprep.subr.bf16.mxu0 0
        %9467 = vmatpush2.bf16.msra.mxu0 %v8788
        %9468 = vmatprep.mubr.bf16.mxu0 %v7525
        %9469 = vmatmul.mubr.bf16.gmra.mxu0 %v7511
        %v9470 = vpop.f32.mrf.mxu0
        %v9471 = vadd.f32 %v9431, %v9470
        %v9472 = vpop.f32.mrf.mxu0
        %v9473 = vpop.f32.mrf.mxu0
        %v9474 = vpop.f32.mrf.mxu0
        %9475 = vdwg.mxu0
        %9476 = vmatprep.subr.bf16.mxu0 0
        %9477 = vmatpush1.bf16.msra.mxu0 %v8803
        %9478 = vmatprep.subr.bf16.mxu0 0
        %9479 = vmatpush1.bf16.msra.mxu0 %v8802
        %9480 = vmatprep.subr.bf16.mxu0 0
        %9481 = vmatpush1.bf16.msra.mxu0 %v8801
        %9482 = vmatprep.subr.bf16.mxu0 0
        %9483 = vmatpush1.bf16.msra.mxu0 %v8800
        %9484 = vmatprep.subr.bf16.mxu0 0
        %9485 = vmatpush1.bf16.msra.mxu0 %v8799
        %9486 = vmatprep.subr.bf16.mxu0 0
        %9487 = vmatpush1.bf16.msra.mxu0 %v8798
        %9488 = vmatprep.subr.bf16.mxu0 0
        %9489 = vmatpush1.bf16.msra.mxu0 %v8797
        %9490 = vmatprep.subr.bf16.mxu0 0
        %9491 = vmatpush1.bf16.msra.mxu0 %v8796
        %9492 = vmatprep.subr.bf16.mxu0 0
        %9493 = vmatpush2.bf16.msra.mxu0 %v8811
        %9494 = vmatprep.subr.bf16.mxu0 0
        %9495 = vmatpush2.bf16.msra.mxu0 %v8810
        %9496 = vmatprep.subr.bf16.mxu0 0
        %9497 = vmatpush2.bf16.msra.mxu0 %v8809
        %9498 = vmatprep.subr.bf16.mxu0 0
        %9499 = vmatpush2.bf16.msra.mxu0 %v8808
        %9500 = vmatprep.subr.bf16.mxu0 0
        %9501 = vmatpush2.bf16.msra.mxu0 %v8807
        %9502 = vmatprep.subr.bf16.mxu0 0
        %9503 = vmatpush2.bf16.msra.mxu0 %v8806
        %9504 = vmatprep.subr.bf16.mxu0 0
        %9505 = vmatpush2.bf16.msra.mxu0 %v8805
        %9506 = vmatprep.subr.bf16.mxu0 0
        %9507 = vmatpush2.bf16.msra.mxu0 %v8804
        %9508 = vmatprep.mubr.bf16.mxu0 %v7529
        %9509 = vmatmul.mubr.bf16.gmra.mxu0 %v7527
        %v9510 = vpop.f32.mrf.mxu0
        %v9511 = vadd.f32 %v9471, %v9510
        %v9512 = vpop.f32.mrf.mxu0
        %v9513 = vpop.f32.mrf.mxu0
        %v9514 = vpop.f32.mrf.mxu0
        %9515 = vdwg.mxu0
        %9516 = vmatprep.subr.bf16.mxu0 0
        %9517 = vmatpush1.bf16.msra.mxu0 %v8819
        %9518 = vmatprep.subr.bf16.mxu0 0
        %9519 = vmatpush1.bf16.msra.mxu0 %v8818
        %9520 = vmatprep.subr.bf16.mxu0 0
        %9521 = vmatpush1.bf16.msra.mxu0 %v8817
        %9522 = vmatprep.subr.bf16.mxu0 0
        %9523 = vmatpush1.bf16.msra.mxu0 %v8816
        %9524 = vmatprep.subr.bf16.mxu0 0
        %9525 = vmatpush1.bf16.msra.mxu0 %v8815
        %9526 = vmatprep.subr.bf16.mxu0 0
        %9527 = vmatpush1.bf16.msra.mxu0 %v8814
        %9528 = vmatprep.subr.bf16.mxu0 0
        %9529 = vmatpush1.bf16.msra.mxu0 %v8813
        %9530 = vmatprep.subr.bf16.mxu0 0
        %9531 = vmatpush1.bf16.msra.mxu0 %v8812
        %9532 = vmatprep.subr.bf16.mxu0 0
        %9533 = vmatpush2.bf16.msra.mxu0 %v8827
        %9534 = vmatprep.subr.bf16.mxu0 0
        %9535 = vmatpush2.bf16.msra.mxu0 %v8826
        %9536 = vmatprep.subr.bf16.mxu0 0
        %9537 = vmatpush2.bf16.msra.mxu0 %v8825
        %9538 = vmatprep.subr.bf16.mxu0 0
        %9539 = vmatpush2.bf16.msra.mxu0 %v8824
        %9540 = vmatprep.subr.bf16.mxu0 0
        %9541 = vmatpush2.bf16.msra.mxu0 %v8823
        %9542 = vmatprep.subr.bf16.mxu0 0
        %9543 = vmatpush2.bf16.msra.mxu0 %v8822
        %9544 = vmatprep.subr.bf16.mxu0 0
        %9545 = vmatpush2.bf16.msra.mxu0 %v8821
        %9546 = vmatprep.subr.bf16.mxu0 0
        %9547 = vmatpush2.bf16.msra.mxu0 %v8820
        %9548 = vmatprep.mubr.bf16.mxu0 %v7567
        %9549 = vmatmul.mubr.bf16.gmra.mxu0 %v7553
        %v9550 = vpop.f32.mrf.mxu0
        %v9551 = vadd.f32 %v9511, %v9550
        %v9552 = vpop.f32.mrf.mxu0
        %v9553 = vpop.f32.mrf.mxu0
        %v9554 = vpop.f32.mrf.mxu0
        %9555 = vdwg.mxu0
        %9556 = vmatprep.subr.bf16.mxu0 0
        %9557 = vmatpush1.bf16.msra.mxu0 %v8835
        %9558 = vmatprep.subr.bf16.mxu0 0
        %9559 = vmatpush1.bf16.msra.mxu0 %v8834
        %9560 = vmatprep.subr.bf16.mxu0 0
        %9561 = vmatpush1.bf16.msra.mxu0 %v8833
        %9562 = vmatprep.subr.bf16.mxu0 0
        %9563 = vmatpush1.bf16.msra.mxu0 %v8832
        %9564 = vmatprep.subr.bf16.mxu0 0
        %9565 = vmatpush1.bf16.msra.mxu0 %v8831
        %9566 = vmatprep.subr.bf16.mxu0 0
        %9567 = vmatpush1.bf16.msra.mxu0 %v8830
        %9568 = vmatprep.subr.bf16.mxu0 0
        %9569 = vmatpush1.bf16.msra.mxu0 %v8829
        %9570 = vmatprep.subr.bf16.mxu0 0
        %9571 = vmatpush1.bf16.msra.mxu0 %v8828
        %9572 = vmatprep.subr.bf16.mxu0 0
        %9573 = vmatpush2.bf16.msra.mxu0 %v8843
        %9574 = vmatprep.subr.bf16.mxu0 0
        %9575 = vmatpush2.bf16.msra.mxu0 %v8842
        %9576 = vmatprep.subr.bf16.mxu0 0
        %9577 = vmatpush2.bf16.msra.mxu0 %v8841
        %9578 = vmatprep.subr.bf16.mxu0 0
        %9579 = vmatpush2.bf16.msra.mxu0 %v8840
        %9580 = vmatprep.subr.bf16.mxu0 0
        %9581 = vmatpush2.bf16.msra.mxu0 %v8839
        %9582 = vmatprep.subr.bf16.mxu0 0
        %9583 = vmatpush2.bf16.msra.mxu0 %v8838
        %9584 = vmatprep.subr.bf16.mxu0 0
        %9585 = vmatpush2.bf16.msra.mxu0 %v8837
        %9586 = vmatprep.subr.bf16.mxu0 0
        %9587 = vmatpush2.bf16.msra.mxu0 %v8836
        %9588 = vmatprep.mubr.bf16.mxu0 %v7577
        %9589 = vmatmul.mubr.bf16.gmra.mxu0 %v7575
        %v9590 = vpop.f32.mrf.mxu0
        %v9591 = vadd.f32 %v9551, %v9590
        %v9592 = vpop.f32.mrf.mxu0
        %v9593 = vpop.f32.mrf.mxu0
        %v9594 = vpop.f32.mrf.mxu0
        %9595 = vdwg.mxu0
        %9596 = vmatprep.subr.bf16.mxu0 0
        %9597 = vmatpush1.bf16.msra.mxu0 %v8851
        %9598 = vmatprep.subr.bf16.mxu0 0
        %9599 = vmatpush1.bf16.msra.mxu0 %v8850
        %9600 = vmatprep.subr.bf16.mxu0 0
        %9601 = vmatpush1.bf16.msra.mxu0 %v8849
        %9602 = vmatprep.subr.bf16.mxu0 0
        %9603 = vmatpush1.bf16.msra.mxu0 %v8848
        %9604 = vmatprep.subr.bf16.mxu0 0
        %9605 = vmatpush1.bf16.msra.mxu0 %v8847
        %9606 = vmatprep.subr.bf16.mxu0 0
        %9607 = vmatpush1.bf16.msra.mxu0 %v8846
        %9608 = vmatprep.subr.bf16.mxu0 0
        %9609 = vmatpush1.bf16.msra.mxu0 %v8845
        %9610 = vmatprep.subr.bf16.mxu0 0
        %9611 = vmatpush1.bf16.msra.mxu0 %v8844
        %9612 = vmatprep.subr.bf16.mxu0 0
        %9613 = vmatpush2.bf16.msra.mxu0 %v8859
        %9614 = vmatprep.subr.bf16.mxu0 0
        %9615 = vmatpush2.bf16.msra.mxu0 %v8858
        %9616 = vmatprep.subr.bf16.mxu0 0
        %9617 = vmatpush2.bf16.msra.mxu0 %v8857
        %9618 = vmatprep.subr.bf16.mxu0 0
        %9619 = vmatpush2.bf16.msra.mxu0 %v8856
        %9620 = vmatprep.subr.bf16.mxu0 0
        %9621 = vmatpush2.bf16.msra.mxu0 %v8855
        %9622 = vmatprep.subr.bf16.mxu0 0
        %9623 = vmatpush2.bf16.msra.mxu0 %v8854
        %9624 = vmatprep.subr.bf16.mxu0 0
        %9625 = vmatpush2.bf16.msra.mxu0 %v8853
        %9626 = vmatprep.subr.bf16.mxu0 0
        %9627 = vmatpush2.bf16.msra.mxu0 %v8852
        %9628 = vmatprep.mubr.bf16.mxu0 %v7574
        %9629 = vmatmul.mubr.bf16.gmra.mxu0 %v7560
        %v9630 = vpop.f32.mrf.mxu0
        %v9631 = vadd.f32 %v9591, %v9630
        %v9632 = vpop.f32.mrf.mxu0
        %v9633 = vpop.f32.mrf.mxu0
        %v9634 = vpop.f32.mrf.mxu0
        %9635 = vdwg.mxu0
        %9636 = vmatprep.subr.bf16.mxu0 0
        %9637 = vmatpush1.bf16.msra.mxu0 %v8867
        %9638 = vmatprep.subr.bf16.mxu0 0
        %9639 = vmatpush1.bf16.msra.mxu0 %v8866
        %9640 = vmatprep.subr.bf16.mxu0 0
        %9641 = vmatpush1.bf16.msra.mxu0 %v8865
        %9642 = vmatprep.subr.bf16.mxu0 0
        %9643 = vmatpush1.bf16.msra.mxu0 %v8864
        %9644 = vmatprep.subr.bf16.mxu0 0
        %9645 = vmatpush1.bf16.msra.mxu0 %v8863
        %9646 = vmatprep.subr.bf16.mxu0 0
        %9647 = vmatpush1.bf16.msra.mxu0 %v8862
        %9648 = vmatprep.subr.bf16.mxu0 0
        %9649 = vmatpush1.bf16.msra.mxu0 %v8861
        %9650 = vmatprep.subr.bf16.mxu0 0
        %9651 = vmatpush1.bf16.msra.mxu0 %v8860
        %9652 = vmatprep.subr.bf16.mxu0 0
        %9653 = vmatpush2.bf16.msra.mxu0 %v8875
        %9654 = vmatprep.subr.bf16.mxu0 0
        %9655 = vmatpush2.bf16.msra.mxu0 %v8874
        %9656 = vmatprep.subr.bf16.mxu0 0
        %9657 = vmatpush2.bf16.msra.mxu0 %v8873
        %9658 = vmatprep.subr.bf16.mxu0 0
        %9659 = vmatpush2.bf16.msra.mxu0 %v8872
        %9660 = vmatprep.subr.bf16.mxu0 0
        %9661 = vmatpush2.bf16.msra.mxu0 %v8871
        %9662 = vmatprep.subr.bf16.mxu0 0
        %9663 = vmatpush2.bf16.msra.mxu0 %v8870
        %9664 = vmatprep.subr.bf16.mxu0 0
        %9665 = vmatpush2.bf16.msra.mxu0 %v8869
        %9666 = vmatprep.subr.bf16.mxu0 0
        %9667 = vmatpush2.bf16.msra.mxu0 %v8868
        %9668 = vmatprep.mubr.bf16.mxu0 %v7578
        %9669 = vmatmul.mubr.bf16.gmra.mxu0 %v7576
        %v9670 = vpop.f32.mrf.mxu0
        %v9671 = vadd.f32 %v9631, %v9670
        %v9672 = vpop.f32.mrf.mxu0
        %v9673 = vpop.f32.mrf.mxu0
        %v9674 = vpop.f32.mrf.mxu0
        %9675 = vdwg.mxu0
        %9676 = vmatprep.subr.bf16.mxu0 0
        %9677 = vmatpush1.bf16.msra.mxu0 %v8883
        %9678 = vmatprep.subr.bf16.mxu0 0
        %9679 = vmatpush1.bf16.msra.mxu0 %v8882
        %9680 = vmatprep.subr.bf16.mxu0 0
        %9681 = vmatpush1.bf16.msra.mxu0 %v8881
        %9682 = vmatprep.subr.bf16.mxu0 0
        %9683 = vmatpush1.bf16.msra.mxu0 %v8880
        %9684 = vmatprep.subr.bf16.mxu0 0
        %9685 = vmatpush1.bf16.msra.mxu0 %v8879
        %9686 = vmatprep.subr.bf16.mxu0 0
        %9687 = vmatpush1.bf16.msra.mxu0 %v8878
        %9688 = vmatprep.subr.bf16.mxu0 0
        %9689 = vmatpush1.bf16.msra.mxu0 %v8877
        %9690 = vmatprep.subr.bf16.mxu0 0
        %9691 = vmatpush1.bf16.msra.mxu0 %v8876
        %9692 = vmatprep.subr.bf16.mxu0 0
        %9693 = vmatpush2.bf16.msra.mxu0 %v8891
        %9694 = vmatprep.subr.bf16.mxu0 0
        %9695 = vmatpush2.bf16.msra.mxu0 %v8890
        %9696 = vmatprep.subr.bf16.mxu0 0
        %9697 = vmatpush2.bf16.msra.mxu0 %v8889
        %9698 = vmatprep.subr.bf16.mxu0 0
        %9699 = vmatpush2.bf16.msra.mxu0 %v8888
        %9700 = vmatprep.subr.bf16.mxu0 0
        %9701 = vmatpush2.bf16.msra.mxu0 %v8887
        %9702 = vmatprep.subr.bf16.mxu0 0
        %9703 = vmatpush2.bf16.msra.mxu0 %v8886
        %9704 = vmatprep.subr.bf16.mxu0 0
        %9705 = vmatpush2.bf16.msra.mxu0 %v8885
        %9706 = vmatprep.subr.bf16.mxu0 0
        %9707 = vmatpush2.bf16.msra.mxu0 %v8884
        %9708 = vmatprep.mubr.bf16.mxu0 %v7616
        %9709 = vmatmul.mubr.bf16.gmra.mxu0 %v7602
        %v9710 = vpop.f32.mrf.mxu0
        %v9711 = vadd.f32 %v9671, %v9710
        %v9712 = vpop.f32.mrf.mxu0
        %v9713 = vpop.f32.mrf.mxu0
        %v9714 = vpop.f32.mrf.mxu0
        %9715 = vdwg.mxu0
        %9716 = vmatprep.subr.bf16.mxu0 0
        %9717 = vmatpush1.bf16.msra.mxu0 %v8899
        %9718 = vmatprep.subr.bf16.mxu0 0
        %9719 = vmatpush1.bf16.msra.mxu0 %v8898
        %9720 = vmatprep.subr.bf16.mxu0 0
        %9721 = vmatpush1.bf16.msra.mxu0 %v8897
        %9722 = vmatprep.subr.bf16.mxu0 0
        %9723 = vmatpush1.bf16.msra.mxu0 %v8896
        %9724 = vmatprep.subr.bf16.mxu0 0
        %9725 = vmatpush1.bf16.msra.mxu0 %v8895
        %9726 = vmatprep.subr.bf16.mxu0 0
        %9727 = vmatpush1.bf16.msra.mxu0 %v8894
        %9728 = vmatprep.subr.bf16.mxu0 0
        %9729 = vmatpush1.bf16.msra.mxu0 %v8893
        %9730 = vmatprep.subr.bf16.mxu0 0
        %9731 = vmatpush1.bf16.msra.mxu0 %v8892
        %9732 = vmatprep.subr.bf16.mxu0 0
        %9733 = vmatpush2.bf16.msra.mxu0 %v8907
        %9734 = vmatprep.subr.bf16.mxu0 0
        %9735 = vmatpush2.bf16.msra.mxu0 %v8906
        %9736 = vmatprep.subr.bf16.mxu0 0
        %9737 = vmatpush2.bf16.msra.mxu0 %v8905
        %9738 = vmatprep.subr.bf16.mxu0 0
        %9739 = vmatpush2.bf16.msra.mxu0 %v8904
        %9740 = vmatprep.subr.bf16.mxu0 0
        %9741 = vmatpush2.bf16.msra.mxu0 %v8903
        %9742 = vmatprep.subr.bf16.mxu0 0
        %9743 = vmatpush2.bf16.msra.mxu0 %v8902
        %9744 = vmatprep.subr.bf16.mxu0 0
        %9745 = vmatpush2.bf16.msra.mxu0 %v8901
        %9746 = vmatprep.subr.bf16.mxu0 0
        %9747 = vmatpush2.bf16.msra.mxu0 %v8900
        %9748 = vmatprep.mubr.bf16.mxu0 %v7626
        %9749 = vmatmul.mubr.bf16.gmra.mxu0 %v7624
        %v9750 = vpop.f32.mrf.mxu0
        %v9751 = vadd.f32 %v9711, %v9750
        %v9752 = vpop.f32.mrf.mxu0
        %v9753 = vpop.f32.mrf.mxu0
        %v9754 = vpop.f32.mrf.mxu0
        %9755 = vdwg.mxu0
        %9756 = vmatprep.subr.bf16.mxu0 0
        %9757 = vmatpush1.bf16.msra.mxu0 %v8915
        %9758 = vmatprep.subr.bf16.mxu0 0
        %9759 = vmatpush1.bf16.msra.mxu0 %v8914
        %9760 = vmatprep.subr.bf16.mxu0 0
        %9761 = vmatpush1.bf16.msra.mxu0 %v8913
        %9762 = vmatprep.subr.bf16.mxu0 0
        %9763 = vmatpush1.bf16.msra.mxu0 %v8912
        %9764 = vmatprep.subr.bf16.mxu0 0
        %9765 = vmatpush1.bf16.msra.mxu0 %v8911
        %9766 = vmatprep.subr.bf16.mxu0 0
        %9767 = vmatpush1.bf16.msra.mxu0 %v8910
        %9768 = vmatprep.subr.bf16.mxu0 0
        %9769 = vmatpush1.bf16.msra.mxu0 %v8909
        %9770 = vmatprep.subr.bf16.mxu0 0
        %9771 = vmatpush1.bf16.msra.mxu0 %v8908
        %9772 = vmatprep.subr.bf16.mxu0 0
        %9773 = vmatpush2.bf16.msra.mxu0 %v8923
        %9774 = vmatprep.subr.bf16.mxu0 0
        %9775 = vmatpush2.bf16.msra.mxu0 %v8922
        %9776 = vmatprep.subr.bf16.mxu0 0
        %9777 = vmatpush2.bf16.msra.mxu0 %v8921
        %9778 = vmatprep.subr.bf16.mxu0 0
        %9779 = vmatpush2.bf16.msra.mxu0 %v8920
        %9780 = vmatprep.subr.bf16.mxu0 0
        %9781 = vmatpush2.bf16.msra.mxu0 %v8919
        %9782 = vmatprep.subr.bf16.mxu0 0
        %9783 = vmatpush2.bf16.msra.mxu0 %v8918
        %9784 = vmatprep.subr.bf16.mxu0 0
        %9785 = vmatpush2.bf16.msra.mxu0 %v8917
        %9786 = vmatprep.subr.bf16.mxu0 0
        %9787 = vmatpush2.bf16.msra.mxu0 %v8916
        %9788 = vmatprep.mubr.bf16.mxu0 %v7623
        %9789 = vmatmul.mubr.bf16.gmra.mxu0 %v7609
        %v9790 = vpop.f32.mrf.mxu0
        %v9791 = vadd.f32 %v9751, %v9790
        %v9792 = vpop.f32.mrf.mxu0
        %v9793 = vpop.f32.mrf.mxu0
        %v9794 = vpop.f32.mrf.mxu0
        %9795 = vdwg.mxu0
        %9796 = vmatprep.subr.bf16.mxu0 0
        %9797 = vmatpush1.bf16.msra.mxu0 %v8931
        %9798 = vmatprep.subr.bf16.mxu0 0
        %9799 = vmatpush1.bf16.msra.mxu0 %v8930
        %9800 = vmatprep.subr.bf16.mxu0 0
        %9801 = vmatpush1.bf16.msra.mxu0 %v8929
        %9802 = vmatprep.subr.bf16.mxu0 0
        %9803 = vmatpush1.bf16.msra.mxu0 %v8928
        %9804 = vmatprep.subr.bf16.mxu0 0
        %9805 = vmatpush1.bf16.msra.mxu0 %v8927
        %9806 = vmatprep.subr.bf16.mxu0 0
        %9807 = vmatpush1.bf16.msra.mxu0 %v8926
        %9808 = vmatprep.subr.bf16.mxu0 0
        %9809 = vmatpush1.bf16.msra.mxu0 %v8925
        %9810 = vmatprep.subr.bf16.mxu0 0
        %9811 = vmatpush1.bf16.msra.mxu0 %v8924
        %9812 = vmatprep.subr.bf16.mxu0 0
        %9813 = vmatpush2.bf16.msra.mxu0 %v8939
        %9814 = vmatprep.subr.bf16.mxu0 0
        %9815 = vmatpush2.bf16.msra.mxu0 %v8938
        %9816 = vmatprep.subr.bf16.mxu0 0
        %9817 = vmatpush2.bf16.msra.mxu0 %v8937
        %9818 = vmatprep.subr.bf16.mxu0 0
        %9819 = vmatpush2.bf16.msra.mxu0 %v8936
        %9820 = vmatprep.subr.bf16.mxu0 0
        %9821 = vmatpush2.bf16.msra.mxu0 %v8935
        %9822 = vmatprep.subr.bf16.mxu0 0
        %9823 = vmatpush2.bf16.msra.mxu0 %v8934
        %9824 = vmatprep.subr.bf16.mxu0 0
        %9825 = vmatpush2.bf16.msra.mxu0 %v8933
        %9826 = vmatprep.subr.bf16.mxu0 0
        %9827 = vmatpush2.bf16.msra.mxu0 %v8932
        %9828 = vmatprep.mubr.bf16.mxu0 %v7627
        %9829 = vmatmul.mubr.bf16.gmra.mxu0 %v7625
        %v9830 = vpop.f32.mrf.mxu0
        %v9831 = vadd.f32 %v9791, %v9830
        %v9832 = vpop.f32.mrf.mxu0
        %v9833 = vpop.f32.mrf.mxu0
        %v9834 = vpop.f32.mrf.mxu0
        %9835 = vdwg.mxu0
        %v9836 = vsub.f32 0.0, %v9831
        %v9837 = vmul.f32 %v9836, 1.442695
        %v9838 = vpow.pop %v9837
        %v9839 = vadd.f32 %v9838, 1.0
        %v9840 = vrcp.pop %v9839
        %v9841 = vpack.c.bf16 %v9840, %v9840
        %v9842 = vld [vmem:[%s7] sm:$0xf]
        %v9843 = vld [vmem:[%s7 + $0x4] sm:$0xf]
        %v9844 = vld [vmem:[%s7 + $0x8] sm:$0xf]
        %v9845 = vld [vmem:[%s7 + $0xc] sm:$0xf]
        %v9846 = vld [vmem:[%s7 + $0x10] sm:$0xf]
        %v9847 = vld [vmem:[%s7 + $0x14] sm:$0xf]
        %v9848 = vld [vmem:[%s7 + $0x18] sm:$0xf]
        %v9849 = vld [vmem:[%s7 + $0x1c] sm:$0xf]
        %v9850 = vld [vmem:[%s7 + $0x20] sm:$0xf]
        %v9851 = vld [vmem:[%s7 + $0x24] sm:$0xf]
        %v9852 = vld [vmem:[%s7 + $0x28] sm:$0xf]
        %v9853 = vld [vmem:[%s7 + $0x2c] sm:$0xf]
        %v9854 = vld [vmem:[%s7 + $0x30] sm:$0xf]
        %v9855 = vld [vmem:[%s7 + $0x34] sm:$0xf]
        %v9856 = vld [vmem:[%s7 + $0x38] sm:$0xf]
        %v9857 = vld [vmem:[%s7 + $0x3c] sm:$0xf]
        %v9858 = vld [vmem:[%s8] sm:$0x1]
        %v9875 = vunpack.c.l.b16 %v9842
        %v9876 = vunpack.c.l.b16 %v9843
        %v9877 = vunpack.c.l.b16 %v9844
        %v9878 = vunpack.c.l.b16 %v9845
        %v9879 = vunpack.c.l.b16 %v9846
        %v9880 = vunpack.c.l.b16 %v9847
        %v9881 = vunpack.c.l.b16 %v9848
        %v9882 = vunpack.c.l.b16 %v9849
        %v9883 = vunpack.c.l.b16 %v9850
        %v9884 = vunpack.c.l.b16 %v9851
        %v9885 = vunpack.c.l.b16 %v9852
        %v9886 = vunpack.c.l.b16 %v9853
        %v9887 = vunpack.c.l.b16 %v9854
        %v9888 = vunpack.c.l.b16 %v9855
        %v9889 = vunpack.c.l.b16 %v9856
        %v9890 = vunpack.c.l.b16 %v9857
        %v9891 = vpack.c.b16 %v9876, %v9875
        %v9892 = vpack.c.b16 %v9878, %v9877
        %v9893 = vpack.c.b16 %v9880, %v9879
        %v9894 = vpack.c.b16 %v9882, %v9881
        %v9895 = vpack.c.b16 %v9884, %v9883
        %v9896 = vpack.c.b16 %v9886, %v9885
        %v9897 = vpack.c.b16 %v9888, %v9887
        %v9898 = vpack.c.b16 %v9890, %v9889
        %9907 = vmatprep.subr.bf16.mxu0 0
        %9908 = vmatpush1.bf16.msra.mxu0 %v9898
        %9909 = vmatprep.subr.bf16.mxu0 0
        %9910 = vmatpush1.bf16.msra.mxu0 %v9897
        %9911 = vmatprep.subr.bf16.mxu0 0
        %9912 = vmatpush1.bf16.msra.mxu0 %v9896
        %9913 = vmatprep.subr.bf16.mxu0 0
        %9914 = vmatpush1.bf16.msra.mxu0 %v9895
        %9915 = vmatprep.subr.bf16.mxu0 0
        %9916 = vmatpush1.bf16.msra.mxu0 %v9894
        %9917 = vmatprep.subr.bf16.mxu0 0
        %9918 = vmatpush1.bf16.msra.mxu0 %v9893
        %9919 = vmatprep.subr.bf16.mxu0 0
        %9920 = vmatpush1.bf16.msra.mxu0 %v9892
        %9921 = vmatprep.subr.bf16.mxu0 0
        %9922 = vmatpush1.bf16.msra.mxu0 %v9891
        %9923 = vmatprep.subr.bf16.mxu0 0
        %9924 = vmatpush2.bf16.msra.mxu0 0
        %9925 = vmatprep.subr.bf16.mxu0 0
        %9926 = vmatpush2.bf16.msra.mxu0 0
        %9927 = vmatprep.subr.bf16.mxu0 0
        %9928 = vmatpush2.bf16.msra.mxu0 0
        %9929 = vmatprep.subr.bf16.mxu0 0
        %9930 = vmatpush2.bf16.msra.mxu0 0
        %9931 = vmatprep.subr.bf16.mxu0 0
        %9932 = vmatpush2.bf16.msra.mxu0 0
        %9933 = vmatprep.subr.bf16.mxu0 0
        %9934 = vmatpush2.bf16.msra.mxu0 0
        %9935 = vmatprep.subr.bf16.mxu0 0
        %9936 = vmatpush2.bf16.msra.mxu0 0
        %9937 = vmatprep.subr.bf16.mxu0 0
        %9938 = vmatpush2.bf16.msra.mxu0 0
        %9939 = vmatprep.mubr.bf16.mxu0 0
        %9940 = vmatmul.mubr.bf16.gmra.mxu0 %v9841
        %v9941 = vpop.f32.mrf.mxu0
        %v9942 = vadd.f32 %v9858, %v9941
        %v9943 = vpop.f32.mrf.mxu0
        %v9944 = vpop.f32.mrf.mxu0
        %v9945 = vpop.f32.mrf.mxu0
        %9946 = vdwg.mxu0
        %v9947 = vsub.f32 0.0, %v9942
        %v9948 = vmul.f32 %v9947, 1.442695
        %v9949 = vpow.pop %v9948
        %v9950 = vadd.f32 %v9949, 1.0
        %v9951 = vrcp.pop %v9950
        %v9952 = vpack.c.bf16 %v9951, %v9951
        %v9953 = vld [vmem:[%s9] sm:$0xf]
        %v9954 = vld [vmem:[%s9 + $0x4] sm:$0xf]
        %v9955 = vld [vmem:[%s9 + $0x8] sm:$0xf]
        %v9956 = vld [vmem:[%s9 + $0xc] sm:$0xf]
        %v9957 = vld [vmem:[%s9 + $0x10] sm:$0xf]
        %v9958 = vld [vmem:[%s9 + $0x14] sm:$0xf]
        %v9959 = vld [vmem:[%s9 + $0x18] sm:$0xf]
        %v9960 = vld [vmem:[%s9 + $0x1c] sm:$0xf]
        %v9961 = vld [vmem:[%s9 + $0x20] sm:$0xf]
        %v9962 = vld [vmem:[%s9 + $0x24] sm:$0xf]
        %v9963 = vld [vmem:[%s9 + $0x28] sm:$0xf]
        %v9964 = vld [vmem:[%s9 + $0x2c] sm:$0xf]
        %v9965 = vld [vmem:[%s9 + $0x30] sm:$0xf]
        %v9966 = vld [vmem:[%s9 + $0x34] sm:$0xf]
        %v9967 = vld [vmem:[%s9 + $0x38] sm:$0xf]
        %v9968 = vld [vmem:[%s9 + $0x3c] sm:$0xf]
        %v9969 = vld [vmem:[%s10] sm:$0x1]
        %v9986 = vunpack.c.l.b16 %v9953
        %v9987 = vunpack.c.l.b16 %v9954
        %v9988 = vunpack.c.l.b16 %v9955
        %v9989 = vunpack.c.l.b16 %v9956
        %v9990 = vunpack.c.l.b16 %v9957
        %v9991 = vunpack.c.l.b16 %v9958
        %v9992 = vunpack.c.l.b16 %v9959
        %v9993 = vunpack.c.l.b16 %v9960
        %v9994 = vunpack.c.l.b16 %v9961
        %v9995 = vunpack.c.l.b16 %v9962
        %v9996 = vunpack.c.l.b16 %v9963
        %v9997 = vunpack.c.l.b16 %v9964
        %v9998 = vunpack.c.l.b16 %v9965
        %v9999 = vunpack.c.l.b16 %v9966
        %v10000 = vunpack.c.l.b16 %v9967
        %v10001 = vunpack.c.l.b16 %v9968
        %v10002 = vpack.c.b16 %v9987, %v9986
        %v10003 = vpack.c.b16 %v9989, %v9988
        %v10004 = vpack.c.b16 %v9991, %v9990
        %v10005 = vpack.c.b16 %v9993, %v9992
        %v10006 = vpack.c.b16 %v9995, %v9994
        %v10007 = vpack.c.b16 %v9997, %v9996
        %v10008 = vpack.c.b16 %v9999, %v9998
        %v10009 = vpack.c.b16 %v10001, %v10000
        %10018 = vmatprep.subr.bf16.mxu0 0
        %10019 = vmatpush1.bf16.msra.mxu0 %v10009
        %10020 = vmatprep.subr.bf16.mxu0 0
        %10021 = vmatpush1.bf16.msra.mxu0 %v10008
        %10022 = vmatprep.subr.bf16.mxu0 0
        %10023 = vmatpush1.bf16.msra.mxu0 %v10007
        %10024 = vmatprep.subr.bf16.mxu0 0
        %10025 = vmatpush1.bf16.msra.mxu0 %v10006
        %10026 = vmatprep.subr.bf16.mxu0 0
        %10027 = vmatpush1.bf16.msra.mxu0 %v10005
        %10028 = vmatprep.subr.bf16.mxu0 0
        %10029 = vmatpush1.bf16.msra.mxu0 %v10004
        %10030 = vmatprep.subr.bf16.mxu0 0
        %10031 = vmatpush1.bf16.msra.mxu0 %v10003
        %10032 = vmatprep.subr.bf16.mxu0 0
        %10033 = vmatpush1.bf16.msra.mxu0 %v10002
        %10034 = vmatprep.subr.bf16.mxu0 0
        %10035 = vmatpush2.bf16.msra.mxu0 0
        %10036 = vmatprep.subr.bf16.mxu0 0
        %10037 = vmatpush2.bf16.msra.mxu0 0
        %10038 = vmatprep.subr.bf16.mxu0 0
        %10039 = vmatpush2.bf16.msra.mxu0 0
        %10040 = vmatprep.subr.bf16.mxu0 0
        %10041 = vmatpush2.bf16.msra.mxu0 0
        %10042 = vmatprep.subr.bf16.mxu0 0
        %10043 = vmatpush2.bf16.msra.mxu0 0
        %10044 = vmatprep.subr.bf16.mxu0 0
        %10045 = vmatpush2.bf16.msra.mxu0 0
        %10046 = vmatprep.subr.bf16.mxu0 0
        %10047 = vmatpush2.bf16.msra.mxu0 0
        %10048 = vmatprep.subr.bf16.mxu0 0
        %10049 = vmatpush2.bf16.msra.mxu0 0
        %10050 = vmatprep.mubr.bf16.mxu0 0
        %10051 = vmatmul.mubr.bf16.gmra.mxu0 %v9952
        %v10052 = vpop.f32.mrf.mxu0
        %v10053 = vadd.f32 %v9969, %v10052
        %v10054 = vpop.f32.mrf.mxu0
        %v10055 = vpop.f32.mrf.mxu0
        %v10056 = vpop.f32.mrf.mxu0
        %10057 = vdwg.mxu0
        %10058 = vst [vmem:[%s807] sm:$0x1] %v10053
        %s10059 = sand.u32 %s269, 1
        %s10060 = scalar_lea.sflag [#allocation8], %s10059
        %s10061 = sand.u32 %s269, 1
        %s10062 = scalar_lea.vmem [#allocation7], %s10061
        // Predicated region
        $region106: #{jcnn_forward.1} parent=100 // pred_check
          %p10063 = pneg %p279
        $region107: #{jcnn_forward.1} parent=100 // pred_check_branch
          %10065 = sbr.rel (%p10063) target = $region109
        $region108: #{jcnn_forward.1} parent=100 // pred_region
          %s10067 = ssub.s32 16, 16
          %10068 = vsyncadd %s10060, %s10067
          %s10069 = smul.addr %s25, 16
          %s10070 = scalar_lea.hbm %s11, %s10069
          %s10072 = sshll.u32 %s10062, 4
          %s10073 = int_to_ptr.vmem [resolvable:$true] %s10072
          %10075 = dma.vmem_to_hbm [thread:$0]  %s10073, 16, %s10070, %s10060
        $region109: #{jcnn_forward.1} parent=100 // pred_fallthru
          _
      $region101: #{jcnn_forward.1} parent=5 // pred_fallthru
        _
      %p10076 = scmp.le.s32.totalorder 2, %s20
      // Predicated region
      $region110: #{jcnn_forward.1} parent=5 // pred_check
        %p10077 = pneg %p10076
      $region111: #{jcnn_forward.1} parent=5 // pred_check_branch
        %10079 = sbr.rel (%p10077) target = $region113
      $region112: #{jcnn_forward.1} parent=5 // pred_region
        %s10080 = ssub.s32 %s20, 2
        // Predicated region
        $region114: #{jcnn_forward.1} parent=112 // pred_check
          %p10081 = pneg %p285
        $region115: #{jcnn_forward.1} parent=112 // pred_check_branch
          %10083 = sbr.rel (%p10081) target = $region117
        $region116: #{jcnn_forward.1} parent=112 // pred_region
          %s10084 = sand.u32 %s270, 1
          %s10085 = scalar_lea.sflag [#allocation8], %s10084
          %s10086 = sand.u32 %s270, 1
          %s10087 = scalar_lea.vmem [#allocation7], %s10086
          %10088 = dma.done %s10085, 16
        $region117: #{jcnn_forward.1} parent=112 // pred_fallthru
          _
      $region113: #{jcnn_forward.1} parent=5 // pred_fallthru
        _
    $region6: #{jcnn_forward.1} parent=1 // loop_footer
      %s24 = sadd.s32 1, %s20
    $region7: #{jcnn_forward.1} parent=1 // loop_footer_branch
      %19 = sbr.rel target = $region3
    $region8: #{jcnn_forward.1} parent=1 // loop_exit
      _
    %10089 = vsyncpa [#allocation8], 1
    %s10090 = scalar_lea.sflag [#allocation8], 1
    %10091 = vsyncpa %s10090, 1

</llo_original>
